<compile_context>
chip_gen: v7x
topology: tpu7x:2x2x1
jax: 0.10.0
libtpu: 0.0.40
codegen_flags: <defaults>
</compile_context>

<pallas_src>
import functools
import math

import jax
import jax.numpy as jnp
from jax import lax
from jax.experimental import pallas as pl
from jax.experimental.pallas import tpu as pltpu

S = 30.0
M = 0.5
COS_M = math.cos(M)
SIN_M = math.sin(M)
EPS = 1e-12  # F.normalize default eps

# Folded blend constants: s*(mk*phi + (1-mk)*cos) == S*cos + mk*(A*cos - B*sin)
A_BLEND = S * (COS_M - 1.0)
B_BLEND = S * SIN_M


def _round_up(x, m):
    return ((x + m - 1) // m) * m


def _l2_normalize(v):
    # F.normalize: v / max(||v||, eps) == v * rsqrt(max(||v||^2, eps^2))
    v32 = v.astype(jnp.float32)
    sq = jnp.sum(v32 * v32, axis=-1, keepdims=True)
    return v32 * lax.rsqrt(jnp.maximum(sq, EPS * EPS))


def _make_kernel(labels_resident, tn):
    """Kernel over pre-normalized operands: matmul + fused ArcFace epilogue."""

    def kernel(xn_ref, wn_ref, mask_ref, out_ref):
        if labels_resident:
            # Full normalized label matrix is VMEM-resident; slice this N tile.
            j = pl.program_id(1)
            start = pl.multiple_of(j * tn, tn)
            w_n = wn_ref[pl.ds(start, tn), :]
        else:
            w_n = wn_ref[...]

        # cosine = x_n @ w_n.T expressed as a trans_b contraction (MXU, f32 acc).
        cosine = lax.dot_general(
            xn_ref[...], w_n,
            dimension_numbers=(((1,), (1,)), ((), ())),
            preferred_element_type=jnp.float32)                     # [tb, tn]

        # Clamp at 0: avoids NaN when |cosine| rounds slightly above 1.
        sine = jnp.sqrt(jnp.maximum(1.0 - cosine * cosine, 0.0))

        mk = mask_ref[...].astype(jnp.float32)                      # [tb, 1]
        out_ref[...] = (
            S * cosine + mk * (A_BLEND * cosine - B_BLEND * sine)
        ).astype(out_ref.dtype)

    return kernel


def arcface_loss(logits, labels, *, matmul_dtype=jnp.bfloat16,
                 out_dtype=jnp.float32, tn_max=1024,
                 vmem_block_budget=28 << 20):
    B, D = logits.shape
    N, D2 = labels.shape
    assert D == D2, "feature dims must match"
    # torch broadcast of labels.view(-1, 1) [N*D, 1] with cosine [B, N]
    # requires N*D == B (implicit shape contract of the reference module).
    assert N * D == B, "labels.view(-1, 1) must broadcast against [B, N]"

    # Blend mask uses the RAW label values (torch normalizes only inside linear).
    mask = labels.reshape(-1, 1).astype(jnp.float32)

    # Pre-normalize once in the wrapper; ship bf16 (or requested) MXU operands.
    xn = _l2_normalize(logits).astype(matmul_dtype)
    wn = _l2_normalize(labels).astype(matmul_dtype)

    mm_bytes = jnp.dtype(matmul_dtype).itemsize
    out_bytes = jnp.dtype(out_dtype).itemsize

    # Lane-dense output tile: tn multiple of 128.
    tn = _round_up(min(tn_max, _round_up(N, 128)), 128)
    N_pad = _round_up(N, tn)

    d_lanes = _round_up(D, 128)

    # Keep the whole normalized label matrix resident in VMEM when it is small
    # (constant block index -> single DMA for the entire grid).
    labels_resident = (N_pad * d_lanes * mm_bytes) <= (6 << 20)

    def footprint(tb):
        lab = (N_pad * d_lanes * mm_bytes if labels_resident
               else 2 * tn * d_lanes * mm_bytes)
        return (2 * tb * d_lanes * mm_bytes      # logits blocks (double-buffered)
                + lab                            # labels block(s)
                + 2 * tb * 128 * 4               # mask blocks (lane-padded)
                + 2 * tb * tn * out_bytes        # output blocks
                + 4 * tb * tn * 4)               # f32 epilogue temporaries

    # Pick the largest B tile that keeps the whole block footprint in budget
    # (fewer grid steps; fewer label/logits revisits). Multiple of 16 for bf16
    # sublane packing (also satisfies the f32 multiple-of-8 requirement).
    tb = 16
    for cand in (4096, 2048, 1024, 512, 256, 128, 64, 32, 16):
        tb_c = _round_up(min(cand, _round_up(B, 16)), 16)
        if footprint(tb_c) <= vmem_block_budget:
            tb = tb_c
            break
    B_pad = _round_up(B, tb)

    if B_pad != B:
        xn = jnp.pad(xn, ((0, B_pad - B), (0, 0)))
        mask = jnp.pad(mask, ((0, B_pad - B), (0, 0)))
    if N_pad != N:
        wn = jnp.pad(wn, ((0, N_pad - N), (0, 0)))

    nb, nn = B_pad // tb, N_pad // tn

    if labels_resident:
        labels_spec = pl.BlockSpec((N_pad, D), lambda i, j: (0, 0))
    else:
        labels_spec = pl.BlockSpec((tn, D), lambda i, j: (j, 0))

    # Footprint + headroom, capped well below v7x's 64 MiB physical VMEM/TC.
    vmem_limit = int(min(max(footprint(tb) + (8 << 20), 16 << 20), 40 << 20))

    cost = pl.CostEstimate(
        flops=2 * B_pad * N_pad * D,
        transcendentals=0,
        bytes_accessed=(B_pad * D * mm_bytes + N_pad * D * mm_bytes
                        + B_pad * 4 + B_pad * N_pad * out_bytes))

    out = pl.pallas_call(
        _make_kernel(labels_resident, tn),
        out_shape=jax.ShapeDtypeStruct((B_pad, N_pad), out_dtype),
        grid=(nb, nn),
        in_specs=[
            pl.BlockSpec((tb, D), lambda i, j: (i, 0)),   # normalized logits tile
            labels_spec,                                   # normalized labels
            pl.BlockSpec((tb, 1), lambda i, j: (i, 0)),   # blend mask tile
        ],
        out_specs=pl.BlockSpec((tb, tn), lambda i, j: (i, j)),
        compiler_params=pltpu.CompilerParams(
            dimension_semantics=("parallel", "arbitrary"),
            vmem_limit_bytes=vmem_limit,
        ),
        cost_estimate=cost,
    )(xn, wn, mask)

    return out[:B, :N]


def arcface_reference(logits, labels, matmul_dtype=jnp.float32):
    """Pure-JAX mirror of the PyTorch forward (sanity check only)."""
    xn = _l2_normalize(logits).astype(matmul_dtype).astype(jnp.float32)
    wn = _l2_normalize(labels).astype(matmul_dtype).astype(jnp.float32)
    cosine = jnp.dot(xn, wn.T, precision=lax.Precision.HIGHEST)
    sine = jnp.sqrt(jnp.maximum(1.0 - cosine * cosine, 0.0))
    phi = cosine * COS_M - sine * SIN_M
    mk = labels.reshape(-1, 1)
    return (mk * phi + (1.0 - mk) * cosine) * S


if __name__ == "__main__":
    key = jax.random.PRNGKey(0)
    k1, k2 = jax.random.split(key)

    # N classes (multiple of 128 -> lane-dense output), D features,
    # B = N * D so labels.view(-1, 1) broadcasts against [B, N].
    N, D = 128, 16
    B = N * D  # 2048

    logits = jax.random.normal(k1, (B, D), dtype=jnp.float32)
    labels = jax.random.normal(k2, (N, D), dtype=jnp.float32)

    out = jax.jit(arcface_loss)(logits, labels)        # default bf16 MXU path
    jax.block_until_ready(out)
    assert out.shape == (B, N) and out.dtype == jnp.float32

    # Tight check vs a reference fed the same bf16-quantized normalized inputs
    # (isolates kernel correctness from the intentional bf16 input rounding).
    ref_q = arcface_reference(logits, labels, matmul_dtype=jnp.bfloat16)
    assert bool(jnp.allclose(out, ref_q, rtol=1e-2, atol=5e-2)), \
        "kernel output mismatch vs bf16-quantized reference"

    # Loose semantic check vs the full-f32 reference (bf16 input rounding is
    # amplified by sqrt(1-c^2) near |c|~1, hence the generous tolerance).
    ref_f32 = arcface_reference(logits, labels)
    assert bool(jnp.allclose(out, ref_f32, rtol=1e-1, atol=2.0)), \
        "kernel output mismatch vs f32 reference"

    print("KERNEL_OK")
</pallas_src>

<mosaic_0001>
module attributes {stable_mosaic.version = 11 : i64} {
  func.func @kernel(%arg0: i32, %arg1: i32, %arg2: memref<2048x16xbf16, #tpu.memory_space<vmem>>, %arg3: memref<128x16xbf16, #tpu.memory_space<vmem>>, %arg4: memref<2048x1xf32, #tpu.memory_space<vmem>>, %arg5: memref<2048x128xf32, #tpu.memory_space<vmem>>) attributes {dimension_semantics = [#tpu.dimension_semantics<parallel>, #tpu.dimension_semantics<arbitrary>], iteration_bounds = array<i64: 1, 1>, scalar_prefetch = 0 : i64, scratch_operands = 0 : i64, tpu.core_type = #tpu.core_type<tc>, window_params = [{transform_indices = @transform_0, window_bounds = array<i64: 2048, 16>}, {pipeline_mode = #tpu.pipeline_mode<synchronous>, transform_indices = @transform_1, window_bounds = array<i64: 128, 16>}, {transform_indices = @transform_2, window_bounds = array<i64: 2048, 1>}, {transform_indices = @transform_3, window_bounds = array<i64: 2048, 128>}]} {
    %c128_i32 = arith.constant 128 : i32
    %0 = arith.muli %arg1, %c128_i32 : i32
    %1 = tpu.assume_multiple %0, 128 : i32
    %2 = arith.index_cast %1 : i32 to index
    %c0 = arith.constant 0 : index
    %3 = vector.load %arg3[%2, %c0] : memref<128x16xbf16, #tpu.memory_space<vmem>>, vector<128x16xbf16>
    %c0_0 = arith.constant 0 : index
    %c0_1 = arith.constant 0 : index
    %4 = vector.load %arg2[%c0_0, %c0_1] : memref<2048x16xbf16, #tpu.memory_space<vmem>>, vector<2048x16xbf16>
    %cst = arith.constant dense<0.000000e+00> : vector<2048x128xf32>
    %5 = tpu.matmul %4, %3, %cst {dimension_numbers = #tpu.dot_dimension_numbers<[1], [1], [0], [0], [0, 0, 1, 0], [], []>} : vector<2048x16xbf16>, vector<128x16xbf16>, vector<2048x128xf32> -> vector<2048x128xf32>
    %6 = arith.mulf %5, %5 : vector<2048x128xf32>
    %cst_2 = arith.constant 1.000000e+00 : f32
    %7 = vector.broadcast %cst_2 : f32 to vector<2048x128xf32>
    %8 = arith.subf %7, %6 : vector<2048x128xf32>
    %cst_3 = arith.constant 0.000000e+00 : f32
    %9 = vector.broadcast %cst_3 : f32 to vector<2048x128xf32>
    %10 = arith.maximumf %8, %9 : vector<2048x128xf32>
    %11 = math.sqrt %10 : vector<2048x128xf32>
    %c0_4 = arith.constant 0 : index
    %c0_5 = arith.constant 0 : index
    %12 = vector.load %arg4[%c0_4, %c0_5] : memref<2048x1xf32, #tpu.memory_space<vmem>>, vector<2048x1xf32>
    %cst_6 = arith.constant 3.000000e+01 : f32
    %13 = vector.broadcast %cst_6 : f32 to vector<2048x128xf32>
    %14 = arith.mulf %13, %5 : vector<2048x128xf32>
    %cst_7 = arith.constant -3.67252326 : f32
    %15 = vector.broadcast %cst_7 : f32 to vector<2048x128xf32>
    %16 = arith.mulf %15, %5 : vector<2048x128xf32>
    %cst_8 = arith.constant 14.3827658 : f32
    %17 = vector.broadcast %cst_8 : f32 to vector<2048x128xf32>
    %18 = arith.mulf %17, %11 : vector<2048x128xf32>
    %19 = arith.subf %16, %18 : vector<2048x128xf32>
    %20 = vector.broadcast %12 : vector<2048x1xf32> to vector<2048x128xf32>
    %21 = arith.mulf %20, %19 : vector<2048x128xf32>
    %22 = arith.addf %14, %21 : vector<2048x128xf32>
    %c0_9 = arith.constant 0 : index
    %c0_10 = arith.constant 0 : index
    %23 = vector.load %arg5[%c0_9, %c0_10] : memref<2048x128xf32, #tpu.memory_space<vmem>>, vector<2048x128xf32>
    tpu.vector_store %arg5[%c0_9, %c0_10], %22 {strides = array<i32>} : memref<2048x128xf32, #tpu.memory_space<vmem>>, vector<2048x128xf32>,
    return
  }
  func.func @transform_0(%arg0: i32, %arg1: i32) -> (i32, i32) {
    %c0_i32 = arith.constant 0 : i32
    %c0_i32_0 = arith.constant 0 : i32
    return %arg0, %c0_i32 : i32, i32
  }
  func.func @transform_1(%arg0: i32, %arg1: i32) -> (i32, i32) {
    %c0_i32 = arith.constant 0 : i32
    %c0_i32_0 = arith.constant 0 : i32
    %c0_i32_1 = arith.constant 0 : i32
    return %c0_i32, %c0_i32_0 : i32, i32
  }
  func.func @transform_2(%arg0: i32, %arg1: i32) -> (i32, i32) {
    %c0_i32 = arith.constant 0 : i32
    %c0_i32_0 = arith.constant 0 : i32
    return %arg0, %c0_i32 : i32, i32
  }
  func.func @transform_3(%arg0: i32, %arg1: i32) -> (i32, i32) {
    %c0_i32 = arith.constant 0 : i32
    return %arg0, %arg1 : i32, i32
  }
}

</mosaic_0001>

<llo_original>
// kernel: arcface_loss.1
$region0: #{arcface_loss.1}
  #allocation0 [shape = 'u32[]', space=smem, size = 0x4, offset = 0x4, fixed_abs, tag = 'smem constant byte address 0x4 - core index']
  #allocation1 [shape = 'u32[144,128]{1,0:T(1,128)}', space=vmem, size = 0x12000, scoped, tag = 'internal scratch']
  %s0 = inlined_call_operand.vmem [shape: bf16[2048,16], index: 0, kind: input, shape index: {}]
  %s1 = inlined_call_operand.vmem [shape: bf16[128,16], index: 1, kind: input, shape index: {}]
  %s2 = inlined_call_operand.vmem [shape: f32[2048,1], index: 2, kind: input, shape index: {}]
  %s3 = inlined_call_operand.hbm [shape: f32[2048,128], index: 3, kind: output, shape index: {}]
  %s4 = sld [smem:[#allocation0]]
  $region22: #{arcface_loss.1} parent=0
    _
  %s6 = ssub.s32 1, %s4
  %s7 = scalar_select 0, %s6, %s4
  $region1: #{arcface_loss.1} parent=0
    #allocation2 [shape = 'u8[1048576]{0}', space=vmem, size = 0x100000, scoped, tag = 'output window, operand 0, single buffered']
    #allocation3 [shape = 's32[1]{0}', space=sflag, size = 0x4, scoped, tag = 'scoped memory for arcface_loss.1']
    %8 = vsyncpa [#allocation3], 0
    // Predicated region
    $region2: #{arcface_loss.1} parent=1 // pred_check
      _
    $region3: #{arcface_loss.1} parent=1 // pred_check_branch
      %10 = sbr.rel (0) target = $region5
    $region4: #{arcface_loss.1} parent=1 // pred_region
      _
    $region5: #{arcface_loss.1} parent=1 // pred_fallthru
      _
    // Predicated region
    $region6: #{arcface_loss.1} parent=1 // pred_check
      _
    $region7: #{arcface_loss.1} parent=1 // pred_check_branch
      %12 = sbr.rel (0) target = $region9
    $region8: #{arcface_loss.1} parent=1 // pred_region
      _
    $region9: #{arcface_loss.1} parent=1 // pred_fallthru
      _
    // Predicated region
    $region10: #{arcface_loss.1} parent=1 // pred_check
      _
    $region11: #{arcface_loss.1} parent=1 // pred_check_branch
      %14 = sbr.rel (0) target = $region13
    $region12: #{arcface_loss.1} parent=1 // pred_region
      _
    $region13: #{arcface_loss.1} parent=1 // pred_fallthru
      _
    %s16 = smul.u32 0, 128
    %s17 = sshra.s32 %s16, 3
    %s18 = sand.u32 %s16, 7
    %s19 = smul.addr %s17, 4
    %s20 = scalar_lea.vmem %s1, %s19
    %v21 = vld [vmem:[%s20] sm:$0xf]
    %v22 = vld [vmem:[%s20 + $0x4] sm:$0xf]
    %v23 = vld [vmem:[%s20 + $0x8] sm:$0xf]
    %v24 = vld [vmem:[%s20 + $0xc] sm:$0xf]
    %v25 = vld [vmem:[%s20 + $0x10] sm:$0xf]
    %v26 = vld [vmem:[%s20 + $0x14] sm:$0xf]
    %v27 = vld [vmem:[%s20 + $0x18] sm:$0xf]
    %v28 = vld [vmem:[%s20 + $0x1c] sm:$0xf]
    %v29 = vld [vmem:[%s20 + $0x20] sm:$0xf]
    %v30 = vld [vmem:[%s20 + $0x24] sm:$0xf]
    %v31 = vld [vmem:[%s20 + $0x28] sm:$0xf]
    %v32 = vld [vmem:[%s20 + $0x2c] sm:$0xf]
    %v33 = vld [vmem:[%s20 + $0x30] sm:$0xf]
    %v34 = vld [vmem:[%s20 + $0x34] sm:$0xf]
    %v35 = vld [vmem:[%s20 + $0x38] sm:$0xf]
    %v36 = vld [vmem:[%s20 + $0x3c] sm:$0xf]
    %v37 = vld [vmem:[%s0] sm:$0xf]
    %v38 = vld [vmem:[%s0 + $0x4] sm:$0xf]
    %v39 = vld [vmem:[%s0 + $0x8] sm:$0xf]
    %v40 = vld [vmem:[%s0 + $0xc] sm:$0xf]
    %v41 = vld [vmem:[%s0 + $0x10] sm:$0xf]
    %v42 = vld [vmem:[%s0 + $0x14] sm:$0xf]
    %v43 = vld [vmem:[%s0 + $0x18] sm:$0xf]
    %v44 = vld [vmem:[%s0 + $0x1c] sm:$0xf]
    %v45 = vld [vmem:[%s0 + $0x20] sm:$0xf]
    %v46 = vld [vmem:[%s0 + $0x24] sm:$0xf]
    %v47 = vld [vmem:[%s0 + $0x28] sm:$0xf]
    %v48 = vld [vmem:[%s0 + $0x2c] sm:$0xf]
    %v49 = vld [vmem:[%s0 + $0x30] sm:$0xf]
    %v50 = vld [vmem:[%s0 + $0x34] sm:$0xf]
    %v51 = vld [vmem:[%s0 + $0x38] sm:$0xf]
    %v52 = vld [vmem:[%s0 + $0x3c] sm:$0xf]
    %v53 = vld [vmem:[%s0 + $0x40] sm:$0xf]
    %v54 = vld [vmem:[%s0 + $0x44] sm:$0xf]
    %v55 = vld [vmem:[%s0 + $0x48] sm:$0xf]
    %v56 = vld [vmem:[%s0 + $0x4c] sm:$0xf]
    %v57 = vld [vmem:[%s0 + $0x50] sm:$0xf]
    %v58 = vld [vmem:[%s0 + $0x54] sm:$0xf]
    %v59 = vld [vmem:[%s0 + $0x58] sm:$0xf]
    %v60 = vld [vmem:[%s0 + $0x5c] sm:$0xf]
    %v61 = vld [vmem:[%s0 + $0x60] sm:$0xf]
    %v62 = vld [vmem:[%s0 + $0x64] sm:$0xf]
    %v63 = vld [vmem:[%s0 + $0x68] sm:$0xf]
    %v64 = vld [vmem:[%s0 + $0x6c] sm:$0xf]
    %v65 = vld [vmem:[%s0 + $0x70] sm:$0xf]
    %v66 = vld [vmem:[%s0 + $0x74] sm:$0xf]
    %v67 = vld [vmem:[%s0 + $0x78] sm:$0xf]
    %v68 = vld [vmem:[%s0 + $0x7c] sm:$0xf]
    %v69 = vld [vmem:[%s0 + $0x80] sm:$0xf]
    %v70 = vld [vmem:[%s0 + $0x84] sm:$0xf]
    %v71 = vld [vmem:[%s0 + $0x88] sm:$0xf]
    %v72 = vld [vmem:[%s0 + $0x8c] sm:$0xf]
    %v73 = vld [vmem:[%s0 + $0x90] sm:$0xf]
    %v74 = vld [vmem:[%s0 + $0x94] sm:$0xf]
    %v75 = vld [vmem:[%s0 + $0x98] sm:$0xf]
    %v76 = vld [vmem:[%s0 + $0x9c] sm:$0xf]
    %v77 = vld [vmem:[%s0 + $0xa0] sm:$0xf]
    %v78 = vld [vmem:[%s0 + $0xa4] sm:$0xf]
    %v79 = vld [vmem:[%s0 + $0xa8] sm:$0xf]
    %v80 = vld [vmem:[%s0 + $0xac] sm:$0xf]
    %v81 = vld [vmem:[%s0 + $0xb0] sm:$0xf]
    %v82 = vld [vmem:[%s0 + $0xb4] sm:$0xf]
    %v83 = vld [vmem:[%s0 + $0xb8] sm:$0xf]
    %v84 = vld [vmem:[%s0 + $0xbc] sm:$0xf]
    %v85 = vld [vmem:[%s0 + $0xc0] sm:$0xf]
    %v86 = vld [vmem:[%s0 + $0xc4] sm:$0xf]
    %v87 = vld [vmem:[%s0 + $0xc8] sm:$0xf]
    %v88 = vld [vmem:[%s0 + $0xcc] sm:$0xf]
    %v89 = vld [vmem:[%s0 + $0xd0] sm:$0xf]
    %v90 = vld [vmem:[%s0 + $0xd4] sm:$0xf]
    %v91 = vld [vmem:[%s0 + $0xd8] sm:$0xf]
    %v92 = vld [vmem:[%s0 + $0xdc] sm:$0xf]
    %v93 = vld [vmem:[%s0 + $0xe0] sm:$0xf]
    %v94 = vld [vmem:[%s0 + $0xe4] sm:$0xf]
    %v95 = vld [vmem:[%s0 + $0xe8] sm:$0xf]
    %v96 = vld [vmem:[%s0 + $0xec] sm:$0xf]
    %v97 = vld [vmem:[%s0 + $0xf0] sm:$0xf]
    %v98 = vld [vmem:[%s0 + $0xf4] sm:$0xf]
    %v99 = vld [vmem:[%s0 + $0xf8] sm:$0xf]
    %v100 = vld [vmem:[%s0 + $0xfc] sm:$0xf]
    %v101 = vld [vmem:[%s0 + $0x100] sm:$0xf]
    %v102 = vld [vmem:[%s0 + $0x104] sm:$0xf]
    %v103 = vld [vmem:[%s0 + $0x108] sm:$0xf]
    %v104 = vld [vmem:[%s0 + $0x10c] sm:$0xf]
    %v105 = vld [vmem:[%s0 + $0x110] sm:$0xf]
    %v106 = vld [vmem:[%s0 + $0x114] sm:$0xf]
    %v107 = vld [vmem:[%s0 + $0x118] sm:$0xf]
    %v108 = vld [vmem:[%s0 + $0x11c] sm:$0xf]
    %v109 = vld [vmem:[%s0 + $0x120] sm:$0xf]
    %v110 = vld [vmem:[%s0 + $0x124] sm:$0xf]
    %v111 = vld [vmem:[%s0 + $0x128] sm:$0xf]
    %v112 = vld [vmem:[%s0 + $0x12c] sm:$0xf]
    %v113 = vld [vmem:[%s0 + $0x130] sm:$0xf]
    %v114 = vld [vmem:[%s0 + $0x134] sm:$0xf]
    %v115 = vld [vmem:[%s0 + $0x138] sm:$0xf]
    %v116 = vld [vmem:[%s0 + $0x13c] sm:$0xf]
    %v117 = vld [vmem:[%s0 + $0x140] sm:$0xf]
    %v118 = vld [vmem:[%s0 + $0x144] sm:$0xf]
    %v119 = vld [vmem:[%s0 + $0x148] sm:$0xf]
    %v120 = vld [vmem:[%s0 + $0x14c] sm:$0xf]
    %v121 = vld [vmem:[%s0 + $0x150] sm:$0xf]
    %v122 = vld [vmem:[%s0 + $0x154] sm:$0xf]
    %v123 = vld [vmem:[%s0 + $0x158] sm:$0xf]
    %v124 = vld [vmem:[%s0 + $0x15c] sm:$0xf]
    %v125 = vld [vmem:[%s0 + $0x160] sm:$0xf]
    %v126 = vld [vmem:[%s0 + $0x164] sm:$0xf]
    %v127 = vld [vmem:[%s0 + $0x168] sm:$0xf]
    %v128 = vld [vmem:[%s0 + $0x16c] sm:$0xf]
    %v129 = vld [vmem:[%s0 + $0x170] sm:$0xf]
    %v130 = vld [vmem:[%s0 + $0x174] sm:$0xf]
    %v131 = vld [vmem:[%s0 + $0x178] sm:$0xf]
    %v132 = vld [vmem:[%s0 + $0x17c] sm:$0xf]
    %v133 = vld [vmem:[%s0 + $0x180] sm:$0xf]
    %v134 = vld [vmem:[%s0 + $0x184] sm:$0xf]
    %v135 = vld [vmem:[%s0 + $0x188] sm:$0xf]
    %v136 = vld [vmem:[%s0 + $0x18c] sm:$0xf]
    %v137 = vld [vmem:[%s0 + $0x190] sm:$0xf]
    %v138 = vld [vmem:[%s0 + $0x194] sm:$0xf]
    %v139 = vld [vmem:[%s0 + $0x198] sm:$0xf]
    %v140 = vld [vmem:[%s0 + $0x19c] sm:$0xf]
    %v141 = vld [vmem:[%s0 + $0x1a0] sm:$0xf]
    %v142 = vld [vmem:[%s0 + $0x1a4] sm:$0xf]
    %v143 = vld [vmem:[%s0 + $0x1a8] sm:$0xf]
    %v144 = vld [vmem:[%s0 + $0x1ac] sm:$0xf]
    %v145 = vld [vmem:[%s0 + $0x1b0] sm:$0xf]
    %v146 = vld [vmem:[%s0 + $0x1b4] sm:$0xf]
    %v147 = vld [vmem:[%s0 + $0x1b8] sm:$0xf]
    %v148 = vld [vmem:[%s0 + $0x1bc] sm:$0xf]
    %v149 = vld [vmem:[%s0 + $0x1c0] sm:$0xf]
    %v150 = vld [vmem:[%s0 + $0x1c4] sm:$0xf]
    %v151 = vld [vmem:[%s0 + $0x1c8] sm:$0xf]
    %v152 = vld [vmem:[%s0 + $0x1cc] sm:$0xf]
    %v153 = vld [vmem:[%s0 + $0x1d0] sm:$0xf]
    %v154 = vld [vmem:[%s0 + $0x1d4] sm:$0xf]
    %v155 = vld [vmem:[%s0 + $0x1d8] sm:$0xf]
    %v156 = vld [vmem:[%s0 + $0x1dc] sm:$0xf]
    %v157 = vld [vmem:[%s0 + $0x1e0] sm:$0xf]
    %v158 = vld [vmem:[%s0 + $0x1e4] sm:$0xf]
    %v159 = vld [vmem:[%s0 + $0x1e8] sm:$0xf]
    %v160 = vld [vmem:[%s0 + $0x1ec] sm:$0xf]
    %v161 = vld [vmem:[%s0 + $0x1f0] sm:$0xf]
    %v162 = vld [vmem:[%s0 + $0x1f4] sm:$0xf]
    %v163 = vld [vmem:[%s0 + $0x1f8] sm:$0xf]
    %v164 = vld [vmem:[%s0 + $0x1fc] sm:$0xf]
    %v165 = vld [vmem:[%s0 + $0x200] sm:$0xf]
    %v166 = vld [vmem:[%s0 + $0x204] sm:$0xf]
    %v167 = vld [vmem:[%s0 + $0x208] sm:$0xf]
    %v168 = vld [vmem:[%s0 + $0x20c] sm:$0xf]
    %v169 = vld [vmem:[%s0 + $0x210] sm:$0xf]
    %v170 = vld [vmem:[%s0 + $0x214] sm:$0xf]
    %v171 = vld [vmem:[%s0 + $0x218] sm:$0xf]
    %v172 = vld [vmem:[%s0 + $0x21c] sm:$0xf]
    %v173 = vld [vmem:[%s0 + $0x220] sm:$0xf]
    %v174 = vld [vmem:[%s0 + $0x224] sm:$0xf]
    %v175 = vld [vmem:[%s0 + $0x228] sm:$0xf]
    %v176 = vld [vmem:[%s0 + $0x22c] sm:$0xf]
    %v177 = vld [vmem:[%s0 + $0x230] sm:$0xf]
    %v178 = vld [vmem:[%s0 + $0x234] sm:$0xf]
    %v179 = vld [vmem:[%s0 + $0x238] sm:$0xf]
    %v180 = vld [vmem:[%s0 + $0x23c] sm:$0xf]
    %v181 = vld [vmem:[%s0 + $0x240] sm:$0xf]
    %v182 = vld [vmem:[%s0 + $0x244] sm:$0xf]
    %v183 = vld [vmem:[%s0 + $0x248] sm:$0xf]
    %v184 = vld [vmem:[%s0 + $0x24c] sm:$0xf]
    %v185 = vld [vmem:[%s0 + $0x250] sm:$0xf]
    %v186 = vld [vmem:[%s0 + $0x254] sm:$0xf]
    %v187 = vld [vmem:[%s0 + $0x258] sm:$0xf]
    %v188 = vld [vmem:[%s0 + $0x25c] sm:$0xf]
    %v189 = vld [vmem:[%s0 + $0x260] sm:$0xf]
    %v190 = vld [vmem:[%s0 + $0x264] sm:$0xf]
    %v191 = vld [vmem:[%s0 + $0x268] sm:$0xf]
    %v192 = vld [vmem:[%s0 + $0x26c] sm:$0xf]
    %v193 = vld [vmem:[%s0 + $0x270] sm:$0xf]
    %v194 = vld [vmem:[%s0 + $0x274] sm:$0xf]
    %v195 = vld [vmem:[%s0 + $0x278] sm:$0xf]
    %v196 = vld [vmem:[%s0 + $0x27c] sm:$0xf]
    %v197 = vld [vmem:[%s0 + $0x280] sm:$0xf]
    %v198 = vld [vmem:[%s0 + $0x284] sm:$0xf]
    %v199 = vld [vmem:[%s0 + $0x288] sm:$0xf]
    %v200 = vld [vmem:[%s0 + $0x28c] sm:$0xf]
    %v201 = vld [vmem:[%s0 + $0x290] sm:$0xf]
    %v202 = vld [vmem:[%s0 + $0x294] sm:$0xf]
    %v203 = vld [vmem:[%s0 + $0x298] sm:$0xf]
    %v204 = vld [vmem:[%s0 + $0x29c] sm:$0xf]
    %v205 = vld [vmem:[%s0 + $0x2a0] sm:$0xf]
    %v206 = vld [vmem:[%s0 + $0x2a4] sm:$0xf]
    %v207 = vld [vmem:[%s0 + $0x2a8] sm:$0xf]
    %v208 = vld [vmem:[%s0 + $0x2ac] sm:$0xf]
    %v209 = vld [vmem:[%s0 + $0x2b0] sm:$0xf]
    %v210 = vld [vmem:[%s0 + $0x2b4] sm:$0xf]
    %v211 = vld [vmem:[%s0 + $0x2b8] sm:$0xf]
    %v212 = vld [vmem:[%s0 + $0x2bc] sm:$0xf]
    %v213 = vld [vmem:[%s0 + $0x2c0] sm:$0xf]
    %v214 = vld [vmem:[%s0 + $0x2c4] sm:$0xf]
    %v215 = vld [vmem:[%s0 + $0x2c8] sm:$0xf]
    %v216 = vld [vmem:[%s0 + $0x2cc] sm:$0xf]
    %v217 = vld [vmem:[%s0 + $0x2d0] sm:$0xf]
    %v218 = vld [vmem:[%s0 + $0x2d4] sm:$0xf]
    %v219 = vld [vmem:[%s0 + $0x2d8] sm:$0xf]
    %v220 = vld [vmem:[%s0 + $0x2dc] sm:$0xf]
    %v221 = vld [vmem:[%s0 + $0x2e0] sm:$0xf]
    %v222 = vld [vmem:[%s0 + $0x2e4] sm:$0xf]
    %v223 = vld [vmem:[%s0 + $0x2e8] sm:$0xf]
    %v224 = vld [vmem:[%s0 + $0x2ec] sm:$0xf]
    %v225 = vld [vmem:[%s0 + $0x2f0] sm:$0xf]
    %v226 = vld [vmem:[%s0 + $0x2f4] sm:$0xf]
    %v227 = vld [vmem:[%s0 + $0x2f8] sm:$0xf]
    %v228 = vld [vmem:[%s0 + $0x2fc] sm:$0xf]
    %v229 = vld [vmem:[%s0 + $0x300] sm:$0xf]
    %v230 = vld [vmem:[%s0 + $0x304] sm:$0xf]
    %v231 = vld [vmem:[%s0 + $0x308] sm:$0xf]
    %v232 = vld [vmem:[%s0 + $0x30c] sm:$0xf]
    %v233 = vld [vmem:[%s0 + $0x310] sm:$0xf]
    %v234 = vld [vmem:[%s0 + $0x314] sm:$0xf]
    %v235 = vld [vmem:[%s0 + $0x318] sm:$0xf]
    %v236 = vld [vmem:[%s0 + $0x31c] sm:$0xf]
    %v237 = vld [vmem:[%s0 + $0x320] sm:$0xf]
    %v238 = vld [vmem:[%s0 + $0x324] sm:$0xf]
    %v239 = vld [vmem:[%s0 + $0x328] sm:$0xf]
    %v240 = vld [vmem:[%s0 + $0x32c] sm:$0xf]
    %v241 = vld [vmem:[%s0 + $0x330] sm:$0xf]
    %v242 = vld [vmem:[%s0 + $0x334] sm:$0xf]
    %v243 = vld [vmem:[%s0 + $0x338] sm:$0xf]
    %v244 = vld [vmem:[%s0 + $0x33c] sm:$0xf]
    %v245 = vld [vmem:[%s0 + $0x340] sm:$0xf]
    %v246 = vld [vmem:[%s0 + $0x344] sm:$0xf]
    %v247 = vld [vmem:[%s0 + $0x348] sm:$0xf]
    %v248 = vld [vmem:[%s0 + $0x34c] sm:$0xf]
    %v249 = vld [vmem:[%s0 + $0x350] sm:$0xf]
    %v250 = vld [vmem:[%s0 + $0x354] sm:$0xf]
    %v251 = vld [vmem:[%s0 + $0x358] sm:$0xf]
    %v252 = vld [vmem:[%s0 + $0x35c] sm:$0xf]
    %v253 = vld [vmem:[%s0 + $0x360] sm:$0xf]
    %v254 = vld [vmem:[%s0 + $0x364] sm:$0xf]
    %v255 = vld [vmem:[%s0 + $0x368] sm:$0xf]
    %v256 = vld [vmem:[%s0 + $0x36c] sm:$0xf]
    %v257 = vld [vmem:[%s0 + $0x370] sm:$0xf]
    %v258 = vld [vmem:[%s0 + $0x374] sm:$0xf]
    %v259 = vld [vmem:[%s0 + $0x378] sm:$0xf]
    %v260 = vld [vmem:[%s0 + $0x37c] sm:$0xf]
    %v261 = vld [vmem:[%s0 + $0x380] sm:$0xf]
    %v262 = vld [vmem:[%s0 + $0x384] sm:$0xf]
    %v263 = vld [vmem:[%s0 + $0x388] sm:$0xf]
    %v264 = vld [vmem:[%s0 + $0x38c] sm:$0xf]
    %v265 = vld [vmem:[%s0 + $0x390] sm:$0xf]
    %v266 = vld [vmem:[%s0 + $0x394] sm:$0xf]
    %v267 = vld [vmem:[%s0 + $0x398] sm:$0xf]
    %v268 = vld [vmem:[%s0 + $0x39c] sm:$0xf]
    %v269 = vld [vmem:[%s0 + $0x3a0] sm:$0xf]
    %v270 = vld [vmem:[%s0 + $0x3a4] sm:$0xf]
    %v271 = vld [vmem:[%s0 + $0x3a8] sm:$0xf]
    %v272 = vld [vmem:[%s0 + $0x3ac] sm:$0xf]
    %v273 = vld [vmem:[%s0 + $0x3b0] sm:$0xf]
    %v274 = vld [vmem:[%s0 + $0x3b4] sm:$0xf]
    %v275 = vld [vmem:[%s0 + $0x3b8] sm:$0xf]
    %v276 = vld [vmem:[%s0 + $0x3bc] sm:$0xf]
    %v277 = vld [vmem:[%s0 + $0x3c0] sm:$0xf]
    %v278 = vld [vmem:[%s0 + $0x3c4] sm:$0xf]
    %v279 = vld [vmem:[%s0 + $0x3c8] sm:$0xf]
    %v280 = vld [vmem:[%s0 + $0x3cc] sm:$0xf]
    %v281 = vld [vmem:[%s0 + $0x3d0] sm:$0xf]
    %v282 = vld [vmem:[%s0 + $0x3d4] sm:$0xf]
    %v283 = vld [vmem:[%s0 + $0x3d8] sm:$0xf]
    %v284 = vld [vmem:[%s0 + $0x3dc] sm:$0xf]
    %v285 = vld [vmem:[%s0 + $0x3e0] sm:$0xf]
    %v286 = vld [vmem:[%s0 + $0x3e4] sm:$0xf]
    %v287 = vld [vmem:[%s0 + $0x3e8] sm:$0xf]
    %v288 = vld [vmem:[%s0 + $0x3ec] sm:$0xf]
    %v289 = vld [vmem:[%s0 + $0x3f0] sm:$0xf]
    %v290 = vld [vmem:[%s0 + $0x3f4] sm:$0xf]
    %v291 = vld [vmem:[%s0 + $0x3f8] sm:$0xf]
    %v292 = vld [vmem:[%s0 + $0x3fc] sm:$0xf]
    %v549 = vunpack.c.l.b16 %v37
    %v550 = vunpack.c.l.b16 %v38
    %v551 = vunpack.c.l.b16 %v39
    %v552 = vunpack.c.l.b16 %v40
    %v553 = vunpack.c.l.b16 %v41
    %v554 = vunpack.c.l.b16 %v42
    %v555 = vunpack.c.l.b16 %v43
    %v556 = vunpack.c.l.b16 %v44
    %v557 = vunpack.c.l.b16 %v45
    %v558 = vunpack.c.l.b16 %v46
    %v559 = vunpack.c.l.b16 %v47
    %v560 = vunpack.c.l.b16 %v48
    %v561 = vunpack.c.l.b16 %v49
    %v562 = vunpack.c.l.b16 %v50
    %v563 = vunpack.c.l.b16 %v51
    %v564 = vunpack.c.l.b16 %v52
    %v565 = vunpack.c.l.b16 %v53
    %v566 = vunpack.c.l.b16 %v54
    %v567 = vunpack.c.l.b16 %v55
    %v568 = vunpack.c.l.b16 %v56
    %v569 = vunpack.c.l.b16 %v57
    %v570 = vunpack.c.l.b16 %v58
    %v571 = vunpack.c.l.b16 %v59
    %v572 = vunpack.c.l.b16 %v60
    %v573 = vunpack.c.l.b16 %v61
    %v574 = vunpack.c.l.b16 %v62
    %v575 = vunpack.c.l.b16 %v63
    %v576 = vunpack.c.l.b16 %v64
    %v577 = vunpack.c.l.b16 %v65
    %v578 = vunpack.c.l.b16 %v66
    %v579 = vunpack.c.l.b16 %v67
    %v580 = vunpack.c.l.b16 %v68
    %v581 = vunpack.c.l.b16 %v69
    %v582 = vunpack.c.l.b16 %v70
    %v583 = vunpack.c.l.b16 %v71
    %v584 = vunpack.c.l.b16 %v72
    %v585 = vunpack.c.l.b16 %v73
    %v586 = vunpack.c.l.b16 %v74
    %v587 = vunpack.c.l.b16 %v75
    %v588 = vunpack.c.l.b16 %v76
    %v589 = vunpack.c.l.b16 %v77
    %v590 = vunpack.c.l.b16 %v78
    %v591 = vunpack.c.l.b16 %v79
    %v592 = vunpack.c.l.b16 %v80
    %v593 = vunpack.c.l.b16 %v81
    %v594 = vunpack.c.l.b16 %v82
    %v595 = vunpack.c.l.b16 %v83
    %v596 = vunpack.c.l.b16 %v84
    %v597 = vunpack.c.l.b16 %v85
    %v598 = vunpack.c.l.b16 %v86
    %v599 = vunpack.c.l.b16 %v87
    %v600 = vunpack.c.l.b16 %v88
    %v601 = vunpack.c.l.b16 %v89
    %v602 = vunpack.c.l.b16 %v90
    %v603 = vunpack.c.l.b16 %v91
    %v604 = vunpack.c.l.b16 %v92
    %v605 = vunpack.c.l.b16 %v93
    %v606 = vunpack.c.l.b16 %v94
    %v607 = vunpack.c.l.b16 %v95
    %v608 = vunpack.c.l.b16 %v96
    %v609 = vunpack.c.l.b16 %v97
    %v610 = vunpack.c.l.b16 %v98
    %v611 = vunpack.c.l.b16 %v99
    %v612 = vunpack.c.l.b16 %v100
    %v613 = vunpack.c.l.b16 %v101
    %v614 = vunpack.c.l.b16 %v102
    %v615 = vunpack.c.l.b16 %v103
    %v616 = vunpack.c.l.b16 %v104
    %v617 = vunpack.c.l.b16 %v105
    %v618 = vunpack.c.l.b16 %v106
    %v619 = vunpack.c.l.b16 %v107
    %v620 = vunpack.c.l.b16 %v108
    %v621 = vunpack.c.l.b16 %v109
    %v622 = vunpack.c.l.b16 %v110
    %v623 = vunpack.c.l.b16 %v111
    %v624 = vunpack.c.l.b16 %v112
    %v625 = vunpack.c.l.b16 %v113
    %v626 = vunpack.c.l.b16 %v114
    %v627 = vunpack.c.l.b16 %v115
    %v628 = vunpack.c.l.b16 %v116
    %v629 = vunpack.c.l.b16 %v117
    %v630 = vunpack.c.l.b16 %v118
    %v631 = vunpack.c.l.b16 %v119
    %v632 = vunpack.c.l.b16 %v120
    %v633 = vunpack.c.l.b16 %v121
    %v634 = vunpack.c.l.b16 %v122
    %v635 = vunpack.c.l.b16 %v123
    %v636 = vunpack.c.l.b16 %v124
    %v637 = vunpack.c.l.b16 %v125
    %v638 = vunpack.c.l.b16 %v126
    %v639 = vunpack.c.l.b16 %v127
    %v640 = vunpack.c.l.b16 %v128
    %v641 = vunpack.c.l.b16 %v129
    %v642 = vunpack.c.l.b16 %v130
    %v643 = vunpack.c.l.b16 %v131
    %v644 = vunpack.c.l.b16 %v132
    %v645 = vunpack.c.l.b16 %v133
    %v646 = vunpack.c.l.b16 %v134
    %v647 = vunpack.c.l.b16 %v135
    %v648 = vunpack.c.l.b16 %v136
    %v649 = vunpack.c.l.b16 %v137
    %v650 = vunpack.c.l.b16 %v138
    %v651 = vunpack.c.l.b16 %v139
    %v652 = vunpack.c.l.b16 %v140
    %v653 = vunpack.c.l.b16 %v141
    %v654 = vunpack.c.l.b16 %v142
    %v655 = vunpack.c.l.b16 %v143
    %v656 = vunpack.c.l.b16 %v144
    %v657 = vunpack.c.l.b16 %v145
    %v658 = vunpack.c.l.b16 %v146
    %v659 = vunpack.c.l.b16 %v147
    %v660 = vunpack.c.l.b16 %v148
    %v661 = vunpack.c.l.b16 %v149
    %v662 = vunpack.c.l.b16 %v150
    %v663 = vunpack.c.l.b16 %v151
    %v664 = vunpack.c.l.b16 %v152
    %v665 = vunpack.c.l.b16 %v153
    %v666 = vunpack.c.l.b16 %v154
    %v667 = vunpack.c.l.b16 %v155
    %v668 = vunpack.c.l.b16 %v156
    %v669 = vunpack.c.l.b16 %v157
    %v670 = vunpack.c.l.b16 %v158
    %v671 = vunpack.c.l.b16 %v159
    %v672 = vunpack.c.l.b16 %v160
    %v673 = vunpack.c.l.b16 %v161
    %v674 = vunpack.c.l.b16 %v162
    %v675 = vunpack.c.l.b16 %v163
    %v676 = vunpack.c.l.b16 %v164
    %v677 = vunpack.c.l.b16 %v165
    %v678 = vunpack.c.l.b16 %v166
    %v679 = vunpack.c.l.b16 %v167
    %v680 = vunpack.c.l.b16 %v168
    %v681 = vunpack.c.l.b16 %v169
    %v682 = vunpack.c.l.b16 %v170
    %v683 = vunpack.c.l.b16 %v171
    %v684 = vunpack.c.l.b16 %v172
    %v685 = vunpack.c.l.b16 %v173
    %v686 = vunpack.c.l.b16 %v174
    %v687 = vunpack.c.l.b16 %v175
    %v688 = vunpack.c.l.b16 %v176
    %v689 = vunpack.c.l.b16 %v177
    %v690 = vunpack.c.l.b16 %v178
    %v691 = vunpack.c.l.b16 %v179
    %v692 = vunpack.c.l.b16 %v180
    %v693 = vunpack.c.l.b16 %v181
    %v694 = vunpack.c.l.b16 %v182
    %v695 = vunpack.c.l.b16 %v183
    %v696 = vunpack.c.l.b16 %v184
    %v697 = vunpack.c.l.b16 %v185
    %v698 = vunpack.c.l.b16 %v186
    %v699 = vunpack.c.l.b16 %v187
    %v700 = vunpack.c.l.b16 %v188
    %v701 = vunpack.c.l.b16 %v189
    %v702 = vunpack.c.l.b16 %v190
    %v703 = vunpack.c.l.b16 %v191
    %v704 = vunpack.c.l.b16 %v192
    %v705 = vunpack.c.l.b16 %v193
    %v706 = vunpack.c.l.b16 %v194
    %v707 = vunpack.c.l.b16 %v195
    %v708 = vunpack.c.l.b16 %v196
    %v709 = vunpack.c.l.b16 %v197
    %v710 = vunpack.c.l.b16 %v198
    %v711 = vunpack.c.l.b16 %v199
    %v712 = vunpack.c.l.b16 %v200
    %v713 = vunpack.c.l.b16 %v201
    %v714 = vunpack.c.l.b16 %v202
    %v715 = vunpack.c.l.b16 %v203
    %v716 = vunpack.c.l.b16 %v204
    %v717 = vunpack.c.l.b16 %v205
    %v718 = vunpack.c.l.b16 %v206
    %v719 = vunpack.c.l.b16 %v207
    %v720 = vunpack.c.l.b16 %v208
    %v721 = vunpack.c.l.b16 %v209
    %v722 = vunpack.c.l.b16 %v210
    %v723 = vunpack.c.l.b16 %v211
    %v724 = vunpack.c.l.b16 %v212
    %v725 = vunpack.c.l.b16 %v213
    %v726 = vunpack.c.l.b16 %v214
    %v727 = vunpack.c.l.b16 %v215
    %v728 = vunpack.c.l.b16 %v216
    %v729 = vunpack.c.l.b16 %v217
    %v730 = vunpack.c.l.b16 %v218
    %v731 = vunpack.c.l.b16 %v219
    %v732 = vunpack.c.l.b16 %v220
    %v733 = vunpack.c.l.b16 %v221
    %v734 = vunpack.c.l.b16 %v222
    %v735 = vunpack.c.l.b16 %v223
    %v736 = vunpack.c.l.b16 %v224
    %v737 = vunpack.c.l.b16 %v225
    %v738 = vunpack.c.l.b16 %v226
    %v739 = vunpack.c.l.b16 %v227
    %v740 = vunpack.c.l.b16 %v228
    %v741 = vunpack.c.l.b16 %v229
    %v742 = vunpack.c.l.b16 %v230
    %v743 = vunpack.c.l.b16 %v231
    %v744 = vunpack.c.l.b16 %v232
    %v745 = vunpack.c.l.b16 %v233
    %v746 = vunpack.c.l.b16 %v234
    %v747 = vunpack.c.l.b16 %v235
    %v748 = vunpack.c.l.b16 %v236
    %v749 = vunpack.c.l.b16 %v237
    %v750 = vunpack.c.l.b16 %v238
    %v751 = vunpack.c.l.b16 %v239
    %v752 = vunpack.c.l.b16 %v240
    %v753 = vunpack.c.l.b16 %v241
    %v754 = vunpack.c.l.b16 %v242
    %v755 = vunpack.c.l.b16 %v243
    %v756 = vunpack.c.l.b16 %v244
    %v757 = vunpack.c.l.b16 %v245
    %v758 = vunpack.c.l.b16 %v246
    %v759 = vunpack.c.l.b16 %v247
    %v760 = vunpack.c.l.b16 %v248
    %v761 = vunpack.c.l.b16 %v249
    %v762 = vunpack.c.l.b16 %v250
    %v763 = vunpack.c.l.b16 %v251
    %v764 = vunpack.c.l.b16 %v252
    %v765 = vunpack.c.l.b16 %v253
    %v766 = vunpack.c.l.b16 %v254
    %v767 = vunpack.c.l.b16 %v255
    %v768 = vunpack.c.l.b16 %v256
    %v769 = vunpack.c.l.b16 %v257
    %v770 = vunpack.c.l.b16 %v258
    %v771 = vunpack.c.l.b16 %v259
    %v772 = vunpack.c.l.b16 %v260
    %v773 = vunpack.c.l.b16 %v261
    %v774 = vunpack.c.l.b16 %v262
    %v775 = vunpack.c.l.b16 %v263
    %v776 = vunpack.c.l.b16 %v264
    %v777 = vunpack.c.l.b16 %v265
    %v778 = vunpack.c.l.b16 %v266
    %v779 = vunpack.c.l.b16 %v267
    %v780 = vunpack.c.l.b16 %v268
    %v781 = vunpack.c.l.b16 %v269
    %v782 = vunpack.c.l.b16 %v270
    %v783 = vunpack.c.l.b16 %v271
    %v784 = vunpack.c.l.b16 %v272
    %v785 = vunpack.c.l.b16 %v273
    %v786 = vunpack.c.l.b16 %v274
    %v787 = vunpack.c.l.b16 %v275
    %v788 = vunpack.c.l.b16 %v276
    %v789 = vunpack.c.l.b16 %v277
    %v790 = vunpack.c.l.b16 %v278
    %v791 = vunpack.c.l.b16 %v279
    %v792 = vunpack.c.l.b16 %v280
    %v793 = vunpack.c.l.b16 %v281
    %v794 = vunpack.c.l.b16 %v282
    %v795 = vunpack.c.l.b16 %v283
    %v796 = vunpack.c.l.b16 %v284
    %v797 = vunpack.c.l.b16 %v285
    %v798 = vunpack.c.l.b16 %v286
    %v799 = vunpack.c.l.b16 %v287
    %v800 = vunpack.c.l.b16 %v288
    %v801 = vunpack.c.l.b16 %v289
    %v802 = vunpack.c.l.b16 %v290
    %v803 = vunpack.c.l.b16 %v291
    %v804 = vunpack.c.l.b16 %v292
    %v805 = vpack.c.b16 %v550, %v549
    %v806 = vpack.c.b16 %v552, %v551
    %v807 = vpack.c.b16 %v554, %v553
    %v808 = vpack.c.b16 %v556, %v555
    %v809 = vpack.c.b16 %v558, %v557
    %v810 = vpack.c.b16 %v560, %v559
    %v811 = vpack.c.b16 %v562, %v561
    %v812 = vpack.c.b16 %v564, %v563
    %v813 = vpack.c.b16 %v566, %v565
    %v814 = vpack.c.b16 %v568, %v567
    %v815 = vpack.c.b16 %v570, %v569
    %v816 = vpack.c.b16 %v572, %v571
    %v817 = vpack.c.b16 %v574, %v573
    %v818 = vpack.c.b16 %v576, %v575
    %v819 = vpack.c.b16 %v578, %v577
    %v820 = vpack.c.b16 %v580, %v579
    %v821 = vpack.c.b16 %v582, %v581
    %v822 = vpack.c.b16 %v584, %v583
    %v823 = vpack.c.b16 %v586, %v585
    %v824 = vpack.c.b16 %v588, %v587
    %v825 = vpack.c.b16 %v590, %v589
    %v826 = vpack.c.b16 %v592, %v591
    %v827 = vpack.c.b16 %v594, %v593
    %v828 = vpack.c.b16 %v596, %v595
    %v829 = vpack.c.b16 %v598, %v597
    %v830 = vpack.c.b16 %v600, %v599
    %v831 = vpack.c.b16 %v602, %v601
    %v832 = vpack.c.b16 %v604, %v603
    %v833 = vpack.c.b16 %v606, %v605
    %v834 = vpack.c.b16 %v608, %v607
    %v835 = vpack.c.b16 %v610, %v609
    %v836 = vpack.c.b16 %v612, %v611
    %v837 = vpack.c.b16 %v614, %v613
    %v838 = vpack.c.b16 %v616, %v615
    %v839 = vpack.c.b16 %v618, %v617
    %v840 = vpack.c.b16 %v620, %v619
    %v841 = vpack.c.b16 %v622, %v621
    %v842 = vpack.c.b16 %v624, %v623
    %v843 = vpack.c.b16 %v626, %v625
    %v844 = vpack.c.b16 %v628, %v627
    %v845 = vpack.c.b16 %v630, %v629
    %v846 = vpack.c.b16 %v632, %v631
    %v847 = vpack.c.b16 %v634, %v633
    %v848 = vpack.c.b16 %v636, %v635
    %v849 = vpack.c.b16 %v638, %v637
    %v850 = vpack.c.b16 %v640, %v639
    %v851 = vpack.c.b16 %v642, %v641
    %v852 = vpack.c.b16 %v644, %v643
    %v853 = vpack.c.b16 %v646, %v645
    %v854 = vpack.c.b16 %v648, %v647
    %v855 = vpack.c.b16 %v650, %v649
    %v856 = vpack.c.b16 %v652, %v651
    %v857 = vpack.c.b16 %v654, %v653
    %v858 = vpack.c.b16 %v656, %v655
    %v859 = vpack.c.b16 %v658, %v657
    %v860 = vpack.c.b16 %v660, %v659
    %v861 = vpack.c.b16 %v662, %v661
    %v862 = vpack.c.b16 %v664, %v663
    %v863 = vpack.c.b16 %v666, %v665
    %v864 = vpack.c.b16 %v668, %v667
    %v865 = vpack.c.b16 %v670, %v669
    %v866 = vpack.c.b16 %v672, %v671
    %v867 = vpack.c.b16 %v674, %v673
    %v868 = vpack.c.b16 %v676, %v675
    %v869 = vpack.c.b16 %v678, %v677
    %v870 = vpack.c.b16 %v680, %v679
    %v871 = vpack.c.b16 %v682, %v681
    %v872 = vpack.c.b16 %v684, %v683
    %v873 = vpack.c.b16 %v686, %v685
    %v874 = vpack.c.b16 %v688, %v687
    %v875 = vpack.c.b16 %v690, %v689
    %v876 = vpack.c.b16 %v692, %v691
    %v877 = vpack.c.b16 %v694, %v693
    %v878 = vpack.c.b16 %v696, %v695
    %v879 = vpack.c.b16 %v698, %v697
    %v880 = vpack.c.b16 %v700, %v699
    %v881 = vpack.c.b16 %v702, %v701
    %v882 = vpack.c.b16 %v704, %v703
    %v883 = vpack.c.b16 %v706, %v705
    %v884 = vpack.c.b16 %v708, %v707
    %v885 = vpack.c.b16 %v710, %v709
    %v886 = vpack.c.b16 %v712, %v711
    %v887 = vpack.c.b16 %v714, %v713
    %v888 = vpack.c.b16 %v716, %v715
    %v889 = vpack.c.b16 %v718, %v717
    %v890 = vpack.c.b16 %v720, %v719
    %v891 = vpack.c.b16 %v722, %v721
    %v892 = vpack.c.b16 %v724, %v723
    %v893 = vpack.c.b16 %v726, %v725
    %v894 = vpack.c.b16 %v728, %v727
    %v895 = vpack.c.b16 %v730, %v729
    %v896 = vpack.c.b16 %v732, %v731
    %v897 = vpack.c.b16 %v734, %v733
    %v898 = vpack.c.b16 %v736, %v735
    %v899 = vpack.c.b16 %v738, %v737
    %v900 = vpack.c.b16 %v740, %v739
    %v901 = vpack.c.b16 %v742, %v741
    %v902 = vpack.c.b16 %v744, %v743
    %v903 = vpack.c.b16 %v746, %v745
    %v904 = vpack.c.b16 %v748, %v747
    %v905 = vpack.c.b16 %v750, %v749
    %v906 = vpack.c.b16 %v752, %v751
    %v907 = vpack.c.b16 %v754, %v753
    %v908 = vpack.c.b16 %v756, %v755
    %v909 = vpack.c.b16 %v758, %v757
    %v910 = vpack.c.b16 %v760, %v759
    %v911 = vpack.c.b16 %v762, %v761
    %v912 = vpack.c.b16 %v764, %v763
    %v913 = vpack.c.b16 %v766, %v765
    %v914 = vpack.c.b16 %v768, %v767
    %v915 = vpack.c.b16 %v770, %v769
    %v916 = vpack.c.b16 %v772, %v771
    %v917 = vpack.c.b16 %v774, %v773
    %v918 = vpack.c.b16 %v776, %v775
    %v919 = vpack.c.b16 %v778, %v777
    %v920 = vpack.c.b16 %v780, %v779
    %v921 = vpack.c.b16 %v782, %v781
    %v922 = vpack.c.b16 %v784, %v783
    %v923 = vpack.c.b16 %v786, %v785
    %v924 = vpack.c.b16 %v788, %v787
    %v925 = vpack.c.b16 %v790, %v789
    %v926 = vpack.c.b16 %v792, %v791
    %v927 = vpack.c.b16 %v794, %v793
    %v928 = vpack.c.b16 %v796, %v795
    %v929 = vpack.c.b16 %v798, %v797
    %v930 = vpack.c.b16 %v800, %v799
    %v931 = vpack.c.b16 %v802, %v801
    %v932 = vpack.c.b16 %v804, %v803
    %v949 = vunpack.c.l.b16 %v21
    %v950 = vunpack.c.l.b16 %v22
    %v951 = vunpack.c.l.b16 %v23
    %v952 = vunpack.c.l.b16 %v24
    %v953 = vunpack.c.l.b16 %v25
    %v954 = vunpack.c.l.b16 %v26
    %v955 = vunpack.c.l.b16 %v27
    %v956 = vunpack.c.l.b16 %v28
    %v957 = vunpack.c.l.b16 %v29
    %v958 = vunpack.c.l.b16 %v30
    %v959 = vunpack.c.l.b16 %v31
    %v960 = vunpack.c.l.b16 %v32
    %v961 = vunpack.c.l.b16 %v33
    %v962 = vunpack.c.l.b16 %v34
    %v963 = vunpack.c.l.b16 %v35
    %v964 = vunpack.c.l.b16 %v36
    %v965 = vpack.c.b16 %v950, %v949
    %v966 = vpack.c.b16 %v952, %v951
    %v967 = vpack.c.b16 %v954, %v953
    %v968 = vpack.c.b16 %v956, %v955
    %v969 = vpack.c.b16 %v958, %v957
    %v970 = vpack.c.b16 %v960, %v959
    %v971 = vpack.c.b16 %v962, %v961
    %v972 = vpack.c.b16 %v964, %v963
    %vm973 = vcmask 130048
    %v975 = vsel %vm973, %v805, 0
    %v978 = vsel %vm973, %v806, 0
    %v981 = vsel %vm973, %v807, 0
    %v984 = vsel %vm973, %v808, 0
    %v987 = vsel %vm973, %v809, 0
    %v990 = vsel %vm973, %v810, 0
    %v993 = vsel %vm973, %v811, 0
    %v996 = vsel %vm973, %v812, 0
    %v999 = vsel %vm973, %v813, 0
    %v1002 = vsel %vm973, %v814, 0
    %v1005 = vsel %vm973, %v815, 0
    %v1008 = vsel %vm973, %v816, 0
    %v1011 = vsel %vm973, %v817, 0
    %v1014 = vsel %vm973, %v818, 0
    %v1017 = vsel %vm973, %v819, 0
    %v1020 = vsel %vm973, %v820, 0
    %v1023 = vsel %vm973, %v821, 0
    %v1026 = vsel %vm973, %v822, 0
    %v1029 = vsel %vm973, %v823, 0
    %v1032 = vsel %vm973, %v824, 0
    %v1035 = vsel %vm973, %v825, 0
    %v1038 = vsel %vm973, %v826, 0
    %v1041 = vsel %vm973, %v827, 0
    %v1044 = vsel %vm973, %v828, 0
    %v1047 = vsel %vm973, %v829, 0
    %v1050 = vsel %vm973, %v830, 0
    %v1053 = vsel %vm973, %v831, 0
    %v1056 = vsel %vm973, %v832, 0
    %v1059 = vsel %vm973, %v833, 0
    %v1062 = vsel %vm973, %v834, 0
    %v1065 = vsel %vm973, %v835, 0
    %v1068 = vsel %vm973, %v836, 0
    %v1071 = vsel %vm973, %v837, 0
    %v1074 = vsel %vm973, %v838, 0
    %v1077 = vsel %vm973, %v839, 0
    %v1080 = vsel %vm973, %v840, 0
    %v1083 = vsel %vm973, %v841, 0
    %v1086 = vsel %vm973, %v842, 0
    %v1089 = vsel %vm973, %v843, 0
    %v1092 = vsel %vm973, %v844, 0
    %v1095 = vsel %vm973, %v845, 0
    %v1098 = vsel %vm973, %v846, 0
    %v1101 = vsel %vm973, %v847, 0
    %v1104 = vsel %vm973, %v848, 0
    %v1107 = vsel %vm973, %v849, 0
    %v1110 = vsel %vm973, %v850, 0
    %v1113 = vsel %vm973, %v851, 0
    %v1116 = vsel %vm973, %v852, 0
    %v1119 = vsel %vm973, %v853, 0
    %v1122 = vsel %vm973, %v854, 0
    %v1125 = vsel %vm973, %v855, 0
    %v1128 = vsel %vm973, %v856, 0
    %v1131 = vsel %vm973, %v857, 0
    %v1134 = vsel %vm973, %v858, 0
    %v1137 = vsel %vm973, %v859, 0
    %v1140 = vsel %vm973, %v860, 0
    %v1143 = vsel %vm973, %v861, 0
    %v1146 = vsel %vm973, %v862, 0
    %v1149 = vsel %vm973, %v863, 0
    %v1152 = vsel %vm973, %v864, 0
    %v1155 = vsel %vm973, %v865, 0
    %v1158 = vsel %vm973, %v866, 0
    %v1161 = vsel %vm973, %v867, 0
    %v1164 = vsel %vm973, %v868, 0
    %v1167 = vsel %vm973, %v869, 0
    %v1170 = vsel %vm973, %v870, 0
    %v1173 = vsel %vm973, %v871, 0
    %v1176 = vsel %vm973, %v872, 0
    %v1179 = vsel %vm973, %v873, 0
    %v1182 = vsel %vm973, %v874, 0
    %v1185 = vsel %vm973, %v875, 0
    %v1188 = vsel %vm973, %v876, 0
    %v1191 = vsel %vm973, %v877, 0
    %v1194 = vsel %vm973, %v878, 0
    %v1197 = vsel %vm973, %v879, 0
    %v1200 = vsel %vm973, %v880, 0
    %v1203 = vsel %vm973, %v881, 0
    %v1206 = vsel %vm973, %v882, 0
    %v1209 = vsel %vm973, %v883, 0
    %v1212 = vsel %vm973, %v884, 0
    %v1215 = vsel %vm973, %v885, 0
    %v1218 = vsel %vm973, %v886, 0
    %v1221 = vsel %vm973, %v887, 0
    %v1224 = vsel %vm973, %v888, 0
    %v1227 = vsel %vm973, %v889, 0
    %v1230 = vsel %vm973, %v890, 0
    %v1233 = vsel %vm973, %v891, 0
    %v1236 = vsel %vm973, %v892, 0
    %v1239 = vsel %vm973, %v893, 0
    %v1242 = vsel %vm973, %v894, 0
    %v1245 = vsel %vm973, %v895, 0
    %v1248 = vsel %vm973, %v896, 0
    %v1251 = vsel %vm973, %v897, 0
    %v1254 = vsel %vm973, %v898, 0
    %v1257 = vsel %vm973, %v899, 0
    %v1260 = vsel %vm973, %v900, 0
    %v1263 = vsel %vm973, %v901, 0
    %v1266 = vsel %vm973, %v902, 0
    %v1269 = vsel %vm973, %v903, 0
    %v1272 = vsel %vm973, %v904, 0
    %v1275 = vsel %vm973, %v905, 0
    %v1278 = vsel %vm973, %v906, 0
    %v1281 = vsel %vm973, %v907, 0
    %v1284 = vsel %vm973, %v908, 0
    %v1287 = vsel %vm973, %v909, 0
    %v1290 = vsel %vm973, %v910, 0
    %v1293 = vsel %vm973, %v911, 0
    %v1296 = vsel %vm973, %v912, 0
    %v1299 = vsel %vm973, %v913, 0
    %v1302 = vsel %vm973, %v914, 0
    %v1305 = vsel %vm973, %v915, 0
    %v1308 = vsel %vm973, %v916, 0
    %v1311 = vsel %vm973, %v917, 0
    %v1314 = vsel %vm973, %v918, 0
    %v1317 = vsel %vm973, %v919, 0
    %v1320 = vsel %vm973, %v920, 0
    %v1323 = vsel %vm973, %v921, 0
    %v1326 = vsel %vm973, %v922, 0
    %v1329 = vsel %vm973, %v923, 0
    %v1332 = vsel %vm973, %v924, 0
    %v1335 = vsel %vm973, %v925, 0
    %v1338 = vsel %vm973, %v926, 0
    %v1341 = vsel %vm973, %v927, 0
    %v1344 = vsel %vm973, %v928, 0
    %v1347 = vsel %vm973, %v929, 0
    %v1350 = vsel %vm973, %v930, 0
    %v1353 = vsel %vm973, %v931, 0
    %v1356 = vsel %vm973, %v932, 0
    %v1359 = vsel %vm973, %v965, 0
    %v1362 = vsel %vm973, %v966, 0
    %v1365 = vsel %vm973, %v967, 0
    %v1368 = vsel %vm973, %v968, 0
    %v1371 = vsel %vm973, %v969, 0
    %v1374 = vsel %vm973, %v970, 0
    %v1377 = vsel %vm973, %v971, 0
    %v1380 = vsel %vm973, %v972, 0
    %1382 = vmatprep.subr.bf16.mxu0 0
    %1383 = vmatpush1.bf16.xpose.msra.mxu0 %v1359
    %1384 = vmatprep.subr.bf16.mxu0 0
    %1385 = vmatpush1.bf16.xpose.msra.mxu0 %v1362
    %1386 = vmatprep.subr.bf16.mxu0 0
    %1387 = vmatpush1.bf16.xpose.msra.mxu0 %v1365
    %1388 = vmatprep.subr.bf16.mxu0 0
    %1389 = vmatpush1.bf16.xpose.msra.mxu0 %v1368
    %1390 = vmatprep.subr.bf16.mxu0 0
    %1391 = vmatpush1.bf16.xpose.msra.mxu0 %v1371
    %1392 = vmatprep.subr.bf16.mxu0 0
    %1393 = vmatpush1.bf16.xpose.msra.mxu0 %v1374
    %1394 = vmatprep.subr.bf16.mxu0 0
    %1395 = vmatpush1.bf16.xpose.msra.mxu0 %v1377
    %1396 = vmatprep.subr.bf16.mxu0 0
    %1397 = vmatpush1.bf16.xpose.msra.mxu0 %v1380
    %1398 = vmatprep.subr.bf16.mxu0 0
    %1399 = vmatpush1.bf16.xpose.msra.mxu0 0
    %1400 = vmatprep.subr.bf16.mxu0 0
    %1401 = vmatpush1.bf16.xpose.msra.mxu0 0
    %1402 = vmatprep.subr.bf16.mxu0 0
    %1403 = vmatpush1.bf16.xpose.msra.mxu0 0
    %1404 = vmatprep.subr.bf16.mxu0 0
    %1405 = vmatpush1.bf16.xpose.msra.mxu0 0
    %1406 = vmatprep.subr.bf16.mxu0 0
    %1407 = vmatpush1.bf16.xpose.msra.mxu0 0
    %1408 = vmatprep.subr.bf16.mxu0 0
    %1409 = vmatpush1.bf16.xpose.msra.mxu0 0
    %1410 = vmatprep.subr.bf16.mxu0 0
    %1411 = vmatpush1.bf16.xpose.msra.mxu0 0
    %1412 = vmatprep.subr.bf16.mxu0 0
    %1413 = vmatpush1.bf16.xpose.msra.mxu0 0
    %1414 = vmatprep.mubr.bf16.mxu0 0
    %1415 = vmatmul.mubr.bf16.gmra.mrb[0].mxu0 %v975
    %v1416 = vpop.f32.mrb[0].mxu0
    %v1417 = vadd.f32 0.0, %v1416
    %v1418 = vpop.f32.mrb[0].mxu0
    %v1419 = vpop.f32.mrb[0].mxu0
    %v1420 = vadd.f32 0.0, %v1419
    %v1421 = vpop.f32.mrb[0].mxu0
    %1422 = vmatprep.mubr.bf16.mxu0 0
    %1423 = vmatmul.mubr.bf16.gmra.mrb[0].mxu0 %v978
    %v1424 = vpop.f32.mrb[0].mxu0
    %v1425 = vadd.f32 0.0, %v1424
    %v1426 = vpop.f32.mrb[0].mxu0
    %v1427 = vpop.f32.mrb[0].mxu0
    %v1428 = vadd.f32 0.0, %v1427
    %v1429 = vpop.f32.mrb[0].mxu0
    %1430 = vmatprep.mubr.bf16.mxu0 0
    %1431 = vmatmul.mubr.bf16.gmra.mrb[0].mxu0 %v981
    %v1432 = vpop.f32.mrb[0].mxu0
    %v1433 = vadd.f32 0.0, %v1432
    %v1434 = vpop.f32.mrb[0].mxu0
    %v1435 = vpop.f32.mrb[0].mxu0
    %v1436 = vadd.f32 0.0, %v1435
    %v1437 = vpop.f32.mrb[0].mxu0
    %1438 = vmatprep.mubr.bf16.mxu0 0
    %1439 = vmatmul.mubr.bf16.gmra.mrb[0].mxu0 %v984
    %v1440 = vpop.f32.mrb[0].mxu0
    %v1441 = vadd.f32 0.0, %v1440
    %v1442 = vpop.f32.mrb[0].mxu0
    %v1443 = vpop.f32.mrb[0].mxu0
    %v1444 = vadd.f32 0.0, %v1443
    %v1445 = vpop.f32.mrb[0].mxu0
    %1446 = vmatprep.mubr.bf16.mxu0 0
    %1447 = vmatmul.mubr.bf16.gmra.mrb[0].mxu0 %v987
    %v1448 = vpop.f32.mrb[0].mxu0
    %v1449 = vadd.f32 0.0, %v1448
    %v1450 = vpop.f32.mrb[0].mxu0
    %v1451 = vpop.f32.mrb[0].mxu0
    %v1452 = vadd.f32 0.0, %v1451
    %v1453 = vpop.f32.mrb[0].mxu0
    %1454 = vmatprep.mubr.bf16.mxu0 0
    %1455 = vmatmul.mubr.bf16.gmra.mrb[0].mxu0 %v990
    %v1456 = vpop.f32.mrb[0].mxu0
    %v1457 = vadd.f32 0.0, %v1456
    %v1458 = vpop.f32.mrb[0].mxu0
    %v1459 = vpop.f32.mrb[0].mxu0
    %v1460 = vadd.f32 0.0, %v1459
    %v1461 = vpop.f32.mrb[0].mxu0
    %1462 = vmatprep.mubr.bf16.mxu0 0
    %1463 = vmatmul.mubr.bf16.gmra.mrb[0].mxu0 %v993
    %v1464 = vpop.f32.mrb[0].mxu0
    %v1465 = vadd.f32 0.0, %v1464
    %v1466 = vpop.f32.mrb[0].mxu0
    %v1467 = vpop.f32.mrb[0].mxu0
    %v1468 = vadd.f32 0.0, %v1467
    %v1469 = vpop.f32.mrb[0].mxu0
    %1470 = vmatprep.mubr.bf16.mxu0 0
    %1471 = vmatmul.mubr.bf16.gmra.mrb[0].mxu0 %v996
    %v1472 = vpop.f32.mrb[0].mxu0
    %v1473 = vadd.f32 0.0, %v1472
    %v1474 = vpop.f32.mrb[0].mxu0
    %v1475 = vpop.f32.mrb[0].mxu0
    %v1476 = vadd.f32 0.0, %v1475
    %v1477 = vpop.f32.mrb[0].mxu0
    %1478 = vmatprep.mubr.bf16.mxu0 0
    %1479 = vmatmul.mubr.bf16.gmra.mrb[0].mxu0 %v999
    %v1480 = vpop.f32.mrb[0].mxu0
    %v1481 = vadd.f32 0.0, %v1480
    %v1482 = vpop.f32.mrb[0].mxu0
    %v1483 = vpop.f32.mrb[0].mxu0
    %v1484 = vadd.f32 0.0, %v1483
    %v1485 = vpop.f32.mrb[0].mxu0
    %1486 = vmatprep.mubr.bf16.mxu0 0
    %1487 = vmatmul.mubr.bf16.gmra.mrb[0].mxu0 %v1002
    %v1488 = vpop.f32.mrb[0].mxu0
    %v1489 = vadd.f32 0.0, %v1488
    %v1490 = vpop.f32.mrb[0].mxu0
    %v1491 = vpop.f32.mrb[0].mxu0
    %v1492 = vadd.f32 0.0, %v1491
    %v1493 = vpop.f32.mrb[0].mxu0
    %1494 = vmatprep.mubr.bf16.mxu0 0
    %1495 = vmatmul.mubr.bf16.gmra.mrb[0].mxu0 %v1005
    %v1496 = vpop.f32.mrb[0].mxu0
    %v1497 = vadd.f32 0.0, %v1496
    %v1498 = vpop.f32.mrb[0].mxu0
    %v1499 = vpop.f32.mrb[0].mxu0
    %v1500 = vadd.f32 0.0, %v1499
    %v1501 = vpop.f32.mrb[0].mxu0
    %1502 = vmatprep.mubr.bf16.mxu0 0
    %1503 = vmatmul.mubr.bf16.gmra.mrb[0].mxu0 %v1008
    %v1504 = vpop.f32.mrb[0].mxu0
    %v1505 = vadd.f32 0.0, %v1504
    %v1506 = vpop.f32.mrb[0].mxu0
    %v1507 = vpop.f32.mrb[0].mxu0
    %v1508 = vadd.f32 0.0, %v1507
    %v1509 = vpop.f32.mrb[0].mxu0
    %1510 = vmatprep.mubr.bf16.mxu0 0
    %1511 = vmatmul.mubr.bf16.gmra.mrb[0].mxu0 %v1011
    %v1512 = vpop.f32.mrb[0].mxu0
    %v1513 = vadd.f32 0.0, %v1512
    %v1514 = vpop.f32.mrb[0].mxu0
    %v1515 = vpop.f32.mrb[0].mxu0
    %v1516 = vadd.f32 0.0, %v1515
    %v1517 = vpop.f32.mrb[0].mxu0
    %1518 = vmatprep.mubr.bf16.mxu0 0
    %1519 = vmatmul.mubr.bf16.gmra.mrb[0].mxu0 %v1014
    %v1520 = vpop.f32.mrb[0].mxu0
    %v1521 = vadd.f32 0.0, %v1520
    %v1522 = vpop.f32.mrb[0].mxu0
    %v1523 = vpop.f32.mrb[0].mxu0
    %v1524 = vadd.f32 0.0, %v1523
    %v1525 = vpop.f32.mrb[0].mxu0
    %1526 = vmatprep.mubr.bf16.mxu0 0
    %1527 = vmatmul.mubr.bf16.gmra.mrb[0].mxu0 %v1017
    %v1528 = vpop.f32.mrb[0].mxu0
    %v1529 = vadd.f32 0.0, %v1528
    %v1530 = vpop.f32.mrb[0].mxu0
    %v1531 = vpop.f32.mrb[0].mxu0
    %v1532 = vadd.f32 0.0, %v1531
    %v1533 = vpop.f32.mrb[0].mxu0
    %1534 = vmatprep.mubr.bf16.mxu0 0
    %1535 = vmatmul.mubr.bf16.gmra.mrb[0].mxu0 %v1020
    %v1536 = vpop.f32.mrb[0].mxu0
    %v1537 = vadd.f32 0.0, %v1536
    %v1538 = vpop.f32.mrb[0].mxu0
    %v1539 = vpop.f32.mrb[0].mxu0
    %v1540 = vadd.f32 0.0, %v1539
    %v1541 = vpop.f32.mrb[0].mxu0
    %1542 = vmatprep.mubr.bf16.mxu0 0
    %1543 = vmatmul.mubr.bf16.gmra.mrb[0].mxu0 %v1023
    %v1544 = vpop.f32.mrb[0].mxu0
    %v1545 = vadd.f32 0.0, %v1544
    %v1546 = vpop.f32.mrb[0].mxu0
    %v1547 = vpop.f32.mrb[0].mxu0
    %v1548 = vadd.f32 0.0, %v1547
    %v1549 = vpop.f32.mrb[0].mxu0
    %1550 = vmatprep.mubr.bf16.mxu0 0
    %1551 = vmatmul.mubr.bf16.gmra.mrb[0].mxu0 %v1026
    %v1552 = vpop.f32.mrb[0].mxu0
    %v1553 = vadd.f32 0.0, %v1552
    %v1554 = vpop.f32.mrb[0].mxu0
    %v1555 = vpop.f32.mrb[0].mxu0
    %v1556 = vadd.f32 0.0, %v1555
    %v1557 = vpop.f32.mrb[0].mxu0
    %1558 = vmatprep.mubr.bf16.mxu0 0
    %1559 = vmatmul.mubr.bf16.gmra.mrb[0].mxu0 %v1029
    %v1560 = vpop.f32.mrb[0].mxu0
    %v1561 = vadd.f32 0.0, %v1560
    %v1562 = vpop.f32.mrb[0].mxu0
    %v1563 = vpop.f32.mrb[0].mxu0
    %v1564 = vadd.f32 0.0, %v1563
    %v1565 = vpop.f32.mrb[0].mxu0
    %1566 = vmatprep.mubr.bf16.mxu0 0
    %1567 = vmatmul.mubr.bf16.gmra.mrb[0].mxu0 %v1032
    %v1568 = vpop.f32.mrb[0].mxu0
    %v1569 = vadd.f32 0.0, %v1568
    %v1570 = vpop.f32.mrb[0].mxu0
    %v1571 = vpop.f32.mrb[0].mxu0
    %v1572 = vadd.f32 0.0, %v1571
    %v1573 = vpop.f32.mrb[0].mxu0
    %1574 = vmatprep.mubr.bf16.mxu0 0
    %1575 = vmatmul.mubr.bf16.gmra.mrb[0].mxu0 %v1035
    %v1576 = vpop.f32.mrb[0].mxu0
    %v1577 = vadd.f32 0.0, %v1576
    %v1578 = vpop.f32.mrb[0].mxu0
    %v1579 = vpop.f32.mrb[0].mxu0
    %v1580 = vadd.f32 0.0, %v1579
    %v1581 = vpop.f32.mrb[0].mxu0
    %1582 = vmatprep.mubr.bf16.mxu0 0
    %1583 = vmatmul.mubr.bf16.gmra.mrb[0].mxu0 %v1038
    %v1584 = vpop.f32.mrb[0].mxu0
    %v1585 = vadd.f32 0.0, %v1584
    %v1586 = vpop.f32.mrb[0].mxu0
    %v1587 = vpop.f32.mrb[0].mxu0
    %v1588 = vadd.f32 0.0, %v1587
    %v1589 = vpop.f32.mrb[0].mxu0
    %1590 = vmatprep.mubr.bf16.mxu0 0
    %1591 = vmatmul.mubr.bf16.gmra.mrb[0].mxu0 %v1041
    %v1592 = vpop.f32.mrb[0].mxu0
    %v1593 = vadd.f32 0.0, %v1592
    %v1594 = vpop.f32.mrb[0].mxu0
    %v1595 = vpop.f32.mrb[0].mxu0
    %v1596 = vadd.f32 0.0, %v1595
    %v1597 = vpop.f32.mrb[0].mxu0
    %1598 = vmatprep.mubr.bf16.mxu0 0
    %1599 = vmatmul.mubr.bf16.gmra.mrb[0].mxu0 %v1044
    %v1600 = vpop.f32.mrb[0].mxu0
    %v1601 = vadd.f32 0.0, %v1600
    %v1602 = vpop.f32.mrb[0].mxu0
    %v1603 = vpop.f32.mrb[0].mxu0
    %v1604 = vadd.f32 0.0, %v1603
    %v1605 = vpop.f32.mrb[0].mxu0
    %1606 = vmatprep.mubr.bf16.mxu0 0
    %1607 = vmatmul.mubr.bf16.gmra.mrb[0].mxu0 %v1047
    %v1608 = vpop.f32.mrb[0].mxu0
    %v1609 = vadd.f32 0.0, %v1608
    %v1610 = vpop.f32.mrb[0].mxu0
    %v1611 = vpop.f32.mrb[0].mxu0
    %v1612 = vadd.f32 0.0, %v1611
    %v1613 = vpop.f32.mrb[0].mxu0
    %1614 = vmatprep.mubr.bf16.mxu0 0
    %1615 = vmatmul.mubr.bf16.gmra.mrb[0].mxu0 %v1050
    %v1616 = vpop.f32.mrb[0].mxu0
    %v1617 = vadd.f32 0.0, %v1616
    %v1618 = vpop.f32.mrb[0].mxu0
    %v1619 = vpop.f32.mrb[0].mxu0
    %v1620 = vadd.f32 0.0, %v1619
    %v1621 = vpop.f32.mrb[0].mxu0
    %1622 = vmatprep.mubr.bf16.mxu0 0
    %1623 = vmatmul.mubr.bf16.gmra.mrb[0].mxu0 %v1053
    %v1624 = vpop.f32.mrb[0].mxu0
    %v1625 = vadd.f32 0.0, %v1624
    %v1626 = vpop.f32.mrb[0].mxu0
    %v1627 = vpop.f32.mrb[0].mxu0
    %v1628 = vadd.f32 0.0, %v1627
    %v1629 = vpop.f32.mrb[0].mxu0
    %1630 = vmatprep.mubr.bf16.mxu0 0
    %1631 = vmatmul.mubr.bf16.gmra.mrb[0].mxu0 %v1056
    %v1632 = vpop.f32.mrb[0].mxu0
    %v1633 = vadd.f32 0.0, %v1632
    %v1634 = vpop.f32.mrb[0].mxu0
    %v1635 = vpop.f32.mrb[0].mxu0
    %v1636 = vadd.f32 0.0, %v1635
    %v1637 = vpop.f32.mrb[0].mxu0
    %1638 = vmatprep.mubr.bf16.mxu0 0
    %1639 = vmatmul.mubr.bf16.gmra.mrb[0].mxu0 %v1059
    %v1640 = vpop.f32.mrb[0].mxu0
    %v1641 = vadd.f32 0.0, %v1640
    %v1642 = vpop.f32.mrb[0].mxu0
    %v1643 = vpop.f32.mrb[0].mxu0
    %v1644 = vadd.f32 0.0, %v1643
    %v1645 = vpop.f32.mrb[0].mxu0
    %1646 = vmatprep.mubr.bf16.mxu0 0
    %1647 = vmatmul.mubr.bf16.gmra.mrb[0].mxu0 %v1062
    %v1648 = vpop.f32.mrb[0].mxu0
    %v1649 = vadd.f32 0.0, %v1648
    %v1650 = vpop.f32.mrb[0].mxu0
    %v1651 = vpop.f32.mrb[0].mxu0
    %v1652 = vadd.f32 0.0, %v1651
    %v1653 = vpop.f32.mrb[0].mxu0
    %1654 = vmatprep.mubr.bf16.mxu0 0
    %1655 = vmatmul.mubr.bf16.gmra.mrb[0].mxu0 %v1065
    %v1656 = vpop.f32.mrb[0].mxu0
    %v1657 = vadd.f32 0.0, %v1656
    %v1658 = vpop.f32.mrb[0].mxu0
    %v1659 = vpop.f32.mrb[0].mxu0
    %v1660 = vadd.f32 0.0, %v1659
    %v1661 = vpop.f32.mrb[0].mxu0
    %1662 = vmatprep.mubr.bf16.mxu0 0
    %1663 = vmatmul.mubr.bf16.gmra.mrb[0].mxu0 %v1068
    %v1664 = vpop.f32.mrb[0].mxu0
    %v1665 = vadd.f32 0.0, %v1664
    %v1666 = vpop.f32.mrb[0].mxu0
    %v1667 = vpop.f32.mrb[0].mxu0
    %v1668 = vadd.f32 0.0, %v1667
    %v1669 = vpop.f32.mrb[0].mxu0
    %1670 = vmatprep.mubr.bf16.mxu0 0
    %1671 = vmatmul.mubr.bf16.gmra.mrb[0].mxu0 %v1071
    %v1672 = vpop.f32.mrb[0].mxu0
    %v1673 = vadd.f32 0.0, %v1672
    %v1674 = vpop.f32.mrb[0].mxu0
    %v1675 = vpop.f32.mrb[0].mxu0
    %v1676 = vadd.f32 0.0, %v1675
    %v1677 = vpop.f32.mrb[0].mxu0
    %1678 = vmatprep.mubr.bf16.mxu0 0
    %1679 = vmatmul.mubr.bf16.gmra.mrb[0].mxu0 %v1074
    %v1680 = vpop.f32.mrb[0].mxu0
    %v1681 = vadd.f32 0.0, %v1680
    %v1682 = vpop.f32.mrb[0].mxu0
    %v1683 = vpop.f32.mrb[0].mxu0
    %v1684 = vadd.f32 0.0, %v1683
    %v1685 = vpop.f32.mrb[0].mxu0
    %1686 = vmatprep.mubr.bf16.mxu0 0
    %1687 = vmatmul.mubr.bf16.gmra.mrb[0].mxu0 %v1077
    %v1688 = vpop.f32.mrb[0].mxu0
    %v1689 = vadd.f32 0.0, %v1688
    %v1690 = vpop.f32.mrb[0].mxu0
    %v1691 = vpop.f32.mrb[0].mxu0
    %v1692 = vadd.f32 0.0, %v1691
    %v1693 = vpop.f32.mrb[0].mxu0
    %1694 = vmatprep.mubr.bf16.mxu0 0
    %1695 = vmatmul.mubr.bf16.gmra.mrb[0].mxu0 %v1080
    %v1696 = vpop.f32.mrb[0].mxu0
    %v1697 = vadd.f32 0.0, %v1696
    %v1698 = vpop.f32.mrb[0].mxu0
    %v1699 = vpop.f32.mrb[0].mxu0
    %v1700 = vadd.f32 0.0, %v1699
    %v1701 = vpop.f32.mrb[0].mxu0
    %1702 = vmatprep.mubr.bf16.mxu0 0
    %1703 = vmatmul.mubr.bf16.gmra.mrb[0].mxu0 %v1083
    %v1704 = vpop.f32.mrb[0].mxu0
    %v1705 = vadd.f32 0.0, %v1704
    %v1706 = vpop.f32.mrb[0].mxu0
    %v1707 = vpop.f32.mrb[0].mxu0
    %v1708 = vadd.f32 0.0, %v1707
    %v1709 = vpop.f32.mrb[0].mxu0
    %1710 = vmatprep.mubr.bf16.mxu0 0
    %1711 = vmatmul.mubr.bf16.gmra.mrb[0].mxu0 %v1086
    %v1712 = vpop.f32.mrb[0].mxu0
    %v1713 = vadd.f32 0.0, %v1712
    %v1714 = vpop.f32.mrb[0].mxu0
    %v1715 = vpop.f32.mrb[0].mxu0
    %v1716 = vadd.f32 0.0, %v1715
    %v1717 = vpop.f32.mrb[0].mxu0
    %1718 = vmatprep.mubr.bf16.mxu0 0
    %1719 = vmatmul.mubr.bf16.gmra.mrb[0].mxu0 %v1089
    %v1720 = vpop.f32.mrb[0].mxu0
    %v1721 = vadd.f32 0.0, %v1720
    %v1722 = vpop.f32.mrb[0].mxu0
    %v1723 = vpop.f32.mrb[0].mxu0
    %v1724 = vadd.f32 0.0, %v1723
    %v1725 = vpop.f32.mrb[0].mxu0
    %1726 = vmatprep.mubr.bf16.mxu0 0
    %1727 = vmatmul.mubr.bf16.gmra.mrb[0].mxu0 %v1092
    %v1728 = vpop.f32.mrb[0].mxu0
    %v1729 = vadd.f32 0.0, %v1728
    %v1730 = vpop.f32.mrb[0].mxu0
    %v1731 = vpop.f32.mrb[0].mxu0
    %v1732 = vadd.f32 0.0, %v1731
    %v1733 = vpop.f32.mrb[0].mxu0
    %1734 = vmatprep.mubr.bf16.mxu0 0
    %1735 = vmatmul.mubr.bf16.gmra.mrb[0].mxu0 %v1095
    %v1736 = vpop.f32.mrb[0].mxu0
    %v1737 = vadd.f32 0.0, %v1736
    %v1738 = vpop.f32.mrb[0].mxu0
    %v1739 = vpop.f32.mrb[0].mxu0
    %v1740 = vadd.f32 0.0, %v1739
    %v1741 = vpop.f32.mrb[0].mxu0
    %1742 = vmatprep.mubr.bf16.mxu0 0
    %1743 = vmatmul.mubr.bf16.gmra.mrb[0].mxu0 %v1098
    %v1744 = vpop.f32.mrb[0].mxu0
    %v1745 = vadd.f32 0.0, %v1744
    %v1746 = vpop.f32.mrb[0].mxu0
    %v1747 = vpop.f32.mrb[0].mxu0
    %v1748 = vadd.f32 0.0, %v1747
    %v1749 = vpop.f32.mrb[0].mxu0
    %1750 = vmatprep.mubr.bf16.mxu0 0
    %1751 = vmatmul.mubr.bf16.gmra.mrb[0].mxu0 %v1101
    %v1752 = vpop.f32.mrb[0].mxu0
    %v1753 = vadd.f32 0.0, %v1752
    %v1754 = vpop.f32.mrb[0].mxu0
    %v1755 = vpop.f32.mrb[0].mxu0
    %v1756 = vadd.f32 0.0, %v1755
    %v1757 = vpop.f32.mrb[0].mxu0
    %1758 = vmatprep.mubr.bf16.mxu0 0
    %1759 = vmatmul.mubr.bf16.gmra.mrb[0].mxu0 %v1104
    %v1760 = vpop.f32.mrb[0].mxu0
    %v1761 = vadd.f32 0.0, %v1760
    %v1762 = vpop.f32.mrb[0].mxu0
    %v1763 = vpop.f32.mrb[0].mxu0
    %v1764 = vadd.f32 0.0, %v1763
    %v1765 = vpop.f32.mrb[0].mxu0
    %1766 = vmatprep.mubr.bf16.mxu0 0
    %1767 = vmatmul.mubr.bf16.gmra.mrb[0].mxu0 %v1107
    %v1768 = vpop.f32.mrb[0].mxu0
    %v1769 = vadd.f32 0.0, %v1768
    %v1770 = vpop.f32.mrb[0].mxu0
    %v1771 = vpop.f32.mrb[0].mxu0
    %v1772 = vadd.f32 0.0, %v1771
    %v1773 = vpop.f32.mrb[0].mxu0
    %1774 = vmatprep.mubr.bf16.mxu0 0
    %1775 = vmatmul.mubr.bf16.gmra.mrb[0].mxu0 %v1110
    %v1776 = vpop.f32.mrb[0].mxu0
    %v1777 = vadd.f32 0.0, %v1776
    %v1778 = vpop.f32.mrb[0].mxu0
    %v1779 = vpop.f32.mrb[0].mxu0
    %v1780 = vadd.f32 0.0, %v1779
    %v1781 = vpop.f32.mrb[0].mxu0
    %1782 = vmatprep.mubr.bf16.mxu0 0
    %1783 = vmatmul.mubr.bf16.gmra.mrb[0].mxu0 %v1113
    %v1784 = vpop.f32.mrb[0].mxu0
    %v1785 = vadd.f32 0.0, %v1784
    %v1786 = vpop.f32.mrb[0].mxu0
    %v1787 = vpop.f32.mrb[0].mxu0
    %v1788 = vadd.f32 0.0, %v1787
    %v1789 = vpop.f32.mrb[0].mxu0
    %1790 = vmatprep.mubr.bf16.mxu0 0
    %1791 = vmatmul.mubr.bf16.gmra.mrb[0].mxu0 %v1116
    %v1792 = vpop.f32.mrb[0].mxu0
    %v1793 = vadd.f32 0.0, %v1792
    %v1794 = vpop.f32.mrb[0].mxu0
    %v1795 = vpop.f32.mrb[0].mxu0
    %v1796 = vadd.f32 0.0, %v1795
    %v1797 = vpop.f32.mrb[0].mxu0
    %1798 = vmatprep.mubr.bf16.mxu0 0
    %1799 = vmatmul.mubr.bf16.gmra.mrb[0].mxu0 %v1119
    %v1800 = vpop.f32.mrb[0].mxu0
    %v1801 = vadd.f32 0.0, %v1800
    %v1802 = vpop.f32.mrb[0].mxu0
    %v1803 = vpop.f32.mrb[0].mxu0
    %v1804 = vadd.f32 0.0, %v1803
    %v1805 = vpop.f32.mrb[0].mxu0
    %1806 = vmatprep.mubr.bf16.mxu0 0
    %1807 = vmatmul.mubr.bf16.gmra.mrb[0].mxu0 %v1122
    %v1808 = vpop.f32.mrb[0].mxu0
    %v1809 = vadd.f32 0.0, %v1808
    %v1810 = vpop.f32.mrb[0].mxu0
    %v1811 = vpop.f32.mrb[0].mxu0
    %v1812 = vadd.f32 0.0, %v1811
    %v1813 = vpop.f32.mrb[0].mxu0
    %1814 = vmatprep.mubr.bf16.mxu0 0
    %1815 = vmatmul.mubr.bf16.gmra.mrb[0].mxu0 %v1125
    %v1816 = vpop.f32.mrb[0].mxu0
    %v1817 = vadd.f32 0.0, %v1816
    %v1818 = vpop.f32.mrb[0].mxu0
    %v1819 = vpop.f32.mrb[0].mxu0
    %v1820 = vadd.f32 0.0, %v1819
    %v1821 = vpop.f32.mrb[0].mxu0
    %1822 = vmatprep.mubr.bf16.mxu0 0
    %1823 = vmatmul.mubr.bf16.gmra.mrb[0].mxu0 %v1128
    %v1824 = vpop.f32.mrb[0].mxu0
    %v1825 = vadd.f32 0.0, %v1824
    %v1826 = vpop.f32.mrb[0].mxu0
    %v1827 = vpop.f32.mrb[0].mxu0
    %v1828 = vadd.f32 0.0, %v1827
    %v1829 = vpop.f32.mrb[0].mxu0
    %1830 = vmatprep.mubr.bf16.mxu0 0
    %1831 = vmatmul.mubr.bf16.gmra.mrb[0].mxu0 %v1131
    %v1832 = vpop.f32.mrb[0].mxu0
    %v1833 = vadd.f32 0.0, %v1832
    %v1834 = vpop.f32.mrb[0].mxu0
    %v1835 = vpop.f32.mrb[0].mxu0
    %v1836 = vadd.f32 0.0, %v1835
    %v1837 = vpop.f32.mrb[0].mxu0
    %1838 = vmatprep.mubr.bf16.mxu0 0
    %1839 = vmatmul.mubr.bf16.gmra.mrb[0].mxu0 %v1134
    %v1840 = vpop.f32.mrb[0].mxu0
    %v1841 = vadd.f32 0.0, %v1840
    %v1842 = vpop.f32.mrb[0].mxu0
    %v1843 = vpop.f32.mrb[0].mxu0
    %v1844 = vadd.f32 0.0, %v1843
    %v1845 = vpop.f32.mrb[0].mxu0
    %1846 = vmatprep.mubr.bf16.mxu0 0
    %1847 = vmatmul.mubr.bf16.gmra.mrb[0].mxu0 %v1137
    %v1848 = vpop.f32.mrb[0].mxu0
    %v1849 = vadd.f32 0.0, %v1848
    %v1850 = vpop.f32.mrb[0].mxu0
    %v1851 = vpop.f32.mrb[0].mxu0
    %v1852 = vadd.f32 0.0, %v1851
    %v1853 = vpop.f32.mrb[0].mxu0
    %1854 = vmatprep.mubr.bf16.mxu0 0
    %1855 = vmatmul.mubr.bf16.gmra.mrb[0].mxu0 %v1140
    %v1856 = vpop.f32.mrb[0].mxu0
    %v1857 = vadd.f32 0.0, %v1856
    %v1858 = vpop.f32.mrb[0].mxu0
    %v1859 = vpop.f32.mrb[0].mxu0
    %v1860 = vadd.f32 0.0, %v1859
    %v1861 = vpop.f32.mrb[0].mxu0
    %1862 = vmatprep.mubr.bf16.mxu0 0
    %1863 = vmatmul.mubr.bf16.gmra.mrb[0].mxu0 %v1143
    %v1864 = vpop.f32.mrb[0].mxu0
    %v1865 = vadd.f32 0.0, %v1864
    %v1866 = vpop.f32.mrb[0].mxu0
    %v1867 = vpop.f32.mrb[0].mxu0
    %v1868 = vadd.f32 0.0, %v1867
    %v1869 = vpop.f32.mrb[0].mxu0
    %1870 = vmatprep.mubr.bf16.mxu0 0
    %1871 = vmatmul.mubr.bf16.gmra.mrb[0].mxu0 %v1146
    %v1872 = vpop.f32.mrb[0].mxu0
    %v1873 = vadd.f32 0.0, %v1872
    %v1874 = vpop.f32.mrb[0].mxu0
    %v1875 = vpop.f32.mrb[0].mxu0
    %v1876 = vadd.f32 0.0, %v1875
    %v1877 = vpop.f32.mrb[0].mxu0
    %1878 = vmatprep.mubr.bf16.mxu0 0
    %1879 = vmatmul.mubr.bf16.gmra.mrb[0].mxu0 %v1149
    %v1880 = vpop.f32.mrb[0].mxu0
    %v1881 = vadd.f32 0.0, %v1880
    %v1882 = vpop.f32.mrb[0].mxu0
    %v1883 = vpop.f32.mrb[0].mxu0
    %v1884 = vadd.f32 0.0, %v1883
    %v1885 = vpop.f32.mrb[0].mxu0
    %1886 = vmatprep.mubr.bf16.mxu0 0
    %1887 = vmatmul.mubr.bf16.gmra.mrb[0].mxu0 %v1152
    %v1888 = vpop.f32.mrb[0].mxu0
    %v1889 = vadd.f32 0.0, %v1888
    %v1890 = vpop.f32.mrb[0].mxu0
    %v1891 = vpop.f32.mrb[0].mxu0
    %v1892 = vadd.f32 0.0, %v1891
    %v1893 = vpop.f32.mrb[0].mxu0
    %1894 = vmatprep.mubr.bf16.mxu0 0
    %1895 = vmatmul.mubr.bf16.gmra.mrb[0].mxu0 %v1155
    %v1896 = vpop.f32.mrb[0].mxu0
    %v1897 = vadd.f32 0.0, %v1896
    %v1898 = vpop.f32.mrb[0].mxu0
    %v1899 = vpop.f32.mrb[0].mxu0
    %v1900 = vadd.f32 0.0, %v1899
    %v1901 = vpop.f32.mrb[0].mxu0
    %1902 = vmatprep.mubr.bf16.mxu0 0
    %1903 = vmatmul.mubr.bf16.gmra.mrb[0].mxu0 %v1158
    %v1904 = vpop.f32.mrb[0].mxu0
    %v1905 = vadd.f32 0.0, %v1904
    %v1906 = vpop.f32.mrb[0].mxu0
    %v1907 = vpop.f32.mrb[0].mxu0
    %v1908 = vadd.f32 0.0, %v1907
    %v1909 = vpop.f32.mrb[0].mxu0
    %1910 = vmatprep.mubr.bf16.mxu0 0
    %1911 = vmatmul.mubr.bf16.gmra.mrb[0].mxu0 %v1161
    %v1912 = vpop.f32.mrb[0].mxu0
    %v1913 = vadd.f32 0.0, %v1912
    %v1914 = vpop.f32.mrb[0].mxu0
    %v1915 = vpop.f32.mrb[0].mxu0
    %v1916 = vadd.f32 0.0, %v1915
    %v1917 = vpop.f32.mrb[0].mxu0
    %1918 = vmatprep.mubr.bf16.mxu0 0
    %1919 = vmatmul.mubr.bf16.gmra.mrb[0].mxu0 %v1164
    %v1920 = vpop.f32.mrb[0].mxu0
    %v1921 = vadd.f32 0.0, %v1920
    %v1922 = vpop.f32.mrb[0].mxu0
    %v1923 = vpop.f32.mrb[0].mxu0
    %v1924 = vadd.f32 0.0, %v1923
    %v1925 = vpop.f32.mrb[0].mxu0
    %1926 = vmatprep.mubr.bf16.mxu0 0
    %1927 = vmatmul.mubr.bf16.gmra.mrb[0].mxu0 %v1167
    %v1928 = vpop.f32.mrb[0].mxu0
    %v1929 = vadd.f32 0.0, %v1928
    %v1930 = vpop.f32.mrb[0].mxu0
    %v1931 = vpop.f32.mrb[0].mxu0
    %v1932 = vadd.f32 0.0, %v1931
    %v1933 = vpop.f32.mrb[0].mxu0
    %1934 = vmatprep.mubr.bf16.mxu0 0
    %1935 = vmatmul.mubr.bf16.gmra.mrb[0].mxu0 %v1170
    %v1936 = vpop.f32.mrb[0].mxu0
    %v1937 = vadd.f32 0.0, %v1936
    %v1938 = vpop.f32.mrb[0].mxu0
    %v1939 = vpop.f32.mrb[0].mxu0
    %v1940 = vadd.f32 0.0, %v1939
    %v1941 = vpop.f32.mrb[0].mxu0
    %1942 = vmatprep.mubr.bf16.mxu0 0
    %1943 = vmatmul.mubr.bf16.gmra.mrb[0].mxu0 %v1173
    %v1944 = vpop.f32.mrb[0].mxu0
    %v1945 = vadd.f32 0.0, %v1944
    %v1946 = vpop.f32.mrb[0].mxu0
    %v1947 = vpop.f32.mrb[0].mxu0
    %v1948 = vadd.f32 0.0, %v1947
    %v1949 = vpop.f32.mrb[0].mxu0
    %1950 = vmatprep.mubr.bf16.mxu0 0
    %1951 = vmatmul.mubr.bf16.gmra.mrb[0].mxu0 %v1176
    %v1952 = vpop.f32.mrb[0].mxu0
    %v1953 = vadd.f32 0.0, %v1952
    %v1954 = vpop.f32.mrb[0].mxu0
    %v1955 = vpop.f32.mrb[0].mxu0
    %v1956 = vadd.f32 0.0, %v1955
    %v1957 = vpop.f32.mrb[0].mxu0
    %1958 = vmatprep.mubr.bf16.mxu0 0
    %1959 = vmatmul.mubr.bf16.gmra.mrb[0].mxu0 %v1179
    %v1960 = vpop.f32.mrb[0].mxu0
    %v1961 = vadd.f32 0.0, %v1960
    %v1962 = vpop.f32.mrb[0].mxu0
    %v1963 = vpop.f32.mrb[0].mxu0
    %v1964 = vadd.f32 0.0, %v1963
    %v1965 = vpop.f32.mrb[0].mxu0
    %1966 = vmatprep.mubr.bf16.mxu0 0
    %1967 = vmatmul.mubr.bf16.gmra.mrb[0].mxu0 %v1182
    %v1968 = vpop.f32.mrb[0].mxu0
    %v1969 = vadd.f32 0.0, %v1968
    %v1970 = vpop.f32.mrb[0].mxu0
    %v1971 = vpop.f32.mrb[0].mxu0
    %v1972 = vadd.f32 0.0, %v1971
    %v1973 = vpop.f32.mrb[0].mxu0
    %1974 = vmatprep.mubr.bf16.mxu0 0
    %1975 = vmatmul.mubr.bf16.gmra.mrb[0].mxu0 %v1185
    %v1976 = vpop.f32.mrb[0].mxu0
    %v1977 = vadd.f32 0.0, %v1976
    %v1978 = vpop.f32.mrb[0].mxu0
    %v1979 = vpop.f32.mrb[0].mxu0
    %v1980 = vadd.f32 0.0, %v1979
    %v1981 = vpop.f32.mrb[0].mxu0
    %1982 = vmatprep.mubr.bf16.mxu0 0
    %1983 = vmatmul.mubr.bf16.gmra.mrb[0].mxu0 %v1188
    %v1984 = vpop.f32.mrb[0].mxu0
    %v1985 = vadd.f32 0.0, %v1984
    %v1986 = vpop.f32.mrb[0].mxu0
    %v1987 = vpop.f32.mrb[0].mxu0
    %v1988 = vadd.f32 0.0, %v1987
    %v1989 = vpop.f32.mrb[0].mxu0
    %1990 = vmatprep.mubr.bf16.mxu0 0
    %1991 = vmatmul.mubr.bf16.gmra.mrb[0].mxu0 %v1191
    %v1992 = vpop.f32.mrb[0].mxu0
    %v1993 = vadd.f32 0.0, %v1992
    %v1994 = vpop.f32.mrb[0].mxu0
    %v1995 = vpop.f32.mrb[0].mxu0
    %v1996 = vadd.f32 0.0, %v1995
    %v1997 = vpop.f32.mrb[0].mxu0
    %1998 = vmatprep.mubr.bf16.mxu0 0
    %1999 = vmatmul.mubr.bf16.gmra.mrb[0].mxu0 %v1194
    %v2000 = vpop.f32.mrb[0].mxu0
    %v2001 = vadd.f32 0.0, %v2000
    %v2002 = vpop.f32.mrb[0].mxu0
    %v2003 = vpop.f32.mrb[0].mxu0
    %v2004 = vadd.f32 0.0, %v2003
    %v2005 = vpop.f32.mrb[0].mxu0
    %2006 = vmatprep.mubr.bf16.mxu0 0
    %2007 = vmatmul.mubr.bf16.gmra.mrb[0].mxu0 %v1197
    %v2008 = vpop.f32.mrb[0].mxu0
    %v2009 = vadd.f32 0.0, %v2008
    %v2010 = vpop.f32.mrb[0].mxu0
    %v2011 = vpop.f32.mrb[0].mxu0
    %v2012 = vadd.f32 0.0, %v2011
    %v2013 = vpop.f32.mrb[0].mxu0
    %2014 = vmatprep.mubr.bf16.mxu0 0
    %2015 = vmatmul.mubr.bf16.gmra.mrb[0].mxu0 %v1200
    %v2016 = vpop.f32.mrb[0].mxu0
    %v2017 = vadd.f32 0.0, %v2016
    %v2018 = vpop.f32.mrb[0].mxu0
    %v2019 = vpop.f32.mrb[0].mxu0
    %v2020 = vadd.f32 0.0, %v2019
    %v2021 = vpop.f32.mrb[0].mxu0
    %2022 = vmatprep.mubr.bf16.mxu0 0
    %2023 = vmatmul.mubr.bf16.gmra.mrb[0].mxu0 %v1203
    %v2024 = vpop.f32.mrb[0].mxu0
    %v2025 = vadd.f32 0.0, %v2024
    %v2026 = vpop.f32.mrb[0].mxu0
    %v2027 = vpop.f32.mrb[0].mxu0
    %v2028 = vadd.f32 0.0, %v2027
    %v2029 = vpop.f32.mrb[0].mxu0
    %2030 = vmatprep.mubr.bf16.mxu0 0
    %2031 = vmatmul.mubr.bf16.gmra.mrb[0].mxu0 %v1206
    %v2032 = vpop.f32.mrb[0].mxu0
    %v2033 = vadd.f32 0.0, %v2032
    %v2034 = vpop.f32.mrb[0].mxu0
    %v2035 = vpop.f32.mrb[0].mxu0
    %v2036 = vadd.f32 0.0, %v2035
    %v2037 = vpop.f32.mrb[0].mxu0
    %2038 = vmatprep.mubr.bf16.mxu0 0
    %2039 = vmatmul.mubr.bf16.gmra.mrb[0].mxu0 %v1209
    %v2040 = vpop.f32.mrb[0].mxu0
    %v2041 = vadd.f32 0.0, %v2040
    %v2042 = vpop.f32.mrb[0].mxu0
    %v2043 = vpop.f32.mrb[0].mxu0
    %v2044 = vadd.f32 0.0, %v2043
    %v2045 = vpop.f32.mrb[0].mxu0
    %2046 = vmatprep.mubr.bf16.mxu0 0
    %2047 = vmatmul.mubr.bf16.gmra.mrb[0].mxu0 %v1212
    %v2048 = vpop.f32.mrb[0].mxu0
    %v2049 = vadd.f32 0.0, %v2048
    %v2050 = vpop.f32.mrb[0].mxu0
    %v2051 = vpop.f32.mrb[0].mxu0
    %v2052 = vadd.f32 0.0, %v2051
    %v2053 = vpop.f32.mrb[0].mxu0
    %2054 = vmatprep.mubr.bf16.mxu0 0
    %2055 = vmatmul.mubr.bf16.gmra.mrb[0].mxu0 %v1215
    %v2056 = vpop.f32.mrb[0].mxu0
    %v2057 = vadd.f32 0.0, %v2056
    %v2058 = vpop.f32.mrb[0].mxu0
    %v2059 = vpop.f32.mrb[0].mxu0
    %v2060 = vadd.f32 0.0, %v2059
    %v2061 = vpop.f32.mrb[0].mxu0
    %2062 = vmatprep.mubr.bf16.mxu0 0
    %2063 = vmatmul.mubr.bf16.gmra.mrb[0].mxu0 %v1218
    %v2064 = vpop.f32.mrb[0].mxu0
    %v2065 = vadd.f32 0.0, %v2064
    %v2066 = vpop.f32.mrb[0].mxu0
    %v2067 = vpop.f32.mrb[0].mxu0
    %v2068 = vadd.f32 0.0, %v2067
    %v2069 = vpop.f32.mrb[0].mxu0
    %2070 = vmatprep.mubr.bf16.mxu0 0
    %2071 = vmatmul.mubr.bf16.gmra.mrb[0].mxu0 %v1221
    %v2072 = vpop.f32.mrb[0].mxu0
    %v2073 = vadd.f32 0.0, %v2072
    %v2074 = vpop.f32.mrb[0].mxu0
    %v2075 = vpop.f32.mrb[0].mxu0
    %v2076 = vadd.f32 0.0, %v2075
    %v2077 = vpop.f32.mrb[0].mxu0
    %2078 = vmatprep.mubr.bf16.mxu0 0
    %2079 = vmatmul.mubr.bf16.gmra.mrb[0].mxu0 %v1224
    %v2080 = vpop.f32.mrb[0].mxu0
    %v2081 = vadd.f32 0.0, %v2080
    %v2082 = vpop.f32.mrb[0].mxu0
    %v2083 = vpop.f32.mrb[0].mxu0
    %v2084 = vadd.f32 0.0, %v2083
    %v2085 = vpop.f32.mrb[0].mxu0
    %2086 = vmatprep.mubr.bf16.mxu0 0
    %2087 = vmatmul.mubr.bf16.gmra.mrb[0].mxu0 %v1227
    %v2088 = vpop.f32.mrb[0].mxu0
    %v2089 = vadd.f32 0.0, %v2088
    %v2090 = vpop.f32.mrb[0].mxu0
    %v2091 = vpop.f32.mrb[0].mxu0
    %v2092 = vadd.f32 0.0, %v2091
    %v2093 = vpop.f32.mrb[0].mxu0
    %2094 = vmatprep.mubr.bf16.mxu0 0
    %2095 = vmatmul.mubr.bf16.gmra.mrb[0].mxu0 %v1230
    %v2096 = vpop.f32.mrb[0].mxu0
    %v2097 = vadd.f32 0.0, %v2096
    %v2098 = vpop.f32.mrb[0].mxu0
    %v2099 = vpop.f32.mrb[0].mxu0
    %v2100 = vadd.f32 0.0, %v2099
    %v2101 = vpop.f32.mrb[0].mxu0
    %2102 = vmatprep.mubr.bf16.mxu0 0
    %2103 = vmatmul.mubr.bf16.gmra.mrb[0].mxu0 %v1233
    %v2104 = vpop.f32.mrb[0].mxu0
    %v2105 = vadd.f32 0.0, %v2104
    %v2106 = vpop.f32.mrb[0].mxu0
    %v2107 = vpop.f32.mrb[0].mxu0
    %v2108 = vadd.f32 0.0, %v2107
    %v2109 = vpop.f32.mrb[0].mxu0
    %2110 = vmatprep.mubr.bf16.mxu0 0
    %2111 = vmatmul.mubr.bf16.gmra.mrb[0].mxu0 %v1236
    %v2112 = vpop.f32.mrb[0].mxu0
    %v2113 = vadd.f32 0.0, %v2112
    %v2114 = vpop.f32.mrb[0].mxu0
    %v2115 = vpop.f32.mrb[0].mxu0
    %v2116 = vadd.f32 0.0, %v2115
    %v2117 = vpop.f32.mrb[0].mxu0
    %2118 = vmatprep.mubr.bf16.mxu0 0
    %2119 = vmatmul.mubr.bf16.gmra.mrb[0].mxu0 %v1239
    %v2120 = vpop.f32.mrb[0].mxu0
    %v2121 = vadd.f32 0.0, %v2120
    %v2122 = vpop.f32.mrb[0].mxu0
    %v2123 = vpop.f32.mrb[0].mxu0
    %v2124 = vadd.f32 0.0, %v2123
    %v2125 = vpop.f32.mrb[0].mxu0
    %2126 = vmatprep.mubr.bf16.mxu0 0
    %2127 = vmatmul.mubr.bf16.gmra.mrb[0].mxu0 %v1242
    %v2128 = vpop.f32.mrb[0].mxu0
    %v2129 = vadd.f32 0.0, %v2128
    %v2130 = vpop.f32.mrb[0].mxu0
    %v2131 = vpop.f32.mrb[0].mxu0
    %v2132 = vadd.f32 0.0, %v2131
    %v2133 = vpop.f32.mrb[0].mxu0
    %2134 = vmatprep.mubr.bf16.mxu0 0
    %2135 = vmatmul.mubr.bf16.gmra.mrb[0].mxu0 %v1245
    %v2136 = vpop.f32.mrb[0].mxu0
    %v2137 = vadd.f32 0.0, %v2136
    %v2138 = vpop.f32.mrb[0].mxu0
    %v2139 = vpop.f32.mrb[0].mxu0
    %v2140 = vadd.f32 0.0, %v2139
    %v2141 = vpop.f32.mrb[0].mxu0
    %2142 = vmatprep.mubr.bf16.mxu0 0
    %2143 = vmatmul.mubr.bf16.gmra.mrb[0].mxu0 %v1248
    %v2144 = vpop.f32.mrb[0].mxu0
    %v2145 = vadd.f32 0.0, %v2144
    %v2146 = vpop.f32.mrb[0].mxu0
    %v2147 = vpop.f32.mrb[0].mxu0
    %v2148 = vadd.f32 0.0, %v2147
    %v2149 = vpop.f32.mrb[0].mxu0
    %2150 = vmatprep.mubr.bf16.mxu0 0
    %2151 = vmatmul.mubr.bf16.gmra.mrb[0].mxu0 %v1251
    %v2152 = vpop.f32.mrb[0].mxu0
    %v2153 = vadd.f32 0.0, %v2152
    %v2154 = vpop.f32.mrb[0].mxu0
    %v2155 = vpop.f32.mrb[0].mxu0
    %v2156 = vadd.f32 0.0, %v2155
    %v2157 = vpop.f32.mrb[0].mxu0
    %2158 = vmatprep.mubr.bf16.mxu0 0
    %2159 = vmatmul.mubr.bf16.gmra.mrb[0].mxu0 %v1254
    %v2160 = vpop.f32.mrb[0].mxu0
    %v2161 = vadd.f32 0.0, %v2160
    %v2162 = vpop.f32.mrb[0].mxu0
    %v2163 = vpop.f32.mrb[0].mxu0
    %v2164 = vadd.f32 0.0, %v2163
    %v2165 = vpop.f32.mrb[0].mxu0
    %2166 = vmatprep.mubr.bf16.mxu0 0
    %2167 = vmatmul.mubr.bf16.gmra.mrb[0].mxu0 %v1257
    %v2168 = vpop.f32.mrb[0].mxu0
    %v2169 = vadd.f32 0.0, %v2168
    %v2170 = vpop.f32.mrb[0].mxu0
    %v2171 = vpop.f32.mrb[0].mxu0
    %v2172 = vadd.f32 0.0, %v2171
    %v2173 = vpop.f32.mrb[0].mxu0
    %2174 = vmatprep.mubr.bf16.mxu0 0
    %2175 = vmatmul.mubr.bf16.gmra.mrb[0].mxu0 %v1260
    %v2176 = vpop.f32.mrb[0].mxu0
    %v2177 = vadd.f32 0.0, %v2176
    %v2178 = vpop.f32.mrb[0].mxu0
    %v2179 = vpop.f32.mrb[0].mxu0
    %v2180 = vadd.f32 0.0, %v2179
    %v2181 = vpop.f32.mrb[0].mxu0
    %2182 = vmatprep.mubr.bf16.mxu0 0
    %2183 = vmatmul.mubr.bf16.gmra.mrb[0].mxu0 %v1263
    %v2184 = vpop.f32.mrb[0].mxu0
    %v2185 = vadd.f32 0.0, %v2184
    %v2186 = vpop.f32.mrb[0].mxu0
    %v2187 = vpop.f32.mrb[0].mxu0
    %v2188 = vadd.f32 0.0, %v2187
    %v2189 = vpop.f32.mrb[0].mxu0
    %2190 = vmatprep.mubr.bf16.mxu0 0
    %2191 = vmatmul.mubr.bf16.gmra.mrb[0].mxu0 %v1266
    %v2192 = vpop.f32.mrb[0].mxu0
    %v2193 = vadd.f32 0.0, %v2192
    %v2194 = vpop.f32.mrb[0].mxu0
    %v2195 = vpop.f32.mrb[0].mxu0
    %v2196 = vadd.f32 0.0, %v2195
    %v2197 = vpop.f32.mrb[0].mxu0
    %2198 = vmatprep.mubr.bf16.mxu0 0
    %2199 = vmatmul.mubr.bf16.gmra.mrb[0].mxu0 %v1269
    %v2200 = vpop.f32.mrb[0].mxu0
    %v2201 = vadd.f32 0.0, %v2200
    %v2202 = vpop.f32.mrb[0].mxu0
    %v2203 = vpop.f32.mrb[0].mxu0
    %v2204 = vadd.f32 0.0, %v2203
    %v2205 = vpop.f32.mrb[0].mxu0
    %2206 = vmatprep.mubr.bf16.mxu0 0
    %2207 = vmatmul.mubr.bf16.gmra.mrb[0].mxu0 %v1272
    %v2208 = vpop.f32.mrb[0].mxu0
    %v2209 = vadd.f32 0.0, %v2208
    %v2210 = vpop.f32.mrb[0].mxu0
    %v2211 = vpop.f32.mrb[0].mxu0
    %v2212 = vadd.f32 0.0, %v2211
    %v2213 = vpop.f32.mrb[0].mxu0
    %2214 = vmatprep.mubr.bf16.mxu0 0
    %2215 = vmatmul.mubr.bf16.gmra.mrb[0].mxu0 %v1275
    %v2216 = vpop.f32.mrb[0].mxu0
    %v2217 = vadd.f32 0.0, %v2216
    %v2218 = vpop.f32.mrb[0].mxu0
    %v2219 = vpop.f32.mrb[0].mxu0
    %v2220 = vadd.f32 0.0, %v2219
    %v2221 = vpop.f32.mrb[0].mxu0
    %2222 = vmatprep.mubr.bf16.mxu0 0
    %2223 = vmatmul.mubr.bf16.gmra.mrb[0].mxu0 %v1278
    %v2224 = vpop.f32.mrb[0].mxu0
    %v2225 = vadd.f32 0.0, %v2224
    %v2226 = vpop.f32.mrb[0].mxu0
    %v2227 = vpop.f32.mrb[0].mxu0
    %v2228 = vadd.f32 0.0, %v2227
    %v2229 = vpop.f32.mrb[0].mxu0
    %2230 = vmatprep.mubr.bf16.mxu0 0
    %2231 = vmatmul.mubr.bf16.gmra.mrb[0].mxu0 %v1281
    %v2232 = vpop.f32.mrb[0].mxu0
    %v2233 = vadd.f32 0.0, %v2232
    %v2234 = vpop.f32.mrb[0].mxu0
    %v2235 = vpop.f32.mrb[0].mxu0
    %v2236 = vadd.f32 0.0, %v2235
    %v2237 = vpop.f32.mrb[0].mxu0
    %2238 = vmatprep.mubr.bf16.mxu0 0
    %2239 = vmatmul.mubr.bf16.gmra.mrb[0].mxu0 %v1284
    %v2240 = vpop.f32.mrb[0].mxu0
    %v2241 = vadd.f32 0.0, %v2240
    %v2242 = vpop.f32.mrb[0].mxu0
    %v2243 = vpop.f32.mrb[0].mxu0
    %v2244 = vadd.f32 0.0, %v2243
    %v2245 = vpop.f32.mrb[0].mxu0
    %2246 = vmatprep.mubr.bf16.mxu0 0
    %2247 = vmatmul.mubr.bf16.gmra.mrb[0].mxu0 %v1287
    %v2248 = vpop.f32.mrb[0].mxu0
    %v2249 = vadd.f32 0.0, %v2248
    %v2250 = vpop.f32.mrb[0].mxu0
    %v2251 = vpop.f32.mrb[0].mxu0
    %v2252 = vadd.f32 0.0, %v2251
    %v2253 = vpop.f32.mrb[0].mxu0
    %2254 = vmatprep.mubr.bf16.mxu0 0
    %2255 = vmatmul.mubr.bf16.gmra.mrb[0].mxu0 %v1290
    %v2256 = vpop.f32.mrb[0].mxu0
    %v2257 = vadd.f32 0.0, %v2256
    %v2258 = vpop.f32.mrb[0].mxu0
    %v2259 = vpop.f32.mrb[0].mxu0
    %v2260 = vadd.f32 0.0, %v2259
    %v2261 = vpop.f32.mrb[0].mxu0
    %2262 = vmatprep.mubr.bf16.mxu0 0
    %2263 = vmatmul.mubr.bf16.gmra.mrb[0].mxu0 %v1293
    %v2264 = vpop.f32.mrb[0].mxu0
    %v2265 = vadd.f32 0.0, %v2264
    %v2266 = vpop.f32.mrb[0].mxu0
    %v2267 = vpop.f32.mrb[0].mxu0
    %v2268 = vadd.f32 0.0, %v2267
    %v2269 = vpop.f32.mrb[0].mxu0
    %2270 = vmatprep.mubr.bf16.mxu0 0
    %2271 = vmatmul.mubr.bf16.gmra.mrb[0].mxu0 %v1296
    %v2272 = vpop.f32.mrb[0].mxu0
    %v2273 = vadd.f32 0.0, %v2272
    %v2274 = vpop.f32.mrb[0].mxu0
    %v2275 = vpop.f32.mrb[0].mxu0
    %v2276 = vadd.f32 0.0, %v2275
    %v2277 = vpop.f32.mrb[0].mxu0
    %2278 = vmatprep.mubr.bf16.mxu0 0
    %2279 = vmatmul.mubr.bf16.gmra.mrb[0].mxu0 %v1299
    %v2280 = vpop.f32.mrb[0].mxu0
    %v2281 = vadd.f32 0.0, %v2280
    %v2282 = vpop.f32.mrb[0].mxu0
    %v2283 = vpop.f32.mrb[0].mxu0
    %v2284 = vadd.f32 0.0, %v2283
    %v2285 = vpop.f32.mrb[0].mxu0
    %2286 = vmatprep.mubr.bf16.mxu0 0
    %2287 = vmatmul.mubr.bf16.gmra.mrb[0].mxu0 %v1302
    %v2288 = vpop.f32.mrb[0].mxu0
    %v2289 = vadd.f32 0.0, %v2288
    %v2290 = vpop.f32.mrb[0].mxu0
    %v2291 = vpop.f32.mrb[0].mxu0
    %v2292 = vadd.f32 0.0, %v2291
    %v2293 = vpop.f32.mrb[0].mxu0
    %2294 = vmatprep.mubr.bf16.mxu0 0
    %2295 = vmatmul.mubr.bf16.gmra.mrb[0].mxu0 %v1305
    %v2296 = vpop.f32.mrb[0].mxu0
    %v2297 = vadd.f32 0.0, %v2296
    %v2298 = vpop.f32.mrb[0].mxu0
    %v2299 = vpop.f32.mrb[0].mxu0
    %v2300 = vadd.f32 0.0, %v2299
    %v2301 = vpop.f32.mrb[0].mxu0
    %2302 = vmatprep.mubr.bf16.mxu0 0
    %2303 = vmatmul.mubr.bf16.gmra.mrb[0].mxu0 %v1308
    %v2304 = vpop.f32.mrb[0].mxu0
    %v2305 = vadd.f32 0.0, %v2304
    %v2306 = vpop.f32.mrb[0].mxu0
    %v2307 = vpop.f32.mrb[0].mxu0
    %v2308 = vadd.f32 0.0, %v2307
    %v2309 = vpop.f32.mrb[0].mxu0
    %2310 = vmatprep.mubr.bf16.mxu0 0
    %2311 = vmatmul.mubr.bf16.gmra.mrb[0].mxu0 %v1311
    %v2312 = vpop.f32.mrb[0].mxu0
    %v2313 = vadd.f32 0.0, %v2312
    %v2314 = vpop.f32.mrb[0].mxu0
    %v2315 = vpop.f32.mrb[0].mxu0
    %v2316 = vadd.f32 0.0, %v2315
    %v2317 = vpop.f32.mrb[0].mxu0
    %2318 = vmatprep.mubr.bf16.mxu0 0
    %2319 = vmatmul.mubr.bf16.gmra.mrb[0].mxu0 %v1314
    %v2320 = vpop.f32.mrb[0].mxu0
    %v2321 = vadd.f32 0.0, %v2320
    %v2322 = vpop.f32.mrb[0].mxu0
    %v2323 = vpop.f32.mrb[0].mxu0
    %v2324 = vadd.f32 0.0, %v2323
    %v2325 = vpop.f32.mrb[0].mxu0
    %2326 = vmatprep.mubr.bf16.mxu0 0
    %2327 = vmatmul.mubr.bf16.gmra.mrb[0].mxu0 %v1317
    %v2328 = vpop.f32.mrb[0].mxu0
    %v2329 = vadd.f32 0.0, %v2328
    %v2330 = vpop.f32.mrb[0].mxu0
    %v2331 = vpop.f32.mrb[0].mxu0
    %v2332 = vadd.f32 0.0, %v2331
    %v2333 = vpop.f32.mrb[0].mxu0
    %2334 = vmatprep.mubr.bf16.mxu0 0
    %2335 = vmatmul.mubr.bf16.gmra.mrb[0].mxu0 %v1320
    %v2336 = vpop.f32.mrb[0].mxu0
    %v2337 = vadd.f32 0.0, %v2336
    %v2338 = vpop.f32.mrb[0].mxu0
    %v2339 = vpop.f32.mrb[0].mxu0
    %v2340 = vadd.f32 0.0, %v2339
    %v2341 = vpop.f32.mrb[0].mxu0
    %2342 = vmatprep.mubr.bf16.mxu0 0
    %2343 = vmatmul.mubr.bf16.gmra.mrb[0].mxu0 %v1323
    %v2344 = vpop.f32.mrb[0].mxu0
    %v2345 = vadd.f32 0.0, %v2344
    %v2346 = vpop.f32.mrb[0].mxu0
    %v2347 = vpop.f32.mrb[0].mxu0
    %v2348 = vadd.f32 0.0, %v2347
    %v2349 = vpop.f32.mrb[0].mxu0
    %2350 = vmatprep.mubr.bf16.mxu0 0
    %2351 = vmatmul.mubr.bf16.gmra.mrb[0].mxu0 %v1326
    %v2352 = vpop.f32.mrb[0].mxu0
    %v2353 = vadd.f32 0.0, %v2352
    %v2354 = vpop.f32.mrb[0].mxu0
    %v2355 = vpop.f32.mrb[0].mxu0
    %v2356 = vadd.f32 0.0, %v2355
    %v2357 = vpop.f32.mrb[0].mxu0
    %2358 = vmatprep.mubr.bf16.mxu0 0
    %2359 = vmatmul.mubr.bf16.gmra.mrb[0].mxu0 %v1329
    %v2360 = vpop.f32.mrb[0].mxu0
    %v2361 = vadd.f32 0.0, %v2360
    %v2362 = vpop.f32.mrb[0].mxu0
    %v2363 = vpop.f32.mrb[0].mxu0
    %v2364 = vadd.f32 0.0, %v2363
    %v2365 = vpop.f32.mrb[0].mxu0
    %2366 = vmatprep.mubr.bf16.mxu0 0
    %2367 = vmatmul.mubr.bf16.gmra.mrb[0].mxu0 %v1332
    %v2368 = vpop.f32.mrb[0].mxu0
    %v2369 = vadd.f32 0.0, %v2368
    %v2370 = vpop.f32.mrb[0].mxu0
    %v2371 = vpop.f32.mrb[0].mxu0
    %v2372 = vadd.f32 0.0, %v2371
    %v2373 = vpop.f32.mrb[0].mxu0
    %2374 = vmatprep.mubr.bf16.mxu0 0
    %2375 = vmatmul.mubr.bf16.gmra.mrb[0].mxu0 %v1335
    %v2376 = vpop.f32.mrb[0].mxu0
    %v2377 = vadd.f32 0.0, %v2376
    %v2378 = vpop.f32.mrb[0].mxu0
    %v2379 = vpop.f32.mrb[0].mxu0
    %v2380 = vadd.f32 0.0, %v2379
    %v2381 = vpop.f32.mrb[0].mxu0
    %2382 = vmatprep.mubr.bf16.mxu0 0
    %2383 = vmatmul.mubr.bf16.gmra.mrb[0].mxu0 %v1338
    %v2384 = vpop.f32.mrb[0].mxu0
    %v2385 = vadd.f32 0.0, %v2384
    %v2386 = vpop.f32.mrb[0].mxu0
    %v2387 = vpop.f32.mrb[0].mxu0
    %v2388 = vadd.f32 0.0, %v2387
    %v2389 = vpop.f32.mrb[0].mxu0
    %2390 = vmatprep.mubr.bf16.mxu0 0
    %2391 = vmatmul.mubr.bf16.gmra.mrb[0].mxu0 %v1341
    %v2392 = vpop.f32.mrb[0].mxu0
    %v2393 = vadd.f32 0.0, %v2392
    %v2394 = vpop.f32.mrb[0].mxu0
    %v2395 = vpop.f32.mrb[0].mxu0
    %v2396 = vadd.f32 0.0, %v2395
    %v2397 = vpop.f32.mrb[0].mxu0
    %2398 = vmatprep.mubr.bf16.mxu0 0
    %2399 = vmatmul.mubr.bf16.gmra.mrb[0].mxu0 %v1344
    %v2400 = vpop.f32.mrb[0].mxu0
    %v2401 = vadd.f32 0.0, %v2400
    %v2402 = vpop.f32.mrb[0].mxu0
    %v2403 = vpop.f32.mrb[0].mxu0
    %v2404 = vadd.f32 0.0, %v2403
    %v2405 = vpop.f32.mrb[0].mxu0
    %2406 = vmatprep.mubr.bf16.mxu0 0
    %2407 = vmatmul.mubr.bf16.gmra.mrb[0].mxu0 %v1347
    %v2408 = vpop.f32.mrb[0].mxu0
    %v2409 = vadd.f32 0.0, %v2408
    %v2410 = vpop.f32.mrb[0].mxu0
    %v2411 = vpop.f32.mrb[0].mxu0
    %v2412 = vadd.f32 0.0, %v2411
    %v2413 = vpop.f32.mrb[0].mxu0
    %2414 = vmatprep.mubr.bf16.mxu0 0
    %2415 = vmatmul.mubr.bf16.gmra.mrb[0].mxu0 %v1350
    %v2416 = vpop.f32.mrb[0].mxu0
    %v2417 = vadd.f32 0.0, %v2416
    %v2418 = vpop.f32.mrb[0].mxu0
    %v2419 = vpop.f32.mrb[0].mxu0
    %v2420 = vadd.f32 0.0, %v2419
    %v2421 = vpop.f32.mrb[0].mxu0
    %2422 = vmatprep.mubr.bf16.mxu0 0
    %2423 = vmatmul.mubr.bf16.gmra.mrb[0].mxu0 %v1353
    %v2424 = vpop.f32.mrb[0].mxu0
    %v2425 = vadd.f32 0.0, %v2424
    %v2426 = vpop.f32.mrb[0].mxu0
    %v2427 = vpop.f32.mrb[0].mxu0
    %v2428 = vadd.f32 0.0, %v2427
    %v2429 = vpop.f32.mrb[0].mxu0
    %2430 = vmatprep.mubr.bf16.mxu0 0
    %2431 = vmatmul.mubr.bf16.gmra.mrb[0].mxu0 %v1356
    %v2432 = vpop.f32.mrb[0].mxu0
    %v2433 = vadd.f32 0.0, %v2432
    %v2434 = vpop.f32.mrb[0].mxu0
    %v2435 = vpop.f32.mrb[0].mxu0
    %v2436 = vadd.f32 0.0, %v2435
    %v2437 = vpop.f32.mrb[0].mxu0
    %2438 = vdwg.mxu0
    %v2439 = vmul.f32 %v1417, %v1417
    %v2440 = vmul.f32 %v1420, %v1420
    %v2441 = vmul.f32 %v1425, %v1425
    %v2442 = vmul.f32 %v1428, %v1428
    %v2443 = vmul.f32 %v1433, %v1433
    %v2444 = vmul.f32 %v1436, %v1436
    %v2445 = vmul.f32 %v1441, %v1441
    %v2446 = vmul.f32 %v1444, %v1444
    %v2447 = vmul.f32 %v1449, %v1449
    %v2448 = vmul.f32 %v1452, %v1452
    %v2449 = vmul.f32 %v1457, %v1457
    %v2450 = vmul.f32 %v1460, %v1460
    %v2451 = vmul.f32 %v1465, %v1465
    %v2452 = vmul.f32 %v1468, %v1468
    %v2453 = vmul.f32 %v1473, %v1473
    %v2454 = vmul.f32 %v1476, %v1476
    %v2455 = vmul.f32 %v1481, %v1481
    %v2456 = vmul.f32 %v1484, %v1484
    %v2457 = vmul.f32 %v1489, %v1489
    %v2458 = vmul.f32 %v1492, %v1492
    %v2459 = vmul.f32 %v1497, %v1497
    %v2460 = vmul.f32 %v1500, %v1500
    %v2461 = vmul.f32 %v1505, %v1505
    %v2462 = vmul.f32 %v1508, %v1508
    %v2463 = vmul.f32 %v1513, %v1513
    %v2464 = vmul.f32 %v1516, %v1516
    %v2465 = vmul.f32 %v1521, %v1521
    %v2466 = vmul.f32 %v1524, %v1524
    %v2467 = vmul.f32 %v1529, %v1529
    %v2468 = vmul.f32 %v1532, %v1532
    %v2469 = vmul.f32 %v1537, %v1537
    %v2470 = vmul.f32 %v1540, %v1540
    %v2471 = vmul.f32 %v1545, %v1545
    %v2472 = vmul.f32 %v1548, %v1548
    %v2473 = vmul.f32 %v1553, %v1553
    %v2474 = vmul.f32 %v1556, %v1556
    %v2475 = vmul.f32 %v1561, %v1561
    %v2476 = vmul.f32 %v1564, %v1564
    %v2477 = vmul.f32 %v1569, %v1569
    %v2478 = vmul.f32 %v1572, %v1572
    %v2479 = vmul.f32 %v1577, %v1577
    %v2480 = vmul.f32 %v1580, %v1580
    %v2481 = vmul.f32 %v1585, %v1585
    %v2482 = vmul.f32 %v1588, %v1588
    %v2483 = vmul.f32 %v1593, %v1593
    %v2484 = vmul.f32 %v1596, %v1596
    %v2485 = vmul.f32 %v1601, %v1601
    %v2486 = vmul.f32 %v1604, %v1604
    %v2487 = vmul.f32 %v1609, %v1609
    %v2488 = vmul.f32 %v1612, %v1612
    %v2489 = vmul.f32 %v1617, %v1617
    %v2490 = vmul.f32 %v1620, %v1620
    %v2491 = vmul.f32 %v1625, %v1625
    %v2492 = vmul.f32 %v1628, %v1628
    %v2493 = vmul.f32 %v1633, %v1633
    %v2494 = vmul.f32 %v1636, %v1636
    %v2495 = vmul.f32 %v1641, %v1641
    %v2496 = vmul.f32 %v1644, %v1644
    %v2497 = vmul.f32 %v1649, %v1649
    %v2498 = vmul.f32 %v1652, %v1652
    %v2499 = vmul.f32 %v1657, %v1657
    %v2500 = vmul.f32 %v1660, %v1660
    %v2501 = vmul.f32 %v1665, %v1665
    %v2502 = vmul.f32 %v1668, %v1668
    %v2503 = vmul.f32 %v1673, %v1673
    %v2504 = vmul.f32 %v1676, %v1676
    %v2505 = vmul.f32 %v1681, %v1681
    %v2506 = vmul.f32 %v1684, %v1684
    %v2507 = vmul.f32 %v1689, %v1689
    %v2508 = vmul.f32 %v1692, %v1692
    %v2509 = vmul.f32 %v1697, %v1697
    %v2510 = vmul.f32 %v1700, %v1700
    %v2511 = vmul.f32 %v1705, %v1705
    %v2512 = vmul.f32 %v1708, %v1708
    %v2513 = vmul.f32 %v1713, %v1713
    %v2514 = vmul.f32 %v1716, %v1716
    %v2515 = vmul.f32 %v1721, %v1721
    %v2516 = vmul.f32 %v1724, %v1724
    %v2517 = vmul.f32 %v1729, %v1729
    %v2518 = vmul.f32 %v1732, %v1732
    %v2519 = vmul.f32 %v1737, %v1737
    %v2520 = vmul.f32 %v1740, %v1740
    %v2521 = vmul.f32 %v1745, %v1745
    %v2522 = vmul.f32 %v1748, %v1748
    %v2523 = vmul.f32 %v1753, %v1753
    %v2524 = vmul.f32 %v1756, %v1756
    %v2525 = vmul.f32 %v1761, %v1761
    %v2526 = vmul.f32 %v1764, %v1764
    %v2527 = vmul.f32 %v1769, %v1769
    %v2528 = vmul.f32 %v1772, %v1772
    %v2529 = vmul.f32 %v1777, %v1777
    %v2530 = vmul.f32 %v1780, %v1780
    %v2531 = vmul.f32 %v1785, %v1785
    %v2532 = vmul.f32 %v1788, %v1788
    %v2533 = vmul.f32 %v1793, %v1793
    %v2534 = vmul.f32 %v1796, %v1796
    %v2535 = vmul.f32 %v1801, %v1801
    %v2536 = vmul.f32 %v1804, %v1804
    %v2537 = vmul.f32 %v1809, %v1809
    %v2538 = vmul.f32 %v1812, %v1812
    %v2539 = vmul.f32 %v1817, %v1817
    %v2540 = vmul.f32 %v1820, %v1820
    %v2541 = vmul.f32 %v1825, %v1825
    %v2542 = vmul.f32 %v1828, %v1828
    %v2543 = vmul.f32 %v1833, %v1833
    %v2544 = vmul.f32 %v1836, %v1836
    %v2545 = vmul.f32 %v1841, %v1841
    %v2546 = vmul.f32 %v1844, %v1844
    %v2547 = vmul.f32 %v1849, %v1849
    %v2548 = vmul.f32 %v1852, %v1852
    %v2549 = vmul.f32 %v1857, %v1857
    %v2550 = vmul.f32 %v1860, %v1860
    %v2551 = vmul.f32 %v1865, %v1865
    %v2552 = vmul.f32 %v1868, %v1868
    %v2553 = vmul.f32 %v1873, %v1873
    %v2554 = vmul.f32 %v1876, %v1876
    %v2555 = vmul.f32 %v1881, %v1881
    %v2556 = vmul.f32 %v1884, %v1884
    %v2557 = vmul.f32 %v1889, %v1889
    %v2558 = vmul.f32 %v1892, %v1892
    %v2559 = vmul.f32 %v1897, %v1897
    %v2560 = vmul.f32 %v1900, %v1900
    %v2561 = vmul.f32 %v1905, %v1905
    %v2562 = vmul.f32 %v1908, %v1908
    %v2563 = vmul.f32 %v1913, %v1913
    %v2564 = vmul.f32 %v1916, %v1916
    %v2565 = vmul.f32 %v1921, %v1921
    %v2566 = vmul.f32 %v1924, %v1924
    %v2567 = vmul.f32 %v1929, %v1929
    %v2568 = vmul.f32 %v1932, %v1932
    %v2569 = vmul.f32 %v1937, %v1937
    %v2570 = vmul.f32 %v1940, %v1940
    %v2571 = vmul.f32 %v1945, %v1945
    %v2572 = vmul.f32 %v1948, %v1948
    %v2573 = vmul.f32 %v1953, %v1953
    %v2574 = vmul.f32 %v1956, %v1956
    %v2575 = vmul.f32 %v1961, %v1961
    %v2576 = vmul.f32 %v1964, %v1964
    %v2577 = vmul.f32 %v1969, %v1969
    %v2578 = vmul.f32 %v1972, %v1972
    %v2579 = vmul.f32 %v1977, %v1977
    %v2580 = vmul.f32 %v1980, %v1980
    %v2581 = vmul.f32 %v1985, %v1985
    %v2582 = vmul.f32 %v1988, %v1988
    %v2583 = vmul.f32 %v1993, %v1993
    %v2584 = vmul.f32 %v1996, %v1996
    %v2585 = vmul.f32 %v2001, %v2001
    %v2586 = vmul.f32 %v2004, %v2004
    %v2587 = vmul.f32 %v2009, %v2009
    %v2588 = vmul.f32 %v2012, %v2012
    %v2589 = vmul.f32 %v2017, %v2017
    %v2590 = vmul.f32 %v2020, %v2020
    %v2591 = vmul.f32 %v2025, %v2025
    %v2592 = vmul.f32 %v2028, %v2028
    %v2593 = vmul.f32 %v2033, %v2033
    %v2594 = vmul.f32 %v2036, %v2036
    %v2595 = vmul.f32 %v2041, %v2041
    %v2596 = vmul.f32 %v2044, %v2044
    %v2597 = vmul.f32 %v2049, %v2049
    %v2598 = vmul.f32 %v2052, %v2052
    %v2599 = vmul.f32 %v2057, %v2057
    %v2600 = vmul.f32 %v2060, %v2060
    %v2601 = vmul.f32 %v2065, %v2065
    %v2602 = vmul.f32 %v2068, %v2068
    %v2603 = vmul.f32 %v2073, %v2073
    %v2604 = vmul.f32 %v2076, %v2076
    %v2605 = vmul.f32 %v2081, %v2081
    %v2606 = vmul.f32 %v2084, %v2084
    %v2607 = vmul.f32 %v2089, %v2089
    %v2608 = vmul.f32 %v2092, %v2092
    %v2609 = vmul.f32 %v2097, %v2097
    %v2610 = vmul.f32 %v2100, %v2100
    %v2611 = vmul.f32 %v2105, %v2105
    %v2612 = vmul.f32 %v2108, %v2108
    %v2613 = vmul.f32 %v2113, %v2113
    %v2614 = vmul.f32 %v2116, %v2116
    %v2615 = vmul.f32 %v2121, %v2121
    %v2616 = vmul.f32 %v2124, %v2124
    %v2617 = vmul.f32 %v2129, %v2129
    %v2618 = vmul.f32 %v2132, %v2132
    %v2619 = vmul.f32 %v2137, %v2137
    %v2620 = vmul.f32 %v2140, %v2140
    %v2621 = vmul.f32 %v2145, %v2145
    %v2622 = vmul.f32 %v2148, %v2148
    %v2623 = vmul.f32 %v2153, %v2153
    %v2624 = vmul.f32 %v2156, %v2156
    %v2625 = vmul.f32 %v2161, %v2161
    %v2626 = vmul.f32 %v2164, %v2164
    %v2627 = vmul.f32 %v2169, %v2169
    %v2628 = vmul.f32 %v2172, %v2172
    %v2629 = vmul.f32 %v2177, %v2177
    %v2630 = vmul.f32 %v2180, %v2180
    %v2631 = vmul.f32 %v2185, %v2185
    %v2632 = vmul.f32 %v2188, %v2188
    %v2633 = vmul.f32 %v2193, %v2193
    %v2634 = vmul.f32 %v2196, %v2196
    %v2635 = vmul.f32 %v2201, %v2201
    %v2636 = vmul.f32 %v2204, %v2204
    %v2637 = vmul.f32 %v2209, %v2209
    %v2638 = vmul.f32 %v2212, %v2212
    %v2639 = vmul.f32 %v2217, %v2217
    %v2640 = vmul.f32 %v2220, %v2220
    %v2641 = vmul.f32 %v2225, %v2225
    %v2642 = vmul.f32 %v2228, %v2228
    %v2643 = vmul.f32 %v2233, %v2233
    %v2644 = vmul.f32 %v2236, %v2236
    %v2645 = vmul.f32 %v2241, %v2241
    %v2646 = vmul.f32 %v2244, %v2244
    %v2647 = vmul.f32 %v2249, %v2249
    %v2648 = vmul.f32 %v2252, %v2252
    %v2649 = vmul.f32 %v2257, %v2257
    %v2650 = vmul.f32 %v2260, %v2260
    %v2651 = vmul.f32 %v2265, %v2265
    %v2652 = vmul.f32 %v2268, %v2268
    %v2653 = vmul.f32 %v2273, %v2273
    %v2654 = vmul.f32 %v2276, %v2276
    %v2655 = vmul.f32 %v2281, %v2281
    %v2656 = vmul.f32 %v2284, %v2284
    %v2657 = vmul.f32 %v2289, %v2289
    %v2658 = vmul.f32 %v2292, %v2292
    %v2659 = vmul.f32 %v2297, %v2297
    %v2660 = vmul.f32 %v2300, %v2300
    %v2661 = vmul.f32 %v2305, %v2305
    %v2662 = vmul.f32 %v2308, %v2308
    %v2663 = vmul.f32 %v2313, %v2313
    %v2664 = vmul.f32 %v2316, %v2316
    %v2665 = vmul.f32 %v2321, %v2321
    %v2666 = vmul.f32 %v2324, %v2324
    %v2667 = vmul.f32 %v2329, %v2329
    %v2668 = vmul.f32 %v2332, %v2332
    %v2669 = vmul.f32 %v2337, %v2337
    %v2670 = vmul.f32 %v2340, %v2340
    %v2671 = vmul.f32 %v2345, %v2345
    %v2672 = vmul.f32 %v2348, %v2348
    %v2673 = vmul.f32 %v2353, %v2353
    %v2674 = vmul.f32 %v2356, %v2356
    %v2675 = vmul.f32 %v2361, %v2361
    %v2676 = vmul.f32 %v2364, %v2364
    %v2677 = vmul.f32 %v2369, %v2369
    %v2678 = vmul.f32 %v2372, %v2372
    %v2679 = vmul.f32 %v2377, %v2377
    %v2680 = vmul.f32 %v2380, %v2380
    %v2681 = vmul.f32 %v2385, %v2385
    %v2682 = vmul.f32 %v2388, %v2388
    %v2683 = vmul.f32 %v2393, %v2393
    %v2684 = vmul.f32 %v2396, %v2396
    %v2685 = vmul.f32 %v2401, %v2401
    %v2686 = vmul.f32 %v2404, %v2404
    %v2687 = vmul.f32 %v2409, %v2409
    %v2688 = vmul.f32 %v2412, %v2412
    %v2689 = vmul.f32 %v2417, %v2417
    %v2690 = vmul.f32 %v2420, %v2420
    %v2691 = vmul.f32 %v2425, %v2425
    %v2692 = vmul.f32 %v2428, %v2428
    %v2693 = vmul.f32 %v2433, %v2433
    %v2694 = vmul.f32 %v2436, %v2436
    %v2695 = vsub.f32 1.0, %v2439
    %v2696 = vsub.f32 1.0, %v2440
    %v2697 = vsub.f32 1.0, %v2441
    %v2698 = vsub.f32 1.0, %v2442
    %v2699 = vsub.f32 1.0, %v2443
    %v2700 = vsub.f32 1.0, %v2444
    %v2701 = vsub.f32 1.0, %v2445
    %v2702 = vsub.f32 1.0, %v2446
    %v2703 = vsub.f32 1.0, %v2447
    %v2704 = vsub.f32 1.0, %v2448
    %v2705 = vsub.f32 1.0, %v2449
    %v2706 = vsub.f32 1.0, %v2450
    %v2707 = vsub.f32 1.0, %v2451
    %v2708 = vsub.f32 1.0, %v2452
    %v2709 = vsub.f32 1.0, %v2453
    %v2710 = vsub.f32 1.0, %v2454
    %v2711 = vsub.f32 1.0, %v2455
    %v2712 = vsub.f32 1.0, %v2456
    %v2713 = vsub.f32 1.0, %v2457
    %v2714 = vsub.f32 1.0, %v2458
    %v2715 = vsub.f32 1.0, %v2459
    %v2716 = vsub.f32 1.0, %v2460
    %v2717 = vsub.f32 1.0, %v2461
    %v2718 = vsub.f32 1.0, %v2462
    %v2719 = vsub.f32 1.0, %v2463
    %v2720 = vsub.f32 1.0, %v2464
    %v2721 = vsub.f32 1.0, %v2465
    %v2722 = vsub.f32 1.0, %v2466
    %v2723 = vsub.f32 1.0, %v2467
    %v2724 = vsub.f32 1.0, %v2468
    %v2725 = vsub.f32 1.0, %v2469
    %v2726 = vsub.f32 1.0, %v2470
    %v2727 = vsub.f32 1.0, %v2471
    %v2728 = vsub.f32 1.0, %v2472
    %v2729 = vsub.f32 1.0, %v2473
    %v2730 = vsub.f32 1.0, %v2474
    %v2731 = vsub.f32 1.0, %v2475
    %v2732 = vsub.f32 1.0, %v2476
    %v2733 = vsub.f32 1.0, %v2477
    %v2734 = vsub.f32 1.0, %v2478
    %v2735 = vsub.f32 1.0, %v2479
    %v2736 = vsub.f32 1.0, %v2480
    %v2737 = vsub.f32 1.0, %v2481
    %v2738 = vsub.f32 1.0, %v2482
    %v2739 = vsub.f32 1.0, %v2483
    %v2740 = vsub.f32 1.0, %v2484
    %v2741 = vsub.f32 1.0, %v2485
    %v2742 = vsub.f32 1.0, %v2486
    %v2743 = vsub.f32 1.0, %v2487
    %v2744 = vsub.f32 1.0, %v2488
    %v2745 = vsub.f32 1.0, %v2489
    %v2746 = vsub.f32 1.0, %v2490
    %v2747 = vsub.f32 1.0, %v2491
    %v2748 = vsub.f32 1.0, %v2492
    %v2749 = vsub.f32 1.0, %v2493
    %v2750 = vsub.f32 1.0, %v2494
    %v2751 = vsub.f32 1.0, %v2495
    %v2752 = vsub.f32 1.0, %v2496
    %v2753 = vsub.f32 1.0, %v2497
    %v2754 = vsub.f32 1.0, %v2498
    %v2755 = vsub.f32 1.0, %v2499
    %v2756 = vsub.f32 1.0, %v2500
    %v2757 = vsub.f32 1.0, %v2501
    %v2758 = vsub.f32 1.0, %v2502
    %v2759 = vsub.f32 1.0, %v2503
    %v2760 = vsub.f32 1.0, %v2504
    %v2761 = vsub.f32 1.0, %v2505
    %v2762 = vsub.f32 1.0, %v2506
    %v2763 = vsub.f32 1.0, %v2507
    %v2764 = vsub.f32 1.0, %v2508
    %v2765 = vsub.f32 1.0, %v2509
    %v2766 = vsub.f32 1.0, %v2510
    %v2767 = vsub.f32 1.0, %v2511
    %v2768 = vsub.f32 1.0, %v2512
    %v2769 = vsub.f32 1.0, %v2513
    %v2770 = vsub.f32 1.0, %v2514
    %v2771 = vsub.f32 1.0, %v2515
    %v2772 = vsub.f32 1.0, %v2516
    %v2773 = vsub.f32 1.0, %v2517
    %v2774 = vsub.f32 1.0, %v2518
    %v2775 = vsub.f32 1.0, %v2519
    %v2776 = vsub.f32 1.0, %v2520
    %v2777 = vsub.f32 1.0, %v2521
    %v2778 = vsub.f32 1.0, %v2522
    %v2779 = vsub.f32 1.0, %v2523
    %v2780 = vsub.f32 1.0, %v2524
    %v2781 = vsub.f32 1.0, %v2525
    %v2782 = vsub.f32 1.0, %v2526
    %v2783 = vsub.f32 1.0, %v2527
    %v2784 = vsub.f32 1.0, %v2528
    %v2785 = vsub.f32 1.0, %v2529
    %v2786 = vsub.f32 1.0, %v2530
    %v2787 = vsub.f32 1.0, %v2531
    %v2788 = vsub.f32 1.0, %v2532
    %v2789 = vsub.f32 1.0, %v2533
    %v2790 = vsub.f32 1.0, %v2534
    %v2791 = vsub.f32 1.0, %v2535
    %v2792 = vsub.f32 1.0, %v2536
    %v2793 = vsub.f32 1.0, %v2537
    %v2794 = vsub.f32 1.0, %v2538
    %v2795 = vsub.f32 1.0, %v2539
    %v2796 = vsub.f32 1.0, %v2540
    %v2797 = vsub.f32 1.0, %v2541
    %v2798 = vsub.f32 1.0, %v2542
    %v2799 = vsub.f32 1.0, %v2543
    %v2800 = vsub.f32 1.0, %v2544
    %v2801 = vsub.f32 1.0, %v2545
    %v2802 = vsub.f32 1.0, %v2546
    %v2803 = vsub.f32 1.0, %v2547
    %v2804 = vsub.f32 1.0, %v2548
    %v2805 = vsub.f32 1.0, %v2549
    %v2806 = vsub.f32 1.0, %v2550
    %v2807 = vsub.f32 1.0, %v2551
    %v2808 = vsub.f32 1.0, %v2552
    %v2809 = vsub.f32 1.0, %v2553
    %v2810 = vsub.f32 1.0, %v2554
    %v2811 = vsub.f32 1.0, %v2555
    %v2812 = vsub.f32 1.0, %v2556
    %v2813 = vsub.f32 1.0, %v2557
    %v2814 = vsub.f32 1.0, %v2558
    %v2815 = vsub.f32 1.0, %v2559
    %v2816 = vsub.f32 1.0, %v2560
    %v2817 = vsub.f32 1.0, %v2561
    %v2818 = vsub.f32 1.0, %v2562
    %v2819 = vsub.f32 1.0, %v2563
    %v2820 = vsub.f32 1.0, %v2564
    %v2821 = vsub.f32 1.0, %v2565
    %v2822 = vsub.f32 1.0, %v2566
    %v2823 = vsub.f32 1.0, %v2567
    %v2824 = vsub.f32 1.0, %v2568
    %v2825 = vsub.f32 1.0, %v2569
    %v2826 = vsub.f32 1.0, %v2570
    %v2827 = vsub.f32 1.0, %v2571
    %v2828 = vsub.f32 1.0, %v2572
    %v2829 = vsub.f32 1.0, %v2573
    %v2830 = vsub.f32 1.0, %v2574
    %v2831 = vsub.f32 1.0, %v2575
    %v2832 = vsub.f32 1.0, %v2576
    %v2833 = vsub.f32 1.0, %v2577
    %v2834 = vsub.f32 1.0, %v2578
    %v2835 = vsub.f32 1.0, %v2579
    %v2836 = vsub.f32 1.0, %v2580
    %v2837 = vsub.f32 1.0, %v2581
    %v2838 = vsub.f32 1.0, %v2582
    %v2839 = vsub.f32 1.0, %v2583
    %v2840 = vsub.f32 1.0, %v2584
    %v2841 = vsub.f32 1.0, %v2585
    %v2842 = vsub.f32 1.0, %v2586
    %v2843 = vsub.f32 1.0, %v2587
    %v2844 = vsub.f32 1.0, %v2588
    %v2845 = vsub.f32 1.0, %v2589
    %v2846 = vsub.f32 1.0, %v2590
    %v2847 = vsub.f32 1.0, %v2591
    %v2848 = vsub.f32 1.0, %v2592
    %v2849 = vsub.f32 1.0, %v2593
    %v2850 = vsub.f32 1.0, %v2594
    %v2851 = vsub.f32 1.0, %v2595
    %v2852 = vsub.f32 1.0, %v2596
    %v2853 = vsub.f32 1.0, %v2597
    %v2854 = vsub.f32 1.0, %v2598
    %v2855 = vsub.f32 1.0, %v2599
    %v2856 = vsub.f32 1.0, %v2600
    %v2857 = vsub.f32 1.0, %v2601
    %v2858 = vsub.f32 1.0, %v2602
    %v2859 = vsub.f32 1.0, %v2603
    %v2860 = vsub.f32 1.0, %v2604
    %v2861 = vsub.f32 1.0, %v2605
    %v2862 = vsub.f32 1.0, %v2606
    %v2863 = vsub.f32 1.0, %v2607
    %v2864 = vsub.f32 1.0, %v2608
    %v2865 = vsub.f32 1.0, %v2609
    %v2866 = vsub.f32 1.0, %v2610
    %v2867 = vsub.f32 1.0, %v2611
    %v2868 = vsub.f32 1.0, %v2612
    %v2869 = vsub.f32 1.0, %v2613
    %v2870 = vsub.f32 1.0, %v2614
    %v2871 = vsub.f32 1.0, %v2615
    %v2872 = vsub.f32 1.0, %v2616
    %v2873 = vsub.f32 1.0, %v2617
    %v2874 = vsub.f32 1.0, %v2618
    %v2875 = vsub.f32 1.0, %v2619
    %v2876 = vsub.f32 1.0, %v2620
    %v2877 = vsub.f32 1.0, %v2621
    %v2878 = vsub.f32 1.0, %v2622
    %v2879 = vsub.f32 1.0, %v2623
    %v2880 = vsub.f32 1.0, %v2624
    %v2881 = vsub.f32 1.0, %v2625
    %v2882 = vsub.f32 1.0, %v2626
    %v2883 = vsub.f32 1.0, %v2627
    %v2884 = vsub.f32 1.0, %v2628
    %v2885 = vsub.f32 1.0, %v2629
    %v2886 = vsub.f32 1.0, %v2630
    %v2887 = vsub.f32 1.0, %v2631
    %v2888 = vsub.f32 1.0, %v2632
    %v2889 = vsub.f32 1.0, %v2633
    %v2890 = vsub.f32 1.0, %v2634
    %v2891 = vsub.f32 1.0, %v2635
    %v2892 = vsub.f32 1.0, %v2636
    %v2893 = vsub.f32 1.0, %v2637
    %v2894 = vsub.f32 1.0, %v2638
    %v2895 = vsub.f32 1.0, %v2639
    %v2896 = vsub.f32 1.0, %v2640
    %v2897 = vsub.f32 1.0, %v2641
    %v2898 = vsub.f32 1.0, %v2642
    %v2899 = vsub.f32 1.0, %v2643
    %v2900 = vsub.f32 1.0, %v2644
    %v2901 = vsub.f32 1.0, %v2645
    %v2902 = vsub.f32 1.0, %v2646
    %v2903 = vsub.f32 1.0, %v2647
    %v2904 = vsub.f32 1.0, %v2648
    %v2905 = vsub.f32 1.0, %v2649
    %v2906 = vsub.f32 1.0, %v2650
    %v2907 = vsub.f32 1.0, %v2651
    %v2908 = vsub.f32 1.0, %v2652
    %v2909 = vsub.f32 1.0, %v2653
    %v2910 = vsub.f32 1.0, %v2654
    %v2911 = vsub.f32 1.0, %v2655
    %v2912 = vsub.f32 1.0, %v2656
    %v2913 = vsub.f32 1.0, %v2657
    %v2914 = vsub.f32 1.0, %v2658
    %v2915 = vsub.f32 1.0, %v2659
    %v2916 = vsub.f32 1.0, %v2660
    %v2917 = vsub.f32 1.0, %v2661
    %v2918 = vsub.f32 1.0, %v2662
    %v2919 = vsub.f32 1.0, %v2663
    %v2920 = vsub.f32 1.0, %v2664
    %v2921 = vsub.f32 1.0, %v2665
    %v2922 = vsub.f32 1.0, %v2666
    %v2923 = vsub.f32 1.0, %v2667
    %v2924 = vsub.f32 1.0, %v2668
    %v2925 = vsub.f32 1.0, %v2669
    %v2926 = vsub.f32 1.0, %v2670
    %v2927 = vsub.f32 1.0, %v2671
    %v2928 = vsub.f32 1.0, %v2672
    %v2929 = vsub.f32 1.0, %v2673
    %v2930 = vsub.f32 1.0, %v2674
    %v2931 = vsub.f32 1.0, %v2675
    %v2932 = vsub.f32 1.0, %v2676
    %v2933 = vsub.f32 1.0, %v2677
    %v2934 = vsub.f32 1.0, %v2678
    %v2935 = vsub.f32 1.0, %v2679
    %v2936 = vsub.f32 1.0, %v2680
    %v2937 = vsub.f32 1.0, %v2681
    %v2938 = vsub.f32 1.0, %v2682
    %v2939 = vsub.f32 1.0, %v2683
    %v2940 = vsub.f32 1.0, %v2684
    %v2941 = vsub.f32 1.0, %v2685
    %v2942 = vsub.f32 1.0, %v2686
    %v2943 = vsub.f32 1.0, %v2687
    %v2944 = vsub.f32 1.0, %v2688
    %v2945 = vsub.f32 1.0, %v2689
    %v2946 = vsub.f32 1.0, %v2690
    %v2947 = vsub.f32 1.0, %v2691
    %v2948 = vsub.f32 1.0, %v2692
    %v2949 = vsub.f32 1.0, %v2693
    %v2950 = vsub.f32 1.0, %v2694
    %v2951 = vmax.f32 %v2695, 0.0
    %v2952 = vmax.f32 %v2696, 0.0
    %v2953 = vmax.f32 %v2697, 0.0
    %v2954 = vmax.f32 %v2698, 0.0
    %v2955 = vmax.f32 %v2699, 0.0
    %v2956 = vmax.f32 %v2700, 0.0
    %v2957 = vmax.f32 %v2701, 0.0
    %v2958 = vmax.f32 %v2702, 0.0
    %v2959 = vmax.f32 %v2703, 0.0
    %v2960 = vmax.f32 %v2704, 0.0
    %v2961 = vmax.f32 %v2705, 0.0
    %v2962 = vmax.f32 %v2706, 0.0
    %v2963 = vmax.f32 %v2707, 0.0
    %v2964 = vmax.f32 %v2708, 0.0
    %v2965 = vmax.f32 %v2709, 0.0
    %v2966 = vmax.f32 %v2710, 0.0
    %v2967 = vmax.f32 %v2711, 0.0
    %v2968 = vmax.f32 %v2712, 0.0
    %v2969 = vmax.f32 %v2713, 0.0
    %v2970 = vmax.f32 %v2714, 0.0
    %v2971 = vmax.f32 %v2715, 0.0
    %v2972 = vmax.f32 %v2716, 0.0
    %v2973 = vmax.f32 %v2717, 0.0
    %v2974 = vmax.f32 %v2718, 0.0
    %v2975 = vmax.f32 %v2719, 0.0
    %v2976 = vmax.f32 %v2720, 0.0
    %v2977 = vmax.f32 %v2721, 0.0
    %v2978 = vmax.f32 %v2722, 0.0
    %v2979 = vmax.f32 %v2723, 0.0
    %v2980 = vmax.f32 %v2724, 0.0
    %v2981 = vmax.f32 %v2725, 0.0
    %v2982 = vmax.f32 %v2726, 0.0
    %v2983 = vmax.f32 %v2727, 0.0
    %v2984 = vmax.f32 %v2728, 0.0
    %v2985 = vmax.f32 %v2729, 0.0
    %v2986 = vmax.f32 %v2730, 0.0
    %v2987 = vmax.f32 %v2731, 0.0
    %v2988 = vmax.f32 %v2732, 0.0
    %v2989 = vmax.f32 %v2733, 0.0
    %v2990 = vmax.f32 %v2734, 0.0
    %v2991 = vmax.f32 %v2735, 0.0
    %v2992 = vmax.f32 %v2736, 0.0
    %v2993 = vmax.f32 %v2737, 0.0
    %v2994 = vmax.f32 %v2738, 0.0
    %v2995 = vmax.f32 %v2739, 0.0
    %v2996 = vmax.f32 %v2740, 0.0
    %v2997 = vmax.f32 %v2741, 0.0
    %v2998 = vmax.f32 %v2742, 0.0
    %v2999 = vmax.f32 %v2743, 0.0
    %v3000 = vmax.f32 %v2744, 0.0
    %v3001 = vmax.f32 %v2745, 0.0
    %v3002 = vmax.f32 %v2746, 0.0
    %v3003 = vmax.f32 %v2747, 0.0
    %v3004 = vmax.f32 %v2748, 0.0
    %v3005 = vmax.f32 %v2749, 0.0
    %v3006 = vmax.f32 %v2750, 0.0
    %v3007 = vmax.f32 %v2751, 0.0
    %v3008 = vmax.f32 %v2752, 0.0
    %v3009 = vmax.f32 %v2753, 0.0
    %v3010 = vmax.f32 %v2754, 0.0
    %v3011 = vmax.f32 %v2755, 0.0
    %v3012 = vmax.f32 %v2756, 0.0
    %v3013 = vmax.f32 %v2757, 0.0
    %v3014 = vmax.f32 %v2758, 0.0
    %v3015 = vmax.f32 %v2759, 0.0
    %v3016 = vmax.f32 %v2760, 0.0
    %v3017 = vmax.f32 %v2761, 0.0
    %v3018 = vmax.f32 %v2762, 0.0
    %v3019 = vmax.f32 %v2763, 0.0
    %v3020 = vmax.f32 %v2764, 0.0
    %v3021 = vmax.f32 %v2765, 0.0
    %v3022 = vmax.f32 %v2766, 0.0
    %v3023 = vmax.f32 %v2767, 0.0
    %v3024 = vmax.f32 %v2768, 0.0
    %v3025 = vmax.f32 %v2769, 0.0
    %v3026 = vmax.f32 %v2770, 0.0
    %v3027 = vmax.f32 %v2771, 0.0
    %v3028 = vmax.f32 %v2772, 0.0
    %v3029 = vmax.f32 %v2773, 0.0
    %v3030 = vmax.f32 %v2774, 0.0
    %v3031 = vmax.f32 %v2775, 0.0
    %v3032 = vmax.f32 %v2776, 0.0
    %v3033 = vmax.f32 %v2777, 0.0
    %v3034 = vmax.f32 %v2778, 0.0
    %v3035 = vmax.f32 %v2779, 0.0
    %v3036 = vmax.f32 %v2780, 0.0
    %v3037 = vmax.f32 %v2781, 0.0
    %v3038 = vmax.f32 %v2782, 0.0
    %v3039 = vmax.f32 %v2783, 0.0
    %v3040 = vmax.f32 %v2784, 0.0
    %v3041 = vmax.f32 %v2785, 0.0
    %v3042 = vmax.f32 %v2786, 0.0
    %v3043 = vmax.f32 %v2787, 0.0
    %v3044 = vmax.f32 %v2788, 0.0
    %v3045 = vmax.f32 %v2789, 0.0
    %v3046 = vmax.f32 %v2790, 0.0
    %v3047 = vmax.f32 %v2791, 0.0
    %v3048 = vmax.f32 %v2792, 0.0
    %v3049 = vmax.f32 %v2793, 0.0
    %v3050 = vmax.f32 %v2794, 0.0
    %v3051 = vmax.f32 %v2795, 0.0
    %v3052 = vmax.f32 %v2796, 0.0
    %v3053 = vmax.f32 %v2797, 0.0
    %v3054 = vmax.f32 %v2798, 0.0
    %v3055 = vmax.f32 %v2799, 0.0
    %v3056 = vmax.f32 %v2800, 0.0
    %v3057 = vmax.f32 %v2801, 0.0
    %v3058 = vmax.f32 %v2802, 0.0
    %v3059 = vmax.f32 %v2803, 0.0
    %v3060 = vmax.f32 %v2804, 0.0
    %v3061 = vmax.f32 %v2805, 0.0
    %v3062 = vmax.f32 %v2806, 0.0
    %v3063 = vmax.f32 %v2807, 0.0
    %v3064 = vmax.f32 %v2808, 0.0
    %v3065 = vmax.f32 %v2809, 0.0
    %v3066 = vmax.f32 %v2810, 0.0
    %v3067 = vmax.f32 %v2811, 0.0
    %v3068 = vmax.f32 %v2812, 0.0
    %v3069 = vmax.f32 %v2813, 0.0
    %v3070 = vmax.f32 %v2814, 0.0
    %v3071 = vmax.f32 %v2815, 0.0
    %v3072 = vmax.f32 %v2816, 0.0
    %v3073 = vmax.f32 %v2817, 0.0
    %v3074 = vmax.f32 %v2818, 0.0
    %v3075 = vmax.f32 %v2819, 0.0
    %v3076 = vmax.f32 %v2820, 0.0
    %v3077 = vmax.f32 %v2821, 0.0
    %v3078 = vmax.f32 %v2822, 0.0
    %v3079 = vmax.f32 %v2823, 0.0
    %v3080 = vmax.f32 %v2824, 0.0
    %v3081 = vmax.f32 %v2825, 0.0
    %v3082 = vmax.f32 %v2826, 0.0
    %v3083 = vmax.f32 %v2827, 0.0
    %v3084 = vmax.f32 %v2828, 0.0
    %v3085 = vmax.f32 %v2829, 0.0
    %v3086 = vmax.f32 %v2830, 0.0
    %v3087 = vmax.f32 %v2831, 0.0
    %v3088 = vmax.f32 %v2832, 0.0
    %v3089 = vmax.f32 %v2833, 0.0
    %v3090 = vmax.f32 %v2834, 0.0
    %v3091 = vmax.f32 %v2835, 0.0
    %v3092 = vmax.f32 %v2836, 0.0
    %v3093 = vmax.f32 %v2837, 0.0
    %v3094 = vmax.f32 %v2838, 0.0
    %v3095 = vmax.f32 %v2839, 0.0
    %v3096 = vmax.f32 %v2840, 0.0
    %v3097 = vmax.f32 %v2841, 0.0
    %v3098 = vmax.f32 %v2842, 0.0
    %v3099 = vmax.f32 %v2843, 0.0
    %v3100 = vmax.f32 %v2844, 0.0
    %v3101 = vmax.f32 %v2845, 0.0
    %v3102 = vmax.f32 %v2846, 0.0
    %v3103 = vmax.f32 %v2847, 0.0
    %v3104 = vmax.f32 %v2848, 0.0
    %v3105 = vmax.f32 %v2849, 0.0
    %v3106 = vmax.f32 %v2850, 0.0
    %v3107 = vmax.f32 %v2851, 0.0
    %v3108 = vmax.f32 %v2852, 0.0
    %v3109 = vmax.f32 %v2853, 0.0
    %v3110 = vmax.f32 %v2854, 0.0
    %v3111 = vmax.f32 %v2855, 0.0
    %v3112 = vmax.f32 %v2856, 0.0
    %v3113 = vmax.f32 %v2857, 0.0
    %v3114 = vmax.f32 %v2858, 0.0
    %v3115 = vmax.f32 %v2859, 0.0
    %v3116 = vmax.f32 %v2860, 0.0
    %v3117 = vmax.f32 %v2861, 0.0
    %v3118 = vmax.f32 %v2862, 0.0
    %v3119 = vmax.f32 %v2863, 0.0
    %v3120 = vmax.f32 %v2864, 0.0
    %v3121 = vmax.f32 %v2865, 0.0
    %v3122 = vmax.f32 %v2866, 0.0
    %v3123 = vmax.f32 %v2867, 0.0
    %v3124 = vmax.f32 %v2868, 0.0
    %v3125 = vmax.f32 %v2869, 0.0
    %v3126 = vmax.f32 %v2870, 0.0
    %v3127 = vmax.f32 %v2871, 0.0
    %v3128 = vmax.f32 %v2872, 0.0
    %v3129 = vmax.f32 %v2873, 0.0
    %v3130 = vmax.f32 %v2874, 0.0
    %v3131 = vmax.f32 %v2875, 0.0
    %v3132 = vmax.f32 %v2876, 0.0
    %v3133 = vmax.f32 %v2877, 0.0
    %v3134 = vmax.f32 %v2878, 0.0
    %v3135 = vmax.f32 %v2879, 0.0
    %v3136 = vmax.f32 %v2880, 0.0
    %v3137 = vmax.f32 %v2881, 0.0
    %v3138 = vmax.f32 %v2882, 0.0
    %v3139 = vmax.f32 %v2883, 0.0
    %v3140 = vmax.f32 %v2884, 0.0
    %v3141 = vmax.f32 %v2885, 0.0
    %v3142 = vmax.f32 %v2886, 0.0
    %v3143 = vmax.f32 %v2887, 0.0
    %v3144 = vmax.f32 %v2888, 0.0
    %v3145 = vmax.f32 %v2889, 0.0
    %v3146 = vmax.f32 %v2890, 0.0
    %v3147 = vmax.f32 %v2891, 0.0
    %v3148 = vmax.f32 %v2892, 0.0
    %v3149 = vmax.f32 %v2893, 0.0
    %v3150 = vmax.f32 %v2894, 0.0
    %v3151 = vmax.f32 %v2895, 0.0
    %v3152 = vmax.f32 %v2896, 0.0
    %v3153 = vmax.f32 %v2897, 0.0
    %v3154 = vmax.f32 %v2898, 0.0
    %v3155 = vmax.f32 %v2899, 0.0
    %v3156 = vmax.f32 %v2900, 0.0
    %v3157 = vmax.f32 %v2901, 0.0
    %v3158 = vmax.f32 %v2902, 0.0
    %v3159 = vmax.f32 %v2903, 0.0
    %v3160 = vmax.f32 %v2904, 0.0
    %v3161 = vmax.f32 %v2905, 0.0
    %v3162 = vmax.f32 %v2906, 0.0
    %v3163 = vmax.f32 %v2907, 0.0
    %v3164 = vmax.f32 %v2908, 0.0
    %v3165 = vmax.f32 %v2909, 0.0
    %v3166 = vmax.f32 %v2910, 0.0
    %v3167 = vmax.f32 %v2911, 0.0
    %v3168 = vmax.f32 %v2912, 0.0
    %v3169 = vmax.f32 %v2913, 0.0
    %v3170 = vmax.f32 %v2914, 0.0
    %v3171 = vmax.f32 %v2915, 0.0
    %v3172 = vmax.f32 %v2916, 0.0
    %v3173 = vmax.f32 %v2917, 0.0
    %v3174 = vmax.f32 %v2918, 0.0
    %v3175 = vmax.f32 %v2919, 0.0
    %v3176 = vmax.f32 %v2920, 0.0
    %v3177 = vmax.f32 %v2921, 0.0
    %v3178 = vmax.f32 %v2922, 0.0
    %v3179 = vmax.f32 %v2923, 0.0
    %v3180 = vmax.f32 %v2924, 0.0
    %v3181 = vmax.f32 %v2925, 0.0
    %v3182 = vmax.f32 %v2926, 0.0
    %v3183 = vmax.f32 %v2927, 0.0
    %v3184 = vmax.f32 %v2928, 0.0
    %v3185 = vmax.f32 %v2929, 0.0
    %v3186 = vmax.f32 %v2930, 0.0
    %v3187 = vmax.f32 %v2931, 0.0
    %v3188 = vmax.f32 %v2932, 0.0
    %v3189 = vmax.f32 %v2933, 0.0
    %v3190 = vmax.f32 %v2934, 0.0
    %v3191 = vmax.f32 %v2935, 0.0
    %v3192 = vmax.f32 %v2936, 0.0
    %v3193 = vmax.f32 %v2937, 0.0
    %v3194 = vmax.f32 %v2938, 0.0
    %v3195 = vmax.f32 %v2939, 0.0
    %v3196 = vmax.f32 %v2940, 0.0
    %v3197 = vmax.f32 %v2941, 0.0
    %v3198 = vmax.f32 %v2942, 0.0
    %v3199 = vmax.f32 %v2943, 0.0
    %v3200 = vmax.f32 %v2944, 0.0
    %v3201 = vmax.f32 %v2945, 0.0
    %v3202 = vmax.f32 %v2946, 0.0
    %v3203 = vmax.f32 %v2947, 0.0
    %v3204 = vmax.f32 %v2948, 0.0
    %v3205 = vmax.f32 %v2949, 0.0
    %v3206 = vmax.f32 %v2950, 0.0
    %v3207 = vrsqrt.pop %v2951
    %v3208 = vmul.f32 %v2951, %v3207
    %vm3209 = vcmp.eq.f32.partialorder %v2951, inf
    %v3210 = vsel %vm3209, %v2951, %v3208
    %vm3211 = vcmp.eq.f32.partialorder %v2951, 0.0
    %v3212 = vand.u32 %v2951, 2147483648
    %v3213 = vsel %vm3211, %v3212, %v3210
    %v3214 = vrsqrt.pop %v2952
    %v3215 = vmul.f32 %v2952, %v3214
    %vm3216 = vcmp.eq.f32.partialorder %v2952, inf
    %v3217 = vsel %vm3216, %v2952, %v3215
    %vm3218 = vcmp.eq.f32.partialorder %v2952, 0.0
    %v3219 = vand.u32 %v2952, 2147483648
    %v3220 = vsel %vm3218, %v3219, %v3217
    %v3221 = vrsqrt.pop %v2953
    %v3222 = vmul.f32 %v2953, %v3221
    %vm3223 = vcmp.eq.f32.partialorder %v2953, inf
    %v3224 = vsel %vm3223, %v2953, %v3222
    %vm3225 = vcmp.eq.f32.partialorder %v2953, 0.0
    %v3226 = vand.u32 %v2953, 2147483648
    %v3227 = vsel %vm3225, %v3226, %v3224
    %v3228 = vrsqrt.pop %v2954
    %v3229 = vmul.f32 %v2954, %v3228
    %vm3230 = vcmp.eq.f32.partialorder %v2954, inf
    %v3231 = vsel %vm3230, %v2954, %v3229
    %vm3232 = vcmp.eq.f32.partialorder %v2954, 0.0
    %v3233 = vand.u32 %v2954, 2147483648
    %v3234 = vsel %vm3232, %v3233, %v3231
    %v3235 = vrsqrt.pop %v2955
    %v3236 = vmul.f32 %v2955, %v3235
    %vm3237 = vcmp.eq.f32.partialorder %v2955, inf
    %v3238 = vsel %vm3237, %v2955, %v3236
    %vm3239 = vcmp.eq.f32.partialorder %v2955, 0.0
    %v3240 = vand.u32 %v2955, 2147483648
    %v3241 = vsel %vm3239, %v3240, %v3238
    %v3242 = vrsqrt.pop %v2956
    %v3243 = vmul.f32 %v2956, %v3242
    %vm3244 = vcmp.eq.f32.partialorder %v2956, inf
    %v3245 = vsel %vm3244, %v2956, %v3243
    %vm3246 = vcmp.eq.f32.partialorder %v2956, 0.0
    %v3247 = vand.u32 %v2956, 2147483648
    %v3248 = vsel %vm3246, %v3247, %v3245
    %v3249 = vrsqrt.pop %v2957
    %v3250 = vmul.f32 %v2957, %v3249
    %vm3251 = vcmp.eq.f32.partialorder %v2957, inf
    %v3252 = vsel %vm3251, %v2957, %v3250
    %vm3253 = vcmp.eq.f32.partialorder %v2957, 0.0
    %v3254 = vand.u32 %v2957, 2147483648
    %v3255 = vsel %vm3253, %v3254, %v3252
    %v3256 = vrsqrt.pop %v2958
    %v3257 = vmul.f32 %v2958, %v3256
    %vm3258 = vcmp.eq.f32.partialorder %v2958, inf
    %v3259 = vsel %vm3258, %v2958, %v3257
    %vm3260 = vcmp.eq.f32.partialorder %v2958, 0.0
    %v3261 = vand.u32 %v2958, 2147483648
    %v3262 = vsel %vm3260, %v3261, %v3259
    %v3263 = vrsqrt.pop %v2959
    %v3264 = vmul.f32 %v2959, %v3263
    %vm3265 = vcmp.eq.f32.partialorder %v2959, inf
    %v3266 = vsel %vm3265, %v2959, %v3264
    %vm3267 = vcmp.eq.f32.partialorder %v2959, 0.0
    %v3268 = vand.u32 %v2959, 2147483648
    %v3269 = vsel %vm3267, %v3268, %v3266
    %v3270 = vrsqrt.pop %v2960
    %v3271 = vmul.f32 %v2960, %v3270
    %vm3272 = vcmp.eq.f32.partialorder %v2960, inf
    %v3273 = vsel %vm3272, %v2960, %v3271
    %vm3274 = vcmp.eq.f32.partialorder %v2960, 0.0
    %v3275 = vand.u32 %v2960, 2147483648
    %v3276 = vsel %vm3274, %v3275, %v3273
    %v3277 = vrsqrt.pop %v2961
    %v3278 = vmul.f32 %v2961, %v3277
    %vm3279 = vcmp.eq.f32.partialorder %v2961, inf
    %v3280 = vsel %vm3279, %v2961, %v3278
    %vm3281 = vcmp.eq.f32.partialorder %v2961, 0.0
    %v3282 = vand.u32 %v2961, 2147483648
    %v3283 = vsel %vm3281, %v3282, %v3280
    %v3284 = vrsqrt.pop %v2962
    %v3285 = vmul.f32 %v2962, %v3284
    %vm3286 = vcmp.eq.f32.partialorder %v2962, inf
    %v3287 = vsel %vm3286, %v2962, %v3285
    %vm3288 = vcmp.eq.f32.partialorder %v2962, 0.0
    %v3289 = vand.u32 %v2962, 2147483648
    %v3290 = vsel %vm3288, %v3289, %v3287
    %v3291 = vrsqrt.pop %v2963
    %v3292 = vmul.f32 %v2963, %v3291
    %vm3293 = vcmp.eq.f32.partialorder %v2963, inf
    %v3294 = vsel %vm3293, %v2963, %v3292
    %vm3295 = vcmp.eq.f32.partialorder %v2963, 0.0
    %v3296 = vand.u32 %v2963, 2147483648
    %v3297 = vsel %vm3295, %v3296, %v3294
    %v3298 = vrsqrt.pop %v2964
    %v3299 = vmul.f32 %v2964, %v3298
    %vm3300 = vcmp.eq.f32.partialorder %v2964, inf
    %v3301 = vsel %vm3300, %v2964, %v3299
    %vm3302 = vcmp.eq.f32.partialorder %v2964, 0.0
    %v3303 = vand.u32 %v2964, 2147483648
    %v3304 = vsel %vm3302, %v3303, %v3301
    %v3305 = vrsqrt.pop %v2965
    %v3306 = vmul.f32 %v2965, %v3305
    %vm3307 = vcmp.eq.f32.partialorder %v2965, inf
    %v3308 = vsel %vm3307, %v2965, %v3306
    %vm3309 = vcmp.eq.f32.partialorder %v2965, 0.0
    %v3310 = vand.u32 %v2965, 2147483648
    %v3311 = vsel %vm3309, %v3310, %v3308
    %v3312 = vrsqrt.pop %v2966
    %v3313 = vmul.f32 %v2966, %v3312
    %vm3314 = vcmp.eq.f32.partialorder %v2966, inf
    %v3315 = vsel %vm3314, %v2966, %v3313
    %vm3316 = vcmp.eq.f32.partialorder %v2966, 0.0
    %v3317 = vand.u32 %v2966, 2147483648
    %v3318 = vsel %vm3316, %v3317, %v3315
    %v3319 = vrsqrt.pop %v2967
    %v3320 = vmul.f32 %v2967, %v3319
    %vm3321 = vcmp.eq.f32.partialorder %v2967, inf
    %v3322 = vsel %vm3321, %v2967, %v3320
    %vm3323 = vcmp.eq.f32.partialorder %v2967, 0.0
    %v3324 = vand.u32 %v2967, 2147483648
    %v3325 = vsel %vm3323, %v3324, %v3322
    %v3326 = vrsqrt.pop %v2968
    %v3327 = vmul.f32 %v2968, %v3326
    %vm3328 = vcmp.eq.f32.partialorder %v2968, inf
    %v3329 = vsel %vm3328, %v2968, %v3327
    %vm3330 = vcmp.eq.f32.partialorder %v2968, 0.0
    %v3331 = vand.u32 %v2968, 2147483648
    %v3332 = vsel %vm3330, %v3331, %v3329
    %v3333 = vrsqrt.pop %v2969
    %v3334 = vmul.f32 %v2969, %v3333
    %vm3335 = vcmp.eq.f32.partialorder %v2969, inf
    %v3336 = vsel %vm3335, %v2969, %v3334
    %vm3337 = vcmp.eq.f32.partialorder %v2969, 0.0
    %v3338 = vand.u32 %v2969, 2147483648
    %v3339 = vsel %vm3337, %v3338, %v3336
    %v3340 = vrsqrt.pop %v2970
    %v3341 = vmul.f32 %v2970, %v3340
    %vm3342 = vcmp.eq.f32.partialorder %v2970, inf
    %v3343 = vsel %vm3342, %v2970, %v3341
    %vm3344 = vcmp.eq.f32.partialorder %v2970, 0.0
    %v3345 = vand.u32 %v2970, 2147483648
    %v3346 = vsel %vm3344, %v3345, %v3343
    %v3347 = vrsqrt.pop %v2971
    %v3348 = vmul.f32 %v2971, %v3347
    %vm3349 = vcmp.eq.f32.partialorder %v2971, inf
    %v3350 = vsel %vm3349, %v2971, %v3348
    %vm3351 = vcmp.eq.f32.partialorder %v2971, 0.0
    %v3352 = vand.u32 %v2971, 2147483648
    %v3353 = vsel %vm3351, %v3352, %v3350
    %v3354 = vrsqrt.pop %v2972
    %v3355 = vmul.f32 %v2972, %v3354
    %vm3356 = vcmp.eq.f32.partialorder %v2972, inf
    %v3357 = vsel %vm3356, %v2972, %v3355
    %vm3358 = vcmp.eq.f32.partialorder %v2972, 0.0
    %v3359 = vand.u32 %v2972, 2147483648
    %v3360 = vsel %vm3358, %v3359, %v3357
    %v3361 = vrsqrt.pop %v2973
    %v3362 = vmul.f32 %v2973, %v3361
    %vm3363 = vcmp.eq.f32.partialorder %v2973, inf
    %v3364 = vsel %vm3363, %v2973, %v3362
    %vm3365 = vcmp.eq.f32.partialorder %v2973, 0.0
    %v3366 = vand.u32 %v2973, 2147483648
    %v3367 = vsel %vm3365, %v3366, %v3364
    %v3368 = vrsqrt.pop %v2974
    %v3369 = vmul.f32 %v2974, %v3368
    %vm3370 = vcmp.eq.f32.partialorder %v2974, inf
    %v3371 = vsel %vm3370, %v2974, %v3369
    %vm3372 = vcmp.eq.f32.partialorder %v2974, 0.0
    %v3373 = vand.u32 %v2974, 2147483648
    %v3374 = vsel %vm3372, %v3373, %v3371
    %v3375 = vrsqrt.pop %v2975
    %v3376 = vmul.f32 %v2975, %v3375
    %vm3377 = vcmp.eq.f32.partialorder %v2975, inf
    %v3378 = vsel %vm3377, %v2975, %v3376
    %vm3379 = vcmp.eq.f32.partialorder %v2975, 0.0
    %v3380 = vand.u32 %v2975, 2147483648
    %v3381 = vsel %vm3379, %v3380, %v3378
    %v3382 = vrsqrt.pop %v2976
    %v3383 = vmul.f32 %v2976, %v3382
    %vm3384 = vcmp.eq.f32.partialorder %v2976, inf
    %v3385 = vsel %vm3384, %v2976, %v3383
    %vm3386 = vcmp.eq.f32.partialorder %v2976, 0.0
    %v3387 = vand.u32 %v2976, 2147483648
    %v3388 = vsel %vm3386, %v3387, %v3385
    %v3389 = vrsqrt.pop %v2977
    %v3390 = vmul.f32 %v2977, %v3389
    %vm3391 = vcmp.eq.f32.partialorder %v2977, inf
    %v3392 = vsel %vm3391, %v2977, %v3390
    %vm3393 = vcmp.eq.f32.partialorder %v2977, 0.0
    %v3394 = vand.u32 %v2977, 2147483648
    %v3395 = vsel %vm3393, %v3394, %v3392
    %v3396 = vrsqrt.pop %v2978
    %v3397 = vmul.f32 %v2978, %v3396
    %vm3398 = vcmp.eq.f32.partialorder %v2978, inf
    %v3399 = vsel %vm3398, %v2978, %v3397
    %vm3400 = vcmp.eq.f32.partialorder %v2978, 0.0
    %v3401 = vand.u32 %v2978, 2147483648
    %v3402 = vsel %vm3400, %v3401, %v3399
    %v3403 = vrsqrt.pop %v2979
    %v3404 = vmul.f32 %v2979, %v3403
    %vm3405 = vcmp.eq.f32.partialorder %v2979, inf
    %v3406 = vsel %vm3405, %v2979, %v3404
    %vm3407 = vcmp.eq.f32.partialorder %v2979, 0.0
    %v3408 = vand.u32 %v2979, 2147483648
    %v3409 = vsel %vm3407, %v3408, %v3406
    %v3410 = vrsqrt.pop %v2980
    %v3411 = vmul.f32 %v2980, %v3410
    %vm3412 = vcmp.eq.f32.partialorder %v2980, inf
    %v3413 = vsel %vm3412, %v2980, %v3411
    %vm3414 = vcmp.eq.f32.partialorder %v2980, 0.0
    %v3415 = vand.u32 %v2980, 2147483648
    %v3416 = vsel %vm3414, %v3415, %v3413
    %v3417 = vrsqrt.pop %v2981
    %v3418 = vmul.f32 %v2981, %v3417
    %vm3419 = vcmp.eq.f32.partialorder %v2981, inf
    %v3420 = vsel %vm3419, %v2981, %v3418
    %vm3421 = vcmp.eq.f32.partialorder %v2981, 0.0
    %v3422 = vand.u32 %v2981, 2147483648
    %v3423 = vsel %vm3421, %v3422, %v3420
    %v3424 = vrsqrt.pop %v2982
    %v3425 = vmul.f32 %v2982, %v3424
    %vm3426 = vcmp.eq.f32.partialorder %v2982, inf
    %v3427 = vsel %vm3426, %v2982, %v3425
    %vm3428 = vcmp.eq.f32.partialorder %v2982, 0.0
    %v3429 = vand.u32 %v2982, 2147483648
    %v3430 = vsel %vm3428, %v3429, %v3427
    %v3431 = vrsqrt.pop %v2983
    %v3432 = vmul.f32 %v2983, %v3431
    %vm3433 = vcmp.eq.f32.partialorder %v2983, inf
    %v3434 = vsel %vm3433, %v2983, %v3432
    %vm3435 = vcmp.eq.f32.partialorder %v2983, 0.0
    %v3436 = vand.u32 %v2983, 2147483648
    %v3437 = vsel %vm3435, %v3436, %v3434
    %v3438 = vrsqrt.pop %v2984
    %v3439 = vmul.f32 %v2984, %v3438
    %vm3440 = vcmp.eq.f32.partialorder %v2984, inf
    %v3441 = vsel %vm3440, %v2984, %v3439
    %vm3442 = vcmp.eq.f32.partialorder %v2984, 0.0
    %v3443 = vand.u32 %v2984, 2147483648
    %v3444 = vsel %vm3442, %v3443, %v3441
    %v3445 = vrsqrt.pop %v2985
    %v3446 = vmul.f32 %v2985, %v3445
    %vm3447 = vcmp.eq.f32.partialorder %v2985, inf
    %v3448 = vsel %vm3447, %v2985, %v3446
    %vm3449 = vcmp.eq.f32.partialorder %v2985, 0.0
    %v3450 = vand.u32 %v2985, 2147483648
    %v3451 = vsel %vm3449, %v3450, %v3448
    %v3452 = vrsqrt.pop %v2986
    %v3453 = vmul.f32 %v2986, %v3452
    %vm3454 = vcmp.eq.f32.partialorder %v2986, inf
    %v3455 = vsel %vm3454, %v2986, %v3453
    %vm3456 = vcmp.eq.f32.partialorder %v2986, 0.0
    %v3457 = vand.u32 %v2986, 2147483648
    %v3458 = vsel %vm3456, %v3457, %v3455
    %v3459 = vrsqrt.pop %v2987
    %v3460 = vmul.f32 %v2987, %v3459
    %vm3461 = vcmp.eq.f32.partialorder %v2987, inf
    %v3462 = vsel %vm3461, %v2987, %v3460
    %vm3463 = vcmp.eq.f32.partialorder %v2987, 0.0
    %v3464 = vand.u32 %v2987, 2147483648
    %v3465 = vsel %vm3463, %v3464, %v3462
    %v3466 = vrsqrt.pop %v2988
    %v3467 = vmul.f32 %v2988, %v3466
    %vm3468 = vcmp.eq.f32.partialorder %v2988, inf
    %v3469 = vsel %vm3468, %v2988, %v3467
    %vm3470 = vcmp.eq.f32.partialorder %v2988, 0.0
    %v3471 = vand.u32 %v2988, 2147483648
    %v3472 = vsel %vm3470, %v3471, %v3469
    %v3473 = vrsqrt.pop %v2989
    %v3474 = vmul.f32 %v2989, %v3473
    %vm3475 = vcmp.eq.f32.partialorder %v2989, inf
    %v3476 = vsel %vm3475, %v2989, %v3474
    %vm3477 = vcmp.eq.f32.partialorder %v2989, 0.0
    %v3478 = vand.u32 %v2989, 2147483648
    %v3479 = vsel %vm3477, %v3478, %v3476
    %v3480 = vrsqrt.pop %v2990
    %v3481 = vmul.f32 %v2990, %v3480
    %vm3482 = vcmp.eq.f32.partialorder %v2990, inf
    %v3483 = vsel %vm3482, %v2990, %v3481
    %vm3484 = vcmp.eq.f32.partialorder %v2990, 0.0
    %v3485 = vand.u32 %v2990, 2147483648
    %v3486 = vsel %vm3484, %v3485, %v3483
    %v3487 = vrsqrt.pop %v2991
    %v3488 = vmul.f32 %v2991, %v3487
    %vm3489 = vcmp.eq.f32.partialorder %v2991, inf
    %v3490 = vsel %vm3489, %v2991, %v3488
    %vm3491 = vcmp.eq.f32.partialorder %v2991, 0.0
    %v3492 = vand.u32 %v2991, 2147483648
    %v3493 = vsel %vm3491, %v3492, %v3490
    %v3494 = vrsqrt.pop %v2992
    %v3495 = vmul.f32 %v2992, %v3494
    %vm3496 = vcmp.eq.f32.partialorder %v2992, inf
    %v3497 = vsel %vm3496, %v2992, %v3495
    %vm3498 = vcmp.eq.f32.partialorder %v2992, 0.0
    %v3499 = vand.u32 %v2992, 2147483648
    %v3500 = vsel %vm3498, %v3499, %v3497
    %v3501 = vrsqrt.pop %v2993
    %v3502 = vmul.f32 %v2993, %v3501
    %vm3503 = vcmp.eq.f32.partialorder %v2993, inf
    %v3504 = vsel %vm3503, %v2993, %v3502
    %vm3505 = vcmp.eq.f32.partialorder %v2993, 0.0
    %v3506 = vand.u32 %v2993, 2147483648
    %v3507 = vsel %vm3505, %v3506, %v3504
    %v3508 = vrsqrt.pop %v2994
    %v3509 = vmul.f32 %v2994, %v3508
    %vm3510 = vcmp.eq.f32.partialorder %v2994, inf
    %v3511 = vsel %vm3510, %v2994, %v3509
    %vm3512 = vcmp.eq.f32.partialorder %v2994, 0.0
    %v3513 = vand.u32 %v2994, 2147483648
    %v3514 = vsel %vm3512, %v3513, %v3511
    %v3515 = vrsqrt.pop %v2995
    %v3516 = vmul.f32 %v2995, %v3515
    %vm3517 = vcmp.eq.f32.partialorder %v2995, inf
    %v3518 = vsel %vm3517, %v2995, %v3516
    %vm3519 = vcmp.eq.f32.partialorder %v2995, 0.0
    %v3520 = vand.u32 %v2995, 2147483648
    %v3521 = vsel %vm3519, %v3520, %v3518
    %v3522 = vrsqrt.pop %v2996
    %v3523 = vmul.f32 %v2996, %v3522
    %vm3524 = vcmp.eq.f32.partialorder %v2996, inf
    %v3525 = vsel %vm3524, %v2996, %v3523
    %vm3526 = vcmp.eq.f32.partialorder %v2996, 0.0
    %v3527 = vand.u32 %v2996, 2147483648
    %v3528 = vsel %vm3526, %v3527, %v3525
    %v3529 = vrsqrt.pop %v2997
    %v3530 = vmul.f32 %v2997, %v3529
    %vm3531 = vcmp.eq.f32.partialorder %v2997, inf
    %v3532 = vsel %vm3531, %v2997, %v3530
    %vm3533 = vcmp.eq.f32.partialorder %v2997, 0.0
    %v3534 = vand.u32 %v2997, 2147483648
    %v3535 = vsel %vm3533, %v3534, %v3532
    %v3536 = vrsqrt.pop %v2998
    %v3537 = vmul.f32 %v2998, %v3536
    %vm3538 = vcmp.eq.f32.partialorder %v2998, inf
    %v3539 = vsel %vm3538, %v2998, %v3537
    %vm3540 = vcmp.eq.f32.partialorder %v2998, 0.0
    %v3541 = vand.u32 %v2998, 2147483648
    %v3542 = vsel %vm3540, %v3541, %v3539
    %v3543 = vrsqrt.pop %v2999
    %v3544 = vmul.f32 %v2999, %v3543
    %vm3545 = vcmp.eq.f32.partialorder %v2999, inf
    %v3546 = vsel %vm3545, %v2999, %v3544
    %vm3547 = vcmp.eq.f32.partialorder %v2999, 0.0
    %v3548 = vand.u32 %v2999, 2147483648
    %v3549 = vsel %vm3547, %v3548, %v3546
    %v3550 = vrsqrt.pop %v3000
    %v3551 = vmul.f32 %v3000, %v3550
    %vm3552 = vcmp.eq.f32.partialorder %v3000, inf
    %v3553 = vsel %vm3552, %v3000, %v3551
    %vm3554 = vcmp.eq.f32.partialorder %v3000, 0.0
    %v3555 = vand.u32 %v3000, 2147483648
    %v3556 = vsel %vm3554, %v3555, %v3553
    %v3557 = vrsqrt.pop %v3001
    %v3558 = vmul.f32 %v3001, %v3557
    %vm3559 = vcmp.eq.f32.partialorder %v3001, inf
    %v3560 = vsel %vm3559, %v3001, %v3558
    %vm3561 = vcmp.eq.f32.partialorder %v3001, 0.0
    %v3562 = vand.u32 %v3001, 2147483648
    %v3563 = vsel %vm3561, %v3562, %v3560
    %v3564 = vrsqrt.pop %v3002
    %v3565 = vmul.f32 %v3002, %v3564
    %vm3566 = vcmp.eq.f32.partialorder %v3002, inf
    %v3567 = vsel %vm3566, %v3002, %v3565
    %vm3568 = vcmp.eq.f32.partialorder %v3002, 0.0
    %v3569 = vand.u32 %v3002, 2147483648
    %v3570 = vsel %vm3568, %v3569, %v3567
    %v3571 = vrsqrt.pop %v3003
    %v3572 = vmul.f32 %v3003, %v3571
    %vm3573 = vcmp.eq.f32.partialorder %v3003, inf
    %v3574 = vsel %vm3573, %v3003, %v3572
    %vm3575 = vcmp.eq.f32.partialorder %v3003, 0.0
    %v3576 = vand.u32 %v3003, 2147483648
    %v3577 = vsel %vm3575, %v3576, %v3574
    %v3578 = vrsqrt.pop %v3004
    %v3579 = vmul.f32 %v3004, %v3578
    %vm3580 = vcmp.eq.f32.partialorder %v3004, inf
    %v3581 = vsel %vm3580, %v3004, %v3579
    %vm3582 = vcmp.eq.f32.partialorder %v3004, 0.0
    %v3583 = vand.u32 %v3004, 2147483648
    %v3584 = vsel %vm3582, %v3583, %v3581
    %v3585 = vrsqrt.pop %v3005
    %v3586 = vmul.f32 %v3005, %v3585
    %vm3587 = vcmp.eq.f32.partialorder %v3005, inf
    %v3588 = vsel %vm3587, %v3005, %v3586
    %vm3589 = vcmp.eq.f32.partialorder %v3005, 0.0
    %v3590 = vand.u32 %v3005, 2147483648
    %v3591 = vsel %vm3589, %v3590, %v3588
    %v3592 = vrsqrt.pop %v3006
    %v3593 = vmul.f32 %v3006, %v3592
    %vm3594 = vcmp.eq.f32.partialorder %v3006, inf
    %v3595 = vsel %vm3594, %v3006, %v3593
    %vm3596 = vcmp.eq.f32.partialorder %v3006, 0.0
    %v3597 = vand.u32 %v3006, 2147483648
    %v3598 = vsel %vm3596, %v3597, %v3595
    %v3599 = vrsqrt.pop %v3007
    %v3600 = vmul.f32 %v3007, %v3599
    %vm3601 = vcmp.eq.f32.partialorder %v3007, inf
    %v3602 = vsel %vm3601, %v3007, %v3600
    %vm3603 = vcmp.eq.f32.partialorder %v3007, 0.0
    %v3604 = vand.u32 %v3007, 2147483648
    %v3605 = vsel %vm3603, %v3604, %v3602
    %v3606 = vrsqrt.pop %v3008
    %v3607 = vmul.f32 %v3008, %v3606
    %vm3608 = vcmp.eq.f32.partialorder %v3008, inf
    %v3609 = vsel %vm3608, %v3008, %v3607
    %vm3610 = vcmp.eq.f32.partialorder %v3008, 0.0
    %v3611 = vand.u32 %v3008, 2147483648
    %v3612 = vsel %vm3610, %v3611, %v3609
    %v3613 = vrsqrt.pop %v3009
    %v3614 = vmul.f32 %v3009, %v3613
    %vm3615 = vcmp.eq.f32.partialorder %v3009, inf
    %v3616 = vsel %vm3615, %v3009, %v3614
    %vm3617 = vcmp.eq.f32.partialorder %v3009, 0.0
    %v3618 = vand.u32 %v3009, 2147483648
    %v3619 = vsel %vm3617, %v3618, %v3616
    %v3620 = vrsqrt.pop %v3010
    %v3621 = vmul.f32 %v3010, %v3620
    %vm3622 = vcmp.eq.f32.partialorder %v3010, inf
    %v3623 = vsel %vm3622, %v3010, %v3621
    %vm3624 = vcmp.eq.f32.partialorder %v3010, 0.0
    %v3625 = vand.u32 %v3010, 2147483648
    %v3626 = vsel %vm3624, %v3625, %v3623
    %v3627 = vrsqrt.pop %v3011
    %v3628 = vmul.f32 %v3011, %v3627
    %vm3629 = vcmp.eq.f32.partialorder %v3011, inf
    %v3630 = vsel %vm3629, %v3011, %v3628
    %vm3631 = vcmp.eq.f32.partialorder %v3011, 0.0
    %v3632 = vand.u32 %v3011, 2147483648
    %v3633 = vsel %vm3631, %v3632, %v3630
    %v3634 = vrsqrt.pop %v3012
    %v3635 = vmul.f32 %v3012, %v3634
    %vm3636 = vcmp.eq.f32.partialorder %v3012, inf
    %v3637 = vsel %vm3636, %v3012, %v3635
    %vm3638 = vcmp.eq.f32.partialorder %v3012, 0.0
    %v3639 = vand.u32 %v3012, 2147483648
    %v3640 = vsel %vm3638, %v3639, %v3637
    %v3641 = vrsqrt.pop %v3013
    %v3642 = vmul.f32 %v3013, %v3641
    %vm3643 = vcmp.eq.f32.partialorder %v3013, inf
    %v3644 = vsel %vm3643, %v3013, %v3642
    %vm3645 = vcmp.eq.f32.partialorder %v3013, 0.0
    %v3646 = vand.u32 %v3013, 2147483648
    %v3647 = vsel %vm3645, %v3646, %v3644
    %v3648 = vrsqrt.pop %v3014
    %v3649 = vmul.f32 %v3014, %v3648
    %vm3650 = vcmp.eq.f32.partialorder %v3014, inf
    %v3651 = vsel %vm3650, %v3014, %v3649
    %vm3652 = vcmp.eq.f32.partialorder %v3014, 0.0
    %v3653 = vand.u32 %v3014, 2147483648
    %v3654 = vsel %vm3652, %v3653, %v3651
    %v3655 = vrsqrt.pop %v3015
    %v3656 = vmul.f32 %v3015, %v3655
    %vm3657 = vcmp.eq.f32.partialorder %v3015, inf
    %v3658 = vsel %vm3657, %v3015, %v3656
    %vm3659 = vcmp.eq.f32.partialorder %v3015, 0.0
    %v3660 = vand.u32 %v3015, 2147483648
    %v3661 = vsel %vm3659, %v3660, %v3658
    %v3662 = vrsqrt.pop %v3016
    %v3663 = vmul.f32 %v3016, %v3662
    %vm3664 = vcmp.eq.f32.partialorder %v3016, inf
    %v3665 = vsel %vm3664, %v3016, %v3663
    %vm3666 = vcmp.eq.f32.partialorder %v3016, 0.0
    %v3667 = vand.u32 %v3016, 2147483648
    %v3668 = vsel %vm3666, %v3667, %v3665
    %v3669 = vrsqrt.pop %v3017
    %v3670 = vmul.f32 %v3017, %v3669
    %vm3671 = vcmp.eq.f32.partialorder %v3017, inf
    %v3672 = vsel %vm3671, %v3017, %v3670
    %vm3673 = vcmp.eq.f32.partialorder %v3017, 0.0
    %v3674 = vand.u32 %v3017, 2147483648
    %v3675 = vsel %vm3673, %v3674, %v3672
    %v3676 = vrsqrt.pop %v3018
    %v3677 = vmul.f32 %v3018, %v3676
    %vm3678 = vcmp.eq.f32.partialorder %v3018, inf
    %v3679 = vsel %vm3678, %v3018, %v3677
    %vm3680 = vcmp.eq.f32.partialorder %v3018, 0.0
    %v3681 = vand.u32 %v3018, 2147483648
    %v3682 = vsel %vm3680, %v3681, %v3679
    %v3683 = vrsqrt.pop %v3019
    %v3684 = vmul.f32 %v3019, %v3683
    %vm3685 = vcmp.eq.f32.partialorder %v3019, inf
    %v3686 = vsel %vm3685, %v3019, %v3684
    %vm3687 = vcmp.eq.f32.partialorder %v3019, 0.0
    %v3688 = vand.u32 %v3019, 2147483648
    %v3689 = vsel %vm3687, %v3688, %v3686
    %v3690 = vrsqrt.pop %v3020
    %v3691 = vmul.f32 %v3020, %v3690
    %vm3692 = vcmp.eq.f32.partialorder %v3020, inf
    %v3693 = vsel %vm3692, %v3020, %v3691
    %vm3694 = vcmp.eq.f32.partialorder %v3020, 0.0
    %v3695 = vand.u32 %v3020, 2147483648
    %v3696 = vsel %vm3694, %v3695, %v3693
    %v3697 = vrsqrt.pop %v3021
    %v3698 = vmul.f32 %v3021, %v3697
    %vm3699 = vcmp.eq.f32.partialorder %v3021, inf
    %v3700 = vsel %vm3699, %v3021, %v3698
    %vm3701 = vcmp.eq.f32.partialorder %v3021, 0.0
    %v3702 = vand.u32 %v3021, 2147483648
    %v3703 = vsel %vm3701, %v3702, %v3700
    %v3704 = vrsqrt.pop %v3022
    %v3705 = vmul.f32 %v3022, %v3704
    %vm3706 = vcmp.eq.f32.partialorder %v3022, inf
    %v3707 = vsel %vm3706, %v3022, %v3705
    %vm3708 = vcmp.eq.f32.partialorder %v3022, 0.0
    %v3709 = vand.u32 %v3022, 2147483648
    %v3710 = vsel %vm3708, %v3709, %v3707
    %v3711 = vrsqrt.pop %v3023
    %v3712 = vmul.f32 %v3023, %v3711
    %vm3713 = vcmp.eq.f32.partialorder %v3023, inf
    %v3714 = vsel %vm3713, %v3023, %v3712
    %vm3715 = vcmp.eq.f32.partialorder %v3023, 0.0
    %v3716 = vand.u32 %v3023, 2147483648
    %v3717 = vsel %vm3715, %v3716, %v3714
    %v3718 = vrsqrt.pop %v3024
    %v3719 = vmul.f32 %v3024, %v3718
    %vm3720 = vcmp.eq.f32.partialorder %v3024, inf
    %v3721 = vsel %vm3720, %v3024, %v3719
    %vm3722 = vcmp.eq.f32.partialorder %v3024, 0.0
    %v3723 = vand.u32 %v3024, 2147483648
    %v3724 = vsel %vm3722, %v3723, %v3721
    %v3725 = vrsqrt.pop %v3025
    %v3726 = vmul.f32 %v3025, %v3725
    %vm3727 = vcmp.eq.f32.partialorder %v3025, inf
    %v3728 = vsel %vm3727, %v3025, %v3726
    %vm3729 = vcmp.eq.f32.partialorder %v3025, 0.0
    %v3730 = vand.u32 %v3025, 2147483648
    %v3731 = vsel %vm3729, %v3730, %v3728
    %v3732 = vrsqrt.pop %v3026
    %v3733 = vmul.f32 %v3026, %v3732
    %vm3734 = vcmp.eq.f32.partialorder %v3026, inf
    %v3735 = vsel %vm3734, %v3026, %v3733
    %vm3736 = vcmp.eq.f32.partialorder %v3026, 0.0
    %v3737 = vand.u32 %v3026, 2147483648
    %v3738 = vsel %vm3736, %v3737, %v3735
    %v3739 = vrsqrt.pop %v3027
    %v3740 = vmul.f32 %v3027, %v3739
    %vm3741 = vcmp.eq.f32.partialorder %v3027, inf
    %v3742 = vsel %vm3741, %v3027, %v3740
    %vm3743 = vcmp.eq.f32.partialorder %v3027, 0.0
    %v3744 = vand.u32 %v3027, 2147483648
    %v3745 = vsel %vm3743, %v3744, %v3742
    %v3746 = vrsqrt.pop %v3028
    %v3747 = vmul.f32 %v3028, %v3746
    %vm3748 = vcmp.eq.f32.partialorder %v3028, inf
    %v3749 = vsel %vm3748, %v3028, %v3747
    %vm3750 = vcmp.eq.f32.partialorder %v3028, 0.0
    %v3751 = vand.u32 %v3028, 2147483648
    %v3752 = vsel %vm3750, %v3751, %v3749
    %v3753 = vrsqrt.pop %v3029
    %v3754 = vmul.f32 %v3029, %v3753
    %vm3755 = vcmp.eq.f32.partialorder %v3029, inf
    %v3756 = vsel %vm3755, %v3029, %v3754
    %vm3757 = vcmp.eq.f32.partialorder %v3029, 0.0
    %v3758 = vand.u32 %v3029, 2147483648
    %v3759 = vsel %vm3757, %v3758, %v3756
    %v3760 = vrsqrt.pop %v3030
    %v3761 = vmul.f32 %v3030, %v3760
    %vm3762 = vcmp.eq.f32.partialorder %v3030, inf
    %v3763 = vsel %vm3762, %v3030, %v3761
    %vm3764 = vcmp.eq.f32.partialorder %v3030, 0.0
    %v3765 = vand.u32 %v3030, 2147483648
    %v3766 = vsel %vm3764, %v3765, %v3763
    %v3767 = vrsqrt.pop %v3031
    %v3768 = vmul.f32 %v3031, %v3767
    %vm3769 = vcmp.eq.f32.partialorder %v3031, inf
    %v3770 = vsel %vm3769, %v3031, %v3768
    %vm3771 = vcmp.eq.f32.partialorder %v3031, 0.0
    %v3772 = vand.u32 %v3031, 2147483648
    %v3773 = vsel %vm3771, %v3772, %v3770
    %v3774 = vrsqrt.pop %v3032
    %v3775 = vmul.f32 %v3032, %v3774
    %vm3776 = vcmp.eq.f32.partialorder %v3032, inf
    %v3777 = vsel %vm3776, %v3032, %v3775
    %vm3778 = vcmp.eq.f32.partialorder %v3032, 0.0
    %v3779 = vand.u32 %v3032, 2147483648
    %v3780 = vsel %vm3778, %v3779, %v3777
    %v3781 = vrsqrt.pop %v3033
    %v3782 = vmul.f32 %v3033, %v3781
    %vm3783 = vcmp.eq.f32.partialorder %v3033, inf
    %v3784 = vsel %vm3783, %v3033, %v3782
    %vm3785 = vcmp.eq.f32.partialorder %v3033, 0.0
    %v3786 = vand.u32 %v3033, 2147483648
    %v3787 = vsel %vm3785, %v3786, %v3784
    %v3788 = vrsqrt.pop %v3034
    %v3789 = vmul.f32 %v3034, %v3788
    %vm3790 = vcmp.eq.f32.partialorder %v3034, inf
    %v3791 = vsel %vm3790, %v3034, %v3789
    %vm3792 = vcmp.eq.f32.partialorder %v3034, 0.0
    %v3793 = vand.u32 %v3034, 2147483648
    %v3794 = vsel %vm3792, %v3793, %v3791
    %v3795 = vrsqrt.pop %v3035
    %v3796 = vmul.f32 %v3035, %v3795
    %vm3797 = vcmp.eq.f32.partialorder %v3035, inf
    %v3798 = vsel %vm3797, %v3035, %v3796
    %vm3799 = vcmp.eq.f32.partialorder %v3035, 0.0
    %v3800 = vand.u32 %v3035, 2147483648
    %v3801 = vsel %vm3799, %v3800, %v3798
    %v3802 = vrsqrt.pop %v3036
    %v3803 = vmul.f32 %v3036, %v3802
    %vm3804 = vcmp.eq.f32.partialorder %v3036, inf
    %v3805 = vsel %vm3804, %v3036, %v3803
    %vm3806 = vcmp.eq.f32.partialorder %v3036, 0.0
    %v3807 = vand.u32 %v3036, 2147483648
    %v3808 = vsel %vm3806, %v3807, %v3805
    %v3809 = vrsqrt.pop %v3037
    %v3810 = vmul.f32 %v3037, %v3809
    %vm3811 = vcmp.eq.f32.partialorder %v3037, inf
    %v3812 = vsel %vm3811, %v3037, %v3810
    %vm3813 = vcmp.eq.f32.partialorder %v3037, 0.0
    %v3814 = vand.u32 %v3037, 2147483648
    %v3815 = vsel %vm3813, %v3814, %v3812
    %v3816 = vrsqrt.pop %v3038
    %v3817 = vmul.f32 %v3038, %v3816
    %vm3818 = vcmp.eq.f32.partialorder %v3038, inf
    %v3819 = vsel %vm3818, %v3038, %v3817
    %vm3820 = vcmp.eq.f32.partialorder %v3038, 0.0
    %v3821 = vand.u32 %v3038, 2147483648
    %v3822 = vsel %vm3820, %v3821, %v3819
    %v3823 = vrsqrt.pop %v3039
    %v3824 = vmul.f32 %v3039, %v3823
    %vm3825 = vcmp.eq.f32.partialorder %v3039, inf
    %v3826 = vsel %vm3825, %v3039, %v3824
    %vm3827 = vcmp.eq.f32.partialorder %v3039, 0.0
    %v3828 = vand.u32 %v3039, 2147483648
    %v3829 = vsel %vm3827, %v3828, %v3826
    %v3830 = vrsqrt.pop %v3040
    %v3831 = vmul.f32 %v3040, %v3830
    %vm3832 = vcmp.eq.f32.partialorder %v3040, inf
    %v3833 = vsel %vm3832, %v3040, %v3831
    %vm3834 = vcmp.eq.f32.partialorder %v3040, 0.0
    %v3835 = vand.u32 %v3040, 2147483648
    %v3836 = vsel %vm3834, %v3835, %v3833
    %v3837 = vrsqrt.pop %v3041
    %v3838 = vmul.f32 %v3041, %v3837
    %vm3839 = vcmp.eq.f32.partialorder %v3041, inf
    %v3840 = vsel %vm3839, %v3041, %v3838
    %vm3841 = vcmp.eq.f32.partialorder %v3041, 0.0
    %v3842 = vand.u32 %v3041, 2147483648
    %v3843 = vsel %vm3841, %v3842, %v3840
    %v3844 = vrsqrt.pop %v3042
    %v3845 = vmul.f32 %v3042, %v3844
    %vm3846 = vcmp.eq.f32.partialorder %v3042, inf
    %v3847 = vsel %vm3846, %v3042, %v3845
    %vm3848 = vcmp.eq.f32.partialorder %v3042, 0.0
    %v3849 = vand.u32 %v3042, 2147483648
    %v3850 = vsel %vm3848, %v3849, %v3847
    %v3851 = vrsqrt.pop %v3043
    %v3852 = vmul.f32 %v3043, %v3851
    %vm3853 = vcmp.eq.f32.partialorder %v3043, inf
    %v3854 = vsel %vm3853, %v3043, %v3852
    %vm3855 = vcmp.eq.f32.partialorder %v3043, 0.0
    %v3856 = vand.u32 %v3043, 2147483648
    %v3857 = vsel %vm3855, %v3856, %v3854
    %v3858 = vrsqrt.pop %v3044
    %v3859 = vmul.f32 %v3044, %v3858
    %vm3860 = vcmp.eq.f32.partialorder %v3044, inf
    %v3861 = vsel %vm3860, %v3044, %v3859
    %vm3862 = vcmp.eq.f32.partialorder %v3044, 0.0
    %v3863 = vand.u32 %v3044, 2147483648
    %v3864 = vsel %vm3862, %v3863, %v3861
    %v3865 = vrsqrt.pop %v3045
    %v3866 = vmul.f32 %v3045, %v3865
    %vm3867 = vcmp.eq.f32.partialorder %v3045, inf
    %v3868 = vsel %vm3867, %v3045, %v3866
    %vm3869 = vcmp.eq.f32.partialorder %v3045, 0.0
    %v3870 = vand.u32 %v3045, 2147483648
    %v3871 = vsel %vm3869, %v3870, %v3868
    %v3872 = vrsqrt.pop %v3046
    %v3873 = vmul.f32 %v3046, %v3872
    %vm3874 = vcmp.eq.f32.partialorder %v3046, inf
    %v3875 = vsel %vm3874, %v3046, %v3873
    %vm3876 = vcmp.eq.f32.partialorder %v3046, 0.0
    %v3877 = vand.u32 %v3046, 2147483648
    %v3878 = vsel %vm3876, %v3877, %v3875
    %v3879 = vrsqrt.pop %v3047
    %v3880 = vmul.f32 %v3047, %v3879
    %vm3881 = vcmp.eq.f32.partialorder %v3047, inf
    %v3882 = vsel %vm3881, %v3047, %v3880
    %vm3883 = vcmp.eq.f32.partialorder %v3047, 0.0
    %v3884 = vand.u32 %v3047, 2147483648
    %v3885 = vsel %vm3883, %v3884, %v3882
    %v3886 = vrsqrt.pop %v3048
    %v3887 = vmul.f32 %v3048, %v3886
    %vm3888 = vcmp.eq.f32.partialorder %v3048, inf
    %v3889 = vsel %vm3888, %v3048, %v3887
    %vm3890 = vcmp.eq.f32.partialorder %v3048, 0.0
    %v3891 = vand.u32 %v3048, 2147483648
    %v3892 = vsel %vm3890, %v3891, %v3889
    %v3893 = vrsqrt.pop %v3049
    %v3894 = vmul.f32 %v3049, %v3893
    %vm3895 = vcmp.eq.f32.partialorder %v3049, inf
    %v3896 = vsel %vm3895, %v3049, %v3894
    %vm3897 = vcmp.eq.f32.partialorder %v3049, 0.0
    %v3898 = vand.u32 %v3049, 2147483648
    %v3899 = vsel %vm3897, %v3898, %v3896
    %v3900 = vrsqrt.pop %v3050
    %v3901 = vmul.f32 %v3050, %v3900
    %vm3902 = vcmp.eq.f32.partialorder %v3050, inf
    %v3903 = vsel %vm3902, %v3050, %v3901
    %vm3904 = vcmp.eq.f32.partialorder %v3050, 0.0
    %v3905 = vand.u32 %v3050, 2147483648
    %v3906 = vsel %vm3904, %v3905, %v3903
    %v3907 = vrsqrt.pop %v3051
    %v3908 = vmul.f32 %v3051, %v3907
    %vm3909 = vcmp.eq.f32.partialorder %v3051, inf
    %v3910 = vsel %vm3909, %v3051, %v3908
    %vm3911 = vcmp.eq.f32.partialorder %v3051, 0.0
    %v3912 = vand.u32 %v3051, 2147483648
    %v3913 = vsel %vm3911, %v3912, %v3910
    %v3914 = vrsqrt.pop %v3052
    %v3915 = vmul.f32 %v3052, %v3914
    %vm3916 = vcmp.eq.f32.partialorder %v3052, inf
    %v3917 = vsel %vm3916, %v3052, %v3915
    %vm3918 = vcmp.eq.f32.partialorder %v3052, 0.0
    %v3919 = vand.u32 %v3052, 2147483648
    %v3920 = vsel %vm3918, %v3919, %v3917
    %v3921 = vrsqrt.pop %v3053
    %v3922 = vmul.f32 %v3053, %v3921
    %vm3923 = vcmp.eq.f32.partialorder %v3053, inf
    %v3924 = vsel %vm3923, %v3053, %v3922
    %vm3925 = vcmp.eq.f32.partialorder %v3053, 0.0
    %v3926 = vand.u32 %v3053, 2147483648
    %v3927 = vsel %vm3925, %v3926, %v3924
    %v3928 = vrsqrt.pop %v3054
    %v3929 = vmul.f32 %v3054, %v3928
    %vm3930 = vcmp.eq.f32.partialorder %v3054, inf
    %v3931 = vsel %vm3930, %v3054, %v3929
    %vm3932 = vcmp.eq.f32.partialorder %v3054, 0.0
    %v3933 = vand.u32 %v3054, 2147483648
    %v3934 = vsel %vm3932, %v3933, %v3931
    %v3935 = vrsqrt.pop %v3055
    %v3936 = vmul.f32 %v3055, %v3935
    %vm3937 = vcmp.eq.f32.partialorder %v3055, inf
    %v3938 = vsel %vm3937, %v3055, %v3936
    %vm3939 = vcmp.eq.f32.partialorder %v3055, 0.0
    %v3940 = vand.u32 %v3055, 2147483648
    %v3941 = vsel %vm3939, %v3940, %v3938
    %v3942 = vrsqrt.pop %v3056
    %v3943 = vmul.f32 %v3056, %v3942
    %vm3944 = vcmp.eq.f32.partialorder %v3056, inf
    %v3945 = vsel %vm3944, %v3056, %v3943
    %vm3946 = vcmp.eq.f32.partialorder %v3056, 0.0
    %v3947 = vand.u32 %v3056, 2147483648
    %v3948 = vsel %vm3946, %v3947, %v3945
    %v3949 = vrsqrt.pop %v3057
    %v3950 = vmul.f32 %v3057, %v3949
    %vm3951 = vcmp.eq.f32.partialorder %v3057, inf
    %v3952 = vsel %vm3951, %v3057, %v3950
    %vm3953 = vcmp.eq.f32.partialorder %v3057, 0.0
    %v3954 = vand.u32 %v3057, 2147483648
    %v3955 = vsel %vm3953, %v3954, %v3952
    %v3956 = vrsqrt.pop %v3058
    %v3957 = vmul.f32 %v3058, %v3956
    %vm3958 = vcmp.eq.f32.partialorder %v3058, inf
    %v3959 = vsel %vm3958, %v3058, %v3957
    %vm3960 = vcmp.eq.f32.partialorder %v3058, 0.0
    %v3961 = vand.u32 %v3058, 2147483648
    %v3962 = vsel %vm3960, %v3961, %v3959
    %v3963 = vrsqrt.pop %v3059
    %v3964 = vmul.f32 %v3059, %v3963
    %vm3965 = vcmp.eq.f32.partialorder %v3059, inf
    %v3966 = vsel %vm3965, %v3059, %v3964
    %vm3967 = vcmp.eq.f32.partialorder %v3059, 0.0
    %v3968 = vand.u32 %v3059, 2147483648
    %v3969 = vsel %vm3967, %v3968, %v3966
    %v3970 = vrsqrt.pop %v3060
    %v3971 = vmul.f32 %v3060, %v3970
    %vm3972 = vcmp.eq.f32.partialorder %v3060, inf
    %v3973 = vsel %vm3972, %v3060, %v3971
    %vm3974 = vcmp.eq.f32.partialorder %v3060, 0.0
    %v3975 = vand.u32 %v3060, 2147483648
    %v3976 = vsel %vm3974, %v3975, %v3973
    %v3977 = vrsqrt.pop %v3061
    %v3978 = vmul.f32 %v3061, %v3977
    %vm3979 = vcmp.eq.f32.partialorder %v3061, inf
    %v3980 = vsel %vm3979, %v3061, %v3978
    %vm3981 = vcmp.eq.f32.partialorder %v3061, 0.0
    %v3982 = vand.u32 %v3061, 2147483648
    %v3983 = vsel %vm3981, %v3982, %v3980
    %v3984 = vrsqrt.pop %v3062
    %v3985 = vmul.f32 %v3062, %v3984
    %vm3986 = vcmp.eq.f32.partialorder %v3062, inf
    %v3987 = vsel %vm3986, %v3062, %v3985
    %vm3988 = vcmp.eq.f32.partialorder %v3062, 0.0
    %v3989 = vand.u32 %v3062, 2147483648
    %v3990 = vsel %vm3988, %v3989, %v3987
    %v3991 = vrsqrt.pop %v3063
    %v3992 = vmul.f32 %v3063, %v3991
    %vm3993 = vcmp.eq.f32.partialorder %v3063, inf
    %v3994 = vsel %vm3993, %v3063, %v3992
    %vm3995 = vcmp.eq.f32.partialorder %v3063, 0.0
    %v3996 = vand.u32 %v3063, 2147483648
    %v3997 = vsel %vm3995, %v3996, %v3994
    %v3998 = vrsqrt.pop %v3064
    %v3999 = vmul.f32 %v3064, %v3998
    %vm4000 = vcmp.eq.f32.partialorder %v3064, inf
    %v4001 = vsel %vm4000, %v3064, %v3999
    %vm4002 = vcmp.eq.f32.partialorder %v3064, 0.0
    %v4003 = vand.u32 %v3064, 2147483648
    %v4004 = vsel %vm4002, %v4003, %v4001
    %v4005 = vrsqrt.pop %v3065
    %v4006 = vmul.f32 %v3065, %v4005
    %vm4007 = vcmp.eq.f32.partialorder %v3065, inf
    %v4008 = vsel %vm4007, %v3065, %v4006
    %vm4009 = vcmp.eq.f32.partialorder %v3065, 0.0
    %v4010 = vand.u32 %v3065, 2147483648
    %v4011 = vsel %vm4009, %v4010, %v4008
    %v4012 = vrsqrt.pop %v3066
    %v4013 = vmul.f32 %v3066, %v4012
    %vm4014 = vcmp.eq.f32.partialorder %v3066, inf
    %v4015 = vsel %vm4014, %v3066, %v4013
    %vm4016 = vcmp.eq.f32.partialorder %v3066, 0.0
    %v4017 = vand.u32 %v3066, 2147483648
    %v4018 = vsel %vm4016, %v4017, %v4015
    %v4019 = vrsqrt.pop %v3067
    %v4020 = vmul.f32 %v3067, %v4019
    %vm4021 = vcmp.eq.f32.partialorder %v3067, inf
    %v4022 = vsel %vm4021, %v3067, %v4020
    %vm4023 = vcmp.eq.f32.partialorder %v3067, 0.0
    %v4024 = vand.u32 %v3067, 2147483648
    %v4025 = vsel %vm4023, %v4024, %v4022
    %v4026 = vrsqrt.pop %v3068
    %v4027 = vmul.f32 %v3068, %v4026
    %vm4028 = vcmp.eq.f32.partialorder %v3068, inf
    %v4029 = vsel %vm4028, %v3068, %v4027
    %vm4030 = vcmp.eq.f32.partialorder %v3068, 0.0
    %v4031 = vand.u32 %v3068, 2147483648
    %v4032 = vsel %vm4030, %v4031, %v4029
    %v4033 = vrsqrt.pop %v3069
    %v4034 = vmul.f32 %v3069, %v4033
    %vm4035 = vcmp.eq.f32.partialorder %v3069, inf
    %v4036 = vsel %vm4035, %v3069, %v4034
    %vm4037 = vcmp.eq.f32.partialorder %v3069, 0.0
    %v4038 = vand.u32 %v3069, 2147483648
    %v4039 = vsel %vm4037, %v4038, %v4036
    %v4040 = vrsqrt.pop %v3070
    %v4041 = vmul.f32 %v3070, %v4040
    %vm4042 = vcmp.eq.f32.partialorder %v3070, inf
    %v4043 = vsel %vm4042, %v3070, %v4041
    %vm4044 = vcmp.eq.f32.partialorder %v3070, 0.0
    %v4045 = vand.u32 %v3070, 2147483648
    %v4046 = vsel %vm4044, %v4045, %v4043
    %v4047 = vrsqrt.pop %v3071
    %v4048 = vmul.f32 %v3071, %v4047
    %vm4049 = vcmp.eq.f32.partialorder %v3071, inf
    %v4050 = vsel %vm4049, %v3071, %v4048
    %vm4051 = vcmp.eq.f32.partialorder %v3071, 0.0
    %v4052 = vand.u32 %v3071, 2147483648
    %v4053 = vsel %vm4051, %v4052, %v4050
    %v4054 = vrsqrt.pop %v3072
    %v4055 = vmul.f32 %v3072, %v4054
    %vm4056 = vcmp.eq.f32.partialorder %v3072, inf
    %v4057 = vsel %vm4056, %v3072, %v4055
    %vm4058 = vcmp.eq.f32.partialorder %v3072, 0.0
    %v4059 = vand.u32 %v3072, 2147483648
    %v4060 = vsel %vm4058, %v4059, %v4057
    %v4061 = vrsqrt.pop %v3073
    %v4062 = vmul.f32 %v3073, %v4061
    %vm4063 = vcmp.eq.f32.partialorder %v3073, inf
    %v4064 = vsel %vm4063, %v3073, %v4062
    %vm4065 = vcmp.eq.f32.partialorder %v3073, 0.0
    %v4066 = vand.u32 %v3073, 2147483648
    %v4067 = vsel %vm4065, %v4066, %v4064
    %v4068 = vrsqrt.pop %v3074
    %v4069 = vmul.f32 %v3074, %v4068
    %vm4070 = vcmp.eq.f32.partialorder %v3074, inf
    %v4071 = vsel %vm4070, %v3074, %v4069
    %vm4072 = vcmp.eq.f32.partialorder %v3074, 0.0
    %v4073 = vand.u32 %v3074, 2147483648
    %v4074 = vsel %vm4072, %v4073, %v4071
    %v4075 = vrsqrt.pop %v3075
    %v4076 = vmul.f32 %v3075, %v4075
    %vm4077 = vcmp.eq.f32.partialorder %v3075, inf
    %v4078 = vsel %vm4077, %v3075, %v4076
    %vm4079 = vcmp.eq.f32.partialorder %v3075, 0.0
    %v4080 = vand.u32 %v3075, 2147483648
    %v4081 = vsel %vm4079, %v4080, %v4078
    %v4082 = vrsqrt.pop %v3076
    %v4083 = vmul.f32 %v3076, %v4082
    %vm4084 = vcmp.eq.f32.partialorder %v3076, inf
    %v4085 = vsel %vm4084, %v3076, %v4083
    %vm4086 = vcmp.eq.f32.partialorder %v3076, 0.0
    %v4087 = vand.u32 %v3076, 2147483648
    %v4088 = vsel %vm4086, %v4087, %v4085
    %v4089 = vrsqrt.pop %v3077
    %v4090 = vmul.f32 %v3077, %v4089
    %vm4091 = vcmp.eq.f32.partialorder %v3077, inf
    %v4092 = vsel %vm4091, %v3077, %v4090
    %vm4093 = vcmp.eq.f32.partialorder %v3077, 0.0
    %v4094 = vand.u32 %v3077, 2147483648
    %v4095 = vsel %vm4093, %v4094, %v4092
    %v4096 = vrsqrt.pop %v3078
    %v4097 = vmul.f32 %v3078, %v4096
    %vm4098 = vcmp.eq.f32.partialorder %v3078, inf
    %v4099 = vsel %vm4098, %v3078, %v4097
    %vm4100 = vcmp.eq.f32.partialorder %v3078, 0.0
    %v4101 = vand.u32 %v3078, 2147483648
    %v4102 = vsel %vm4100, %v4101, %v4099
    %v4103 = vrsqrt.pop %v3079
    %v4104 = vmul.f32 %v3079, %v4103
    %vm4105 = vcmp.eq.f32.partialorder %v3079, inf
    %v4106 = vsel %vm4105, %v3079, %v4104
    %vm4107 = vcmp.eq.f32.partialorder %v3079, 0.0
    %v4108 = vand.u32 %v3079, 2147483648
    %v4109 = vsel %vm4107, %v4108, %v4106
    %v4110 = vrsqrt.pop %v3080
    %v4111 = vmul.f32 %v3080, %v4110
    %vm4112 = vcmp.eq.f32.partialorder %v3080, inf
    %v4113 = vsel %vm4112, %v3080, %v4111
    %vm4114 = vcmp.eq.f32.partialorder %v3080, 0.0
    %v4115 = vand.u32 %v3080, 2147483648
    %v4116 = vsel %vm4114, %v4115, %v4113
    %v4117 = vrsqrt.pop %v3081
    %v4118 = vmul.f32 %v3081, %v4117
    %vm4119 = vcmp.eq.f32.partialorder %v3081, inf
    %v4120 = vsel %vm4119, %v3081, %v4118
    %vm4121 = vcmp.eq.f32.partialorder %v3081, 0.0
    %v4122 = vand.u32 %v3081, 2147483648
    %v4123 = vsel %vm4121, %v4122, %v4120
    %v4124 = vrsqrt.pop %v3082
    %v4125 = vmul.f32 %v3082, %v4124
    %vm4126 = vcmp.eq.f32.partialorder %v3082, inf
    %v4127 = vsel %vm4126, %v3082, %v4125
    %vm4128 = vcmp.eq.f32.partialorder %v3082, 0.0
    %v4129 = vand.u32 %v3082, 2147483648
    %v4130 = vsel %vm4128, %v4129, %v4127
    %v4131 = vrsqrt.pop %v3083
    %v4132 = vmul.f32 %v3083, %v4131
    %vm4133 = vcmp.eq.f32.partialorder %v3083, inf
    %v4134 = vsel %vm4133, %v3083, %v4132
    %vm4135 = vcmp.eq.f32.partialorder %v3083, 0.0
    %v4136 = vand.u32 %v3083, 2147483648
    %v4137 = vsel %vm4135, %v4136, %v4134
    %v4138 = vrsqrt.pop %v3084
    %v4139 = vmul.f32 %v3084, %v4138
    %vm4140 = vcmp.eq.f32.partialorder %v3084, inf
    %v4141 = vsel %vm4140, %v3084, %v4139
    %vm4142 = vcmp.eq.f32.partialorder %v3084, 0.0
    %v4143 = vand.u32 %v3084, 2147483648
    %v4144 = vsel %vm4142, %v4143, %v4141
    %v4145 = vrsqrt.pop %v3085
    %v4146 = vmul.f32 %v3085, %v4145
    %vm4147 = vcmp.eq.f32.partialorder %v3085, inf
    %v4148 = vsel %vm4147, %v3085, %v4146
    %vm4149 = vcmp.eq.f32.partialorder %v3085, 0.0
    %v4150 = vand.u32 %v3085, 2147483648
    %v4151 = vsel %vm4149, %v4150, %v4148
    %v4152 = vrsqrt.pop %v3086
    %v4153 = vmul.f32 %v3086, %v4152
    %vm4154 = vcmp.eq.f32.partialorder %v3086, inf
    %v4155 = vsel %vm4154, %v3086, %v4153
    %vm4156 = vcmp.eq.f32.partialorder %v3086, 0.0
    %v4157 = vand.u32 %v3086, 2147483648
    %v4158 = vsel %vm4156, %v4157, %v4155
    %v4159 = vrsqrt.pop %v3087
    %v4160 = vmul.f32 %v3087, %v4159
    %vm4161 = vcmp.eq.f32.partialorder %v3087, inf
    %v4162 = vsel %vm4161, %v3087, %v4160
    %vm4163 = vcmp.eq.f32.partialorder %v3087, 0.0
    %v4164 = vand.u32 %v3087, 2147483648
    %v4165 = vsel %vm4163, %v4164, %v4162
    %v4166 = vrsqrt.pop %v3088
    %v4167 = vmul.f32 %v3088, %v4166
    %vm4168 = vcmp.eq.f32.partialorder %v3088, inf
    %v4169 = vsel %vm4168, %v3088, %v4167
    %vm4170 = vcmp.eq.f32.partialorder %v3088, 0.0
    %v4171 = vand.u32 %v3088, 2147483648
    %v4172 = vsel %vm4170, %v4171, %v4169
    %v4173 = vrsqrt.pop %v3089
    %v4174 = vmul.f32 %v3089, %v4173
    %vm4175 = vcmp.eq.f32.partialorder %v3089, inf
    %v4176 = vsel %vm4175, %v3089, %v4174
    %vm4177 = vcmp.eq.f32.partialorder %v3089, 0.0
    %v4178 = vand.u32 %v3089, 2147483648
    %v4179 = vsel %vm4177, %v4178, %v4176
    %v4180 = vrsqrt.pop %v3090
    %v4181 = vmul.f32 %v3090, %v4180
    %vm4182 = vcmp.eq.f32.partialorder %v3090, inf
    %v4183 = vsel %vm4182, %v3090, %v4181
    %vm4184 = vcmp.eq.f32.partialorder %v3090, 0.0
    %v4185 = vand.u32 %v3090, 2147483648
    %v4186 = vsel %vm4184, %v4185, %v4183
    %v4187 = vrsqrt.pop %v3091
    %v4188 = vmul.f32 %v3091, %v4187
    %vm4189 = vcmp.eq.f32.partialorder %v3091, inf
    %v4190 = vsel %vm4189, %v3091, %v4188
    %vm4191 = vcmp.eq.f32.partialorder %v3091, 0.0
    %v4192 = vand.u32 %v3091, 2147483648
    %v4193 = vsel %vm4191, %v4192, %v4190
    %v4194 = vrsqrt.pop %v3092
    %v4195 = vmul.f32 %v3092, %v4194
    %vm4196 = vcmp.eq.f32.partialorder %v3092, inf
    %v4197 = vsel %vm4196, %v3092, %v4195
    %vm4198 = vcmp.eq.f32.partialorder %v3092, 0.0
    %v4199 = vand.u32 %v3092, 2147483648
    %v4200 = vsel %vm4198, %v4199, %v4197
    %v4201 = vrsqrt.pop %v3093
    %v4202 = vmul.f32 %v3093, %v4201
    %vm4203 = vcmp.eq.f32.partialorder %v3093, inf
    %v4204 = vsel %vm4203, %v3093, %v4202
    %vm4205 = vcmp.eq.f32.partialorder %v3093, 0.0
    %v4206 = vand.u32 %v3093, 2147483648
    %v4207 = vsel %vm4205, %v4206, %v4204
    %v4208 = vrsqrt.pop %v3094
    %v4209 = vmul.f32 %v3094, %v4208
    %vm4210 = vcmp.eq.f32.partialorder %v3094, inf
    %v4211 = vsel %vm4210, %v3094, %v4209
    %vm4212 = vcmp.eq.f32.partialorder %v3094, 0.0
    %v4213 = vand.u32 %v3094, 2147483648
    %v4214 = vsel %vm4212, %v4213, %v4211
    %v4215 = vrsqrt.pop %v3095
    %v4216 = vmul.f32 %v3095, %v4215
    %vm4217 = vcmp.eq.f32.partialorder %v3095, inf
    %v4218 = vsel %vm4217, %v3095, %v4216
    %vm4219 = vcmp.eq.f32.partialorder %v3095, 0.0
    %v4220 = vand.u32 %v3095, 2147483648
    %v4221 = vsel %vm4219, %v4220, %v4218
    %v4222 = vrsqrt.pop %v3096
    %v4223 = vmul.f32 %v3096, %v4222
    %vm4224 = vcmp.eq.f32.partialorder %v3096, inf
    %v4225 = vsel %vm4224, %v3096, %v4223
    %vm4226 = vcmp.eq.f32.partialorder %v3096, 0.0
    %v4227 = vand.u32 %v3096, 2147483648
    %v4228 = vsel %vm4226, %v4227, %v4225
    %v4229 = vrsqrt.pop %v3097
    %v4230 = vmul.f32 %v3097, %v4229
    %vm4231 = vcmp.eq.f32.partialorder %v3097, inf
    %v4232 = vsel %vm4231, %v3097, %v4230
    %vm4233 = vcmp.eq.f32.partialorder %v3097, 0.0
    %v4234 = vand.u32 %v3097, 2147483648
    %v4235 = vsel %vm4233, %v4234, %v4232
    %v4236 = vrsqrt.pop %v3098
    %v4237 = vmul.f32 %v3098, %v4236
    %vm4238 = vcmp.eq.f32.partialorder %v3098, inf
    %v4239 = vsel %vm4238, %v3098, %v4237
    %vm4240 = vcmp.eq.f32.partialorder %v3098, 0.0
    %v4241 = vand.u32 %v3098, 2147483648
    %v4242 = vsel %vm4240, %v4241, %v4239
    %v4243 = vrsqrt.pop %v3099
    %v4244 = vmul.f32 %v3099, %v4243
    %vm4245 = vcmp.eq.f32.partialorder %v3099, inf
    %v4246 = vsel %vm4245, %v3099, %v4244
    %vm4247 = vcmp.eq.f32.partialorder %v3099, 0.0
    %v4248 = vand.u32 %v3099, 2147483648
    %v4249 = vsel %vm4247, %v4248, %v4246
    %v4250 = vrsqrt.pop %v3100
    %v4251 = vmul.f32 %v3100, %v4250
    %vm4252 = vcmp.eq.f32.partialorder %v3100, inf
    %v4253 = vsel %vm4252, %v3100, %v4251
    %vm4254 = vcmp.eq.f32.partialorder %v3100, 0.0
    %v4255 = vand.u32 %v3100, 2147483648
    %v4256 = vsel %vm4254, %v4255, %v4253
    %v4257 = vrsqrt.pop %v3101
    %v4258 = vmul.f32 %v3101, %v4257
    %vm4259 = vcmp.eq.f32.partialorder %v3101, inf
    %v4260 = vsel %vm4259, %v3101, %v4258
    %vm4261 = vcmp.eq.f32.partialorder %v3101, 0.0
    %v4262 = vand.u32 %v3101, 2147483648
    %v4263 = vsel %vm4261, %v4262, %v4260
    %v4264 = vrsqrt.pop %v3102
    %v4265 = vmul.f32 %v3102, %v4264
    %vm4266 = vcmp.eq.f32.partialorder %v3102, inf
    %v4267 = vsel %vm4266, %v3102, %v4265
    %vm4268 = vcmp.eq.f32.partialorder %v3102, 0.0
    %v4269 = vand.u32 %v3102, 2147483648
    %v4270 = vsel %vm4268, %v4269, %v4267
    %v4271 = vrsqrt.pop %v3103
    %v4272 = vmul.f32 %v3103, %v4271
    %vm4273 = vcmp.eq.f32.partialorder %v3103, inf
    %v4274 = vsel %vm4273, %v3103, %v4272
    %vm4275 = vcmp.eq.f32.partialorder %v3103, 0.0
    %v4276 = vand.u32 %v3103, 2147483648
    %v4277 = vsel %vm4275, %v4276, %v4274
    %v4278 = vrsqrt.pop %v3104
    %v4279 = vmul.f32 %v3104, %v4278
    %vm4280 = vcmp.eq.f32.partialorder %v3104, inf
    %v4281 = vsel %vm4280, %v3104, %v4279
    %vm4282 = vcmp.eq.f32.partialorder %v3104, 0.0
    %v4283 = vand.u32 %v3104, 2147483648
    %v4284 = vsel %vm4282, %v4283, %v4281
    %v4285 = vrsqrt.pop %v3105
    %v4286 = vmul.f32 %v3105, %v4285
    %vm4287 = vcmp.eq.f32.partialorder %v3105, inf
    %v4288 = vsel %vm4287, %v3105, %v4286
    %vm4289 = vcmp.eq.f32.partialorder %v3105, 0.0
    %v4290 = vand.u32 %v3105, 2147483648
    %v4291 = vsel %vm4289, %v4290, %v4288
    %v4292 = vrsqrt.pop %v3106
    %v4293 = vmul.f32 %v3106, %v4292
    %vm4294 = vcmp.eq.f32.partialorder %v3106, inf
    %v4295 = vsel %vm4294, %v3106, %v4293
    %vm4296 = vcmp.eq.f32.partialorder %v3106, 0.0
    %v4297 = vand.u32 %v3106, 2147483648
    %v4298 = vsel %vm4296, %v4297, %v4295
    %v4299 = vrsqrt.pop %v3107
    %v4300 = vmul.f32 %v3107, %v4299
    %vm4301 = vcmp.eq.f32.partialorder %v3107, inf
    %v4302 = vsel %vm4301, %v3107, %v4300
    %vm4303 = vcmp.eq.f32.partialorder %v3107, 0.0
    %v4304 = vand.u32 %v3107, 2147483648
    %v4305 = vsel %vm4303, %v4304, %v4302
    %v4306 = vrsqrt.pop %v3108
    %v4307 = vmul.f32 %v3108, %v4306
    %vm4308 = vcmp.eq.f32.partialorder %v3108, inf
    %v4309 = vsel %vm4308, %v3108, %v4307
    %vm4310 = vcmp.eq.f32.partialorder %v3108, 0.0
    %v4311 = vand.u32 %v3108, 2147483648
    %v4312 = vsel %vm4310, %v4311, %v4309
    %v4313 = vrsqrt.pop %v3109
    %v4314 = vmul.f32 %v3109, %v4313
    %vm4315 = vcmp.eq.f32.partialorder %v3109, inf
    %v4316 = vsel %vm4315, %v3109, %v4314
    %vm4317 = vcmp.eq.f32.partialorder %v3109, 0.0
    %v4318 = vand.u32 %v3109, 2147483648
    %v4319 = vsel %vm4317, %v4318, %v4316
    %v4320 = vrsqrt.pop %v3110
    %v4321 = vmul.f32 %v3110, %v4320
    %vm4322 = vcmp.eq.f32.partialorder %v3110, inf
    %v4323 = vsel %vm4322, %v3110, %v4321
    %vm4324 = vcmp.eq.f32.partialorder %v3110, 0.0
    %v4325 = vand.u32 %v3110, 2147483648
    %v4326 = vsel %vm4324, %v4325, %v4323
    %v4327 = vrsqrt.pop %v3111
    %v4328 = vmul.f32 %v3111, %v4327
    %vm4329 = vcmp.eq.f32.partialorder %v3111, inf
    %v4330 = vsel %vm4329, %v3111, %v4328
    %vm4331 = vcmp.eq.f32.partialorder %v3111, 0.0
    %v4332 = vand.u32 %v3111, 2147483648
    %v4333 = vsel %vm4331, %v4332, %v4330
    %v4334 = vrsqrt.pop %v3112
    %v4335 = vmul.f32 %v3112, %v4334
    %vm4336 = vcmp.eq.f32.partialorder %v3112, inf
    %v4337 = vsel %vm4336, %v3112, %v4335
    %vm4338 = vcmp.eq.f32.partialorder %v3112, 0.0
    %v4339 = vand.u32 %v3112, 2147483648
    %v4340 = vsel %vm4338, %v4339, %v4337
    %v4341 = vrsqrt.pop %v3113
    %v4342 = vmul.f32 %v3113, %v4341
    %vm4343 = vcmp.eq.f32.partialorder %v3113, inf
    %v4344 = vsel %vm4343, %v3113, %v4342
    %vm4345 = vcmp.eq.f32.partialorder %v3113, 0.0
    %v4346 = vand.u32 %v3113, 2147483648
    %v4347 = vsel %vm4345, %v4346, %v4344
    %v4348 = vrsqrt.pop %v3114
    %v4349 = vmul.f32 %v3114, %v4348
    %vm4350 = vcmp.eq.f32.partialorder %v3114, inf
    %v4351 = vsel %vm4350, %v3114, %v4349
    %vm4352 = vcmp.eq.f32.partialorder %v3114, 0.0
    %v4353 = vand.u32 %v3114, 2147483648
    %v4354 = vsel %vm4352, %v4353, %v4351
    %v4355 = vrsqrt.pop %v3115
    %v4356 = vmul.f32 %v3115, %v4355
    %vm4357 = vcmp.eq.f32.partialorder %v3115, inf
    %v4358 = vsel %vm4357, %v3115, %v4356
    %vm4359 = vcmp.eq.f32.partialorder %v3115, 0.0
    %v4360 = vand.u32 %v3115, 2147483648
    %v4361 = vsel %vm4359, %v4360, %v4358
    %v4362 = vrsqrt.pop %v3116
    %v4363 = vmul.f32 %v3116, %v4362
    %vm4364 = vcmp.eq.f32.partialorder %v3116, inf
    %v4365 = vsel %vm4364, %v3116, %v4363
    %vm4366 = vcmp.eq.f32.partialorder %v3116, 0.0
    %v4367 = vand.u32 %v3116, 2147483648
    %v4368 = vsel %vm4366, %v4367, %v4365
    %v4369 = vrsqrt.pop %v3117
    %v4370 = vmul.f32 %v3117, %v4369
    %vm4371 = vcmp.eq.f32.partialorder %v3117, inf
    %v4372 = vsel %vm4371, %v3117, %v4370
    %vm4373 = vcmp.eq.f32.partialorder %v3117, 0.0
    %v4374 = vand.u32 %v3117, 2147483648
    %v4375 = vsel %vm4373, %v4374, %v4372
    %v4376 = vrsqrt.pop %v3118
    %v4377 = vmul.f32 %v3118, %v4376
    %vm4378 = vcmp.eq.f32.partialorder %v3118, inf
    %v4379 = vsel %vm4378, %v3118, %v4377
    %vm4380 = vcmp.eq.f32.partialorder %v3118, 0.0
    %v4381 = vand.u32 %v3118, 2147483648
    %v4382 = vsel %vm4380, %v4381, %v4379
    %v4383 = vrsqrt.pop %v3119
    %v4384 = vmul.f32 %v3119, %v4383
    %vm4385 = vcmp.eq.f32.partialorder %v3119, inf
    %v4386 = vsel %vm4385, %v3119, %v4384
    %vm4387 = vcmp.eq.f32.partialorder %v3119, 0.0
    %v4388 = vand.u32 %v3119, 2147483648
    %v4389 = vsel %vm4387, %v4388, %v4386
    %v4390 = vrsqrt.pop %v3120
    %v4391 = vmul.f32 %v3120, %v4390
    %vm4392 = vcmp.eq.f32.partialorder %v3120, inf
    %v4393 = vsel %vm4392, %v3120, %v4391
    %vm4394 = vcmp.eq.f32.partialorder %v3120, 0.0
    %v4395 = vand.u32 %v3120, 2147483648
    %v4396 = vsel %vm4394, %v4395, %v4393
    %v4397 = vrsqrt.pop %v3121
    %v4398 = vmul.f32 %v3121, %v4397
    %vm4399 = vcmp.eq.f32.partialorder %v3121, inf
    %v4400 = vsel %vm4399, %v3121, %v4398
    %vm4401 = vcmp.eq.f32.partialorder %v3121, 0.0
    %v4402 = vand.u32 %v3121, 2147483648
    %v4403 = vsel %vm4401, %v4402, %v4400
    %v4404 = vrsqrt.pop %v3122
    %v4405 = vmul.f32 %v3122, %v4404
    %vm4406 = vcmp.eq.f32.partialorder %v3122, inf
    %v4407 = vsel %vm4406, %v3122, %v4405
    %vm4408 = vcmp.eq.f32.partialorder %v3122, 0.0
    %v4409 = vand.u32 %v3122, 2147483648
    %v4410 = vsel %vm4408, %v4409, %v4407
    %v4411 = vrsqrt.pop %v3123
    %v4412 = vmul.f32 %v3123, %v4411
    %vm4413 = vcmp.eq.f32.partialorder %v3123, inf
    %v4414 = vsel %vm4413, %v3123, %v4412
    %vm4415 = vcmp.eq.f32.partialorder %v3123, 0.0
    %v4416 = vand.u32 %v3123, 2147483648
    %v4417 = vsel %vm4415, %v4416, %v4414
    %v4418 = vrsqrt.pop %v3124
    %v4419 = vmul.f32 %v3124, %v4418
    %vm4420 = vcmp.eq.f32.partialorder %v3124, inf
    %v4421 = vsel %vm4420, %v3124, %v4419
    %vm4422 = vcmp.eq.f32.partialorder %v3124, 0.0
    %v4423 = vand.u32 %v3124, 2147483648
    %v4424 = vsel %vm4422, %v4423, %v4421
    %v4425 = vrsqrt.pop %v3125
    %v4426 = vmul.f32 %v3125, %v4425
    %vm4427 = vcmp.eq.f32.partialorder %v3125, inf
    %v4428 = vsel %vm4427, %v3125, %v4426
    %vm4429 = vcmp.eq.f32.partialorder %v3125, 0.0
    %v4430 = vand.u32 %v3125, 2147483648
    %v4431 = vsel %vm4429, %v4430, %v4428
    %v4432 = vrsqrt.pop %v3126
    %v4433 = vmul.f32 %v3126, %v4432
    %vm4434 = vcmp.eq.f32.partialorder %v3126, inf
    %v4435 = vsel %vm4434, %v3126, %v4433
    %vm4436 = vcmp.eq.f32.partialorder %v3126, 0.0
    %v4437 = vand.u32 %v3126, 2147483648
    %v4438 = vsel %vm4436, %v4437, %v4435
    %v4439 = vrsqrt.pop %v3127
    %v4440 = vmul.f32 %v3127, %v4439
    %vm4441 = vcmp.eq.f32.partialorder %v3127, inf
    %v4442 = vsel %vm4441, %v3127, %v4440
    %vm4443 = vcmp.eq.f32.partialorder %v3127, 0.0
    %v4444 = vand.u32 %v3127, 2147483648
    %v4445 = vsel %vm4443, %v4444, %v4442
    %v4446 = vrsqrt.pop %v3128
    %v4447 = vmul.f32 %v3128, %v4446
    %vm4448 = vcmp.eq.f32.partialorder %v3128, inf
    %v4449 = vsel %vm4448, %v3128, %v4447
    %vm4450 = vcmp.eq.f32.partialorder %v3128, 0.0
    %v4451 = vand.u32 %v3128, 2147483648
    %v4452 = vsel %vm4450, %v4451, %v4449
    %v4453 = vrsqrt.pop %v3129
    %v4454 = vmul.f32 %v3129, %v4453
    %vm4455 = vcmp.eq.f32.partialorder %v3129, inf
    %v4456 = vsel %vm4455, %v3129, %v4454
    %vm4457 = vcmp.eq.f32.partialorder %v3129, 0.0
    %v4458 = vand.u32 %v3129, 2147483648
    %v4459 = vsel %vm4457, %v4458, %v4456
    %v4460 = vrsqrt.pop %v3130
    %v4461 = vmul.f32 %v3130, %v4460
    %vm4462 = vcmp.eq.f32.partialorder %v3130, inf
    %v4463 = vsel %vm4462, %v3130, %v4461
    %vm4464 = vcmp.eq.f32.partialorder %v3130, 0.0
    %v4465 = vand.u32 %v3130, 2147483648
    %v4466 = vsel %vm4464, %v4465, %v4463
    %v4467 = vrsqrt.pop %v3131
    %v4468 = vmul.f32 %v3131, %v4467
    %vm4469 = vcmp.eq.f32.partialorder %v3131, inf
    %v4470 = vsel %vm4469, %v3131, %v4468
    %vm4471 = vcmp.eq.f32.partialorder %v3131, 0.0
    %v4472 = vand.u32 %v3131, 2147483648
    %v4473 = vsel %vm4471, %v4472, %v4470
    %v4474 = vrsqrt.pop %v3132
    %v4475 = vmul.f32 %v3132, %v4474
    %vm4476 = vcmp.eq.f32.partialorder %v3132, inf
    %v4477 = vsel %vm4476, %v3132, %v4475
    %vm4478 = vcmp.eq.f32.partialorder %v3132, 0.0
    %v4479 = vand.u32 %v3132, 2147483648
    %v4480 = vsel %vm4478, %v4479, %v4477
    %v4481 = vrsqrt.pop %v3133
    %v4482 = vmul.f32 %v3133, %v4481
    %vm4483 = vcmp.eq.f32.partialorder %v3133, inf
    %v4484 = vsel %vm4483, %v3133, %v4482
    %vm4485 = vcmp.eq.f32.partialorder %v3133, 0.0
    %v4486 = vand.u32 %v3133, 2147483648
    %v4487 = vsel %vm4485, %v4486, %v4484
    %v4488 = vrsqrt.pop %v3134
    %v4489 = vmul.f32 %v3134, %v4488
    %vm4490 = vcmp.eq.f32.partialorder %v3134, inf
    %v4491 = vsel %vm4490, %v3134, %v4489
    %vm4492 = vcmp.eq.f32.partialorder %v3134, 0.0
    %v4493 = vand.u32 %v3134, 2147483648
    %v4494 = vsel %vm4492, %v4493, %v4491
    %v4495 = vrsqrt.pop %v3135
    %v4496 = vmul.f32 %v3135, %v4495
    %vm4497 = vcmp.eq.f32.partialorder %v3135, inf
    %v4498 = vsel %vm4497, %v3135, %v4496
    %vm4499 = vcmp.eq.f32.partialorder %v3135, 0.0
    %v4500 = vand.u32 %v3135, 2147483648
    %v4501 = vsel %vm4499, %v4500, %v4498
    %v4502 = vrsqrt.pop %v3136
    %v4503 = vmul.f32 %v3136, %v4502
    %vm4504 = vcmp.eq.f32.partialorder %v3136, inf
    %v4505 = vsel %vm4504, %v3136, %v4503
    %vm4506 = vcmp.eq.f32.partialorder %v3136, 0.0
    %v4507 = vand.u32 %v3136, 2147483648
    %v4508 = vsel %vm4506, %v4507, %v4505
    %v4509 = vrsqrt.pop %v3137
    %v4510 = vmul.f32 %v3137, %v4509
    %vm4511 = vcmp.eq.f32.partialorder %v3137, inf
    %v4512 = vsel %vm4511, %v3137, %v4510
    %vm4513 = vcmp.eq.f32.partialorder %v3137, 0.0
    %v4514 = vand.u32 %v3137, 2147483648
    %v4515 = vsel %vm4513, %v4514, %v4512
    %v4516 = vrsqrt.pop %v3138
    %v4517 = vmul.f32 %v3138, %v4516
    %vm4518 = vcmp.eq.f32.partialorder %v3138, inf
    %v4519 = vsel %vm4518, %v3138, %v4517
    %vm4520 = vcmp.eq.f32.partialorder %v3138, 0.0
    %v4521 = vand.u32 %v3138, 2147483648
    %v4522 = vsel %vm4520, %v4521, %v4519
    %v4523 = vrsqrt.pop %v3139
    %v4524 = vmul.f32 %v3139, %v4523
    %vm4525 = vcmp.eq.f32.partialorder %v3139, inf
    %v4526 = vsel %vm4525, %v3139, %v4524
    %vm4527 = vcmp.eq.f32.partialorder %v3139, 0.0
    %v4528 = vand.u32 %v3139, 2147483648
    %v4529 = vsel %vm4527, %v4528, %v4526
    %v4530 = vrsqrt.pop %v3140
    %v4531 = vmul.f32 %v3140, %v4530
    %vm4532 = vcmp.eq.f32.partialorder %v3140, inf
    %v4533 = vsel %vm4532, %v3140, %v4531
    %vm4534 = vcmp.eq.f32.partialorder %v3140, 0.0
    %v4535 = vand.u32 %v3140, 2147483648
    %v4536 = vsel %vm4534, %v4535, %v4533
    %v4537 = vrsqrt.pop %v3141
    %v4538 = vmul.f32 %v3141, %v4537
    %vm4539 = vcmp.eq.f32.partialorder %v3141, inf
    %v4540 = vsel %vm4539, %v3141, %v4538
    %vm4541 = vcmp.eq.f32.partialorder %v3141, 0.0
    %v4542 = vand.u32 %v3141, 2147483648
    %v4543 = vsel %vm4541, %v4542, %v4540
    %v4544 = vrsqrt.pop %v3142
    %v4545 = vmul.f32 %v3142, %v4544
    %vm4546 = vcmp.eq.f32.partialorder %v3142, inf
    %v4547 = vsel %vm4546, %v3142, %v4545
    %vm4548 = vcmp.eq.f32.partialorder %v3142, 0.0
    %v4549 = vand.u32 %v3142, 2147483648
    %v4550 = vsel %vm4548, %v4549, %v4547
    %v4551 = vrsqrt.pop %v3143
    %v4552 = vmul.f32 %v3143, %v4551
    %vm4553 = vcmp.eq.f32.partialorder %v3143, inf
    %v4554 = vsel %vm4553, %v3143, %v4552
    %vm4555 = vcmp.eq.f32.partialorder %v3143, 0.0
    %v4556 = vand.u32 %v3143, 2147483648
    %v4557 = vsel %vm4555, %v4556, %v4554
    %v4558 = vrsqrt.pop %v3144
    %v4559 = vmul.f32 %v3144, %v4558
    %vm4560 = vcmp.eq.f32.partialorder %v3144, inf
    %v4561 = vsel %vm4560, %v3144, %v4559
    %vm4562 = vcmp.eq.f32.partialorder %v3144, 0.0
    %v4563 = vand.u32 %v3144, 2147483648
    %v4564 = vsel %vm4562, %v4563, %v4561
    %v4565 = vrsqrt.pop %v3145
    %v4566 = vmul.f32 %v3145, %v4565
    %vm4567 = vcmp.eq.f32.partialorder %v3145, inf
    %v4568 = vsel %vm4567, %v3145, %v4566
    %vm4569 = vcmp.eq.f32.partialorder %v3145, 0.0
    %v4570 = vand.u32 %v3145, 2147483648
    %v4571 = vsel %vm4569, %v4570, %v4568
    %v4572 = vrsqrt.pop %v3146
    %v4573 = vmul.f32 %v3146, %v4572
    %vm4574 = vcmp.eq.f32.partialorder %v3146, inf
    %v4575 = vsel %vm4574, %v3146, %v4573
    %vm4576 = vcmp.eq.f32.partialorder %v3146, 0.0
    %v4577 = vand.u32 %v3146, 2147483648
    %v4578 = vsel %vm4576, %v4577, %v4575
    %v4579 = vrsqrt.pop %v3147
    %v4580 = vmul.f32 %v3147, %v4579
    %vm4581 = vcmp.eq.f32.partialorder %v3147, inf
    %v4582 = vsel %vm4581, %v3147, %v4580
    %vm4583 = vcmp.eq.f32.partialorder %v3147, 0.0
    %v4584 = vand.u32 %v3147, 2147483648
    %v4585 = vsel %vm4583, %v4584, %v4582
    %v4586 = vrsqrt.pop %v3148
    %v4587 = vmul.f32 %v3148, %v4586
    %vm4588 = vcmp.eq.f32.partialorder %v3148, inf
    %v4589 = vsel %vm4588, %v3148, %v4587
    %vm4590 = vcmp.eq.f32.partialorder %v3148, 0.0
    %v4591 = vand.u32 %v3148, 2147483648
    %v4592 = vsel %vm4590, %v4591, %v4589
    %v4593 = vrsqrt.pop %v3149
    %v4594 = vmul.f32 %v3149, %v4593
    %vm4595 = vcmp.eq.f32.partialorder %v3149, inf
    %v4596 = vsel %vm4595, %v3149, %v4594
    %vm4597 = vcmp.eq.f32.partialorder %v3149, 0.0
    %v4598 = vand.u32 %v3149, 2147483648
    %v4599 = vsel %vm4597, %v4598, %v4596
    %v4600 = vrsqrt.pop %v3150
    %v4601 = vmul.f32 %v3150, %v4600
    %vm4602 = vcmp.eq.f32.partialorder %v3150, inf
    %v4603 = vsel %vm4602, %v3150, %v4601
    %vm4604 = vcmp.eq.f32.partialorder %v3150, 0.0
    %v4605 = vand.u32 %v3150, 2147483648
    %v4606 = vsel %vm4604, %v4605, %v4603
    %v4607 = vrsqrt.pop %v3151
    %v4608 = vmul.f32 %v3151, %v4607
    %vm4609 = vcmp.eq.f32.partialorder %v3151, inf
    %v4610 = vsel %vm4609, %v3151, %v4608
    %vm4611 = vcmp.eq.f32.partialorder %v3151, 0.0
    %v4612 = vand.u32 %v3151, 2147483648
    %v4613 = vsel %vm4611, %v4612, %v4610
    %v4614 = vrsqrt.pop %v3152
    %v4615 = vmul.f32 %v3152, %v4614
    %vm4616 = vcmp.eq.f32.partialorder %v3152, inf
    %v4617 = vsel %vm4616, %v3152, %v4615
    %vm4618 = vcmp.eq.f32.partialorder %v3152, 0.0
    %v4619 = vand.u32 %v3152, 2147483648
    %v4620 = vsel %vm4618, %v4619, %v4617
    %v4621 = vrsqrt.pop %v3153
    %v4622 = vmul.f32 %v3153, %v4621
    %vm4623 = vcmp.eq.f32.partialorder %v3153, inf
    %v4624 = vsel %vm4623, %v3153, %v4622
    %vm4625 = vcmp.eq.f32.partialorder %v3153, 0.0
    %v4626 = vand.u32 %v3153, 2147483648
    %v4627 = vsel %vm4625, %v4626, %v4624
    %v4628 = vrsqrt.pop %v3154
    %v4629 = vmul.f32 %v3154, %v4628
    %vm4630 = vcmp.eq.f32.partialorder %v3154, inf
    %v4631 = vsel %vm4630, %v3154, %v4629
    %vm4632 = vcmp.eq.f32.partialorder %v3154, 0.0
    %v4633 = vand.u32 %v3154, 2147483648
    %v4634 = vsel %vm4632, %v4633, %v4631
    %v4635 = vrsqrt.pop %v3155
    %v4636 = vmul.f32 %v3155, %v4635
    %vm4637 = vcmp.eq.f32.partialorder %v3155, inf
    %v4638 = vsel %vm4637, %v3155, %v4636
    %vm4639 = vcmp.eq.f32.partialorder %v3155, 0.0
    %v4640 = vand.u32 %v3155, 2147483648
    %v4641 = vsel %vm4639, %v4640, %v4638
    %v4642 = vrsqrt.pop %v3156
    %v4643 = vmul.f32 %v3156, %v4642
    %vm4644 = vcmp.eq.f32.partialorder %v3156, inf
    %v4645 = vsel %vm4644, %v3156, %v4643
    %vm4646 = vcmp.eq.f32.partialorder %v3156, 0.0
    %v4647 = vand.u32 %v3156, 2147483648
    %v4648 = vsel %vm4646, %v4647, %v4645
    %v4649 = vrsqrt.pop %v3157
    %v4650 = vmul.f32 %v3157, %v4649
    %vm4651 = vcmp.eq.f32.partialorder %v3157, inf
    %v4652 = vsel %vm4651, %v3157, %v4650
    %vm4653 = vcmp.eq.f32.partialorder %v3157, 0.0
    %v4654 = vand.u32 %v3157, 2147483648
    %v4655 = vsel %vm4653, %v4654, %v4652
    %v4656 = vrsqrt.pop %v3158
    %v4657 = vmul.f32 %v3158, %v4656
    %vm4658 = vcmp.eq.f32.partialorder %v3158, inf
    %v4659 = vsel %vm4658, %v3158, %v4657
    %vm4660 = vcmp.eq.f32.partialorder %v3158, 0.0
    %v4661 = vand.u32 %v3158, 2147483648
    %v4662 = vsel %vm4660, %v4661, %v4659
    %v4663 = vrsqrt.pop %v3159
    %v4664 = vmul.f32 %v3159, %v4663
    %vm4665 = vcmp.eq.f32.partialorder %v3159, inf
    %v4666 = vsel %vm4665, %v3159, %v4664
    %vm4667 = vcmp.eq.f32.partialorder %v3159, 0.0
    %v4668 = vand.u32 %v3159, 2147483648
    %v4669 = vsel %vm4667, %v4668, %v4666
    %v4670 = vrsqrt.pop %v3160
    %v4671 = vmul.f32 %v3160, %v4670
    %vm4672 = vcmp.eq.f32.partialorder %v3160, inf
    %v4673 = vsel %vm4672, %v3160, %v4671
    %vm4674 = vcmp.eq.f32.partialorder %v3160, 0.0
    %v4675 = vand.u32 %v3160, 2147483648
    %v4676 = vsel %vm4674, %v4675, %v4673
    %v4677 = vrsqrt.pop %v3161
    %v4678 = vmul.f32 %v3161, %v4677
    %vm4679 = vcmp.eq.f32.partialorder %v3161, inf
    %v4680 = vsel %vm4679, %v3161, %v4678
    %vm4681 = vcmp.eq.f32.partialorder %v3161, 0.0
    %v4682 = vand.u32 %v3161, 2147483648
    %v4683 = vsel %vm4681, %v4682, %v4680
    %v4684 = vrsqrt.pop %v3162
    %v4685 = vmul.f32 %v3162, %v4684
    %vm4686 = vcmp.eq.f32.partialorder %v3162, inf
    %v4687 = vsel %vm4686, %v3162, %v4685
    %vm4688 = vcmp.eq.f32.partialorder %v3162, 0.0
    %v4689 = vand.u32 %v3162, 2147483648
    %v4690 = vsel %vm4688, %v4689, %v4687
    %v4691 = vrsqrt.pop %v3163
    %v4692 = vmul.f32 %v3163, %v4691
    %vm4693 = vcmp.eq.f32.partialorder %v3163, inf
    %v4694 = vsel %vm4693, %v3163, %v4692
    %vm4695 = vcmp.eq.f32.partialorder %v3163, 0.0
    %v4696 = vand.u32 %v3163, 2147483648
    %v4697 = vsel %vm4695, %v4696, %v4694
    %v4698 = vrsqrt.pop %v3164
    %v4699 = vmul.f32 %v3164, %v4698
    %vm4700 = vcmp.eq.f32.partialorder %v3164, inf
    %v4701 = vsel %vm4700, %v3164, %v4699
    %vm4702 = vcmp.eq.f32.partialorder %v3164, 0.0
    %v4703 = vand.u32 %v3164, 2147483648
    %v4704 = vsel %vm4702, %v4703, %v4701
    %v4705 = vrsqrt.pop %v3165
    %v4706 = vmul.f32 %v3165, %v4705
    %vm4707 = vcmp.eq.f32.partialorder %v3165, inf
    %v4708 = vsel %vm4707, %v3165, %v4706
    %vm4709 = vcmp.eq.f32.partialorder %v3165, 0.0
    %v4710 = vand.u32 %v3165, 2147483648
    %v4711 = vsel %vm4709, %v4710, %v4708
    %v4712 = vrsqrt.pop %v3166
    %v4713 = vmul.f32 %v3166, %v4712
    %vm4714 = vcmp.eq.f32.partialorder %v3166, inf
    %v4715 = vsel %vm4714, %v3166, %v4713
    %vm4716 = vcmp.eq.f32.partialorder %v3166, 0.0
    %v4717 = vand.u32 %v3166, 2147483648
    %v4718 = vsel %vm4716, %v4717, %v4715
    %v4719 = vrsqrt.pop %v3167
    %v4720 = vmul.f32 %v3167, %v4719
    %vm4721 = vcmp.eq.f32.partialorder %v3167, inf
    %v4722 = vsel %vm4721, %v3167, %v4720
    %vm4723 = vcmp.eq.f32.partialorder %v3167, 0.0
    %v4724 = vand.u32 %v3167, 2147483648
    %v4725 = vsel %vm4723, %v4724, %v4722
    %v4726 = vrsqrt.pop %v3168
    %v4727 = vmul.f32 %v3168, %v4726
    %vm4728 = vcmp.eq.f32.partialorder %v3168, inf
    %v4729 = vsel %vm4728, %v3168, %v4727
    %vm4730 = vcmp.eq.f32.partialorder %v3168, 0.0
    %v4731 = vand.u32 %v3168, 2147483648
    %v4732 = vsel %vm4730, %v4731, %v4729
    %v4733 = vrsqrt.pop %v3169
    %v4734 = vmul.f32 %v3169, %v4733
    %vm4735 = vcmp.eq.f32.partialorder %v3169, inf
    %v4736 = vsel %vm4735, %v3169, %v4734
    %vm4737 = vcmp.eq.f32.partialorder %v3169, 0.0
    %v4738 = vand.u32 %v3169, 2147483648
    %v4739 = vsel %vm4737, %v4738, %v4736
    %v4740 = vrsqrt.pop %v3170
    %v4741 = vmul.f32 %v3170, %v4740
    %vm4742 = vcmp.eq.f32.partialorder %v3170, inf
    %v4743 = vsel %vm4742, %v3170, %v4741
    %vm4744 = vcmp.eq.f32.partialorder %v3170, 0.0
    %v4745 = vand.u32 %v3170, 2147483648
    %v4746 = vsel %vm4744, %v4745, %v4743
    %v4747 = vrsqrt.pop %v3171
    %v4748 = vmul.f32 %v3171, %v4747
    %vm4749 = vcmp.eq.f32.partialorder %v3171, inf
    %v4750 = vsel %vm4749, %v3171, %v4748
    %vm4751 = vcmp.eq.f32.partialorder %v3171, 0.0
    %v4752 = vand.u32 %v3171, 2147483648
    %v4753 = vsel %vm4751, %v4752, %v4750
    %v4754 = vrsqrt.pop %v3172
    %v4755 = vmul.f32 %v3172, %v4754
    %vm4756 = vcmp.eq.f32.partialorder %v3172, inf
    %v4757 = vsel %vm4756, %v3172, %v4755
    %vm4758 = vcmp.eq.f32.partialorder %v3172, 0.0
    %v4759 = vand.u32 %v3172, 2147483648
    %v4760 = vsel %vm4758, %v4759, %v4757
    %v4761 = vrsqrt.pop %v3173
    %v4762 = vmul.f32 %v3173, %v4761
    %vm4763 = vcmp.eq.f32.partialorder %v3173, inf
    %v4764 = vsel %vm4763, %v3173, %v4762
    %vm4765 = vcmp.eq.f32.partialorder %v3173, 0.0
    %v4766 = vand.u32 %v3173, 2147483648
    %v4767 = vsel %vm4765, %v4766, %v4764
    %v4768 = vrsqrt.pop %v3174
    %v4769 = vmul.f32 %v3174, %v4768
    %vm4770 = vcmp.eq.f32.partialorder %v3174, inf
    %v4771 = vsel %vm4770, %v3174, %v4769
    %vm4772 = vcmp.eq.f32.partialorder %v3174, 0.0
    %v4773 = vand.u32 %v3174, 2147483648
    %v4774 = vsel %vm4772, %v4773, %v4771
    %v4775 = vrsqrt.pop %v3175
    %v4776 = vmul.f32 %v3175, %v4775
    %vm4777 = vcmp.eq.f32.partialorder %v3175, inf
    %v4778 = vsel %vm4777, %v3175, %v4776
    %vm4779 = vcmp.eq.f32.partialorder %v3175, 0.0
    %v4780 = vand.u32 %v3175, 2147483648
    %v4781 = vsel %vm4779, %v4780, %v4778
    %v4782 = vrsqrt.pop %v3176
    %v4783 = vmul.f32 %v3176, %v4782
    %vm4784 = vcmp.eq.f32.partialorder %v3176, inf
    %v4785 = vsel %vm4784, %v3176, %v4783
    %vm4786 = vcmp.eq.f32.partialorder %v3176, 0.0
    %v4787 = vand.u32 %v3176, 2147483648
    %v4788 = vsel %vm4786, %v4787, %v4785
    %v4789 = vrsqrt.pop %v3177
    %v4790 = vmul.f32 %v3177, %v4789
    %vm4791 = vcmp.eq.f32.partialorder %v3177, inf
    %v4792 = vsel %vm4791, %v3177, %v4790
    %vm4793 = vcmp.eq.f32.partialorder %v3177, 0.0
    %v4794 = vand.u32 %v3177, 2147483648
    %v4795 = vsel %vm4793, %v4794, %v4792
    %v4796 = vrsqrt.pop %v3178
    %v4797 = vmul.f32 %v3178, %v4796
    %vm4798 = vcmp.eq.f32.partialorder %v3178, inf
    %v4799 = vsel %vm4798, %v3178, %v4797
    %vm4800 = vcmp.eq.f32.partialorder %v3178, 0.0
    %v4801 = vand.u32 %v3178, 2147483648
    %v4802 = vsel %vm4800, %v4801, %v4799
    %v4803 = vrsqrt.pop %v3179
    %v4804 = vmul.f32 %v3179, %v4803
    %vm4805 = vcmp.eq.f32.partialorder %v3179, inf
    %v4806 = vsel %vm4805, %v3179, %v4804
    %vm4807 = vcmp.eq.f32.partialorder %v3179, 0.0
    %v4808 = vand.u32 %v3179, 2147483648
    %v4809 = vsel %vm4807, %v4808, %v4806
    %v4810 = vrsqrt.pop %v3180
    %v4811 = vmul.f32 %v3180, %v4810
    %vm4812 = vcmp.eq.f32.partialorder %v3180, inf
    %v4813 = vsel %vm4812, %v3180, %v4811
    %vm4814 = vcmp.eq.f32.partialorder %v3180, 0.0
    %v4815 = vand.u32 %v3180, 2147483648
    %v4816 = vsel %vm4814, %v4815, %v4813
    %v4817 = vrsqrt.pop %v3181
    %v4818 = vmul.f32 %v3181, %v4817
    %vm4819 = vcmp.eq.f32.partialorder %v3181, inf
    %v4820 = vsel %vm4819, %v3181, %v4818
    %vm4821 = vcmp.eq.f32.partialorder %v3181, 0.0
    %v4822 = vand.u32 %v3181, 2147483648
    %v4823 = vsel %vm4821, %v4822, %v4820
    %v4824 = vrsqrt.pop %v3182
    %v4825 = vmul.f32 %v3182, %v4824
    %vm4826 = vcmp.eq.f32.partialorder %v3182, inf
    %v4827 = vsel %vm4826, %v3182, %v4825
    %vm4828 = vcmp.eq.f32.partialorder %v3182, 0.0
    %v4829 = vand.u32 %v3182, 2147483648
    %v4830 = vsel %vm4828, %v4829, %v4827
    %v4831 = vrsqrt.pop %v3183
    %v4832 = vmul.f32 %v3183, %v4831
    %vm4833 = vcmp.eq.f32.partialorder %v3183, inf
    %v4834 = vsel %vm4833, %v3183, %v4832
    %vm4835 = vcmp.eq.f32.partialorder %v3183, 0.0
    %v4836 = vand.u32 %v3183, 2147483648
    %v4837 = vsel %vm4835, %v4836, %v4834
    %v4838 = vrsqrt.pop %v3184
    %v4839 = vmul.f32 %v3184, %v4838
    %vm4840 = vcmp.eq.f32.partialorder %v3184, inf
    %v4841 = vsel %vm4840, %v3184, %v4839
    %vm4842 = vcmp.eq.f32.partialorder %v3184, 0.0
    %v4843 = vand.u32 %v3184, 2147483648
    %v4844 = vsel %vm4842, %v4843, %v4841
    %v4845 = vrsqrt.pop %v3185
    %v4846 = vmul.f32 %v3185, %v4845
    %vm4847 = vcmp.eq.f32.partialorder %v3185, inf
    %v4848 = vsel %vm4847, %v3185, %v4846
    %vm4849 = vcmp.eq.f32.partialorder %v3185, 0.0
    %v4850 = vand.u32 %v3185, 2147483648
    %v4851 = vsel %vm4849, %v4850, %v4848
    %v4852 = vrsqrt.pop %v3186
    %v4853 = vmul.f32 %v3186, %v4852
    %vm4854 = vcmp.eq.f32.partialorder %v3186, inf
    %v4855 = vsel %vm4854, %v3186, %v4853
    %vm4856 = vcmp.eq.f32.partialorder %v3186, 0.0
    %v4857 = vand.u32 %v3186, 2147483648
    %v4858 = vsel %vm4856, %v4857, %v4855
    %v4859 = vrsqrt.pop %v3187
    %v4860 = vmul.f32 %v3187, %v4859
    %vm4861 = vcmp.eq.f32.partialorder %v3187, inf
    %v4862 = vsel %vm4861, %v3187, %v4860
    %vm4863 = vcmp.eq.f32.partialorder %v3187, 0.0
    %v4864 = vand.u32 %v3187, 2147483648
    %v4865 = vsel %vm4863, %v4864, %v4862
    %v4866 = vrsqrt.pop %v3188
    %v4867 = vmul.f32 %v3188, %v4866
    %vm4868 = vcmp.eq.f32.partialorder %v3188, inf
    %v4869 = vsel %vm4868, %v3188, %v4867
    %vm4870 = vcmp.eq.f32.partialorder %v3188, 0.0
    %v4871 = vand.u32 %v3188, 2147483648
    %v4872 = vsel %vm4870, %v4871, %v4869
    %v4873 = vrsqrt.pop %v3189
    %v4874 = vmul.f32 %v3189, %v4873
    %vm4875 = vcmp.eq.f32.partialorder %v3189, inf
    %v4876 = vsel %vm4875, %v3189, %v4874
    %vm4877 = vcmp.eq.f32.partialorder %v3189, 0.0
    %v4878 = vand.u32 %v3189, 2147483648
    %v4879 = vsel %vm4877, %v4878, %v4876
    %v4880 = vrsqrt.pop %v3190
    %v4881 = vmul.f32 %v3190, %v4880
    %vm4882 = vcmp.eq.f32.partialorder %v3190, inf
    %v4883 = vsel %vm4882, %v3190, %v4881
    %vm4884 = vcmp.eq.f32.partialorder %v3190, 0.0
    %v4885 = vand.u32 %v3190, 2147483648
    %v4886 = vsel %vm4884, %v4885, %v4883
    %v4887 = vrsqrt.pop %v3191
    %v4888 = vmul.f32 %v3191, %v4887
    %vm4889 = vcmp.eq.f32.partialorder %v3191, inf
    %v4890 = vsel %vm4889, %v3191, %v4888
    %vm4891 = vcmp.eq.f32.partialorder %v3191, 0.0
    %v4892 = vand.u32 %v3191, 2147483648
    %v4893 = vsel %vm4891, %v4892, %v4890
    %v4894 = vrsqrt.pop %v3192
    %v4895 = vmul.f32 %v3192, %v4894
    %vm4896 = vcmp.eq.f32.partialorder %v3192, inf
    %v4897 = vsel %vm4896, %v3192, %v4895
    %vm4898 = vcmp.eq.f32.partialorder %v3192, 0.0
    %v4899 = vand.u32 %v3192, 2147483648
    %v4900 = vsel %vm4898, %v4899, %v4897
    %v4901 = vrsqrt.pop %v3193
    %v4902 = vmul.f32 %v3193, %v4901
    %vm4903 = vcmp.eq.f32.partialorder %v3193, inf
    %v4904 = vsel %vm4903, %v3193, %v4902
    %vm4905 = vcmp.eq.f32.partialorder %v3193, 0.0
    %v4906 = vand.u32 %v3193, 2147483648
    %v4907 = vsel %vm4905, %v4906, %v4904
    %v4908 = vrsqrt.pop %v3194
    %v4909 = vmul.f32 %v3194, %v4908
    %vm4910 = vcmp.eq.f32.partialorder %v3194, inf
    %v4911 = vsel %vm4910, %v3194, %v4909
    %vm4912 = vcmp.eq.f32.partialorder %v3194, 0.0
    %v4913 = vand.u32 %v3194, 2147483648
    %v4914 = vsel %vm4912, %v4913, %v4911
    %v4915 = vrsqrt.pop %v3195
    %v4916 = vmul.f32 %v3195, %v4915
    %vm4917 = vcmp.eq.f32.partialorder %v3195, inf
    %v4918 = vsel %vm4917, %v3195, %v4916
    %vm4919 = vcmp.eq.f32.partialorder %v3195, 0.0
    %v4920 = vand.u32 %v3195, 2147483648
    %v4921 = vsel %vm4919, %v4920, %v4918
    %v4922 = vrsqrt.pop %v3196
    %v4923 = vmul.f32 %v3196, %v4922
    %vm4924 = vcmp.eq.f32.partialorder %v3196, inf
    %v4925 = vsel %vm4924, %v3196, %v4923
    %vm4926 = vcmp.eq.f32.partialorder %v3196, 0.0
    %v4927 = vand.u32 %v3196, 2147483648
    %v4928 = vsel %vm4926, %v4927, %v4925
    %v4929 = vrsqrt.pop %v3197
    %v4930 = vmul.f32 %v3197, %v4929
    %vm4931 = vcmp.eq.f32.partialorder %v3197, inf
    %v4932 = vsel %vm4931, %v3197, %v4930
    %vm4933 = vcmp.eq.f32.partialorder %v3197, 0.0
    %v4934 = vand.u32 %v3197, 2147483648
    %v4935 = vsel %vm4933, %v4934, %v4932
    %v4936 = vrsqrt.pop %v3198
    %v4937 = vmul.f32 %v3198, %v4936
    %vm4938 = vcmp.eq.f32.partialorder %v3198, inf
    %v4939 = vsel %vm4938, %v3198, %v4937
    %vm4940 = vcmp.eq.f32.partialorder %v3198, 0.0
    %v4941 = vand.u32 %v3198, 2147483648
    %v4942 = vsel %vm4940, %v4941, %v4939
    %v4943 = vrsqrt.pop %v3199
    %v4944 = vmul.f32 %v3199, %v4943
    %vm4945 = vcmp.eq.f32.partialorder %v3199, inf
    %v4946 = vsel %vm4945, %v3199, %v4944
    %vm4947 = vcmp.eq.f32.partialorder %v3199, 0.0
    %v4948 = vand.u32 %v3199, 2147483648
    %v4949 = vsel %vm4947, %v4948, %v4946
    %v4950 = vrsqrt.pop %v3200
    %v4951 = vmul.f32 %v3200, %v4950
    %vm4952 = vcmp.eq.f32.partialorder %v3200, inf
    %v4953 = vsel %vm4952, %v3200, %v4951
    %vm4954 = vcmp.eq.f32.partialorder %v3200, 0.0
    %v4955 = vand.u32 %v3200, 2147483648
    %v4956 = vsel %vm4954, %v4955, %v4953
    %v4957 = vrsqrt.pop %v3201
    %v4958 = vmul.f32 %v3201, %v4957
    %vm4959 = vcmp.eq.f32.partialorder %v3201, inf
    %v4960 = vsel %vm4959, %v3201, %v4958
    %vm4961 = vcmp.eq.f32.partialorder %v3201, 0.0
    %v4962 = vand.u32 %v3201, 2147483648
    %v4963 = vsel %vm4961, %v4962, %v4960
    %v4964 = vrsqrt.pop %v3202
    %v4965 = vmul.f32 %v3202, %v4964
    %vm4966 = vcmp.eq.f32.partialorder %v3202, inf
    %v4967 = vsel %vm4966, %v3202, %v4965
    %vm4968 = vcmp.eq.f32.partialorder %v3202, 0.0
    %v4969 = vand.u32 %v3202, 2147483648
    %v4970 = vsel %vm4968, %v4969, %v4967
    %v4971 = vrsqrt.pop %v3203
    %v4972 = vmul.f32 %v3203, %v4971
    %vm4973 = vcmp.eq.f32.partialorder %v3203, inf
    %v4974 = vsel %vm4973, %v3203, %v4972
    %vm4975 = vcmp.eq.f32.partialorder %v3203, 0.0
    %v4976 = vand.u32 %v3203, 2147483648
    %v4977 = vsel %vm4975, %v4976, %v4974
    %v4978 = vrsqrt.pop %v3204
    %v4979 = vmul.f32 %v3204, %v4978
    %vm4980 = vcmp.eq.f32.partialorder %v3204, inf
    %v4981 = vsel %vm4980, %v3204, %v4979
    %vm4982 = vcmp.eq.f32.partialorder %v3204, 0.0
    %v4983 = vand.u32 %v3204, 2147483648
    %v4984 = vsel %vm4982, %v4983, %v4981
    %v4985 = vrsqrt.pop %v3205
    %v4986 = vmul.f32 %v3205, %v4985
    %vm4987 = vcmp.eq.f32.partialorder %v3205, inf
    %v4988 = vsel %vm4987, %v3205, %v4986
    %vm4989 = vcmp.eq.f32.partialorder %v3205, 0.0
    %v4990 = vand.u32 %v3205, 2147483648
    %v4991 = vsel %vm4989, %v4990, %v4988
    %v4992 = vrsqrt.pop %v3206
    %v4993 = vmul.f32 %v3206, %v4992
    %vm4994 = vcmp.eq.f32.partialorder %v3206, inf
    %v4995 = vsel %vm4994, %v3206, %v4993
    %vm4996 = vcmp.eq.f32.partialorder %v3206, 0.0
    %v4997 = vand.u32 %v3206, 2147483648
    %v4998 = vsel %vm4996, %v4997, %v4995
    %v4999 = vld [vmem:[%s2] sm:$0xff]
    %v5000 = vld [vmem:[%s2 + $0x8] sm:$0xff]
    %v5001 = vld [vmem:[%s2 + $0x10] sm:$0xff]
    %v5002 = vld [vmem:[%s2 + $0x18] sm:$0xff]
    %v5003 = vld [vmem:[%s2 + $0x20] sm:$0xff]
    %v5004 = vld [vmem:[%s2 + $0x28] sm:$0xff]
    %v5005 = vld [vmem:[%s2 + $0x30] sm:$0xff]
    %v5006 = vld [vmem:[%s2 + $0x38] sm:$0xff]
    %v5007 = vld [vmem:[%s2 + $0x40] sm:$0xff]
    %v5008 = vld [vmem:[%s2 + $0x48] sm:$0xff]
    %v5009 = vld [vmem:[%s2 + $0x50] sm:$0xff]
    %v5010 = vld [vmem:[%s2 + $0x58] sm:$0xff]
    %v5011 = vld [vmem:[%s2 + $0x60] sm:$0xff]
    %v5012 = vld [vmem:[%s2 + $0x68] sm:$0xff]
    %v5013 = vld [vmem:[%s2 + $0x70] sm:$0xff]
    %v5014 = vld [vmem:[%s2 + $0x78] sm:$0xff]
    %v5015 = vld [vmem:[%s2 + $0x80] sm:$0xff]
    %v5016 = vld [vmem:[%s2 + $0x88] sm:$0xff]
    %v5017 = vld [vmem:[%s2 + $0x90] sm:$0xff]
    %v5018 = vld [vmem:[%s2 + $0x98] sm:$0xff]
    %v5019 = vld [vmem:[%s2 + $0xa0] sm:$0xff]
    %v5020 = vld [vmem:[%s2 + $0xa8] sm:$0xff]
    %v5021 = vld [vmem:[%s2 + $0xb0] sm:$0xff]
    %v5022 = vld [vmem:[%s2 + $0xb8] sm:$0xff]
    %v5023 = vld [vmem:[%s2 + $0xc0] sm:$0xff]
    %v5024 = vld [vmem:[%s2 + $0xc8] sm:$0xff]
    %v5025 = vld [vmem:[%s2 + $0xd0] sm:$0xff]
    %v5026 = vld [vmem:[%s2 + $0xd8] sm:$0xff]
    %v5027 = vld [vmem:[%s2 + $0xe0] sm:$0xff]
    %v5028 = vld [vmem:[%s2 + $0xe8] sm:$0xff]
    %v5029 = vld [vmem:[%s2 + $0xf0] sm:$0xff]
    %v5030 = vld [vmem:[%s2 + $0xf8] sm:$0xff]
    %v5031 = vld [vmem:[%s2 + $0x100] sm:$0xff]
    %v5032 = vld [vmem:[%s2 + $0x108] sm:$0xff]
    %v5033 = vld [vmem:[%s2 + $0x110] sm:$0xff]
    %v5034 = vld [vmem:[%s2 + $0x118] sm:$0xff]
    %v5035 = vld [vmem:[%s2 + $0x120] sm:$0xff]
    %v5036 = vld [vmem:[%s2 + $0x128] sm:$0xff]
    %v5037 = vld [vmem:[%s2 + $0x130] sm:$0xff]
    %v5038 = vld [vmem:[%s2 + $0x138] sm:$0xff]
    %v5039 = vld [vmem:[%s2 + $0x140] sm:$0xff]
    %v5040 = vld [vmem:[%s2 + $0x148] sm:$0xff]
    %v5041 = vld [vmem:[%s2 + $0x150] sm:$0xff]
    %v5042 = vld [vmem:[%s2 + $0x158] sm:$0xff]
    %v5043 = vld [vmem:[%s2 + $0x160] sm:$0xff]
    %v5044 = vld [vmem:[%s2 + $0x168] sm:$0xff]
    %v5045 = vld [vmem:[%s2 + $0x170] sm:$0xff]
    %v5046 = vld [vmem:[%s2 + $0x178] sm:$0xff]
    %v5047 = vld [vmem:[%s2 + $0x180] sm:$0xff]
    %v5048 = vld [vmem:[%s2 + $0x188] sm:$0xff]
    %v5049 = vld [vmem:[%s2 + $0x190] sm:$0xff]
    %v5050 = vld [vmem:[%s2 + $0x198] sm:$0xff]
    %v5051 = vld [vmem:[%s2 + $0x1a0] sm:$0xff]
    %v5052 = vld [vmem:[%s2 + $0x1a8] sm:$0xff]
    %v5053 = vld [vmem:[%s2 + $0x1b0] sm:$0xff]
    %v5054 = vld [vmem:[%s2 + $0x1b8] sm:$0xff]
    %v5055 = vld [vmem:[%s2 + $0x1c0] sm:$0xff]
    %v5056 = vld [vmem:[%s2 + $0x1c8] sm:$0xff]
    %v5057 = vld [vmem:[%s2 + $0x1d0] sm:$0xff]
    %v5058 = vld [vmem:[%s2 + $0x1d8] sm:$0xff]
    %v5059 = vld [vmem:[%s2 + $0x1e0] sm:$0xff]
    %v5060 = vld [vmem:[%s2 + $0x1e8] sm:$0xff]
    %v5061 = vld [vmem:[%s2 + $0x1f0] sm:$0xff]
    %v5062 = vld [vmem:[%s2 + $0x1f8] sm:$0xff]
    %v5063 = vld [vmem:[%s2 + $0x200] sm:$0xff]
    %v5064 = vld [vmem:[%s2 + $0x208] sm:$0xff]
    %v5065 = vld [vmem:[%s2 + $0x210] sm:$0xff]
    %v5066 = vld [vmem:[%s2 + $0x218] sm:$0xff]
    %v5067 = vld [vmem:[%s2 + $0x220] sm:$0xff]
    %v5068 = vld [vmem:[%s2 + $0x228] sm:$0xff]
    %v5069 = vld [vmem:[%s2 + $0x230] sm:$0xff]
    %v5070 = vld [vmem:[%s2 + $0x238] sm:$0xff]
    %v5071 = vld [vmem:[%s2 + $0x240] sm:$0xff]
    %v5072 = vld [vmem:[%s2 + $0x248] sm:$0xff]
    %v5073 = vld [vmem:[%s2 + $0x250] sm:$0xff]
    %v5074 = vld [vmem:[%s2 + $0x258] sm:$0xff]
    %v5075 = vld [vmem:[%s2 + $0x260] sm:$0xff]
    %v5076 = vld [vmem:[%s2 + $0x268] sm:$0xff]
    %v5077 = vld [vmem:[%s2 + $0x270] sm:$0xff]
    %v5078 = vld [vmem:[%s2 + $0x278] sm:$0xff]
    %v5079 = vld [vmem:[%s2 + $0x280] sm:$0xff]
    %v5080 = vld [vmem:[%s2 + $0x288] sm:$0xff]
    %v5081 = vld [vmem:[%s2 + $0x290] sm:$0xff]
    %v5082 = vld [vmem:[%s2 + $0x298] sm:$0xff]
    %v5083 = vld [vmem:[%s2 + $0x2a0] sm:$0xff]
    %v5084 = vld [vmem:[%s2 + $0x2a8] sm:$0xff]
    %v5085 = vld [vmem:[%s2 + $0x2b0] sm:$0xff]
    %v5086 = vld [vmem:[%s2 + $0x2b8] sm:$0xff]
    %v5087 = vld [vmem:[%s2 + $0x2c0] sm:$0xff]
    %v5088 = vld [vmem:[%s2 + $0x2c8] sm:$0xff]
    %v5089 = vld [vmem:[%s2 + $0x2d0] sm:$0xff]
    %v5090 = vld [vmem:[%s2 + $0x2d8] sm:$0xff]
    %v5091 = vld [vmem:[%s2 + $0x2e0] sm:$0xff]
    %v5092 = vld [vmem:[%s2 + $0x2e8] sm:$0xff]
    %v5093 = vld [vmem:[%s2 + $0x2f0] sm:$0xff]
    %v5094 = vld [vmem:[%s2 + $0x2f8] sm:$0xff]
    %v5095 = vld [vmem:[%s2 + $0x300] sm:$0xff]
    %v5096 = vld [vmem:[%s2 + $0x308] sm:$0xff]
    %v5097 = vld [vmem:[%s2 + $0x310] sm:$0xff]
    %v5098 = vld [vmem:[%s2 + $0x318] sm:$0xff]
    %v5099 = vld [vmem:[%s2 + $0x320] sm:$0xff]
    %v5100 = vld [vmem:[%s2 + $0x328] sm:$0xff]
    %v5101 = vld [vmem:[%s2 + $0x330] sm:$0xff]
    %v5102 = vld [vmem:[%s2 + $0x338] sm:$0xff]
    %v5103 = vld [vmem:[%s2 + $0x340] sm:$0xff]
    %v5104 = vld [vmem:[%s2 + $0x348] sm:$0xff]
    %v5105 = vld [vmem:[%s2 + $0x350] sm:$0xff]
    %v5106 = vld [vmem:[%s2 + $0x358] sm:$0xff]
    %v5107 = vld [vmem:[%s2 + $0x360] sm:$0xff]
    %v5108 = vld [vmem:[%s2 + $0x368] sm:$0xff]
    %v5109 = vld [vmem:[%s2 + $0x370] sm:$0xff]
    %v5110 = vld [vmem:[%s2 + $0x378] sm:$0xff]
    %v5111 = vld [vmem:[%s2 + $0x380] sm:$0xff]
    %v5112 = vld [vmem:[%s2 + $0x388] sm:$0xff]
    %v5113 = vld [vmem:[%s2 + $0x390] sm:$0xff]
    %v5114 = vld [vmem:[%s2 + $0x398] sm:$0xff]
    %v5115 = vld [vmem:[%s2 + $0x3a0] sm:$0xff]
    %v5116 = vld [vmem:[%s2 + $0x3a8] sm:$0xff]
    %v5117 = vld [vmem:[%s2 + $0x3b0] sm:$0xff]
    %v5118 = vld [vmem:[%s2 + $0x3b8] sm:$0xff]
    %v5119 = vld [vmem:[%s2 + $0x3c0] sm:$0xff]
    %v5120 = vld [vmem:[%s2 + $0x3c8] sm:$0xff]
    %v5121 = vld [vmem:[%s2 + $0x3d0] sm:$0xff]
    %v5122 = vld [vmem:[%s2 + $0x3d8] sm:$0xff]
    %v5123 = vld [vmem:[%s2 + $0x3e0] sm:$0xff]
    %v5124 = vld [vmem:[%s2 + $0x3e8] sm:$0xff]
    %v5125 = vld [vmem:[%s2 + $0x3f0] sm:$0xff]
    %v5126 = vld [vmem:[%s2 + $0x3f8] sm:$0xff]
    %v5127 = vld [vmem:[%s2 + $0x400] sm:$0xff]
    %v5128 = vld [vmem:[%s2 + $0x408] sm:$0xff]
    %v5129 = vld [vmem:[%s2 + $0x410] sm:$0xff]
    %v5130 = vld [vmem:[%s2 + $0x418] sm:$0xff]
    %v5131 = vld [vmem:[%s2 + $0x420] sm:$0xff]
    %v5132 = vld [vmem:[%s2 + $0x428] sm:$0xff]
    %v5133 = vld [vmem:[%s2 + $0x430] sm:$0xff]
    %v5134 = vld [vmem:[%s2 + $0x438] sm:$0xff]
    %v5135 = vld [vmem:[%s2 + $0x440] sm:$0xff]
    %v5136 = vld [vmem:[%s2 + $0x448] sm:$0xff]
    %v5137 = vld [vmem:[%s2 + $0x450] sm:$0xff]
    %v5138 = vld [vmem:[%s2 + $0x458] sm:$0xff]
    %v5139 = vld [vmem:[%s2 + $0x460] sm:$0xff]
    %v5140 = vld [vmem:[%s2 + $0x468] sm:$0xff]
    %v5141 = vld [vmem:[%s2 + $0x470] sm:$0xff]
    %v5142 = vld [vmem:[%s2 + $0x478] sm:$0xff]
    %v5143 = vld [vmem:[%s2 + $0x480] sm:$0xff]
    %v5144 = vld [vmem:[%s2 + $0x488] sm:$0xff]
    %v5145 = vld [vmem:[%s2 + $0x490] sm:$0xff]
    %v5146 = vld [vmem:[%s2 + $0x498] sm:$0xff]
    %v5147 = vld [vmem:[%s2 + $0x4a0] sm:$0xff]
    %v5148 = vld [vmem:[%s2 + $0x4a8] sm:$0xff]
    %v5149 = vld [vmem:[%s2 + $0x4b0] sm:$0xff]
    %v5150 = vld [vmem:[%s2 + $0x4b8] sm:$0xff]
    %v5151 = vld [vmem:[%s2 + $0x4c0] sm:$0xff]
    %v5152 = vld [vmem:[%s2 + $0x4c8] sm:$0xff]
    %v5153 = vld [vmem:[%s2 + $0x4d0] sm:$0xff]
    %v5154 = vld [vmem:[%s2 + $0x4d8] sm:$0xff]
    %v5155 = vld [vmem:[%s2 + $0x4e0] sm:$0xff]
    %v5156 = vld [vmem:[%s2 + $0x4e8] sm:$0xff]
    %v5157 = vld [vmem:[%s2 + $0x4f0] sm:$0xff]
    %v5158 = vld [vmem:[%s2 + $0x4f8] sm:$0xff]
    %v5159 = vld [vmem:[%s2 + $0x500] sm:$0xff]
    %v5160 = vld [vmem:[%s2 + $0x508] sm:$0xff]
    %v5161 = vld [vmem:[%s2 + $0x510] sm:$0xff]
    %v5162 = vld [vmem:[%s2 + $0x518] sm:$0xff]
    %v5163 = vld [vmem:[%s2 + $0x520] sm:$0xff]
    %v5164 = vld [vmem:[%s2 + $0x528] sm:$0xff]
    %v5165 = vld [vmem:[%s2 + $0x530] sm:$0xff]
    %v5166 = vld [vmem:[%s2 + $0x538] sm:$0xff]
    %v5167 = vld [vmem:[%s2 + $0x540] sm:$0xff]
    %v5168 = vld [vmem:[%s2 + $0x548] sm:$0xff]
    %v5169 = vld [vmem:[%s2 + $0x550] sm:$0xff]
    %v5170 = vld [vmem:[%s2 + $0x558] sm:$0xff]
    %v5171 = vld [vmem:[%s2 + $0x560] sm:$0xff]
    %v5172 = vld [vmem:[%s2 + $0x568] sm:$0xff]
    %v5173 = vld [vmem:[%s2 + $0x570] sm:$0xff]
    %v5174 = vld [vmem:[%s2 + $0x578] sm:$0xff]
    %v5175 = vld [vmem:[%s2 + $0x580] sm:$0xff]
    %v5176 = vld [vmem:[%s2 + $0x588] sm:$0xff]
    %v5177 = vld [vmem:[%s2 + $0x590] sm:$0xff]
    %v5178 = vld [vmem:[%s2 + $0x598] sm:$0xff]
    %v5179 = vld [vmem:[%s2 + $0x5a0] sm:$0xff]
    %v5180 = vld [vmem:[%s2 + $0x5a8] sm:$0xff]
    %v5181 = vld [vmem:[%s2 + $0x5b0] sm:$0xff]
    %v5182 = vld [vmem:[%s2 + $0x5b8] sm:$0xff]
    %v5183 = vld [vmem:[%s2 + $0x5c0] sm:$0xff]
    %v5184 = vld [vmem:[%s2 + $0x5c8] sm:$0xff]
    %v5185 = vld [vmem:[%s2 + $0x5d0] sm:$0xff]
    %v5186 = vld [vmem:[%s2 + $0x5d8] sm:$0xff]
    %v5187 = vld [vmem:[%s2 + $0x5e0] sm:$0xff]
    %v5188 = vld [vmem:[%s2 + $0x5e8] sm:$0xff]
    %v5189 = vld [vmem:[%s2 + $0x5f0] sm:$0xff]
    %v5190 = vld [vmem:[%s2 + $0x5f8] sm:$0xff]
    %v5191 = vld [vmem:[%s2 + $0x600] sm:$0xff]
    %v5192 = vld [vmem:[%s2 + $0x608] sm:$0xff]
    %v5193 = vld [vmem:[%s2 + $0x610] sm:$0xff]
    %v5194 = vld [vmem:[%s2 + $0x618] sm:$0xff]
    %v5195 = vld [vmem:[%s2 + $0x620] sm:$0xff]
    %v5196 = vld [vmem:[%s2 + $0x628] sm:$0xff]
    %v5197 = vld [vmem:[%s2 + $0x630] sm:$0xff]
    %v5198 = vld [vmem:[%s2 + $0x638] sm:$0xff]
    %v5199 = vld [vmem:[%s2 + $0x640] sm:$0xff]
    %v5200 = vld [vmem:[%s2 + $0x648] sm:$0xff]
    %v5201 = vld [vmem:[%s2 + $0x650] sm:$0xff]
    %v5202 = vld [vmem:[%s2 + $0x658] sm:$0xff]
    %v5203 = vld [vmem:[%s2 + $0x660] sm:$0xff]
    %v5204 = vld [vmem:[%s2 + $0x668] sm:$0xff]
    %v5205 = vld [vmem:[%s2 + $0x670] sm:$0xff]
    %v5206 = vld [vmem:[%s2 + $0x678] sm:$0xff]
    %v5207 = vld [vmem:[%s2 + $0x680] sm:$0xff]
    %v5208 = vld [vmem:[%s2 + $0x688] sm:$0xff]
    %v5209 = vld [vmem:[%s2 + $0x690] sm:$0xff]
    %v5210 = vld [vmem:[%s2 + $0x698] sm:$0xff]
    %v5211 = vld [vmem:[%s2 + $0x6a0] sm:$0xff]
    %v5212 = vld [vmem:[%s2 + $0x6a8] sm:$0xff]
    %v5213 = vld [vmem:[%s2 + $0x6b0] sm:$0xff]
    %v5214 = vld [vmem:[%s2 + $0x6b8] sm:$0xff]
    %v5215 = vld [vmem:[%s2 + $0x6c0] sm:$0xff]
    %v5216 = vld [vmem:[%s2 + $0x6c8] sm:$0xff]
    %v5217 = vld [vmem:[%s2 + $0x6d0] sm:$0xff]
    %v5218 = vld [vmem:[%s2 + $0x6d8] sm:$0xff]
    %v5219 = vld [vmem:[%s2 + $0x6e0] sm:$0xff]
    %v5220 = vld [vmem:[%s2 + $0x6e8] sm:$0xff]
    %v5221 = vld [vmem:[%s2 + $0x6f0] sm:$0xff]
    %v5222 = vld [vmem:[%s2 + $0x6f8] sm:$0xff]
    %v5223 = vld [vmem:[%s2 + $0x700] sm:$0xff]
    %v5224 = vld [vmem:[%s2 + $0x708] sm:$0xff]
    %v5225 = vld [vmem:[%s2 + $0x710] sm:$0xff]
    %v5226 = vld [vmem:[%s2 + $0x718] sm:$0xff]
    %v5227 = vld [vmem:[%s2 + $0x720] sm:$0xff]
    %v5228 = vld [vmem:[%s2 + $0x728] sm:$0xff]
    %v5229 = vld [vmem:[%s2 + $0x730] sm:$0xff]
    %v5230 = vld [vmem:[%s2 + $0x738] sm:$0xff]
    %v5231 = vld [vmem:[%s2 + $0x740] sm:$0xff]
    %v5232 = vld [vmem:[%s2 + $0x748] sm:$0xff]
    %v5233 = vld [vmem:[%s2 + $0x750] sm:$0xff]
    %v5234 = vld [vmem:[%s2 + $0x758] sm:$0xff]
    %v5235 = vld [vmem:[%s2 + $0x760] sm:$0xff]
    %v5236 = vld [vmem:[%s2 + $0x768] sm:$0xff]
    %v5237 = vld [vmem:[%s2 + $0x770] sm:$0xff]
    %v5238 = vld [vmem:[%s2 + $0x778] sm:$0xff]
    %v5239 = vld [vmem:[%s2 + $0x780] sm:$0xff]
    %v5240 = vld [vmem:[%s2 + $0x788] sm:$0xff]
    %v5241 = vld [vmem:[%s2 + $0x790] sm:$0xff]
    %v5242 = vld [vmem:[%s2 + $0x798] sm:$0xff]
    %v5243 = vld [vmem:[%s2 + $0x7a0] sm:$0xff]
    %v5244 = vld [vmem:[%s2 + $0x7a8] sm:$0xff]
    %v5245 = vld [vmem:[%s2 + $0x7b0] sm:$0xff]
    %v5246 = vld [vmem:[%s2 + $0x7b8] sm:$0xff]
    %v5247 = vld [vmem:[%s2 + $0x7c0] sm:$0xff]
    %v5248 = vld [vmem:[%s2 + $0x7c8] sm:$0xff]
    %v5249 = vld [vmem:[%s2 + $0x7d0] sm:$0xff]
    %v5250 = vld [vmem:[%s2 + $0x7d8] sm:$0xff]
    %v5251 = vld [vmem:[%s2 + $0x7e0] sm:$0xff]
    %v5252 = vld [vmem:[%s2 + $0x7e8] sm:$0xff]
    %v5253 = vld [vmem:[%s2 + $0x7f0] sm:$0xff]
    %v5254 = vld [vmem:[%s2 + $0x7f8] sm:$0xff]
    %v5255 = vmul.f32 %v1417, 30.0
    %v5256 = vmul.f32 %v1420, 30.0
    %v5257 = vmul.f32 %v1425, 30.0
    %v5258 = vmul.f32 %v1428, 30.0
    %v5259 = vmul.f32 %v1433, 30.0
    %v5260 = vmul.f32 %v1436, 30.0
    %v5261 = vmul.f32 %v1441, 30.0
    %v5262 = vmul.f32 %v1444, 30.0
    %v5263 = vmul.f32 %v1449, 30.0
    %v5264 = vmul.f32 %v1452, 30.0
    %v5265 = vmul.f32 %v1457, 30.0
    %v5266 = vmul.f32 %v1460, 30.0
    %v5267 = vmul.f32 %v1465, 30.0
    %v5268 = vmul.f32 %v1468, 30.0
    %v5269 = vmul.f32 %v1473, 30.0
    %v5270 = vmul.f32 %v1476, 30.0
    %v5271 = vmul.f32 %v1481, 30.0
    %v5272 = vmul.f32 %v1484, 30.0
    %v5273 = vmul.f32 %v1489, 30.0
    %v5274 = vmul.f32 %v1492, 30.0
    %v5275 = vmul.f32 %v1497, 30.0
    %v5276 = vmul.f32 %v1500, 30.0
    %v5277 = vmul.f32 %v1505, 30.0
    %v5278 = vmul.f32 %v1508, 30.0
    %v5279 = vmul.f32 %v1513, 30.0
    %v5280 = vmul.f32 %v1516, 30.0
    %v5281 = vmul.f32 %v1521, 30.0
    %v5282 = vmul.f32 %v1524, 30.0
    %v5283 = vmul.f32 %v1529, 30.0
    %v5284 = vmul.f32 %v1532, 30.0
    %v5285 = vmul.f32 %v1537, 30.0
    %v5286 = vmul.f32 %v1540, 30.0
    %v5287 = vmul.f32 %v1545, 30.0
    %v5288 = vmul.f32 %v1548, 30.0
    %v5289 = vmul.f32 %v1553, 30.0
    %v5290 = vmul.f32 %v1556, 30.0
    %v5291 = vmul.f32 %v1561, 30.0
    %v5292 = vmul.f32 %v1564, 30.0
    %v5293 = vmul.f32 %v1569, 30.0
    %v5294 = vmul.f32 %v1572, 30.0
    %v5295 = vmul.f32 %v1577, 30.0
    %v5296 = vmul.f32 %v1580, 30.0
    %v5297 = vmul.f32 %v1585, 30.0
    %v5298 = vmul.f32 %v1588, 30.0
    %v5299 = vmul.f32 %v1593, 30.0
    %v5300 = vmul.f32 %v1596, 30.0
    %v5301 = vmul.f32 %v1601, 30.0
    %v5302 = vmul.f32 %v1604, 30.0
    %v5303 = vmul.f32 %v1609, 30.0
    %v5304 = vmul.f32 %v1612, 30.0
    %v5305 = vmul.f32 %v1617, 30.0
    %v5306 = vmul.f32 %v1620, 30.0
    %v5307 = vmul.f32 %v1625, 30.0
    %v5308 = vmul.f32 %v1628, 30.0
    %v5309 = vmul.f32 %v1633, 30.0
    %v5310 = vmul.f32 %v1636, 30.0
    %v5311 = vmul.f32 %v1641, 30.0
    %v5312 = vmul.f32 %v1644, 30.0
    %v5313 = vmul.f32 %v1649, 30.0
    %v5314 = vmul.f32 %v1652, 30.0
    %v5315 = vmul.f32 %v1657, 30.0
    %v5316 = vmul.f32 %v1660, 30.0
    %v5317 = vmul.f32 %v1665, 30.0
    %v5318 = vmul.f32 %v1668, 30.0
    %v5319 = vmul.f32 %v1673, 30.0
    %v5320 = vmul.f32 %v1676, 30.0
    %v5321 = vmul.f32 %v1681, 30.0
    %v5322 = vmul.f32 %v1684, 30.0
    %v5323 = vmul.f32 %v1689, 30.0
    %v5324 = vmul.f32 %v1692, 30.0
    %v5325 = vmul.f32 %v1697, 30.0
    %v5326 = vmul.f32 %v1700, 30.0
    %v5327 = vmul.f32 %v1705, 30.0
    %v5328 = vmul.f32 %v1708, 30.0
    %v5329 = vmul.f32 %v1713, 30.0
    %v5330 = vmul.f32 %v1716, 30.0
    %v5331 = vmul.f32 %v1721, 30.0
    %v5332 = vmul.f32 %v1724, 30.0
    %v5333 = vmul.f32 %v1729, 30.0
    %v5334 = vmul.f32 %v1732, 30.0
    %v5335 = vmul.f32 %v1737, 30.0
    %v5336 = vmul.f32 %v1740, 30.0
    %v5337 = vmul.f32 %v1745, 30.0
    %v5338 = vmul.f32 %v1748, 30.0
    %v5339 = vmul.f32 %v1753, 30.0
    %v5340 = vmul.f32 %v1756, 30.0
    %v5341 = vmul.f32 %v1761, 30.0
    %v5342 = vmul.f32 %v1764, 30.0
    %v5343 = vmul.f32 %v1769, 30.0
    %v5344 = vmul.f32 %v1772, 30.0
    %v5345 = vmul.f32 %v1777, 30.0
    %v5346 = vmul.f32 %v1780, 30.0
    %v5347 = vmul.f32 %v1785, 30.0
    %v5348 = vmul.f32 %v1788, 30.0
    %v5349 = vmul.f32 %v1793, 30.0
    %v5350 = vmul.f32 %v1796, 30.0
    %v5351 = vmul.f32 %v1801, 30.0
    %v5352 = vmul.f32 %v1804, 30.0
    %v5353 = vmul.f32 %v1809, 30.0
    %v5354 = vmul.f32 %v1812, 30.0
    %v5355 = vmul.f32 %v1817, 30.0
    %v5356 = vmul.f32 %v1820, 30.0
    %v5357 = vmul.f32 %v1825, 30.0
    %v5358 = vmul.f32 %v1828, 30.0
    %v5359 = vmul.f32 %v1833, 30.0
    %v5360 = vmul.f32 %v1836, 30.0
    %v5361 = vmul.f32 %v1841, 30.0
    %v5362 = vmul.f32 %v1844, 30.0
    %v5363 = vmul.f32 %v1849, 30.0
    %v5364 = vmul.f32 %v1852, 30.0
    %v5365 = vmul.f32 %v1857, 30.0
    %v5366 = vmul.f32 %v1860, 30.0
    %v5367 = vmul.f32 %v1865, 30.0
    %v5368 = vmul.f32 %v1868, 30.0
    %v5369 = vmul.f32 %v1873, 30.0
    %v5370 = vmul.f32 %v1876, 30.0
    %v5371 = vmul.f32 %v1881, 30.0
    %v5372 = vmul.f32 %v1884, 30.0
    %v5373 = vmul.f32 %v1889, 30.0
    %v5374 = vmul.f32 %v1892, 30.0
    %v5375 = vmul.f32 %v1897, 30.0
    %v5376 = vmul.f32 %v1900, 30.0
    %v5377 = vmul.f32 %v1905, 30.0
    %v5378 = vmul.f32 %v1908, 30.0
    %v5379 = vmul.f32 %v1913, 30.0
    %v5380 = vmul.f32 %v1916, 30.0
    %v5381 = vmul.f32 %v1921, 30.0
    %v5382 = vmul.f32 %v1924, 30.0
    %v5383 = vmul.f32 %v1929, 30.0
    %v5384 = vmul.f32 %v1932, 30.0
    %v5385 = vmul.f32 %v1937, 30.0
    %v5386 = vmul.f32 %v1940, 30.0
    %v5387 = vmul.f32 %v1945, 30.0
    %v5388 = vmul.f32 %v1948, 30.0
    %v5389 = vmul.f32 %v1953, 30.0
    %v5390 = vmul.f32 %v1956, 30.0
    %v5391 = vmul.f32 %v1961, 30.0
    %v5392 = vmul.f32 %v1964, 30.0
    %v5393 = vmul.f32 %v1969, 30.0
    %v5394 = vmul.f32 %v1972, 30.0
    %v5395 = vmul.f32 %v1977, 30.0
    %v5396 = vmul.f32 %v1980, 30.0
    %v5397 = vmul.f32 %v1985, 30.0
    %v5398 = vmul.f32 %v1988, 30.0
    %v5399 = vmul.f32 %v1993, 30.0
    %v5400 = vmul.f32 %v1996, 30.0
    %v5401 = vmul.f32 %v2001, 30.0
    %v5402 = vmul.f32 %v2004, 30.0
    %v5403 = vmul.f32 %v2009, 30.0
    %v5404 = vmul.f32 %v2012, 30.0
    %v5405 = vmul.f32 %v2017, 30.0
    %v5406 = vmul.f32 %v2020, 30.0
    %v5407 = vmul.f32 %v2025, 30.0
    %v5408 = vmul.f32 %v2028, 30.0
    %v5409 = vmul.f32 %v2033, 30.0
    %v5410 = vmul.f32 %v2036, 30.0
    %v5411 = vmul.f32 %v2041, 30.0
    %v5412 = vmul.f32 %v2044, 30.0
    %v5413 = vmul.f32 %v2049, 30.0
    %v5414 = vmul.f32 %v2052, 30.0
    %v5415 = vmul.f32 %v2057, 30.0
    %v5416 = vmul.f32 %v2060, 30.0
    %v5417 = vmul.f32 %v2065, 30.0
    %v5418 = vmul.f32 %v2068, 30.0
    %v5419 = vmul.f32 %v2073, 30.0
    %v5420 = vmul.f32 %v2076, 30.0
    %v5421 = vmul.f32 %v2081, 30.0
    %v5422 = vmul.f32 %v2084, 30.0
    %v5423 = vmul.f32 %v2089, 30.0
    %v5424 = vmul.f32 %v2092, 30.0
    %v5425 = vmul.f32 %v2097, 30.0
    %v5426 = vmul.f32 %v2100, 30.0
    %v5427 = vmul.f32 %v2105, 30.0
    %v5428 = vmul.f32 %v2108, 30.0
    %v5429 = vmul.f32 %v2113, 30.0
    %v5430 = vmul.f32 %v2116, 30.0
    %v5431 = vmul.f32 %v2121, 30.0
    %v5432 = vmul.f32 %v2124, 30.0
    %v5433 = vmul.f32 %v2129, 30.0
    %v5434 = vmul.f32 %v2132, 30.0
    %v5435 = vmul.f32 %v2137, 30.0
    %v5436 = vmul.f32 %v2140, 30.0
    %v5437 = vmul.f32 %v2145, 30.0
    %v5438 = vmul.f32 %v2148, 30.0
    %v5439 = vmul.f32 %v2153, 30.0
    %v5440 = vmul.f32 %v2156, 30.0
    %v5441 = vmul.f32 %v2161, 30.0
    %v5442 = vmul.f32 %v2164, 30.0
    %v5443 = vmul.f32 %v2169, 30.0
    %v5444 = vmul.f32 %v2172, 30.0
    %v5445 = vmul.f32 %v2177, 30.0
    %v5446 = vmul.f32 %v2180, 30.0
    %v5447 = vmul.f32 %v2185, 30.0
    %v5448 = vmul.f32 %v2188, 30.0
    %v5449 = vmul.f32 %v2193, 30.0
    %v5450 = vmul.f32 %v2196, 30.0
    %v5451 = vmul.f32 %v2201, 30.0
    %v5452 = vmul.f32 %v2204, 30.0
    %v5453 = vmul.f32 %v2209, 30.0
    %v5454 = vmul.f32 %v2212, 30.0
    %v5455 = vmul.f32 %v2217, 30.0
    %v5456 = vmul.f32 %v2220, 30.0
    %v5457 = vmul.f32 %v2225, 30.0
    %v5458 = vmul.f32 %v2228, 30.0
    %v5459 = vmul.f32 %v2233, 30.0
    %v5460 = vmul.f32 %v2236, 30.0
    %v5461 = vmul.f32 %v2241, 30.0
    %v5462 = vmul.f32 %v2244, 30.0
    %v5463 = vmul.f32 %v2249, 30.0
    %v5464 = vmul.f32 %v2252, 30.0
    %v5465 = vmul.f32 %v2257, 30.0
    %v5466 = vmul.f32 %v2260, 30.0
    %v5467 = vmul.f32 %v2265, 30.0
    %v5468 = vmul.f32 %v2268, 30.0
    %v5469 = vmul.f32 %v2273, 30.0
    %v5470 = vmul.f32 %v2276, 30.0
    %v5471 = vmul.f32 %v2281, 30.0
    %v5472 = vmul.f32 %v2284, 30.0
    %v5473 = vmul.f32 %v2289, 30.0
    %v5474 = vmul.f32 %v2292, 30.0
    %v5475 = vmul.f32 %v2297, 30.0
    %v5476 = vmul.f32 %v2300, 30.0
    %v5477 = vmul.f32 %v2305, 30.0
    %v5478 = vmul.f32 %v2308, 30.0
    %v5479 = vmul.f32 %v2313, 30.0
    %v5480 = vmul.f32 %v2316, 30.0
    %v5481 = vmul.f32 %v2321, 30.0
    %v5482 = vmul.f32 %v2324, 30.0
    %v5483 = vmul.f32 %v2329, 30.0
    %v5484 = vmul.f32 %v2332, 30.0
    %v5485 = vmul.f32 %v2337, 30.0
    %v5486 = vmul.f32 %v2340, 30.0
    %v5487 = vmul.f32 %v2345, 30.0
    %v5488 = vmul.f32 %v2348, 30.0
    %v5489 = vmul.f32 %v2353, 30.0
    %v5490 = vmul.f32 %v2356, 30.0
    %v5491 = vmul.f32 %v2361, 30.0
    %v5492 = vmul.f32 %v2364, 30.0
    %v5493 = vmul.f32 %v2369, 30.0
    %v5494 = vmul.f32 %v2372, 30.0
    %v5495 = vmul.f32 %v2377, 30.0
    %v5496 = vmul.f32 %v2380, 30.0
    %v5497 = vmul.f32 %v2385, 30.0
    %v5498 = vmul.f32 %v2388, 30.0
    %v5499 = vmul.f32 %v2393, 30.0
    %v5500 = vmul.f32 %v2396, 30.0
    %v5501 = vmul.f32 %v2401, 30.0
    %v5502 = vmul.f32 %v2404, 30.0
    %v5503 = vmul.f32 %v2409, 30.0
    %v5504 = vmul.f32 %v2412, 30.0
    %v5505 = vmul.f32 %v2417, 30.0
    %v5506 = vmul.f32 %v2420, 30.0
    %v5507 = vmul.f32 %v2425, 30.0
    %v5508 = vmul.f32 %v2428, 30.0
    %v5509 = vmul.f32 %v2433, 30.0
    %v5510 = vmul.f32 %v2436, 30.0
    %v5511 = vmul.f32 %v1417, -3.6725233
    %v5512 = vmul.f32 %v1420, -3.6725233
    %v5513 = vmul.f32 %v1425, -3.6725233
    %v5514 = vmul.f32 %v1428, -3.6725233
    %v5515 = vmul.f32 %v1433, -3.6725233
    %v5516 = vmul.f32 %v1436, -3.6725233
    %v5517 = vmul.f32 %v1441, -3.6725233
    %v5518 = vmul.f32 %v1444, -3.6725233
    %v5519 = vmul.f32 %v1449, -3.6725233
    %v5520 = vmul.f32 %v1452, -3.6725233
    %v5521 = vmul.f32 %v1457, -3.6725233
    %v5522 = vmul.f32 %v1460, -3.6725233
    %v5523 = vmul.f32 %v1465, -3.6725233
    %v5524 = vmul.f32 %v1468, -3.6725233
    %v5525 = vmul.f32 %v1473, -3.6725233
    %v5526 = vmul.f32 %v1476, -3.6725233
    %v5527 = vmul.f32 %v1481, -3.6725233
    %v5528 = vmul.f32 %v1484, -3.6725233
    %v5529 = vmul.f32 %v1489, -3.6725233
    %v5530 = vmul.f32 %v1492, -3.6725233
    %v5531 = vmul.f32 %v1497, -3.6725233
    %v5532 = vmul.f32 %v1500, -3.6725233
    %v5533 = vmul.f32 %v1505, -3.6725233
    %v5534 = vmul.f32 %v1508, -3.6725233
    %v5535 = vmul.f32 %v1513, -3.6725233
    %v5536 = vmul.f32 %v1516, -3.6725233
    %v5537 = vmul.f32 %v1521, -3.6725233
    %v5538 = vmul.f32 %v1524, -3.6725233
    %v5539 = vmul.f32 %v1529, -3.6725233
    %v5540 = vmul.f32 %v1532, -3.6725233
    %v5541 = vmul.f32 %v1537, -3.6725233
    %v5542 = vmul.f32 %v1540, -3.6725233
    %v5543 = vmul.f32 %v1545, -3.6725233
    %v5544 = vmul.f32 %v1548, -3.6725233
    %v5545 = vmul.f32 %v1553, -3.6725233
    %v5546 = vmul.f32 %v1556, -3.6725233
    %v5547 = vmul.f32 %v1561, -3.6725233
    %v5548 = vmul.f32 %v1564, -3.6725233
    %v5549 = vmul.f32 %v1569, -3.6725233
    %v5550 = vmul.f32 %v1572, -3.6725233
    %v5551 = vmul.f32 %v1577, -3.6725233
    %v5552 = vmul.f32 %v1580, -3.6725233
    %v5553 = vmul.f32 %v1585, -3.6725233
    %v5554 = vmul.f32 %v1588, -3.6725233
    %v5555 = vmul.f32 %v1593, -3.6725233
    %v5556 = vmul.f32 %v1596, -3.6725233
    %v5557 = vmul.f32 %v1601, -3.6725233
    %v5558 = vmul.f32 %v1604, -3.6725233
    %v5559 = vmul.f32 %v1609, -3.6725233
    %v5560 = vmul.f32 %v1612, -3.6725233
    %v5561 = vmul.f32 %v1617, -3.6725233
    %v5562 = vmul.f32 %v1620, -3.6725233
    %v5563 = vmul.f32 %v1625, -3.6725233
    %v5564 = vmul.f32 %v1628, -3.6725233
    %v5565 = vmul.f32 %v1633, -3.6725233
    %v5566 = vmul.f32 %v1636, -3.6725233
    %v5567 = vmul.f32 %v1641, -3.6725233
    %v5568 = vmul.f32 %v1644, -3.6725233
    %v5569 = vmul.f32 %v1649, -3.6725233
    %v5570 = vmul.f32 %v1652, -3.6725233
    %v5571 = vmul.f32 %v1657, -3.6725233
    %v5572 = vmul.f32 %v1660, -3.6725233
    %v5573 = vmul.f32 %v1665, -3.6725233
    %v5574 = vmul.f32 %v1668, -3.6725233
    %v5575 = vmul.f32 %v1673, -3.6725233
    %v5576 = vmul.f32 %v1676, -3.6725233
    %v5577 = vmul.f32 %v1681, -3.6725233
    %v5578 = vmul.f32 %v1684, -3.6725233
    %v5579 = vmul.f32 %v1689, -3.6725233
    %v5580 = vmul.f32 %v1692, -3.6725233
    %v5581 = vmul.f32 %v1697, -3.6725233
    %v5582 = vmul.f32 %v1700, -3.6725233
    %v5583 = vmul.f32 %v1705, -3.6725233
    %v5584 = vmul.f32 %v1708, -3.6725233
    %v5585 = vmul.f32 %v1713, -3.6725233
    %v5586 = vmul.f32 %v1716, -3.6725233
    %v5587 = vmul.f32 %v1721, -3.6725233
    %v5588 = vmul.f32 %v1724, -3.6725233
    %v5589 = vmul.f32 %v1729, -3.6725233
    %v5590 = vmul.f32 %v1732, -3.6725233
    %v5591 = vmul.f32 %v1737, -3.6725233
    %v5592 = vmul.f32 %v1740, -3.6725233
    %v5593 = vmul.f32 %v1745, -3.6725233
    %v5594 = vmul.f32 %v1748, -3.6725233
    %v5595 = vmul.f32 %v1753, -3.6725233
    %v5596 = vmul.f32 %v1756, -3.6725233
    %v5597 = vmul.f32 %v1761, -3.6725233
    %v5598 = vmul.f32 %v1764, -3.6725233
    %v5599 = vmul.f32 %v1769, -3.6725233
    %v5600 = vmul.f32 %v1772, -3.6725233
    %v5601 = vmul.f32 %v1777, -3.6725233
    %v5602 = vmul.f32 %v1780, -3.6725233
    %v5603 = vmul.f32 %v1785, -3.6725233
    %v5604 = vmul.f32 %v1788, -3.6725233
    %v5605 = vmul.f32 %v1793, -3.6725233
    %v5606 = vmul.f32 %v1796, -3.6725233
    %v5607 = vmul.f32 %v1801, -3.6725233
    %v5608 = vmul.f32 %v1804, -3.6725233
    %v5609 = vmul.f32 %v1809, -3.6725233
    %v5610 = vmul.f32 %v1812, -3.6725233
    %v5611 = vmul.f32 %v1817, -3.6725233
    %v5612 = vmul.f32 %v1820, -3.6725233
    %v5613 = vmul.f32 %v1825, -3.6725233
    %v5614 = vmul.f32 %v1828, -3.6725233
    %v5615 = vmul.f32 %v1833, -3.6725233
    %v5616 = vmul.f32 %v1836, -3.6725233
    %v5617 = vmul.f32 %v1841, -3.6725233
    %v5618 = vmul.f32 %v1844, -3.6725233
    %v5619 = vmul.f32 %v1849, -3.6725233
    %v5620 = vmul.f32 %v1852, -3.6725233
    %v5621 = vmul.f32 %v1857, -3.6725233
    %v5622 = vmul.f32 %v1860, -3.6725233
    %v5623 = vmul.f32 %v1865, -3.6725233
    %v5624 = vmul.f32 %v1868, -3.6725233
    %v5625 = vmul.f32 %v1873, -3.6725233
    %v5626 = vmul.f32 %v1876, -3.6725233
    %v5627 = vmul.f32 %v1881, -3.6725233
    %v5628 = vmul.f32 %v1884, -3.6725233
    %v5629 = vmul.f32 %v1889, -3.6725233
    %v5630 = vmul.f32 %v1892, -3.6725233
    %v5631 = vmul.f32 %v1897, -3.6725233
    %v5632 = vmul.f32 %v1900, -3.6725233
    %v5633 = vmul.f32 %v1905, -3.6725233
    %v5634 = vmul.f32 %v1908, -3.6725233
    %v5635 = vmul.f32 %v1913, -3.6725233
    %v5636 = vmul.f32 %v1916, -3.6725233
    %v5637 = vmul.f32 %v1921, -3.6725233
    %v5638 = vmul.f32 %v1924, -3.6725233
    %v5639 = vmul.f32 %v1929, -3.6725233
    %v5640 = vmul.f32 %v1932, -3.6725233
    %v5641 = vmul.f32 %v1937, -3.6725233
    %v5642 = vmul.f32 %v1940, -3.6725233
    %v5643 = vmul.f32 %v1945, -3.6725233
    %v5644 = vmul.f32 %v1948, -3.6725233
    %v5645 = vmul.f32 %v1953, -3.6725233
    %v5646 = vmul.f32 %v1956, -3.6725233
    %v5647 = vmul.f32 %v1961, -3.6725233
    %v5648 = vmul.f32 %v1964, -3.6725233
    %v5649 = vmul.f32 %v1969, -3.6725233
    %v5650 = vmul.f32 %v1972, -3.6725233
    %v5651 = vmul.f32 %v1977, -3.6725233
    %v5652 = vmul.f32 %v1980, -3.6725233
    %v5653 = vmul.f32 %v1985, -3.6725233
    %v5654 = vmul.f32 %v1988, -3.6725233
    %v5655 = vmul.f32 %v1993, -3.6725233
    %v5656 = vmul.f32 %v1996, -3.6725233
    %v5657 = vmul.f32 %v2001, -3.6725233
    %v5658 = vmul.f32 %v2004, -3.6725233
    %v5659 = vmul.f32 %v2009, -3.6725233
    %v5660 = vmul.f32 %v2012, -3.6725233
    %v5661 = vmul.f32 %v2017, -3.6725233
    %v5662 = vmul.f32 %v2020, -3.6725233
    %v5663 = vmul.f32 %v2025, -3.6725233
    %v5664 = vmul.f32 %v2028, -3.6725233
    %v5665 = vmul.f32 %v2033, -3.6725233
    %v5666 = vmul.f32 %v2036, -3.6725233
    %v5667 = vmul.f32 %v2041, -3.6725233
    %v5668 = vmul.f32 %v2044, -3.6725233
    %v5669 = vmul.f32 %v2049, -3.6725233
    %v5670 = vmul.f32 %v2052, -3.6725233
    %v5671 = vmul.f32 %v2057, -3.6725233
    %v5672 = vmul.f32 %v2060, -3.6725233
    %v5673 = vmul.f32 %v2065, -3.6725233
    %v5674 = vmul.f32 %v2068, -3.6725233
    %v5675 = vmul.f32 %v2073, -3.6725233
    %v5676 = vmul.f32 %v2076, -3.6725233
    %v5677 = vmul.f32 %v2081, -3.6725233
    %v5678 = vmul.f32 %v2084, -3.6725233
    %v5679 = vmul.f32 %v2089, -3.6725233
    %v5680 = vmul.f32 %v2092, -3.6725233
    %v5681 = vmul.f32 %v2097, -3.6725233
    %v5682 = vmul.f32 %v2100, -3.6725233
    %v5683 = vmul.f32 %v2105, -3.6725233
    %v5684 = vmul.f32 %v2108, -3.6725233
    %v5685 = vmul.f32 %v2113, -3.6725233
    %v5686 = vmul.f32 %v2116, -3.6725233
    %v5687 = vmul.f32 %v2121, -3.6725233
    %v5688 = vmul.f32 %v2124, -3.6725233
    %v5689 = vmul.f32 %v2129, -3.6725233
    %v5690 = vmul.f32 %v2132, -3.6725233
    %v5691 = vmul.f32 %v2137, -3.6725233
    %v5692 = vmul.f32 %v2140, -3.6725233
    %v5693 = vmul.f32 %v2145, -3.6725233
    %v5694 = vmul.f32 %v2148, -3.6725233
    %v5695 = vmul.f32 %v2153, -3.6725233
    %v5696 = vmul.f32 %v2156, -3.6725233
    %v5697 = vmul.f32 %v2161, -3.6725233
    %v5698 = vmul.f32 %v2164, -3.6725233
    %v5699 = vmul.f32 %v2169, -3.6725233
    %v5700 = vmul.f32 %v2172, -3.6725233
    %v5701 = vmul.f32 %v2177, -3.6725233
    %v5702 = vmul.f32 %v2180, -3.6725233
    %v5703 = vmul.f32 %v2185, -3.6725233
    %v5704 = vmul.f32 %v2188, -3.6725233
    %v5705 = vmul.f32 %v2193, -3.6725233
    %v5706 = vmul.f32 %v2196, -3.6725233
    %v5707 = vmul.f32 %v2201, -3.6725233
    %v5708 = vmul.f32 %v2204, -3.6725233
    %v5709 = vmul.f32 %v2209, -3.6725233
    %v5710 = vmul.f32 %v2212, -3.6725233
    %v5711 = vmul.f32 %v2217, -3.6725233
    %v5712 = vmul.f32 %v2220, -3.6725233
    %v5713 = vmul.f32 %v2225, -3.6725233
    %v5714 = vmul.f32 %v2228, -3.6725233
    %v5715 = vmul.f32 %v2233, -3.6725233
    %v5716 = vmul.f32 %v2236, -3.6725233
    %v5717 = vmul.f32 %v2241, -3.6725233
    %v5718 = vmul.f32 %v2244, -3.6725233
    %v5719 = vmul.f32 %v2249, -3.6725233
    %v5720 = vmul.f32 %v2252, -3.6725233
    %v5721 = vmul.f32 %v2257, -3.6725233
    %v5722 = vmul.f32 %v2260, -3.6725233
    %v5723 = vmul.f32 %v2265, -3.6725233
    %v5724 = vmul.f32 %v2268, -3.6725233
    %v5725 = vmul.f32 %v2273, -3.6725233
    %v5726 = vmul.f32 %v2276, -3.6725233
    %v5727 = vmul.f32 %v2281, -3.6725233
    %v5728 = vmul.f32 %v2284, -3.6725233
    %v5729 = vmul.f32 %v2289, -3.6725233
    %v5730 = vmul.f32 %v2292, -3.6725233
    %v5731 = vmul.f32 %v2297, -3.6725233
    %v5732 = vmul.f32 %v2300, -3.6725233
    %v5733 = vmul.f32 %v2305, -3.6725233
    %v5734 = vmul.f32 %v2308, -3.6725233
    %v5735 = vmul.f32 %v2313, -3.6725233
    %v5736 = vmul.f32 %v2316, -3.6725233
    %v5737 = vmul.f32 %v2321, -3.6725233
    %v5738 = vmul.f32 %v2324, -3.6725233
    %v5739 = vmul.f32 %v2329, -3.6725233
    %v5740 = vmul.f32 %v2332, -3.6725233
    %v5741 = vmul.f32 %v2337, -3.6725233
    %v5742 = vmul.f32 %v2340, -3.6725233
    %v5743 = vmul.f32 %v2345, -3.6725233
    %v5744 = vmul.f32 %v2348, -3.6725233
    %v5745 = vmul.f32 %v2353, -3.6725233
    %v5746 = vmul.f32 %v2356, -3.6725233
    %v5747 = vmul.f32 %v2361, -3.6725233
    %v5748 = vmul.f32 %v2364, -3.6725233
    %v5749 = vmul.f32 %v2369, -3.6725233
    %v5750 = vmul.f32 %v2372, -3.6725233
    %v5751 = vmul.f32 %v2377, -3.6725233
    %v5752 = vmul.f32 %v2380, -3.6725233
    %v5753 = vmul.f32 %v2385, -3.6725233
    %v5754 = vmul.f32 %v2388, -3.6725233
    %v5755 = vmul.f32 %v2393, -3.6725233
    %v5756 = vmul.f32 %v2396, -3.6725233
    %v5757 = vmul.f32 %v2401, -3.6725233
    %v5758 = vmul.f32 %v2404, -3.6725233
    %v5759 = vmul.f32 %v2409, -3.6725233
    %v5760 = vmul.f32 %v2412, -3.6725233
    %v5761 = vmul.f32 %v2417, -3.6725233
    %v5762 = vmul.f32 %v2420, -3.6725233
    %v5763 = vmul.f32 %v2425, -3.6725233
    %v5764 = vmul.f32 %v2428, -3.6725233
    %v5765 = vmul.f32 %v2433, -3.6725233
    %v5766 = vmul.f32 %v2436, -3.6725233
    %v5767 = vmul.f32 %v3213, 14.382766
    %v5768 = vmul.f32 %v3220, 14.382766
    %v5769 = vmul.f32 %v3227, 14.382766
    %v5770 = vmul.f32 %v3234, 14.382766
    %v5771 = vmul.f32 %v3241, 14.382766
    %v5772 = vmul.f32 %v3248, 14.382766
    %v5773 = vmul.f32 %v3255, 14.382766
    %v5774 = vmul.f32 %v3262, 14.382766
    %v5775 = vmul.f32 %v3269, 14.382766
    %v5776 = vmul.f32 %v3276, 14.382766
    %v5777 = vmul.f32 %v3283, 14.382766
    %v5778 = vmul.f32 %v3290, 14.382766
    %v5779 = vmul.f32 %v3297, 14.382766
    %v5780 = vmul.f32 %v3304, 14.382766
    %v5781 = vmul.f32 %v3311, 14.382766
    %v5782 = vmul.f32 %v3318, 14.382766
    %v5783 = vmul.f32 %v3325, 14.382766
    %v5784 = vmul.f32 %v3332, 14.382766
    %v5785 = vmul.f32 %v3339, 14.382766
    %v5786 = vmul.f32 %v3346, 14.382766
    %v5787 = vmul.f32 %v3353, 14.382766
    %v5788 = vmul.f32 %v3360, 14.382766
    %v5789 = vmul.f32 %v3367, 14.382766
    %v5790 = vmul.f32 %v3374, 14.382766
    %v5791 = vmul.f32 %v3381, 14.382766
    %v5792 = vmul.f32 %v3388, 14.382766
    %v5793 = vmul.f32 %v3395, 14.382766
    %v5794 = vmul.f32 %v3402, 14.382766
    %v5795 = vmul.f32 %v3409, 14.382766
    %v5796 = vmul.f32 %v3416, 14.382766
    %v5797 = vmul.f32 %v3423, 14.382766
    %v5798 = vmul.f32 %v3430, 14.382766
    %v5799 = vmul.f32 %v3437, 14.382766
    %v5800 = vmul.f32 %v3444, 14.382766
    %v5801 = vmul.f32 %v3451, 14.382766
    %v5802 = vmul.f32 %v3458, 14.382766
    %v5803 = vmul.f32 %v3465, 14.382766
    %v5804 = vmul.f32 %v3472, 14.382766
    %v5805 = vmul.f32 %v3479, 14.382766
    %v5806 = vmul.f32 %v3486, 14.382766
    %v5807 = vmul.f32 %v3493, 14.382766
    %v5808 = vmul.f32 %v3500, 14.382766
    %v5809 = vmul.f32 %v3507, 14.382766
    %v5810 = vmul.f32 %v3514, 14.382766
    %v5811 = vmul.f32 %v3521, 14.382766
    %v5812 = vmul.f32 %v3528, 14.382766
    %v5813 = vmul.f32 %v3535, 14.382766
    %v5814 = vmul.f32 %v3542, 14.382766
    %v5815 = vmul.f32 %v3549, 14.382766
    %v5816 = vmul.f32 %v3556, 14.382766
    %v5817 = vmul.f32 %v3563, 14.382766
    %v5818 = vmul.f32 %v3570, 14.382766
    %v5819 = vmul.f32 %v3577, 14.382766
    %v5820 = vmul.f32 %v3584, 14.382766
    %v5821 = vmul.f32 %v3591, 14.382766
    %v5822 = vmul.f32 %v3598, 14.382766
    %v5823 = vmul.f32 %v3605, 14.382766
    %v5824 = vmul.f32 %v3612, 14.382766
    %v5825 = vmul.f32 %v3619, 14.382766
    %v5826 = vmul.f32 %v3626, 14.382766
    %v5827 = vmul.f32 %v3633, 14.382766
    %v5828 = vmul.f32 %v3640, 14.382766
    %v5829 = vmul.f32 %v3647, 14.382766
    %v5830 = vmul.f32 %v3654, 14.382766
    %v5831 = vmul.f32 %v3661, 14.382766
    %v5832 = vmul.f32 %v3668, 14.382766
    %v5833 = vmul.f32 %v3675, 14.382766
    %v5834 = vmul.f32 %v3682, 14.382766
    %v5835 = vmul.f32 %v3689, 14.382766
    %v5836 = vmul.f32 %v3696, 14.382766
    %v5837 = vmul.f32 %v3703, 14.382766
    %v5838 = vmul.f32 %v3710, 14.382766
    %v5839 = vmul.f32 %v3717, 14.382766
    %v5840 = vmul.f32 %v3724, 14.382766
    %v5841 = vmul.f32 %v3731, 14.382766
    %v5842 = vmul.f32 %v3738, 14.382766
    %v5843 = vmul.f32 %v3745, 14.382766
    %v5844 = vmul.f32 %v3752, 14.382766
    %v5845 = vmul.f32 %v3759, 14.382766
    %v5846 = vmul.f32 %v3766, 14.382766
    %v5847 = vmul.f32 %v3773, 14.382766
    %v5848 = vmul.f32 %v3780, 14.382766
    %v5849 = vmul.f32 %v3787, 14.382766
    %v5850 = vmul.f32 %v3794, 14.382766
    %v5851 = vmul.f32 %v3801, 14.382766
    %v5852 = vmul.f32 %v3808, 14.382766
    %v5853 = vmul.f32 %v3815, 14.382766
    %v5854 = vmul.f32 %v3822, 14.382766
    %v5855 = vmul.f32 %v3829, 14.382766
    %v5856 = vmul.f32 %v3836, 14.382766
    %v5857 = vmul.f32 %v3843, 14.382766
    %v5858 = vmul.f32 %v3850, 14.382766
    %v5859 = vmul.f32 %v3857, 14.382766
    %v5860 = vmul.f32 %v3864, 14.382766
    %v5861 = vmul.f32 %v3871, 14.382766
    %v5862 = vmul.f32 %v3878, 14.382766
    %v5863 = vmul.f32 %v3885, 14.382766
    %v5864 = vmul.f32 %v3892, 14.382766
    %v5865 = vmul.f32 %v3899, 14.382766
    %v5866 = vmul.f32 %v3906, 14.382766
    %v5867 = vmul.f32 %v3913, 14.382766
    %v5868 = vmul.f32 %v3920, 14.382766
    %v5869 = vmul.f32 %v3927, 14.382766
    %v5870 = vmul.f32 %v3934, 14.382766
    %v5871 = vmul.f32 %v3941, 14.382766
    %v5872 = vmul.f32 %v3948, 14.382766
    %v5873 = vmul.f32 %v3955, 14.382766
    %v5874 = vmul.f32 %v3962, 14.382766
    %v5875 = vmul.f32 %v3969, 14.382766
    %v5876 = vmul.f32 %v3976, 14.382766
    %v5877 = vmul.f32 %v3983, 14.382766
    %v5878 = vmul.f32 %v3990, 14.382766
    %v5879 = vmul.f32 %v3997, 14.382766
    %v5880 = vmul.f32 %v4004, 14.382766
    %v5881 = vmul.f32 %v4011, 14.382766
    %v5882 = vmul.f32 %v4018, 14.382766
    %v5883 = vmul.f32 %v4025, 14.382766
    %v5884 = vmul.f32 %v4032, 14.382766
    %v5885 = vmul.f32 %v4039, 14.382766
    %v5886 = vmul.f32 %v4046, 14.382766
    %v5887 = vmul.f32 %v4053, 14.382766
    %v5888 = vmul.f32 %v4060, 14.382766
    %v5889 = vmul.f32 %v4067, 14.382766
    %v5890 = vmul.f32 %v4074, 14.382766
    %v5891 = vmul.f32 %v4081, 14.382766
    %v5892 = vmul.f32 %v4088, 14.382766
    %v5893 = vmul.f32 %v4095, 14.382766
    %v5894 = vmul.f32 %v4102, 14.382766
    %v5895 = vmul.f32 %v4109, 14.382766
    %v5896 = vmul.f32 %v4116, 14.382766
    %v5897 = vmul.f32 %v4123, 14.382766
    %v5898 = vmul.f32 %v4130, 14.382766
    %v5899 = vmul.f32 %v4137, 14.382766
    %v5900 = vmul.f32 %v4144, 14.382766
    %v5901 = vmul.f32 %v4151, 14.382766
    %v5902 = vmul.f32 %v4158, 14.382766
    %v5903 = vmul.f32 %v4165, 14.382766
    %v5904 = vmul.f32 %v4172, 14.382766
    %v5905 = vmul.f32 %v4179, 14.382766
    %v5906 = vmul.f32 %v4186, 14.382766
    %v5907 = vmul.f32 %v4193, 14.382766
    %v5908 = vmul.f32 %v4200, 14.382766
    %v5909 = vmul.f32 %v4207, 14.382766
    %v5910 = vmul.f32 %v4214, 14.382766
    %v5911 = vmul.f32 %v4221, 14.382766
    %v5912 = vmul.f32 %v4228, 14.382766
    %v5913 = vmul.f32 %v4235, 14.382766
    %v5914 = vmul.f32 %v4242, 14.382766
    %v5915 = vmul.f32 %v4249, 14.382766
    %v5916 = vmul.f32 %v4256, 14.382766
    %v5917 = vmul.f32 %v4263, 14.382766
    %v5918 = vmul.f32 %v4270, 14.382766
    %v5919 = vmul.f32 %v4277, 14.382766
    %v5920 = vmul.f32 %v4284, 14.382766
    %v5921 = vmul.f32 %v4291, 14.382766
    %v5922 = vmul.f32 %v4298, 14.382766
    %v5923 = vmul.f32 %v4305, 14.382766
    %v5924 = vmul.f32 %v4312, 14.382766
    %v5925 = vmul.f32 %v4319, 14.382766
    %v5926 = vmul.f32 %v4326, 14.382766
    %v5927 = vmul.f32 %v4333, 14.382766
    %v5928 = vmul.f32 %v4340, 14.382766
    %v5929 = vmul.f32 %v4347, 14.382766
    %v5930 = vmul.f32 %v4354, 14.382766
    %v5931 = vmul.f32 %v4361, 14.382766
    %v5932 = vmul.f32 %v4368, 14.382766
    %v5933 = vmul.f32 %v4375, 14.382766
    %v5934 = vmul.f32 %v4382, 14.382766
    %v5935 = vmul.f32 %v4389, 14.382766
    %v5936 = vmul.f32 %v4396, 14.382766
    %v5937 = vmul.f32 %v4403, 14.382766
    %v5938 = vmul.f32 %v4410, 14.382766
    %v5939 = vmul.f32 %v4417, 14.382766
    %v5940 = vmul.f32 %v4424, 14.382766
    %v5941 = vmul.f32 %v4431, 14.382766
    %v5942 = vmul.f32 %v4438, 14.382766
    %v5943 = vmul.f32 %v4445, 14.382766
    %v5944 = vmul.f32 %v4452, 14.382766
    %v5945 = vmul.f32 %v4459, 14.382766
    %v5946 = vmul.f32 %v4466, 14.382766
    %v5947 = vmul.f32 %v4473, 14.382766
    %v5948 = vmul.f32 %v4480, 14.382766
    %v5949 = vmul.f32 %v4487, 14.382766
    %v5950 = vmul.f32 %v4494, 14.382766
    %v5951 = vmul.f32 %v4501, 14.382766
    %v5952 = vmul.f32 %v4508, 14.382766
    %v5953 = vmul.f32 %v4515, 14.382766
    %v5954 = vmul.f32 %v4522, 14.382766
    %v5955 = vmul.f32 %v4529, 14.382766
    %v5956 = vmul.f32 %v4536, 14.382766
    %v5957 = vmul.f32 %v4543, 14.382766
    %v5958 = vmul.f32 %v4550, 14.382766
    %v5959 = vmul.f32 %v4557, 14.382766
    %v5960 = vmul.f32 %v4564, 14.382766
    %v5961 = vmul.f32 %v4571, 14.382766
    %v5962 = vmul.f32 %v4578, 14.382766
    %v5963 = vmul.f32 %v4585, 14.382766
    %v5964 = vmul.f32 %v4592, 14.382766
    %v5965 = vmul.f32 %v4599, 14.382766
    %v5966 = vmul.f32 %v4606, 14.382766
    %v5967 = vmul.f32 %v4613, 14.382766
    %v5968 = vmul.f32 %v4620, 14.382766
    %v5969 = vmul.f32 %v4627, 14.382766
    %v5970 = vmul.f32 %v4634, 14.382766
    %v5971 = vmul.f32 %v4641, 14.382766
    %v5972 = vmul.f32 %v4648, 14.382766
    %v5973 = vmul.f32 %v4655, 14.382766
    %v5974 = vmul.f32 %v4662, 14.382766
    %v5975 = vmul.f32 %v4669, 14.382766
    %v5976 = vmul.f32 %v4676, 14.382766
    %v5977 = vmul.f32 %v4683, 14.382766
    %v5978 = vmul.f32 %v4690, 14.382766
    %v5979 = vmul.f32 %v4697, 14.382766
    %v5980 = vmul.f32 %v4704, 14.382766
    %v5981 = vmul.f32 %v4711, 14.382766
    %v5982 = vmul.f32 %v4718, 14.382766
    %v5983 = vmul.f32 %v4725, 14.382766
    %v5984 = vmul.f32 %v4732, 14.382766
    %v5985 = vmul.f32 %v4739, 14.382766
    %v5986 = vmul.f32 %v4746, 14.382766
    %v5987 = vmul.f32 %v4753, 14.382766
    %v5988 = vmul.f32 %v4760, 14.382766
    %v5989 = vmul.f32 %v4767, 14.382766
    %v5990 = vmul.f32 %v4774, 14.382766
    %v5991 = vmul.f32 %v4781, 14.382766
    %v5992 = vmul.f32 %v4788, 14.382766
    %v5993 = vmul.f32 %v4795, 14.382766
    %v5994 = vmul.f32 %v4802, 14.382766
    %v5995 = vmul.f32 %v4809, 14.382766
    %v5996 = vmul.f32 %v4816, 14.382766
    %v5997 = vmul.f32 %v4823, 14.382766
    %v5998 = vmul.f32 %v4830, 14.382766
    %v5999 = vmul.f32 %v4837, 14.382766
    %v6000 = vmul.f32 %v4844, 14.382766
    %v6001 = vmul.f32 %v4851, 14.382766
    %v6002 = vmul.f32 %v4858, 14.382766
    %v6003 = vmul.f32 %v4865, 14.382766
    %v6004 = vmul.f32 %v4872, 14.382766
    %v6005 = vmul.f32 %v4879, 14.382766
    %v6006 = vmul.f32 %v4886, 14.382766
    %v6007 = vmul.f32 %v4893, 14.382766
    %v6008 = vmul.f32 %v4900, 14.382766
    %v6009 = vmul.f32 %v4907, 14.382766
    %v6010 = vmul.f32 %v4914, 14.382766
    %v6011 = vmul.f32 %v4921, 14.382766
    %v6012 = vmul.f32 %v4928, 14.382766
    %v6013 = vmul.f32 %v4935, 14.382766
    %v6014 = vmul.f32 %v4942, 14.382766
    %v6015 = vmul.f32 %v4949, 14.382766
    %v6016 = vmul.f32 %v4956, 14.382766
    %v6017 = vmul.f32 %v4963, 14.382766
    %v6018 = vmul.f32 %v4970, 14.382766
    %v6019 = vmul.f32 %v4977, 14.382766
    %v6020 = vmul.f32 %v4984, 14.382766
    %v6021 = vmul.f32 %v4991, 14.382766
    %v6022 = vmul.f32 %v4998, 14.382766
    %v6023 = vsub.f32 %v5511, %v5767
    %v6024 = vsub.f32 %v5512, %v5768
    %v6025 = vsub.f32 %v5513, %v5769
    %v6026 = vsub.f32 %v5514, %v5770
    %v6027 = vsub.f32 %v5515, %v5771
    %v6028 = vsub.f32 %v5516, %v5772
    %v6029 = vsub.f32 %v5517, %v5773
    %v6030 = vsub.f32 %v5518, %v5774
    %v6031 = vsub.f32 %v5519, %v5775
    %v6032 = vsub.f32 %v5520, %v5776
    %v6033 = vsub.f32 %v5521, %v5777
    %v6034 = vsub.f32 %v5522, %v5778
    %v6035 = vsub.f32 %v5523, %v5779
    %v6036 = vsub.f32 %v5524, %v5780
    %v6037 = vsub.f32 %v5525, %v5781
    %v6038 = vsub.f32 %v5526, %v5782
    %v6039 = vsub.f32 %v5527, %v5783
    %v6040 = vsub.f32 %v5528, %v5784
    %v6041 = vsub.f32 %v5529, %v5785
    %v6042 = vsub.f32 %v5530, %v5786
    %v6043 = vsub.f32 %v5531, %v5787
    %v6044 = vsub.f32 %v5532, %v5788
    %v6045 = vsub.f32 %v5533, %v5789
    %v6046 = vsub.f32 %v5534, %v5790
    %v6047 = vsub.f32 %v5535, %v5791
    %v6048 = vsub.f32 %v5536, %v5792
    %v6049 = vsub.f32 %v5537, %v5793
    %v6050 = vsub.f32 %v5538, %v5794
    %v6051 = vsub.f32 %v5539, %v5795
    %v6052 = vsub.f32 %v5540, %v5796
    %v6053 = vsub.f32 %v5541, %v5797
    %v6054 = vsub.f32 %v5542, %v5798
    %v6055 = vsub.f32 %v5543, %v5799
    %v6056 = vsub.f32 %v5544, %v5800
    %v6057 = vsub.f32 %v5545, %v5801
    %v6058 = vsub.f32 %v5546, %v5802
    %v6059 = vsub.f32 %v5547, %v5803
    %v6060 = vsub.f32 %v5548, %v5804
    %v6061 = vsub.f32 %v5549, %v5805
    %v6062 = vsub.f32 %v5550, %v5806
    %v6063 = vsub.f32 %v5551, %v5807
    %v6064 = vsub.f32 %v5552, %v5808
    %v6065 = vsub.f32 %v5553, %v5809
    %v6066 = vsub.f32 %v5554, %v5810
    %v6067 = vsub.f32 %v5555, %v5811
    %v6068 = vsub.f32 %v5556, %v5812
    %v6069 = vsub.f32 %v5557, %v5813
    %v6070 = vsub.f32 %v5558, %v5814
    %v6071 = vsub.f32 %v5559, %v5815
    %v6072 = vsub.f32 %v5560, %v5816
    %v6073 = vsub.f32 %v5561, %v5817
    %v6074 = vsub.f32 %v5562, %v5818
    %v6075 = vsub.f32 %v5563, %v5819
    %v6076 = vsub.f32 %v5564, %v5820
    %v6077 = vsub.f32 %v5565, %v5821
    %v6078 = vsub.f32 %v5566, %v5822
    %v6079 = vsub.f32 %v5567, %v5823
    %v6080 = vsub.f32 %v5568, %v5824
    %v6081 = vsub.f32 %v5569, %v5825
    %v6082 = vsub.f32 %v5570, %v5826
    %v6083 = vsub.f32 %v5571, %v5827
    %v6084 = vsub.f32 %v5572, %v5828
    %v6085 = vsub.f32 %v5573, %v5829
    %v6086 = vsub.f32 %v5574, %v5830
    %v6087 = vsub.f32 %v5575, %v5831
    %v6088 = vsub.f32 %v5576, %v5832
    %v6089 = vsub.f32 %v5577, %v5833
    %v6090 = vsub.f32 %v5578, %v5834
    %v6091 = vsub.f32 %v5579, %v5835
    %v6092 = vsub.f32 %v5580, %v5836
    %v6093 = vsub.f32 %v5581, %v5837
    %v6094 = vsub.f32 %v5582, %v5838
    %v6095 = vsub.f32 %v5583, %v5839
    %v6096 = vsub.f32 %v5584, %v5840
    %v6097 = vsub.f32 %v5585, %v5841
    %v6098 = vsub.f32 %v5586, %v5842
    %v6099 = vsub.f32 %v5587, %v5843
    %v6100 = vsub.f32 %v5588, %v5844
    %v6101 = vsub.f32 %v5589, %v5845
    %v6102 = vsub.f32 %v5590, %v5846
    %v6103 = vsub.f32 %v5591, %v5847
    %v6104 = vsub.f32 %v5592, %v5848
    %v6105 = vsub.f32 %v5593, %v5849
    %v6106 = vsub.f32 %v5594, %v5850
    %v6107 = vsub.f32 %v5595, %v5851
    %v6108 = vsub.f32 %v5596, %v5852
    %v6109 = vsub.f32 %v5597, %v5853
    %v6110 = vsub.f32 %v5598, %v5854
    %v6111 = vsub.f32 %v5599, %v5855
    %v6112 = vsub.f32 %v5600, %v5856
    %v6113 = vsub.f32 %v5601, %v5857
    %v6114 = vsub.f32 %v5602, %v5858
    %v6115 = vsub.f32 %v5603, %v5859
    %v6116 = vsub.f32 %v5604, %v5860
    %v6117 = vsub.f32 %v5605, %v5861
    %v6118 = vsub.f32 %v5606, %v5862
    %v6119 = vsub.f32 %v5607, %v5863
    %v6120 = vsub.f32 %v5608, %v5864
    %v6121 = vsub.f32 %v5609, %v5865
    %v6122 = vsub.f32 %v5610, %v5866
    %v6123 = vsub.f32 %v5611, %v5867
    %v6124 = vsub.f32 %v5612, %v5868
    %v6125 = vsub.f32 %v5613, %v5869
    %v6126 = vsub.f32 %v5614, %v5870
    %v6127 = vsub.f32 %v5615, %v5871
    %v6128 = vsub.f32 %v5616, %v5872
    %v6129 = vsub.f32 %v5617, %v5873
    %v6130 = vsub.f32 %v5618, %v5874
    %v6131 = vsub.f32 %v5619, %v5875
    %v6132 = vsub.f32 %v5620, %v5876
    %v6133 = vsub.f32 %v5621, %v5877
    %v6134 = vsub.f32 %v5622, %v5878
    %v6135 = vsub.f32 %v5623, %v5879
    %v6136 = vsub.f32 %v5624, %v5880
    %v6137 = vsub.f32 %v5625, %v5881
    %v6138 = vsub.f32 %v5626, %v5882
    %v6139 = vsub.f32 %v5627, %v5883
    %v6140 = vsub.f32 %v5628, %v5884
    %v6141 = vsub.f32 %v5629, %v5885
    %v6142 = vsub.f32 %v5630, %v5886
    %v6143 = vsub.f32 %v5631, %v5887
    %v6144 = vsub.f32 %v5632, %v5888
    %v6145 = vsub.f32 %v5633, %v5889
    %v6146 = vsub.f32 %v5634, %v5890
    %v6147 = vsub.f32 %v5635, %v5891
    %v6148 = vsub.f32 %v5636, %v5892
    %v6149 = vsub.f32 %v5637, %v5893
    %v6150 = vsub.f32 %v5638, %v5894
    %v6151 = vsub.f32 %v5639, %v5895
    %v6152 = vsub.f32 %v5640, %v5896
    %v6153 = vsub.f32 %v5641, %v5897
    %v6154 = vsub.f32 %v5642, %v5898
    %v6155 = vsub.f32 %v5643, %v5899
    %v6156 = vsub.f32 %v5644, %v5900
    %v6157 = vsub.f32 %v5645, %v5901
    %v6158 = vsub.f32 %v5646, %v5902
    %v6159 = vsub.f32 %v5647, %v5903
    %v6160 = vsub.f32 %v5648, %v5904
    %v6161 = vsub.f32 %v5649, %v5905
    %v6162 = vsub.f32 %v5650, %v5906
    %v6163 = vsub.f32 %v5651, %v5907
    %v6164 = vsub.f32 %v5652, %v5908
    %v6165 = vsub.f32 %v5653, %v5909
    %v6166 = vsub.f32 %v5654, %v5910
    %v6167 = vsub.f32 %v5655, %v5911
    %v6168 = vsub.f32 %v5656, %v5912
    %v6169 = vsub.f32 %v5657, %v5913
    %v6170 = vsub.f32 %v5658, %v5914
    %v6171 = vsub.f32 %v5659, %v5915
    %v6172 = vsub.f32 %v5660, %v5916
    %v6173 = vsub.f32 %v5661, %v5917
    %v6174 = vsub.f32 %v5662, %v5918
    %v6175 = vsub.f32 %v5663, %v5919
    %v6176 = vsub.f32 %v5664, %v5920
    %v6177 = vsub.f32 %v5665, %v5921
    %v6178 = vsub.f32 %v5666, %v5922
    %v6179 = vsub.f32 %v5667, %v5923
    %v6180 = vsub.f32 %v5668, %v5924
    %v6181 = vsub.f32 %v5669, %v5925
    %v6182 = vsub.f32 %v5670, %v5926
    %v6183 = vsub.f32 %v5671, %v5927
    %v6184 = vsub.f32 %v5672, %v5928
    %v6185 = vsub.f32 %v5673, %v5929
    %v6186 = vsub.f32 %v5674, %v5930
    %v6187 = vsub.f32 %v5675, %v5931
    %v6188 = vsub.f32 %v5676, %v5932
    %v6189 = vsub.f32 %v5677, %v5933
    %v6190 = vsub.f32 %v5678, %v5934
    %v6191 = vsub.f32 %v5679, %v5935
    %v6192 = vsub.f32 %v5680, %v5936
    %v6193 = vsub.f32 %v5681, %v5937
    %v6194 = vsub.f32 %v5682, %v5938
    %v6195 = vsub.f32 %v5683, %v5939
    %v6196 = vsub.f32 %v5684, %v5940
    %v6197 = vsub.f32 %v5685, %v5941
    %v6198 = vsub.f32 %v5686, %v5942
    %v6199 = vsub.f32 %v5687, %v5943
    %v6200 = vsub.f32 %v5688, %v5944
    %v6201 = vsub.f32 %v5689, %v5945
    %v6202 = vsub.f32 %v5690, %v5946
    %v6203 = vsub.f32 %v5691, %v5947
    %v6204 = vsub.f32 %v5692, %v5948
    %v6205 = vsub.f32 %v5693, %v5949
    %v6206 = vsub.f32 %v5694, %v5950
    %v6207 = vsub.f32 %v5695, %v5951
    %v6208 = vsub.f32 %v5696, %v5952
    %v6209 = vsub.f32 %v5697, %v5953
    %v6210 = vsub.f32 %v5698, %v5954
    %v6211 = vsub.f32 %v5699, %v5955
    %v6212 = vsub.f32 %v5700, %v5956
    %v6213 = vsub.f32 %v5701, %v5957
    %v6214 = vsub.f32 %v5702, %v5958
    %v6215 = vsub.f32 %v5703, %v5959
    %v6216 = vsub.f32 %v5704, %v5960
    %v6217 = vsub.f32 %v5705, %v5961
    %v6218 = vsub.f32 %v5706, %v5962
    %v6219 = vsub.f32 %v5707, %v5963
    %v6220 = vsub.f32 %v5708, %v5964
    %v6221 = vsub.f32 %v5709, %v5965
    %v6222 = vsub.f32 %v5710, %v5966
    %v6223 = vsub.f32 %v5711, %v5967
    %v6224 = vsub.f32 %v5712, %v5968
    %v6225 = vsub.f32 %v5713, %v5969
    %v6226 = vsub.f32 %v5714, %v5970
    %v6227 = vsub.f32 %v5715, %v5971
    %v6228 = vsub.f32 %v5716, %v5972
    %v6229 = vsub.f32 %v5717, %v5973
    %v6230 = vsub.f32 %v5718, %v5974
    %v6231 = vsub.f32 %v5719, %v5975
    %v6232 = vsub.f32 %v5720, %v5976
    %v6233 = vsub.f32 %v5721, %v5977
    %v6234 = vsub.f32 %v5722, %v5978
    %v6235 = vsub.f32 %v5723, %v5979
    %v6236 = vsub.f32 %v5724, %v5980
    %v6237 = vsub.f32 %v5725, %v5981
    %v6238 = vsub.f32 %v5726, %v5982
    %v6239 = vsub.f32 %v5727, %v5983
    %v6240 = vsub.f32 %v5728, %v5984
    %v6241 = vsub.f32 %v5729, %v5985
    %v6242 = vsub.f32 %v5730, %v5986
    %v6243 = vsub.f32 %v5731, %v5987
    %v6244 = vsub.f32 %v5732, %v5988
    %v6245 = vsub.f32 %v5733, %v5989
    %v6246 = vsub.f32 %v5734, %v5990
    %v6247 = vsub.f32 %v5735, %v5991
    %v6248 = vsub.f32 %v5736, %v5992
    %v6249 = vsub.f32 %v5737, %v5993
    %v6250 = vsub.f32 %v5738, %v5994
    %v6251 = vsub.f32 %v5739, %v5995
    %v6252 = vsub.f32 %v5740, %v5996
    %v6253 = vsub.f32 %v5741, %v5997
    %v6254 = vsub.f32 %v5742, %v5998
    %v6255 = vsub.f32 %v5743, %v5999
    %v6256 = vsub.f32 %v5744, %v6000
    %v6257 = vsub.f32 %v5745, %v6001
    %v6258 = vsub.f32 %v5746, %v6002
    %v6259 = vsub.f32 %v5747, %v6003
    %v6260 = vsub.f32 %v5748, %v6004
    %v6261 = vsub.f32 %v5749, %v6005
    %v6262 = vsub.f32 %v5750, %v6006
    %v6263 = vsub.f32 %v5751, %v6007
    %v6264 = vsub.f32 %v5752, %v6008
    %v6265 = vsub.f32 %v5753, %v6009
    %v6266 = vsub.f32 %v5754, %v6010
    %v6267 = vsub.f32 %v5755, %v6011
    %v6268 = vsub.f32 %v5756, %v6012
    %v6269 = vsub.f32 %v5757, %v6013
    %v6270 = vsub.f32 %v5758, %v6014
    %v6271 = vsub.f32 %v5759, %v6015
    %v6272 = vsub.f32 %v5760, %v6016
    %v6273 = vsub.f32 %v5761, %v6017
    %v6274 = vsub.f32 %v5762, %v6018
    %v6275 = vsub.f32 %v5763, %v6019
    %v6276 = vsub.f32 %v5764, %v6020
    %v6277 = vsub.f32 %v5765, %v6021
    %v6278 = vsub.f32 %v5766, %v6022
    %6280 = vset.pattern.permute.xlu0 0
    %6281 = vperm.xlu0 %6280, %v4999
    %v6282 = vpop.permute.xlu0 %6281
    %6285 = vset.pattern.permute.xlu0 0
    %6286 = vperm.xlu0 %6285, %v5000
    %v6287 = vpop.permute.xlu0 %6286
    %6290 = vset.pattern.permute.xlu0 0
    %6291 = vperm.xlu0 %6290, %v5001
    %v6292 = vpop.permute.xlu0 %6291
    %6295 = vset.pattern.permute.xlu0 0
    %6296 = vperm.xlu0 %6295, %v5002
    %v6297 = vpop.permute.xlu0 %6296
    %6300 = vset.pattern.permute.xlu0 0
    %6301 = vperm.xlu0 %6300, %v5003
    %v6302 = vpop.permute.xlu0 %6301
    %6305 = vset.pattern.permute.xlu0 0
    %6306 = vperm.xlu0 %6305, %v5004
    %v6307 = vpop.permute.xlu0 %6306
    %6310 = vset.pattern.permute.xlu0 0
    %6311 = vperm.xlu0 %6310, %v5005
    %v6312 = vpop.permute.xlu0 %6311
    %6315 = vset.pattern.permute.xlu0 0
    %6316 = vperm.xlu0 %6315, %v5006
    %v6317 = vpop.permute.xlu0 %6316
    %6320 = vset.pattern.permute.xlu0 0
    %6321 = vperm.xlu0 %6320, %v5007
    %v6322 = vpop.permute.xlu0 %6321
    %6325 = vset.pattern.permute.xlu0 0
    %6326 = vperm.xlu0 %6325, %v5008
    %v6327 = vpop.permute.xlu0 %6326
    %6330 = vset.pattern.permute.xlu0 0
    %6331 = vperm.xlu0 %6330, %v5009
    %v6332 = vpop.permute.xlu0 %6331
    %6335 = vset.pattern.permute.xlu0 0
    %6336 = vperm.xlu0 %6335, %v5010
    %v6337 = vpop.permute.xlu0 %6336
    %6340 = vset.pattern.permute.xlu0 0
    %6341 = vperm.xlu0 %6340, %v5011
    %v6342 = vpop.permute.xlu0 %6341
    %6345 = vset.pattern.permute.xlu0 0
    %6346 = vperm.xlu0 %6345, %v5012
    %v6347 = vpop.permute.xlu0 %6346
    %6350 = vset.pattern.permute.xlu0 0
    %6351 = vperm.xlu0 %6350, %v5013
    %v6352 = vpop.permute.xlu0 %6351
    %6355 = vset.pattern.permute.xlu0 0
    %6356 = vperm.xlu0 %6355, %v5014
    %v6357 = vpop.permute.xlu0 %6356
    %6360 = vset.pattern.permute.xlu0 0
    %6361 = vperm.xlu0 %6360, %v5015
    %v6362 = vpop.permute.xlu0 %6361
    %6365 = vset.pattern.permute.xlu0 0
    %6366 = vperm.xlu0 %6365, %v5016
    %v6367 = vpop.permute.xlu0 %6366
    %6370 = vset.pattern.permute.xlu0 0
    %6371 = vperm.xlu0 %6370, %v5017
    %v6372 = vpop.permute.xlu0 %6371
    %6375 = vset.pattern.permute.xlu0 0
    %6376 = vperm.xlu0 %6375, %v5018
    %v6377 = vpop.permute.xlu0 %6376
    %6380 = vset.pattern.permute.xlu0 0
    %6381 = vperm.xlu0 %6380, %v5019
    %v6382 = vpop.permute.xlu0 %6381
    %6385 = vset.pattern.permute.xlu0 0
    %6386 = vperm.xlu0 %6385, %v5020
    %v6387 = vpop.permute.xlu0 %6386
    %6390 = vset.pattern.permute.xlu0 0
    %6391 = vperm.xlu0 %6390, %v5021
    %v6392 = vpop.permute.xlu0 %6391
    %6395 = vset.pattern.permute.xlu0 0
    %6396 = vperm.xlu0 %6395, %v5022
    %v6397 = vpop.permute.xlu0 %6396
    %6400 = vset.pattern.permute.xlu0 0
    %6401 = vperm.xlu0 %6400, %v5023
    %v6402 = vpop.permute.xlu0 %6401
    %6405 = vset.pattern.permute.xlu0 0
    %6406 = vperm.xlu0 %6405, %v5024
    %v6407 = vpop.permute.xlu0 %6406
    %6410 = vset.pattern.permute.xlu0 0
    %6411 = vperm.xlu0 %6410, %v5025
    %v6412 = vpop.permute.xlu0 %6411
    %6415 = vset.pattern.permute.xlu0 0
    %6416 = vperm.xlu0 %6415, %v5026
    %v6417 = vpop.permute.xlu0 %6416
    %6420 = vset.pattern.permute.xlu0 0
    %6421 = vperm.xlu0 %6420, %v5027
    %v6422 = vpop.permute.xlu0 %6421
    %6425 = vset.pattern.permute.xlu0 0
    %6426 = vperm.xlu0 %6425, %v5028
    %v6427 = vpop.permute.xlu0 %6426
    %6430 = vset.pattern.permute.xlu0 0
    %6431 = vperm.xlu0 %6430, %v5029
    %v6432 = vpop.permute.xlu0 %6431
    %6435 = vset.pattern.permute.xlu0 0
    %6436 = vperm.xlu0 %6435, %v5030
    %v6437 = vpop.permute.xlu0 %6436
    %6440 = vset.pattern.permute.xlu0 0
    %6441 = vperm.xlu0 %6440, %v5031
    %v6442 = vpop.permute.xlu0 %6441
    %6445 = vset.pattern.permute.xlu0 0
    %6446 = vperm.xlu0 %6445, %v5032
    %v6447 = vpop.permute.xlu0 %6446
    %6450 = vset.pattern.permute.xlu0 0
    %6451 = vperm.xlu0 %6450, %v5033
    %v6452 = vpop.permute.xlu0 %6451
    %6455 = vset.pattern.permute.xlu0 0
    %6456 = vperm.xlu0 %6455, %v5034
    %v6457 = vpop.permute.xlu0 %6456
    %6460 = vset.pattern.permute.xlu0 0
    %6461 = vperm.xlu0 %6460, %v5035
    %v6462 = vpop.permute.xlu0 %6461
    %6465 = vset.pattern.permute.xlu0 0
    %6466 = vperm.xlu0 %6465, %v5036
    %v6467 = vpop.permute.xlu0 %6466
    %6470 = vset.pattern.permute.xlu0 0
    %6471 = vperm.xlu0 %6470, %v5037
    %v6472 = vpop.permute.xlu0 %6471
    %6475 = vset.pattern.permute.xlu0 0
    %6476 = vperm.xlu0 %6475, %v5038
    %v6477 = vpop.permute.xlu0 %6476
    %6480 = vset.pattern.permute.xlu0 0
    %6481 = vperm.xlu0 %6480, %v5039
    %v6482 = vpop.permute.xlu0 %6481
    %6485 = vset.pattern.permute.xlu0 0
    %6486 = vperm.xlu0 %6485, %v5040
    %v6487 = vpop.permute.xlu0 %6486
    %6490 = vset.pattern.permute.xlu0 0
    %6491 = vperm.xlu0 %6490, %v5041
    %v6492 = vpop.permute.xlu0 %6491
    %6495 = vset.pattern.permute.xlu0 0
    %6496 = vperm.xlu0 %6495, %v5042
    %v6497 = vpop.permute.xlu0 %6496
    %6500 = vset.pattern.permute.xlu0 0
    %6501 = vperm.xlu0 %6500, %v5043
    %v6502 = vpop.permute.xlu0 %6501
    %6505 = vset.pattern.permute.xlu0 0
    %6506 = vperm.xlu0 %6505, %v5044
    %v6507 = vpop.permute.xlu0 %6506
    %6510 = vset.pattern.permute.xlu0 0
    %6511 = vperm.xlu0 %6510, %v5045
    %v6512 = vpop.permute.xlu0 %6511
    %6515 = vset.pattern.permute.xlu0 0
    %6516 = vperm.xlu0 %6515, %v5046
    %v6517 = vpop.permute.xlu0 %6516
    %6520 = vset.pattern.permute.xlu0 0
    %6521 = vperm.xlu0 %6520, %v5047
    %v6522 = vpop.permute.xlu0 %6521
    %6525 = vset.pattern.permute.xlu0 0
    %6526 = vperm.xlu0 %6525, %v5048
    %v6527 = vpop.permute.xlu0 %6526
    %6530 = vset.pattern.permute.xlu0 0
    %6531 = vperm.xlu0 %6530, %v5049
    %v6532 = vpop.permute.xlu0 %6531
    %6535 = vset.pattern.permute.xlu0 0
    %6536 = vperm.xlu0 %6535, %v5050
    %v6537 = vpop.permute.xlu0 %6536
    %6540 = vset.pattern.permute.xlu0 0
    %6541 = vperm.xlu0 %6540, %v5051
    %v6542 = vpop.permute.xlu0 %6541
    %6545 = vset.pattern.permute.xlu0 0
    %6546 = vperm.xlu0 %6545, %v5052
    %v6547 = vpop.permute.xlu0 %6546
    %6550 = vset.pattern.permute.xlu0 0
    %6551 = vperm.xlu0 %6550, %v5053
    %v6552 = vpop.permute.xlu0 %6551
    %6555 = vset.pattern.permute.xlu0 0
    %6556 = vperm.xlu0 %6555, %v5054
    %v6557 = vpop.permute.xlu0 %6556
    %6560 = vset.pattern.permute.xlu0 0
    %6561 = vperm.xlu0 %6560, %v5055
    %v6562 = vpop.permute.xlu0 %6561
    %6565 = vset.pattern.permute.xlu0 0
    %6566 = vperm.xlu0 %6565, %v5056
    %v6567 = vpop.permute.xlu0 %6566
    %6570 = vset.pattern.permute.xlu0 0
    %6571 = vperm.xlu0 %6570, %v5057
    %v6572 = vpop.permute.xlu0 %6571
    %6575 = vset.pattern.permute.xlu0 0
    %6576 = vperm.xlu0 %6575, %v5058
    %v6577 = vpop.permute.xlu0 %6576
    %6580 = vset.pattern.permute.xlu0 0
    %6581 = vperm.xlu0 %6580, %v5059
    %v6582 = vpop.permute.xlu0 %6581
    %6585 = vset.pattern.permute.xlu0 0
    %6586 = vperm.xlu0 %6585, %v5060
    %v6587 = vpop.permute.xlu0 %6586
    %6590 = vset.pattern.permute.xlu0 0
    %6591 = vperm.xlu0 %6590, %v5061
    %v6592 = vpop.permute.xlu0 %6591
    %6595 = vset.pattern.permute.xlu0 0
    %6596 = vperm.xlu0 %6595, %v5062
    %v6597 = vpop.permute.xlu0 %6596
    %6600 = vset.pattern.permute.xlu0 0
    %6601 = vperm.xlu0 %6600, %v5063
    %v6602 = vpop.permute.xlu0 %6601
    %6605 = vset.pattern.permute.xlu0 0
    %6606 = vperm.xlu0 %6605, %v5064
    %v6607 = vpop.permute.xlu0 %6606
    %6610 = vset.pattern.permute.xlu0 0
    %6611 = vperm.xlu0 %6610, %v5065
    %v6612 = vpop.permute.xlu0 %6611
    %6615 = vset.pattern.permute.xlu0 0
    %6616 = vperm.xlu0 %6615, %v5066
    %v6617 = vpop.permute.xlu0 %6616
    %6620 = vset.pattern.permute.xlu0 0
    %6621 = vperm.xlu0 %6620, %v5067
    %v6622 = vpop.permute.xlu0 %6621
    %6625 = vset.pattern.permute.xlu0 0
    %6626 = vperm.xlu0 %6625, %v5068
    %v6627 = vpop.permute.xlu0 %6626
    %6630 = vset.pattern.permute.xlu0 0
    %6631 = vperm.xlu0 %6630, %v5069
    %v6632 = vpop.permute.xlu0 %6631
    %6635 = vset.pattern.permute.xlu0 0
    %6636 = vperm.xlu0 %6635, %v5070
    %v6637 = vpop.permute.xlu0 %6636
    %6640 = vset.pattern.permute.xlu0 0
    %6641 = vperm.xlu0 %6640, %v5071
    %v6642 = vpop.permute.xlu0 %6641
    %6645 = vset.pattern.permute.xlu0 0
    %6646 = vperm.xlu0 %6645, %v5072
    %v6647 = vpop.permute.xlu0 %6646
    %6650 = vset.pattern.permute.xlu0 0
    %6651 = vperm.xlu0 %6650, %v5073
    %v6652 = vpop.permute.xlu0 %6651
    %6655 = vset.pattern.permute.xlu0 0
    %6656 = vperm.xlu0 %6655, %v5074
    %v6657 = vpop.permute.xlu0 %6656
    %6660 = vset.pattern.permute.xlu0 0
    %6661 = vperm.xlu0 %6660, %v5075
    %v6662 = vpop.permute.xlu0 %6661
    %6665 = vset.pattern.permute.xlu0 0
    %6666 = vperm.xlu0 %6665, %v5076
    %v6667 = vpop.permute.xlu0 %6666
    %6670 = vset.pattern.permute.xlu0 0
    %6671 = vperm.xlu0 %6670, %v5077
    %v6672 = vpop.permute.xlu0 %6671
    %6675 = vset.pattern.permute.xlu0 0
    %6676 = vperm.xlu0 %6675, %v5078
    %v6677 = vpop.permute.xlu0 %6676
    %6680 = vset.pattern.permute.xlu0 0
    %6681 = vperm.xlu0 %6680, %v5079
    %v6682 = vpop.permute.xlu0 %6681
    %6685 = vset.pattern.permute.xlu0 0
    %6686 = vperm.xlu0 %6685, %v5080
    %v6687 = vpop.permute.xlu0 %6686
    %6690 = vset.pattern.permute.xlu0 0
    %6691 = vperm.xlu0 %6690, %v5081
    %v6692 = vpop.permute.xlu0 %6691
    %6695 = vset.pattern.permute.xlu0 0
    %6696 = vperm.xlu0 %6695, %v5082
    %v6697 = vpop.permute.xlu0 %6696
    %6700 = vset.pattern.permute.xlu0 0
    %6701 = vperm.xlu0 %6700, %v5083
    %v6702 = vpop.permute.xlu0 %6701
    %6705 = vset.pattern.permute.xlu0 0
    %6706 = vperm.xlu0 %6705, %v5084
    %v6707 = vpop.permute.xlu0 %6706
    %6710 = vset.pattern.permute.xlu0 0
    %6711 = vperm.xlu0 %6710, %v5085
    %v6712 = vpop.permute.xlu0 %6711
    %6715 = vset.pattern.permute.xlu0 0
    %6716 = vperm.xlu0 %6715, %v5086
    %v6717 = vpop.permute.xlu0 %6716
    %6720 = vset.pattern.permute.xlu0 0
    %6721 = vperm.xlu0 %6720, %v5087
    %v6722 = vpop.permute.xlu0 %6721
    %6725 = vset.pattern.permute.xlu0 0
    %6726 = vperm.xlu0 %6725, %v5088
    %v6727 = vpop.permute.xlu0 %6726
    %6730 = vset.pattern.permute.xlu0 0
    %6731 = vperm.xlu0 %6730, %v5089
    %v6732 = vpop.permute.xlu0 %6731
    %6735 = vset.pattern.permute.xlu0 0
    %6736 = vperm.xlu0 %6735, %v5090
    %v6737 = vpop.permute.xlu0 %6736
    %6740 = vset.pattern.permute.xlu0 0
    %6741 = vperm.xlu0 %6740, %v5091
    %v6742 = vpop.permute.xlu0 %6741
    %6745 = vset.pattern.permute.xlu0 0
    %6746 = vperm.xlu0 %6745, %v5092
    %v6747 = vpop.permute.xlu0 %6746
    %6750 = vset.pattern.permute.xlu0 0
    %6751 = vperm.xlu0 %6750, %v5093
    %v6752 = vpop.permute.xlu0 %6751
    %6755 = vset.pattern.permute.xlu0 0
    %6756 = vperm.xlu0 %6755, %v5094
    %v6757 = vpop.permute.xlu0 %6756
    %6760 = vset.pattern.permute.xlu0 0
    %6761 = vperm.xlu0 %6760, %v5095
    %v6762 = vpop.permute.xlu0 %6761
    %6765 = vset.pattern.permute.xlu0 0
    %6766 = vperm.xlu0 %6765, %v5096
    %v6767 = vpop.permute.xlu0 %6766
    %6770 = vset.pattern.permute.xlu0 0
    %6771 = vperm.xlu0 %6770, %v5097
    %v6772 = vpop.permute.xlu0 %6771
    %6775 = vset.pattern.permute.xlu0 0
    %6776 = vperm.xlu0 %6775, %v5098
    %v6777 = vpop.permute.xlu0 %6776
    %6780 = vset.pattern.permute.xlu0 0
    %6781 = vperm.xlu0 %6780, %v5099
    %v6782 = vpop.permute.xlu0 %6781
    %6785 = vset.pattern.permute.xlu0 0
    %6786 = vperm.xlu0 %6785, %v5100
    %v6787 = vpop.permute.xlu0 %6786
    %6790 = vset.pattern.permute.xlu0 0
    %6791 = vperm.xlu0 %6790, %v5101
    %v6792 = vpop.permute.xlu0 %6791
    %6795 = vset.pattern.permute.xlu0 0
    %6796 = vperm.xlu0 %6795, %v5102
    %v6797 = vpop.permute.xlu0 %6796
    %6800 = vset.pattern.permute.xlu0 0
    %6801 = vperm.xlu0 %6800, %v5103
    %v6802 = vpop.permute.xlu0 %6801
    %6805 = vset.pattern.permute.xlu0 0
    %6806 = vperm.xlu0 %6805, %v5104
    %v6807 = vpop.permute.xlu0 %6806
    %6810 = vset.pattern.permute.xlu0 0
    %6811 = vperm.xlu0 %6810, %v5105
    %v6812 = vpop.permute.xlu0 %6811
    %6815 = vset.pattern.permute.xlu0 0
    %6816 = vperm.xlu0 %6815, %v5106
    %v6817 = vpop.permute.xlu0 %6816
    %6820 = vset.pattern.permute.xlu0 0
    %6821 = vperm.xlu0 %6820, %v5107
    %v6822 = vpop.permute.xlu0 %6821
    %6825 = vset.pattern.permute.xlu0 0
    %6826 = vperm.xlu0 %6825, %v5108
    %v6827 = vpop.permute.xlu0 %6826
    %6830 = vset.pattern.permute.xlu0 0
    %6831 = vperm.xlu0 %6830, %v5109
    %v6832 = vpop.permute.xlu0 %6831
    %6835 = vset.pattern.permute.xlu0 0
    %6836 = vperm.xlu0 %6835, %v5110
    %v6837 = vpop.permute.xlu0 %6836
    %6840 = vset.pattern.permute.xlu0 0
    %6841 = vperm.xlu0 %6840, %v5111
    %v6842 = vpop.permute.xlu0 %6841
    %6845 = vset.pattern.permute.xlu0 0
    %6846 = vperm.xlu0 %6845, %v5112
    %v6847 = vpop.permute.xlu0 %6846
    %6850 = vset.pattern.permute.xlu0 0
    %6851 = vperm.xlu0 %6850, %v5113
    %v6852 = vpop.permute.xlu0 %6851
    %6855 = vset.pattern.permute.xlu0 0
    %6856 = vperm.xlu0 %6855, %v5114
    %v6857 = vpop.permute.xlu0 %6856
    %6860 = vset.pattern.permute.xlu0 0
    %6861 = vperm.xlu0 %6860, %v5115
    %v6862 = vpop.permute.xlu0 %6861
    %6865 = vset.pattern.permute.xlu0 0
    %6866 = vperm.xlu0 %6865, %v5116
    %v6867 = vpop.permute.xlu0 %6866
    %6870 = vset.pattern.permute.xlu0 0
    %6871 = vperm.xlu0 %6870, %v5117
    %v6872 = vpop.permute.xlu0 %6871
    %6875 = vset.pattern.permute.xlu0 0
    %6876 = vperm.xlu0 %6875, %v5118
    %v6877 = vpop.permute.xlu0 %6876
    %6880 = vset.pattern.permute.xlu0 0
    %6881 = vperm.xlu0 %6880, %v5119
    %v6882 = vpop.permute.xlu0 %6881
    %6885 = vset.pattern.permute.xlu0 0
    %6886 = vperm.xlu0 %6885, %v5120
    %v6887 = vpop.permute.xlu0 %6886
    %6890 = vset.pattern.permute.xlu0 0
    %6891 = vperm.xlu0 %6890, %v5121
    %v6892 = vpop.permute.xlu0 %6891
    %6895 = vset.pattern.permute.xlu0 0
    %6896 = vperm.xlu0 %6895, %v5122
    %v6897 = vpop.permute.xlu0 %6896
    %6900 = vset.pattern.permute.xlu0 0
    %6901 = vperm.xlu0 %6900, %v5123
    %v6902 = vpop.permute.xlu0 %6901
    %6905 = vset.pattern.permute.xlu0 0
    %6906 = vperm.xlu0 %6905, %v5124
    %v6907 = vpop.permute.xlu0 %6906
    %6910 = vset.pattern.permute.xlu0 0
    %6911 = vperm.xlu0 %6910, %v5125
    %v6912 = vpop.permute.xlu0 %6911
    %6915 = vset.pattern.permute.xlu0 0
    %6916 = vperm.xlu0 %6915, %v5126
    %v6917 = vpop.permute.xlu0 %6916
    %6920 = vset.pattern.permute.xlu0 0
    %6921 = vperm.xlu0 %6920, %v5127
    %v6922 = vpop.permute.xlu0 %6921
    %6925 = vset.pattern.permute.xlu0 0
    %6926 = vperm.xlu0 %6925, %v5128
    %v6927 = vpop.permute.xlu0 %6926
    %6930 = vset.pattern.permute.xlu0 0
    %6931 = vperm.xlu0 %6930, %v5129
    %v6932 = vpop.permute.xlu0 %6931
    %6935 = vset.pattern.permute.xlu0 0
    %6936 = vperm.xlu0 %6935, %v5130
    %v6937 = vpop.permute.xlu0 %6936
    %6940 = vset.pattern.permute.xlu0 0
    %6941 = vperm.xlu0 %6940, %v5131
    %v6942 = vpop.permute.xlu0 %6941
    %6945 = vset.pattern.permute.xlu0 0
    %6946 = vperm.xlu0 %6945, %v5132
    %v6947 = vpop.permute.xlu0 %6946
    %6950 = vset.pattern.permute.xlu0 0
    %6951 = vperm.xlu0 %6950, %v5133
    %v6952 = vpop.permute.xlu0 %6951
    %6955 = vset.pattern.permute.xlu0 0
    %6956 = vperm.xlu0 %6955, %v5134
    %v6957 = vpop.permute.xlu0 %6956
    %6960 = vset.pattern.permute.xlu0 0
    %6961 = vperm.xlu0 %6960, %v5135
    %v6962 = vpop.permute.xlu0 %6961
    %6965 = vset.pattern.permute.xlu0 0
    %6966 = vperm.xlu0 %6965, %v5136
    %v6967 = vpop.permute.xlu0 %6966
    %6970 = vset.pattern.permute.xlu0 0
    %6971 = vperm.xlu0 %6970, %v5137
    %v6972 = vpop.permute.xlu0 %6971
    %6975 = vset.pattern.permute.xlu0 0
    %6976 = vperm.xlu0 %6975, %v5138
    %v6977 = vpop.permute.xlu0 %6976
    %6980 = vset.pattern.permute.xlu0 0
    %6981 = vperm.xlu0 %6980, %v5139
    %v6982 = vpop.permute.xlu0 %6981
    %6985 = vset.pattern.permute.xlu0 0
    %6986 = vperm.xlu0 %6985, %v5140
    %v6987 = vpop.permute.xlu0 %6986
    %6990 = vset.pattern.permute.xlu0 0
    %6991 = vperm.xlu0 %6990, %v5141
    %v6992 = vpop.permute.xlu0 %6991
    %6995 = vset.pattern.permute.xlu0 0
    %6996 = vperm.xlu0 %6995, %v5142
    %v6997 = vpop.permute.xlu0 %6996
    %7000 = vset.pattern.permute.xlu0 0
    %7001 = vperm.xlu0 %7000, %v5143
    %v7002 = vpop.permute.xlu0 %7001
    %7005 = vset.pattern.permute.xlu0 0
    %7006 = vperm.xlu0 %7005, %v5144
    %v7007 = vpop.permute.xlu0 %7006
    %7010 = vset.pattern.permute.xlu0 0
    %7011 = vperm.xlu0 %7010, %v5145
    %v7012 = vpop.permute.xlu0 %7011
    %7015 = vset.pattern.permute.xlu0 0
    %7016 = vperm.xlu0 %7015, %v5146
    %v7017 = vpop.permute.xlu0 %7016
    %7020 = vset.pattern.permute.xlu0 0
    %7021 = vperm.xlu0 %7020, %v5147
    %v7022 = vpop.permute.xlu0 %7021
    %7025 = vset.pattern.permute.xlu0 0
    %7026 = vperm.xlu0 %7025, %v5148
    %v7027 = vpop.permute.xlu0 %7026
    %7030 = vset.pattern.permute.xlu0 0
    %7031 = vperm.xlu0 %7030, %v5149
    %v7032 = vpop.permute.xlu0 %7031
    %7035 = vset.pattern.permute.xlu0 0
    %7036 = vperm.xlu0 %7035, %v5150
    %v7037 = vpop.permute.xlu0 %7036
    %7040 = vset.pattern.permute.xlu0 0
    %7041 = vperm.xlu0 %7040, %v5151
    %v7042 = vpop.permute.xlu0 %7041
    %7045 = vset.pattern.permute.xlu0 0
    %7046 = vperm.xlu0 %7045, %v5152
    %v7047 = vpop.permute.xlu0 %7046
    %7050 = vset.pattern.permute.xlu0 0
    %7051 = vperm.xlu0 %7050, %v5153
    %v7052 = vpop.permute.xlu0 %7051
    %7055 = vset.pattern.permute.xlu0 0
    %7056 = vperm.xlu0 %7055, %v5154
    %v7057 = vpop.permute.xlu0 %7056
    %7060 = vset.pattern.permute.xlu0 0
    %7061 = vperm.xlu0 %7060, %v5155
    %v7062 = vpop.permute.xlu0 %7061
    %7065 = vset.pattern.permute.xlu0 0
    %7066 = vperm.xlu0 %7065, %v5156
    %v7067 = vpop.permute.xlu0 %7066
    %7070 = vset.pattern.permute.xlu0 0
    %7071 = vperm.xlu0 %7070, %v5157
    %v7072 = vpop.permute.xlu0 %7071
    %7075 = vset.pattern.permute.xlu0 0
    %7076 = vperm.xlu0 %7075, %v5158
    %v7077 = vpop.permute.xlu0 %7076
    %7080 = vset.pattern.permute.xlu0 0
    %7081 = vperm.xlu0 %7080, %v5159
    %v7082 = vpop.permute.xlu0 %7081
    %7085 = vset.pattern.permute.xlu0 0
    %7086 = vperm.xlu0 %7085, %v5160
    %v7087 = vpop.permute.xlu0 %7086
    %7090 = vset.pattern.permute.xlu0 0
    %7091 = vperm.xlu0 %7090, %v5161
    %v7092 = vpop.permute.xlu0 %7091
    %7095 = vset.pattern.permute.xlu0 0
    %7096 = vperm.xlu0 %7095, %v5162
    %v7097 = vpop.permute.xlu0 %7096
    %7100 = vset.pattern.permute.xlu0 0
    %7101 = vperm.xlu0 %7100, %v5163
    %v7102 = vpop.permute.xlu0 %7101
    %7105 = vset.pattern.permute.xlu0 0
    %7106 = vperm.xlu0 %7105, %v5164
    %v7107 = vpop.permute.xlu0 %7106
    %7110 = vset.pattern.permute.xlu0 0
    %7111 = vperm.xlu0 %7110, %v5165
    %v7112 = vpop.permute.xlu0 %7111
    %7115 = vset.pattern.permute.xlu0 0
    %7116 = vperm.xlu0 %7115, %v5166
    %v7117 = vpop.permute.xlu0 %7116
    %7120 = vset.pattern.permute.xlu0 0
    %7121 = vperm.xlu0 %7120, %v5167
    %v7122 = vpop.permute.xlu0 %7121
    %7125 = vset.pattern.permute.xlu0 0
    %7126 = vperm.xlu0 %7125, %v5168
    %v7127 = vpop.permute.xlu0 %7126
    %7130 = vset.pattern.permute.xlu0 0
    %7131 = vperm.xlu0 %7130, %v5169
    %v7132 = vpop.permute.xlu0 %7131
    %7135 = vset.pattern.permute.xlu0 0
    %7136 = vperm.xlu0 %7135, %v5170
    %v7137 = vpop.permute.xlu0 %7136
    %7140 = vset.pattern.permute.xlu0 0
    %7141 = vperm.xlu0 %7140, %v5171
    %v7142 = vpop.permute.xlu0 %7141
    %7145 = vset.pattern.permute.xlu0 0
    %7146 = vperm.xlu0 %7145, %v5172
    %v7147 = vpop.permute.xlu0 %7146
    %7150 = vset.pattern.permute.xlu0 0
    %7151 = vperm.xlu0 %7150, %v5173
    %v7152 = vpop.permute.xlu0 %7151
    %7155 = vset.pattern.permute.xlu0 0
    %7156 = vperm.xlu0 %7155, %v5174
    %v7157 = vpop.permute.xlu0 %7156
    %7160 = vset.pattern.permute.xlu0 0
    %7161 = vperm.xlu0 %7160, %v5175
    %v7162 = vpop.permute.xlu0 %7161
    %7165 = vset.pattern.permute.xlu0 0
    %7166 = vperm.xlu0 %7165, %v5176
    %v7167 = vpop.permute.xlu0 %7166
    %7170 = vset.pattern.permute.xlu0 0
    %7171 = vperm.xlu0 %7170, %v5177
    %v7172 = vpop.permute.xlu0 %7171
    %7175 = vset.pattern.permute.xlu0 0
    %7176 = vperm.xlu0 %7175, %v5178
    %v7177 = vpop.permute.xlu0 %7176
    %7180 = vset.pattern.permute.xlu0 0
    %7181 = vperm.xlu0 %7180, %v5179
    %v7182 = vpop.permute.xlu0 %7181
    %7185 = vset.pattern.permute.xlu0 0
    %7186 = vperm.xlu0 %7185, %v5180
    %v7187 = vpop.permute.xlu0 %7186
    %7190 = vset.pattern.permute.xlu0 0
    %7191 = vperm.xlu0 %7190, %v5181
    %v7192 = vpop.permute.xlu0 %7191
    %7195 = vset.pattern.permute.xlu0 0
    %7196 = vperm.xlu0 %7195, %v5182
    %v7197 = vpop.permute.xlu0 %7196
    %7200 = vset.pattern.permute.xlu0 0
    %7201 = vperm.xlu0 %7200, %v5183
    %v7202 = vpop.permute.xlu0 %7201
    %7205 = vset.pattern.permute.xlu0 0
    %7206 = vperm.xlu0 %7205, %v5184
    %v7207 = vpop.permute.xlu0 %7206
    %7210 = vset.pattern.permute.xlu0 0
    %7211 = vperm.xlu0 %7210, %v5185
    %v7212 = vpop.permute.xlu0 %7211
    %7215 = vset.pattern.permute.xlu0 0
    %7216 = vperm.xlu0 %7215, %v5186
    %v7217 = vpop.permute.xlu0 %7216
    %7220 = vset.pattern.permute.xlu0 0
    %7221 = vperm.xlu0 %7220, %v5187
    %v7222 = vpop.permute.xlu0 %7221
    %7225 = vset.pattern.permute.xlu0 0
    %7226 = vperm.xlu0 %7225, %v5188
    %v7227 = vpop.permute.xlu0 %7226
    %7230 = vset.pattern.permute.xlu0 0
    %7231 = vperm.xlu0 %7230, %v5189
    %v7232 = vpop.permute.xlu0 %7231
    %7235 = vset.pattern.permute.xlu0 0
    %7236 = vperm.xlu0 %7235, %v5190
    %v7237 = vpop.permute.xlu0 %7236
    %7240 = vset.pattern.permute.xlu0 0
    %7241 = vperm.xlu0 %7240, %v5191
    %v7242 = vpop.permute.xlu0 %7241
    %7245 = vset.pattern.permute.xlu0 0
    %7246 = vperm.xlu0 %7245, %v5192
    %v7247 = vpop.permute.xlu0 %7246
    %7250 = vset.pattern.permute.xlu0 0
    %7251 = vperm.xlu0 %7250, %v5193
    %v7252 = vpop.permute.xlu0 %7251
    %7255 = vset.pattern.permute.xlu0 0
    %7256 = vperm.xlu0 %7255, %v5194
    %v7257 = vpop.permute.xlu0 %7256
    %7260 = vset.pattern.permute.xlu0 0
    %7261 = vperm.xlu0 %7260, %v5195
    %v7262 = vpop.permute.xlu0 %7261
    %7265 = vset.pattern.permute.xlu0 0
    %7266 = vperm.xlu0 %7265, %v5196
    %v7267 = vpop.permute.xlu0 %7266
    %7270 = vset.pattern.permute.xlu0 0
    %7271 = vperm.xlu0 %7270, %v5197
    %v7272 = vpop.permute.xlu0 %7271
    %7275 = vset.pattern.permute.xlu0 0
    %7276 = vperm.xlu0 %7275, %v5198
    %v7277 = vpop.permute.xlu0 %7276
    %7280 = vset.pattern.permute.xlu0 0
    %7281 = vperm.xlu0 %7280, %v5199
    %v7282 = vpop.permute.xlu0 %7281
    %7285 = vset.pattern.permute.xlu0 0
    %7286 = vperm.xlu0 %7285, %v5200
    %v7287 = vpop.permute.xlu0 %7286
    %7290 = vset.pattern.permute.xlu0 0
    %7291 = vperm.xlu0 %7290, %v5201
    %v7292 = vpop.permute.xlu0 %7291
    %7295 = vset.pattern.permute.xlu0 0
    %7296 = vperm.xlu0 %7295, %v5202
    %v7297 = vpop.permute.xlu0 %7296
    %7300 = vset.pattern.permute.xlu0 0
    %7301 = vperm.xlu0 %7300, %v5203
    %v7302 = vpop.permute.xlu0 %7301
    %7305 = vset.pattern.permute.xlu0 0
    %7306 = vperm.xlu0 %7305, %v5204
    %v7307 = vpop.permute.xlu0 %7306
    %7310 = vset.pattern.permute.xlu0 0
    %7311 = vperm.xlu0 %7310, %v5205
    %v7312 = vpop.permute.xlu0 %7311
    %7315 = vset.pattern.permute.xlu0 0
    %7316 = vperm.xlu0 %7315, %v5206
    %v7317 = vpop.permute.xlu0 %7316
    %7320 = vset.pattern.permute.xlu0 0
    %7321 = vperm.xlu0 %7320, %v5207
    %v7322 = vpop.permute.xlu0 %7321
    %7325 = vset.pattern.permute.xlu0 0
    %7326 = vperm.xlu0 %7325, %v5208
    %v7327 = vpop.permute.xlu0 %7326
    %7330 = vset.pattern.permute.xlu0 0
    %7331 = vperm.xlu0 %7330, %v5209
    %v7332 = vpop.permute.xlu0 %7331
    %7335 = vset.pattern.permute.xlu0 0
    %7336 = vperm.xlu0 %7335, %v5210
    %v7337 = vpop.permute.xlu0 %7336
    %7340 = vset.pattern.permute.xlu0 0
    %7341 = vperm.xlu0 %7340, %v5211
    %v7342 = vpop.permute.xlu0 %7341
    %7345 = vset.pattern.permute.xlu0 0
    %7346 = vperm.xlu0 %7345, %v5212
    %v7347 = vpop.permute.xlu0 %7346
    %7350 = vset.pattern.permute.xlu0 0
    %7351 = vperm.xlu0 %7350, %v5213
    %v7352 = vpop.permute.xlu0 %7351
    %7355 = vset.pattern.permute.xlu0 0
    %7356 = vperm.xlu0 %7355, %v5214
    %v7357 = vpop.permute.xlu0 %7356
    %7360 = vset.pattern.permute.xlu0 0
    %7361 = vperm.xlu0 %7360, %v5215
    %v7362 = vpop.permute.xlu0 %7361
    %7365 = vset.pattern.permute.xlu0 0
    %7366 = vperm.xlu0 %7365, %v5216
    %v7367 = vpop.permute.xlu0 %7366
    %7370 = vset.pattern.permute.xlu0 0
    %7371 = vperm.xlu0 %7370, %v5217
    %v7372 = vpop.permute.xlu0 %7371
    %7375 = vset.pattern.permute.xlu0 0
    %7376 = vperm.xlu0 %7375, %v5218
    %v7377 = vpop.permute.xlu0 %7376
    %7380 = vset.pattern.permute.xlu0 0
    %7381 = vperm.xlu0 %7380, %v5219
    %v7382 = vpop.permute.xlu0 %7381
    %7385 = vset.pattern.permute.xlu0 0
    %7386 = vperm.xlu0 %7385, %v5220
    %v7387 = vpop.permute.xlu0 %7386
    %7390 = vset.pattern.permute.xlu0 0
    %7391 = vperm.xlu0 %7390, %v5221
    %v7392 = vpop.permute.xlu0 %7391
    %7395 = vset.pattern.permute.xlu0 0
    %7396 = vperm.xlu0 %7395, %v5222
    %v7397 = vpop.permute.xlu0 %7396
    %7400 = vset.pattern.permute.xlu0 0
    %7401 = vperm.xlu0 %7400, %v5223
    %v7402 = vpop.permute.xlu0 %7401
    %7405 = vset.pattern.permute.xlu0 0
    %7406 = vperm.xlu0 %7405, %v5224
    %v7407 = vpop.permute.xlu0 %7406
    %7410 = vset.pattern.permute.xlu0 0
    %7411 = vperm.xlu0 %7410, %v5225
    %v7412 = vpop.permute.xlu0 %7411
    %7415 = vset.pattern.permute.xlu0 0
    %7416 = vperm.xlu0 %7415, %v5226
    %v7417 = vpop.permute.xlu0 %7416
    %7420 = vset.pattern.permute.xlu0 0
    %7421 = vperm.xlu0 %7420, %v5227
    %v7422 = vpop.permute.xlu0 %7421
    %7425 = vset.pattern.permute.xlu0 0
    %7426 = vperm.xlu0 %7425, %v5228
    %v7427 = vpop.permute.xlu0 %7426
    %7430 = vset.pattern.permute.xlu0 0
    %7431 = vperm.xlu0 %7430, %v5229
    %v7432 = vpop.permute.xlu0 %7431
    %7435 = vset.pattern.permute.xlu0 0
    %7436 = vperm.xlu0 %7435, %v5230
    %v7437 = vpop.permute.xlu0 %7436
    %7440 = vset.pattern.permute.xlu0 0
    %7441 = vperm.xlu0 %7440, %v5231
    %v7442 = vpop.permute.xlu0 %7441
    %7445 = vset.pattern.permute.xlu0 0
    %7446 = vperm.xlu0 %7445, %v5232
    %v7447 = vpop.permute.xlu0 %7446
    %7450 = vset.pattern.permute.xlu0 0
    %7451 = vperm.xlu0 %7450, %v5233
    %v7452 = vpop.permute.xlu0 %7451
    %7455 = vset.pattern.permute.xlu0 0
    %7456 = vperm.xlu0 %7455, %v5234
    %v7457 = vpop.permute.xlu0 %7456
    %7460 = vset.pattern.permute.xlu0 0
    %7461 = vperm.xlu0 %7460, %v5235
    %v7462 = vpop.permute.xlu0 %7461
    %7465 = vset.pattern.permute.xlu0 0
    %7466 = vperm.xlu0 %7465, %v5236
    %v7467 = vpop.permute.xlu0 %7466
    %7470 = vset.pattern.permute.xlu0 0
    %7471 = vperm.xlu0 %7470, %v5237
    %v7472 = vpop.permute.xlu0 %7471
    %7475 = vset.pattern.permute.xlu0 0
    %7476 = vperm.xlu0 %7475, %v5238
    %v7477 = vpop.permute.xlu0 %7476
    %7480 = vset.pattern.permute.xlu0 0
    %7481 = vperm.xlu0 %7480, %v5239
    %v7482 = vpop.permute.xlu0 %7481
    %7485 = vset.pattern.permute.xlu0 0
    %7486 = vperm.xlu0 %7485, %v5240
    %v7487 = vpop.permute.xlu0 %7486
    %7490 = vset.pattern.permute.xlu0 0
    %7491 = vperm.xlu0 %7490, %v5241
    %v7492 = vpop.permute.xlu0 %7491
    %7495 = vset.pattern.permute.xlu0 0
    %7496 = vperm.xlu0 %7495, %v5242
    %v7497 = vpop.permute.xlu0 %7496
    %7500 = vset.pattern.permute.xlu0 0
    %7501 = vperm.xlu0 %7500, %v5243
    %v7502 = vpop.permute.xlu0 %7501
    %7505 = vset.pattern.permute.xlu0 0
    %7506 = vperm.xlu0 %7505, %v5244
    %v7507 = vpop.permute.xlu0 %7506
    %7510 = vset.pattern.permute.xlu0 0
    %7511 = vperm.xlu0 %7510, %v5245
    %v7512 = vpop.permute.xlu0 %7511
    %7515 = vset.pattern.permute.xlu0 0
    %7516 = vperm.xlu0 %7515, %v5246
    %v7517 = vpop.permute.xlu0 %7516
    %7520 = vset.pattern.permute.xlu0 0
    %7521 = vperm.xlu0 %7520, %v5247
    %v7522 = vpop.permute.xlu0 %7521
    %7525 = vset.pattern.permute.xlu0 0
    %7526 = vperm.xlu0 %7525, %v5248
    %v7527 = vpop.permute.xlu0 %7526
    %7530 = vset.pattern.permute.xlu0 0
    %7531 = vperm.xlu0 %7530, %v5249
    %v7532 = vpop.permute.xlu0 %7531
    %7535 = vset.pattern.permute.xlu0 0
    %7536 = vperm.xlu0 %7535, %v5250
    %v7537 = vpop.permute.xlu0 %7536
    %7540 = vset.pattern.permute.xlu0 0
    %7541 = vperm.xlu0 %7540, %v5251
    %v7542 = vpop.permute.xlu0 %7541
    %7545 = vset.pattern.permute.xlu0 0
    %7546 = vperm.xlu0 %7545, %v5252
    %v7547 = vpop.permute.xlu0 %7546
    %7550 = vset.pattern.permute.xlu0 0
    %7551 = vperm.xlu0 %7550, %v5253
    %v7552 = vpop.permute.xlu0 %7551
    %7555 = vset.pattern.permute.xlu0 0
    %7556 = vperm.xlu0 %7555, %v5254
    %v7557 = vpop.permute.xlu0 %7556
    %v7559 = vmul.f32 %v6282, %v6023
    %v7560 = vmul.f32 %v6287, %v6024
    %v7561 = vmul.f32 %v6292, %v6025
    %v7562 = vmul.f32 %v6297, %v6026
    %v7563 = vmul.f32 %v6302, %v6027
    %v7564 = vmul.f32 %v6307, %v6028
    %v7565 = vmul.f32 %v6312, %v6029
    %v7566 = vmul.f32 %v6317, %v6030
    %v7567 = vmul.f32 %v6322, %v6031
    %v7568 = vmul.f32 %v6327, %v6032
    %v7569 = vmul.f32 %v6332, %v6033
    %v7570 = vmul.f32 %v6337, %v6034
    %v7571 = vmul.f32 %v6342, %v6035
    %v7572 = vmul.f32 %v6347, %v6036
    %v7573 = vmul.f32 %v6352, %v6037
    %v7574 = vmul.f32 %v6357, %v6038
    %v7575 = vmul.f32 %v6362, %v6039
    %v7576 = vmul.f32 %v6367, %v6040
    %v7577 = vmul.f32 %v6372, %v6041
    %v7578 = vmul.f32 %v6377, %v6042
    %v7579 = vmul.f32 %v6382, %v6043
    %v7580 = vmul.f32 %v6387, %v6044
    %v7581 = vmul.f32 %v6392, %v6045
    %v7582 = vmul.f32 %v6397, %v6046
    %v7583 = vmul.f32 %v6402, %v6047
    %v7584 = vmul.f32 %v6407, %v6048
    %v7585 = vmul.f32 %v6412, %v6049
    %v7586 = vmul.f32 %v6417, %v6050
    %v7587 = vmul.f32 %v6422, %v6051
    %v7588 = vmul.f32 %v6427, %v6052
    %v7589 = vmul.f32 %v6432, %v6053
    %v7590 = vmul.f32 %v6437, %v6054
    %v7591 = vmul.f32 %v6442, %v6055
    %v7592 = vmul.f32 %v6447, %v6056
    %v7593 = vmul.f32 %v6452, %v6057
    %v7594 = vmul.f32 %v6457, %v6058
    %v7595 = vmul.f32 %v6462, %v6059
    %v7596 = vmul.f32 %v6467, %v6060
    %v7597 = vmul.f32 %v6472, %v6061
    %v7598 = vmul.f32 %v6477, %v6062
    %v7599 = vmul.f32 %v6482, %v6063
    %v7600 = vmul.f32 %v6487, %v6064
    %v7601 = vmul.f32 %v6492, %v6065
    %v7602 = vmul.f32 %v6497, %v6066
    %v7603 = vmul.f32 %v6502, %v6067
    %v7604 = vmul.f32 %v6507, %v6068
    %v7605 = vmul.f32 %v6512, %v6069
    %v7606 = vmul.f32 %v6517, %v6070
    %v7607 = vmul.f32 %v6522, %v6071
    %v7608 = vmul.f32 %v6527, %v6072
    %v7609 = vmul.f32 %v6532, %v6073
    %v7610 = vmul.f32 %v6537, %v6074
    %v7611 = vmul.f32 %v6542, %v6075
    %v7612 = vmul.f32 %v6547, %v6076
    %v7613 = vmul.f32 %v6552, %v6077
    %v7614 = vmul.f32 %v6557, %v6078
    %v7615 = vmul.f32 %v6562, %v6079
    %v7616 = vmul.f32 %v6567, %v6080
    %v7617 = vmul.f32 %v6572, %v6081
    %v7618 = vmul.f32 %v6577, %v6082
    %v7619 = vmul.f32 %v6582, %v6083
    %v7620 = vmul.f32 %v6587, %v6084
    %v7621 = vmul.f32 %v6592, %v6085
    %v7622 = vmul.f32 %v6597, %v6086
    %v7623 = vmul.f32 %v6602, %v6087
    %v7624 = vmul.f32 %v6607, %v6088
    %v7625 = vmul.f32 %v6612, %v6089
    %v7626 = vmul.f32 %v6617, %v6090
    %v7627 = vmul.f32 %v6622, %v6091
    %v7628 = vmul.f32 %v6627, %v6092
    %v7629 = vmul.f32 %v6632, %v6093
    %v7630 = vmul.f32 %v6637, %v6094
    %v7631 = vmul.f32 %v6642, %v6095
    %v7632 = vmul.f32 %v6647, %v6096
    %v7633 = vmul.f32 %v6652, %v6097
    %v7634 = vmul.f32 %v6657, %v6098
    %v7635 = vmul.f32 %v6662, %v6099
    %v7636 = vmul.f32 %v6667, %v6100
    %v7637 = vmul.f32 %v6672, %v6101
    %v7638 = vmul.f32 %v6677, %v6102
    %v7639 = vmul.f32 %v6682, %v6103
    %v7640 = vmul.f32 %v6687, %v6104
    %v7641 = vmul.f32 %v6692, %v6105
    %v7642 = vmul.f32 %v6697, %v6106
    %v7643 = vmul.f32 %v6702, %v6107
    %v7644 = vmul.f32 %v6707, %v6108
    %v7645 = vmul.f32 %v6712, %v6109
    %v7646 = vmul.f32 %v6717, %v6110
    %v7647 = vmul.f32 %v6722, %v6111
    %v7648 = vmul.f32 %v6727, %v6112
    %v7649 = vmul.f32 %v6732, %v6113
    %v7650 = vmul.f32 %v6737, %v6114
    %v7651 = vmul.f32 %v6742, %v6115
    %v7652 = vmul.f32 %v6747, %v6116
    %v7653 = vmul.f32 %v6752, %v6117
    %v7654 = vmul.f32 %v6757, %v6118
    %v7655 = vmul.f32 %v6762, %v6119
    %v7656 = vmul.f32 %v6767, %v6120
    %v7657 = vmul.f32 %v6772, %v6121
    %v7658 = vmul.f32 %v6777, %v6122
    %v7659 = vmul.f32 %v6782, %v6123
    %v7660 = vmul.f32 %v6787, %v6124
    %v7661 = vmul.f32 %v6792, %v6125
    %v7662 = vmul.f32 %v6797, %v6126
    %v7663 = vmul.f32 %v6802, %v6127
    %v7664 = vmul.f32 %v6807, %v6128
    %v7665 = vmul.f32 %v6812, %v6129
    %v7666 = vmul.f32 %v6817, %v6130
    %v7667 = vmul.f32 %v6822, %v6131
    %v7668 = vmul.f32 %v6827, %v6132
    %v7669 = vmul.f32 %v6832, %v6133
    %v7670 = vmul.f32 %v6837, %v6134
    %v7671 = vmul.f32 %v6842, %v6135
    %v7672 = vmul.f32 %v6847, %v6136
    %v7673 = vmul.f32 %v6852, %v6137
    %v7674 = vmul.f32 %v6857, %v6138
    %v7675 = vmul.f32 %v6862, %v6139
    %v7676 = vmul.f32 %v6867, %v6140
    %v7677 = vmul.f32 %v6872, %v6141
    %v7678 = vmul.f32 %v6877, %v6142
    %v7679 = vmul.f32 %v6882, %v6143
    %v7680 = vmul.f32 %v6887, %v6144
    %v7681 = vmul.f32 %v6892, %v6145
    %v7682 = vmul.f32 %v6897, %v6146
    %v7683 = vmul.f32 %v6902, %v6147
    %v7684 = vmul.f32 %v6907, %v6148
    %v7685 = vmul.f32 %v6912, %v6149
    %v7686 = vmul.f32 %v6917, %v6150
    %v7687 = vmul.f32 %v6922, %v6151
    %v7688 = vmul.f32 %v6927, %v6152
    %v7689 = vmul.f32 %v6932, %v6153
    %v7690 = vmul.f32 %v6937, %v6154
    %v7691 = vmul.f32 %v6942, %v6155
    %v7692 = vmul.f32 %v6947, %v6156
    %v7693 = vmul.f32 %v6952, %v6157
    %v7694 = vmul.f32 %v6957, %v6158
    %v7695 = vmul.f32 %v6962, %v6159
    %v7696 = vmul.f32 %v6967, %v6160
    %v7697 = vmul.f32 %v6972, %v6161
    %v7698 = vmul.f32 %v6977, %v6162
    %v7699 = vmul.f32 %v6982, %v6163
    %v7700 = vmul.f32 %v6987, %v6164
    %v7701 = vmul.f32 %v6992, %v6165
    %v7702 = vmul.f32 %v6997, %v6166
    %v7703 = vmul.f32 %v7002, %v6167
    %v7704 = vmul.f32 %v7007, %v6168
    %v7705 = vmul.f32 %v7012, %v6169
    %v7706 = vmul.f32 %v7017, %v6170
    %v7707 = vmul.f32 %v7022, %v6171
    %v7708 = vmul.f32 %v7027, %v6172
    %v7709 = vmul.f32 %v7032, %v6173
    %v7710 = vmul.f32 %v7037, %v6174
    %v7711 = vmul.f32 %v7042, %v6175
    %v7712 = vmul.f32 %v7047, %v6176
    %v7713 = vmul.f32 %v7052, %v6177
    %v7714 = vmul.f32 %v7057, %v6178
    %v7715 = vmul.f32 %v7062, %v6179
    %v7716 = vmul.f32 %v7067, %v6180
    %v7717 = vmul.f32 %v7072, %v6181
    %v7718 = vmul.f32 %v7077, %v6182
    %v7719 = vmul.f32 %v7082, %v6183
    %v7720 = vmul.f32 %v7087, %v6184
    %v7721 = vmul.f32 %v7092, %v6185
    %v7722 = vmul.f32 %v7097, %v6186
    %v7723 = vmul.f32 %v7102, %v6187
    %v7724 = vmul.f32 %v7107, %v6188
    %v7725 = vmul.f32 %v7112, %v6189
    %v7726 = vmul.f32 %v7117, %v6190
    %v7727 = vmul.f32 %v7122, %v6191
    %v7728 = vmul.f32 %v7127, %v6192
    %v7729 = vmul.f32 %v7132, %v6193
    %v7730 = vmul.f32 %v7137, %v6194
    %v7731 = vmul.f32 %v7142, %v6195
    %v7732 = vmul.f32 %v7147, %v6196
    %v7733 = vmul.f32 %v7152, %v6197
    %v7734 = vmul.f32 %v7157, %v6198
    %v7735 = vmul.f32 %v7162, %v6199
    %v7736 = vmul.f32 %v7167, %v6200
    %v7737 = vmul.f32 %v7172, %v6201
    %v7738 = vmul.f32 %v7177, %v6202
    %v7739 = vmul.f32 %v7182, %v6203
    %v7740 = vmul.f32 %v7187, %v6204
    %v7741 = vmul.f32 %v7192, %v6205
    %v7742 = vmul.f32 %v7197, %v6206
    %v7743 = vmul.f32 %v7202, %v6207
    %v7744 = vmul.f32 %v7207, %v6208
    %v7745 = vmul.f32 %v7212, %v6209
    %v7746 = vmul.f32 %v7217, %v6210
    %v7747 = vmul.f32 %v7222, %v6211
    %v7748 = vmul.f32 %v7227, %v6212
    %v7749 = vmul.f32 %v7232, %v6213
    %v7750 = vmul.f32 %v7237, %v6214
    %v7751 = vmul.f32 %v7242, %v6215
    %v7752 = vmul.f32 %v7247, %v6216
    %v7753 = vmul.f32 %v7252, %v6217
    %v7754 = vmul.f32 %v7257, %v6218
    %v7755 = vmul.f32 %v7262, %v6219
    %v7756 = vmul.f32 %v7267, %v6220
    %v7757 = vmul.f32 %v7272, %v6221
    %v7758 = vmul.f32 %v7277, %v6222
    %v7759 = vmul.f32 %v7282, %v6223
    %v7760 = vmul.f32 %v7287, %v6224
    %v7761 = vmul.f32 %v7292, %v6225
    %v7762 = vmul.f32 %v7297, %v6226
    %v7763 = vmul.f32 %v7302, %v6227
    %v7764 = vmul.f32 %v7307, %v6228
    %v7765 = vmul.f32 %v7312, %v6229
    %v7766 = vmul.f32 %v7317, %v6230
    %v7767 = vmul.f32 %v7322, %v6231
    %v7768 = vmul.f32 %v7327, %v6232
    %v7769 = vmul.f32 %v7332, %v6233
    %v7770 = vmul.f32 %v7337, %v6234
    %v7771 = vmul.f32 %v7342, %v6235
    %v7772 = vmul.f32 %v7347, %v6236
    %v7773 = vmul.f32 %v7352, %v6237
    %v7774 = vmul.f32 %v7357, %v6238
    %v7775 = vmul.f32 %v7362, %v6239
    %v7776 = vmul.f32 %v7367, %v6240
    %v7777 = vmul.f32 %v7372, %v6241
    %v7778 = vmul.f32 %v7377, %v6242
    %v7779 = vmul.f32 %v7382, %v6243
    %v7780 = vmul.f32 %v7387, %v6244
    %v7781 = vmul.f32 %v7392, %v6245
    %v7782 = vmul.f32 %v7397, %v6246
    %v7783 = vmul.f32 %v7402, %v6247
    %v7784 = vmul.f32 %v7407, %v6248
    %v7785 = vmul.f32 %v7412, %v6249
    %v7786 = vmul.f32 %v7417, %v6250
    %v7787 = vmul.f32 %v7422, %v6251
    %v7788 = vmul.f32 %v7427, %v6252
    %v7789 = vmul.f32 %v7432, %v6253
    %v7790 = vmul.f32 %v7437, %v6254
    %v7791 = vmul.f32 %v7442, %v6255
    %v7792 = vmul.f32 %v7447, %v6256
    %v7793 = vmul.f32 %v7452, %v6257
    %v7794 = vmul.f32 %v7457, %v6258
    %v7795 = vmul.f32 %v7462, %v6259
    %v7796 = vmul.f32 %v7467, %v6260
    %v7797 = vmul.f32 %v7472, %v6261
    %v7798 = vmul.f32 %v7477, %v6262
    %v7799 = vmul.f32 %v7482, %v6263
    %v7800 = vmul.f32 %v7487, %v6264
    %v7801 = vmul.f32 %v7492, %v6265
    %v7802 = vmul.f32 %v7497, %v6266
    %v7803 = vmul.f32 %v7502, %v6267
    %v7804 = vmul.f32 %v7507, %v6268
    %v7805 = vmul.f32 %v7512, %v6269
    %v7806 = vmul.f32 %v7517, %v6270
    %v7807 = vmul.f32 %v7522, %v6271
    %v7808 = vmul.f32 %v7527, %v6272
    %v7809 = vmul.f32 %v7532, %v6273
    %v7810 = vmul.f32 %v7537, %v6274
    %v7811 = vmul.f32 %v7542, %v6275
    %v7812 = vmul.f32 %v7547, %v6276
    %v7813 = vmul.f32 %v7552, %v6277
    %v7814 = vmul.f32 %v7557, %v6278
    %v7815 = vadd.f32 %v5255, %v7559
    %v7816 = vadd.f32 %v5256, %v7560
    %v7817 = vadd.f32 %v5257, %v7561
    %v7818 = vadd.f32 %v5258, %v7562
    %v7819 = vadd.f32 %v5259, %v7563
    %v7820 = vadd.f32 %v5260, %v7564
    %v7821 = vadd.f32 %v5261, %v7565
    %v7822 = vadd.f32 %v5262, %v7566
    %v7823 = vadd.f32 %v5263, %v7567
    %v7824 = vadd.f32 %v5264, %v7568
    %v7825 = vadd.f32 %v5265, %v7569
    %v7826 = vadd.f32 %v5266, %v7570
    %v7827 = vadd.f32 %v5267, %v7571
    %v7828 = vadd.f32 %v5268, %v7572
    %v7829 = vadd.f32 %v5269, %v7573
    %v7830 = vadd.f32 %v5270, %v7574
    %v7831 = vadd.f32 %v5271, %v7575
    %v7832 = vadd.f32 %v5272, %v7576
    %v7833 = vadd.f32 %v5273, %v7577
    %v7834 = vadd.f32 %v5274, %v7578
    %v7835 = vadd.f32 %v5275, %v7579
    %v7836 = vadd.f32 %v5276, %v7580
    %v7837 = vadd.f32 %v5277, %v7581
    %v7838 = vadd.f32 %v5278, %v7582
    %v7839 = vadd.f32 %v5279, %v7583
    %v7840 = vadd.f32 %v5280, %v7584
    %v7841 = vadd.f32 %v5281, %v7585
    %v7842 = vadd.f32 %v5282, %v7586
    %v7843 = vadd.f32 %v5283, %v7587
    %v7844 = vadd.f32 %v5284, %v7588
    %v7845 = vadd.f32 %v5285, %v7589
    %v7846 = vadd.f32 %v5286, %v7590
    %v7847 = vadd.f32 %v5287, %v7591
    %v7848 = vadd.f32 %v5288, %v7592
    %v7849 = vadd.f32 %v5289, %v7593
    %v7850 = vadd.f32 %v5290, %v7594
    %v7851 = vadd.f32 %v5291, %v7595
    %v7852 = vadd.f32 %v5292, %v7596
    %v7853 = vadd.f32 %v5293, %v7597
    %v7854 = vadd.f32 %v5294, %v7598
    %v7855 = vadd.f32 %v5295, %v7599
    %v7856 = vadd.f32 %v5296, %v7600
    %v7857 = vadd.f32 %v5297, %v7601
    %v7858 = vadd.f32 %v5298, %v7602
    %v7859 = vadd.f32 %v5299, %v7603
    %v7860 = vadd.f32 %v5300, %v7604
    %v7861 = vadd.f32 %v5301, %v7605
    %v7862 = vadd.f32 %v5302, %v7606
    %v7863 = vadd.f32 %v5303, %v7607
    %v7864 = vadd.f32 %v5304, %v7608
    %v7865 = vadd.f32 %v5305, %v7609
    %v7866 = vadd.f32 %v5306, %v7610
    %v7867 = vadd.f32 %v5307, %v7611
    %v7868 = vadd.f32 %v5308, %v7612
    %v7869 = vadd.f32 %v5309, %v7613
    %v7870 = vadd.f32 %v5310, %v7614
    %v7871 = vadd.f32 %v5311, %v7615
    %v7872 = vadd.f32 %v5312, %v7616
    %v7873 = vadd.f32 %v5313, %v7617
    %v7874 = vadd.f32 %v5314, %v7618
    %v7875 = vadd.f32 %v5315, %v7619
    %v7876 = vadd.f32 %v5316, %v7620
    %v7877 = vadd.f32 %v5317, %v7621
    %v7878 = vadd.f32 %v5318, %v7622
    %v7879 = vadd.f32 %v5319, %v7623
    %v7880 = vadd.f32 %v5320, %v7624
    %v7881 = vadd.f32 %v5321, %v7625
    %v7882 = vadd.f32 %v5322, %v7626
    %v7883 = vadd.f32 %v5323, %v7627
    %v7884 = vadd.f32 %v5324, %v7628
    %v7885 = vadd.f32 %v5325, %v7629
    %v7886 = vadd.f32 %v5326, %v7630
    %v7887 = vadd.f32 %v5327, %v7631
    %v7888 = vadd.f32 %v5328, %v7632
    %v7889 = vadd.f32 %v5329, %v7633
    %v7890 = vadd.f32 %v5330, %v7634
    %v7891 = vadd.f32 %v5331, %v7635
    %v7892 = vadd.f32 %v5332, %v7636
    %v7893 = vadd.f32 %v5333, %v7637
    %v7894 = vadd.f32 %v5334, %v7638
    %v7895 = vadd.f32 %v5335, %v7639
    %v7896 = vadd.f32 %v5336, %v7640
    %v7897 = vadd.f32 %v5337, %v7641
    %v7898 = vadd.f32 %v5338, %v7642
    %v7899 = vadd.f32 %v5339, %v7643
    %v7900 = vadd.f32 %v5340, %v7644
    %v7901 = vadd.f32 %v5341, %v7645
    %v7902 = vadd.f32 %v5342, %v7646
    %v7903 = vadd.f32 %v5343, %v7647
    %v7904 = vadd.f32 %v5344, %v7648
    %v7905 = vadd.f32 %v5345, %v7649
    %v7906 = vadd.f32 %v5346, %v7650
    %v7907 = vadd.f32 %v5347, %v7651
    %v7908 = vadd.f32 %v5348, %v7652
    %v7909 = vadd.f32 %v5349, %v7653
    %v7910 = vadd.f32 %v5350, %v7654
    %v7911 = vadd.f32 %v5351, %v7655
    %v7912 = vadd.f32 %v5352, %v7656
    %v7913 = vadd.f32 %v5353, %v7657
    %v7914 = vadd.f32 %v5354, %v7658
    %v7915 = vadd.f32 %v5355, %v7659
    %v7916 = vadd.f32 %v5356, %v7660
    %v7917 = vadd.f32 %v5357, %v7661
    %v7918 = vadd.f32 %v5358, %v7662
    %v7919 = vadd.f32 %v5359, %v7663
    %v7920 = vadd.f32 %v5360, %v7664
    %v7921 = vadd.f32 %v5361, %v7665
    %v7922 = vadd.f32 %v5362, %v7666
    %v7923 = vadd.f32 %v5363, %v7667
    %v7924 = vadd.f32 %v5364, %v7668
    %v7925 = vadd.f32 %v5365, %v7669
    %v7926 = vadd.f32 %v5366, %v7670
    %v7927 = vadd.f32 %v5367, %v7671
    %v7928 = vadd.f32 %v5368, %v7672
    %v7929 = vadd.f32 %v5369, %v7673
    %v7930 = vadd.f32 %v5370, %v7674
    %v7931 = vadd.f32 %v5371, %v7675
    %v7932 = vadd.f32 %v5372, %v7676
    %v7933 = vadd.f32 %v5373, %v7677
    %v7934 = vadd.f32 %v5374, %v7678
    %v7935 = vadd.f32 %v5375, %v7679
    %v7936 = vadd.f32 %v5376, %v7680
    %v7937 = vadd.f32 %v5377, %v7681
    %v7938 = vadd.f32 %v5378, %v7682
    %v7939 = vadd.f32 %v5379, %v7683
    %v7940 = vadd.f32 %v5380, %v7684
    %v7941 = vadd.f32 %v5381, %v7685
    %v7942 = vadd.f32 %v5382, %v7686
    %v7943 = vadd.f32 %v5383, %v7687
    %v7944 = vadd.f32 %v5384, %v7688
    %v7945 = vadd.f32 %v5385, %v7689
    %v7946 = vadd.f32 %v5386, %v7690
    %v7947 = vadd.f32 %v5387, %v7691
    %v7948 = vadd.f32 %v5388, %v7692
    %v7949 = vadd.f32 %v5389, %v7693
    %v7950 = vadd.f32 %v5390, %v7694
    %v7951 = vadd.f32 %v5391, %v7695
    %v7952 = vadd.f32 %v5392, %v7696
    %v7953 = vadd.f32 %v5393, %v7697
    %v7954 = vadd.f32 %v5394, %v7698
    %v7955 = vadd.f32 %v5395, %v7699
    %v7956 = vadd.f32 %v5396, %v7700
    %v7957 = vadd.f32 %v5397, %v7701
    %v7958 = vadd.f32 %v5398, %v7702
    %v7959 = vadd.f32 %v5399, %v7703
    %v7960 = vadd.f32 %v5400, %v7704
    %v7961 = vadd.f32 %v5401, %v7705
    %v7962 = vadd.f32 %v5402, %v7706
    %v7963 = vadd.f32 %v5403, %v7707
    %v7964 = vadd.f32 %v5404, %v7708
    %v7965 = vadd.f32 %v5405, %v7709
    %v7966 = vadd.f32 %v5406, %v7710
    %v7967 = vadd.f32 %v5407, %v7711
    %v7968 = vadd.f32 %v5408, %v7712
    %v7969 = vadd.f32 %v5409, %v7713
    %v7970 = vadd.f32 %v5410, %v7714
    %v7971 = vadd.f32 %v5411, %v7715
    %v7972 = vadd.f32 %v5412, %v7716
    %v7973 = vadd.f32 %v5413, %v7717
    %v7974 = vadd.f32 %v5414, %v7718
    %v7975 = vadd.f32 %v5415, %v7719
    %v7976 = vadd.f32 %v5416, %v7720
    %v7977 = vadd.f32 %v5417, %v7721
    %v7978 = vadd.f32 %v5418, %v7722
    %v7979 = vadd.f32 %v5419, %v7723
    %v7980 = vadd.f32 %v5420, %v7724
    %v7981 = vadd.f32 %v5421, %v7725
    %v7982 = vadd.f32 %v5422, %v7726
    %v7983 = vadd.f32 %v5423, %v7727
    %v7984 = vadd.f32 %v5424, %v7728
    %v7985 = vadd.f32 %v5425, %v7729
    %v7986 = vadd.f32 %v5426, %v7730
    %v7987 = vadd.f32 %v5427, %v7731
    %v7988 = vadd.f32 %v5428, %v7732
    %v7989 = vadd.f32 %v5429, %v7733
    %v7990 = vadd.f32 %v5430, %v7734
    %v7991 = vadd.f32 %v5431, %v7735
    %v7992 = vadd.f32 %v5432, %v7736
    %v7993 = vadd.f32 %v5433, %v7737
    %v7994 = vadd.f32 %v5434, %v7738
    %v7995 = vadd.f32 %v5435, %v7739
    %v7996 = vadd.f32 %v5436, %v7740
    %v7997 = vadd.f32 %v5437, %v7741
    %v7998 = vadd.f32 %v5438, %v7742
    %v7999 = vadd.f32 %v5439, %v7743
    %v8000 = vadd.f32 %v5440, %v7744
    %v8001 = vadd.f32 %v5441, %v7745
    %v8002 = vadd.f32 %v5442, %v7746
    %v8003 = vadd.f32 %v5443, %v7747
    %v8004 = vadd.f32 %v5444, %v7748
    %v8005 = vadd.f32 %v5445, %v7749
    %v8006 = vadd.f32 %v5446, %v7750
    %v8007 = vadd.f32 %v5447, %v7751
    %v8008 = vadd.f32 %v5448, %v7752
    %v8009 = vadd.f32 %v5449, %v7753
    %v8010 = vadd.f32 %v5450, %v7754
    %v8011 = vadd.f32 %v5451, %v7755
    %v8012 = vadd.f32 %v5452, %v7756
    %v8013 = vadd.f32 %v5453, %v7757
    %v8014 = vadd.f32 %v5454, %v7758
    %v8015 = vadd.f32 %v5455, %v7759
    %v8016 = vadd.f32 %v5456, %v7760
    %v8017 = vadd.f32 %v5457, %v7761
    %v8018 = vadd.f32 %v5458, %v7762
    %v8019 = vadd.f32 %v5459, %v7763
    %v8020 = vadd.f32 %v5460, %v7764
    %v8021 = vadd.f32 %v5461, %v7765
    %v8022 = vadd.f32 %v5462, %v7766
    %v8023 = vadd.f32 %v5463, %v7767
    %v8024 = vadd.f32 %v5464, %v7768
    %v8025 = vadd.f32 %v5465, %v7769
    %v8026 = vadd.f32 %v5466, %v7770
    %v8027 = vadd.f32 %v5467, %v7771
    %v8028 = vadd.f32 %v5468, %v7772
    %v8029 = vadd.f32 %v5469, %v7773
    %v8030 = vadd.f32 %v5470, %v7774
    %v8031 = vadd.f32 %v5471, %v7775
    %v8032 = vadd.f32 %v5472, %v7776
    %v8033 = vadd.f32 %v5473, %v7777
    %v8034 = vadd.f32 %v5474, %v7778
    %v8035 = vadd.f32 %v5475, %v7779
    %v8036 = vadd.f32 %v5476, %v7780
    %v8037 = vadd.f32 %v5477, %v7781
    %v8038 = vadd.f32 %v5478, %v7782
    %v8039 = vadd.f32 %v5479, %v7783
    %v8040 = vadd.f32 %v5480, %v7784
    %v8041 = vadd.f32 %v5481, %v7785
    %v8042 = vadd.f32 %v5482, %v7786
    %v8043 = vadd.f32 %v5483, %v7787
    %v8044 = vadd.f32 %v5484, %v7788
    %v8045 = vadd.f32 %v5485, %v7789
    %v8046 = vadd.f32 %v5486, %v7790
    %v8047 = vadd.f32 %v5487, %v7791
    %v8048 = vadd.f32 %v5488, %v7792
    %v8049 = vadd.f32 %v5489, %v7793
    %v8050 = vadd.f32 %v5490, %v7794
    %v8051 = vadd.f32 %v5491, %v7795
    %v8052 = vadd.f32 %v5492, %v7796
    %v8053 = vadd.f32 %v5493, %v7797
    %v8054 = vadd.f32 %v5494, %v7798
    %v8055 = vadd.f32 %v5495, %v7799
    %v8056 = vadd.f32 %v5496, %v7800
    %v8057 = vadd.f32 %v5497, %v7801
    %v8058 = vadd.f32 %v5498, %v7802
    %v8059 = vadd.f32 %v5499, %v7803
    %v8060 = vadd.f32 %v5500, %v7804
    %v8061 = vadd.f32 %v5501, %v7805
    %v8062 = vadd.f32 %v5502, %v7806
    %v8063 = vadd.f32 %v5503, %v7807
    %v8064 = vadd.f32 %v5504, %v7808
    %v8065 = vadd.f32 %v5505, %v7809
    %v8066 = vadd.f32 %v5506, %v7810
    %v8067 = vadd.f32 %v5507, %v7811
    %v8068 = vadd.f32 %v5508, %v7812
    %v8069 = vadd.f32 %v5509, %v7813
    %v8070 = vadd.f32 %v5510, %v7814
    %8071 = vst [vmem:[#allocation2] sm:$0xff] %v7815
    %8072 = vst [vmem:[#allocation2 + $0x8] sm:$0xff] %v7816
    %8073 = vst [vmem:[#allocation2 + $0x10] sm:$0xff] %v7817
    %8074 = vst [vmem:[#allocation2 + $0x18] sm:$0xff] %v7818
    %8075 = vst [vmem:[#allocation2 + $0x20] sm:$0xff] %v7819
    %8076 = vst [vmem:[#allocation2 + $0x28] sm:$0xff] %v7820
    %8077 = vst [vmem:[#allocation2 + $0x30] sm:$0xff] %v7821
    %8078 = vst [vmem:[#allocation2 + $0x38] sm:$0xff] %v7822
    %8079 = vst [vmem:[#allocation2 + $0x40] sm:$0xff] %v7823
    %8080 = vst [vmem:[#allocation2 + $0x48] sm:$0xff] %v7824
    %8081 = vst [vmem:[#allocation2 + $0x50] sm:$0xff] %v7825
    %8082 = vst [vmem:[#allocation2 + $0x58] sm:$0xff] %v7826
    %8083 = vst [vmem:[#allocation2 + $0x60] sm:$0xff] %v7827
    %8084 = vst [vmem:[#allocation2 + $0x68] sm:$0xff] %v7828
    %8085 = vst [vmem:[#allocation2 + $0x70] sm:$0xff] %v7829
    %8086 = vst [vmem:[#allocation2 + $0x78] sm:$0xff] %v7830
    %8087 = vst [vmem:[#allocation2 + $0x80] sm:$0xff] %v7831
    %8088 = vst [vmem:[#allocation2 + $0x88] sm:$0xff] %v7832
    %8089 = vst [vmem:[#allocation2 + $0x90] sm:$0xff] %v7833
    %8090 = vst [vmem:[#allocation2 + $0x98] sm:$0xff] %v7834
    %8091 = vst [vmem:[#allocation2 + $0xa0] sm:$0xff] %v7835
    %8092 = vst [vmem:[#allocation2 + $0xa8] sm:$0xff] %v7836
    %8093 = vst [vmem:[#allocation2 + $0xb0] sm:$0xff] %v7837
    %8094 = vst [vmem:[#allocation2 + $0xb8] sm:$0xff] %v7838
    %8095 = vst [vmem:[#allocation2 + $0xc0] sm:$0xff] %v7839
    %8096 = vst [vmem:[#allocation2 + $0xc8] sm:$0xff] %v7840
    %8097 = vst [vmem:[#allocation2 + $0xd0] sm:$0xff] %v7841
    %8098 = vst [vmem:[#allocation2 + $0xd8] sm:$0xff] %v7842
    %8099 = vst [vmem:[#allocation2 + $0xe0] sm:$0xff] %v7843
    %8100 = vst [vmem:[#allocation2 + $0xe8] sm:$0xff] %v7844
    %8101 = vst [vmem:[#allocation2 + $0xf0] sm:$0xff] %v7845
    %8102 = vst [vmem:[#allocation2 + $0xf8] sm:$0xff] %v7846
    %8103 = vst [vmem:[#allocation2 + $0x100] sm:$0xff] %v7847
    %8104 = vst [vmem:[#allocation2 + $0x108] sm:$0xff] %v7848
    %8105 = vst [vmem:[#allocation2 + $0x110] sm:$0xff] %v7849
    %8106 = vst [vmem:[#allocation2 + $0x118] sm:$0xff] %v7850
    %8107 = vst [vmem:[#allocation2 + $0x120] sm:$0xff] %v7851
    %8108 = vst [vmem:[#allocation2 + $0x128] sm:$0xff] %v7852
    %8109 = vst [vmem:[#allocation2 + $0x130] sm:$0xff] %v7853
    %8110 = vst [vmem:[#allocation2 + $0x138] sm:$0xff] %v7854
    %8111 = vst [vmem:[#allocation2 + $0x140] sm:$0xff] %v7855
    %8112 = vst [vmem:[#allocation2 + $0x148] sm:$0xff] %v7856
    %8113 = vst [vmem:[#allocation2 + $0x150] sm:$0xff] %v7857
    %8114 = vst [vmem:[#allocation2 + $0x158] sm:$0xff] %v7858
    %8115 = vst [vmem:[#allocation2 + $0x160] sm:$0xff] %v7859
    %8116 = vst [vmem:[#allocation2 + $0x168] sm:$0xff] %v7860
    %8117 = vst [vmem:[#allocation2 + $0x170] sm:$0xff] %v7861
    %8118 = vst [vmem:[#allocation2 + $0x178] sm:$0xff] %v7862
    %8119 = vst [vmem:[#allocation2 + $0x180] sm:$0xff] %v7863
    %8120 = vst [vmem:[#allocation2 + $0x188] sm:$0xff] %v7864
    %8121 = vst [vmem:[#allocation2 + $0x190] sm:$0xff] %v7865
    %8122 = vst [vmem:[#allocation2 + $0x198] sm:$0xff] %v7866
    %8123 = vst [vmem:[#allocation2 + $0x1a0] sm:$0xff] %v7867
    %8124 = vst [vmem:[#allocation2 + $0x1a8] sm:$0xff] %v7868
    %8125 = vst [vmem:[#allocation2 + $0x1b0] sm:$0xff] %v7869
    %8126 = vst [vmem:[#allocation2 + $0x1b8] sm:$0xff] %v7870
    %8127 = vst [vmem:[#allocation2 + $0x1c0] sm:$0xff] %v7871
    %8128 = vst [vmem:[#allocation2 + $0x1c8] sm:$0xff] %v7872
    %8129 = vst [vmem:[#allocation2 + $0x1d0] sm:$0xff] %v7873
    %8130 = vst [vmem:[#allocation2 + $0x1d8] sm:$0xff] %v7874
    %8131 = vst [vmem:[#allocation2 + $0x1e0] sm:$0xff] %v7875
    %8132 = vst [vmem:[#allocation2 + $0x1e8] sm:$0xff] %v7876
    %8133 = vst [vmem:[#allocation2 + $0x1f0] sm:$0xff] %v7877
    %8134 = vst [vmem:[#allocation2 + $0x1f8] sm:$0xff] %v7878
    %8135 = vst [vmem:[#allocation2 + $0x200] sm:$0xff] %v7879
    %8136 = vst [vmem:[#allocation2 + $0x208] sm:$0xff] %v7880
    %8137 = vst [vmem:[#allocation2 + $0x210] sm:$0xff] %v7881
    %8138 = vst [vmem:[#allocation2 + $0x218] sm:$0xff] %v7882
    %8139 = vst [vmem:[#allocation2 + $0x220] sm:$0xff] %v7883
    %8140 = vst [vmem:[#allocation2 + $0x228] sm:$0xff] %v7884
    %8141 = vst [vmem:[#allocation2 + $0x230] sm:$0xff] %v7885
    %8142 = vst [vmem:[#allocation2 + $0x238] sm:$0xff] %v7886
    %8143 = vst [vmem:[#allocation2 + $0x240] sm:$0xff] %v7887
    %8144 = vst [vmem:[#allocation2 + $0x248] sm:$0xff] %v7888
    %8145 = vst [vmem:[#allocation2 + $0x250] sm:$0xff] %v7889
    %8146 = vst [vmem:[#allocation2 + $0x258] sm:$0xff] %v7890
    %8147 = vst [vmem:[#allocation2 + $0x260] sm:$0xff] %v7891
    %8148 = vst [vmem:[#allocation2 + $0x268] sm:$0xff] %v7892
    %8149 = vst [vmem:[#allocation2 + $0x270] sm:$0xff] %v7893
    %8150 = vst [vmem:[#allocation2 + $0x278] sm:$0xff] %v7894
    %8151 = vst [vmem:[#allocation2 + $0x280] sm:$0xff] %v7895
    %8152 = vst [vmem:[#allocation2 + $0x288] sm:$0xff] %v7896
    %8153 = vst [vmem:[#allocation2 + $0x290] sm:$0xff] %v7897
    %8154 = vst [vmem:[#allocation2 + $0x298] sm:$0xff] %v7898
    %8155 = vst [vmem:[#allocation2 + $0x2a0] sm:$0xff] %v7899
    %8156 = vst [vmem:[#allocation2 + $0x2a8] sm:$0xff] %v7900
    %8157 = vst [vmem:[#allocation2 + $0x2b0] sm:$0xff] %v7901
    %8158 = vst [vmem:[#allocation2 + $0x2b8] sm:$0xff] %v7902
    %8159 = vst [vmem:[#allocation2 + $0x2c0] sm:$0xff] %v7903
    %8160 = vst [vmem:[#allocation2 + $0x2c8] sm:$0xff] %v7904
    %8161 = vst [vmem:[#allocation2 + $0x2d0] sm:$0xff] %v7905
    %8162 = vst [vmem:[#allocation2 + $0x2d8] sm:$0xff] %v7906
    %8163 = vst [vmem:[#allocation2 + $0x2e0] sm:$0xff] %v7907
    %8164 = vst [vmem:[#allocation2 + $0x2e8] sm:$0xff] %v7908
    %8165 = vst [vmem:[#allocation2 + $0x2f0] sm:$0xff] %v7909
    %8166 = vst [vmem:[#allocation2 + $0x2f8] sm:$0xff] %v7910
    %8167 = vst [vmem:[#allocation2 + $0x300] sm:$0xff] %v7911
    %8168 = vst [vmem:[#allocation2 + $0x308] sm:$0xff] %v7912
    %8169 = vst [vmem:[#allocation2 + $0x310] sm:$0xff] %v7913
    %8170 = vst [vmem:[#allocation2 + $0x318] sm:$0xff] %v7914
    %8171 = vst [vmem:[#allocation2 + $0x320] sm:$0xff] %v7915
    %8172 = vst [vmem:[#allocation2 + $0x328] sm:$0xff] %v7916
    %8173 = vst [vmem:[#allocation2 + $0x330] sm:$0xff] %v7917
    %8174 = vst [vmem:[#allocation2 + $0x338] sm:$0xff] %v7918
    %8175 = vst [vmem:[#allocation2 + $0x340] sm:$0xff] %v7919
    %8176 = vst [vmem:[#allocation2 + $0x348] sm:$0xff] %v7920
    %8177 = vst [vmem:[#allocation2 + $0x350] sm:$0xff] %v7921
    %8178 = vst [vmem:[#allocation2 + $0x358] sm:$0xff] %v7922
    %8179 = vst [vmem:[#allocation2 + $0x360] sm:$0xff] %v7923
    %8180 = vst [vmem:[#allocation2 + $0x368] sm:$0xff] %v7924
    %8181 = vst [vmem:[#allocation2 + $0x370] sm:$0xff] %v7925
    %8182 = vst [vmem:[#allocation2 + $0x378] sm:$0xff] %v7926
    %8183 = vst [vmem:[#allocation2 + $0x380] sm:$0xff] %v7927
    %8184 = vst [vmem:[#allocation2 + $0x388] sm:$0xff] %v7928
    %8185 = vst [vmem:[#allocation2 + $0x390] sm:$0xff] %v7929
    %8186 = vst [vmem:[#allocation2 + $0x398] sm:$0xff] %v7930
    %8187 = vst [vmem:[#allocation2 + $0x3a0] sm:$0xff] %v7931
    %8188 = vst [vmem:[#allocation2 + $0x3a8] sm:$0xff] %v7932
    %8189 = vst [vmem:[#allocation2 + $0x3b0] sm:$0xff] %v7933
    %8190 = vst [vmem:[#allocation2 + $0x3b8] sm:$0xff] %v7934
    %8191 = vst [vmem:[#allocation2 + $0x3c0] sm:$0xff] %v7935
    %8192 = vst [vmem:[#allocation2 + $0x3c8] sm:$0xff] %v7936
    %8193 = vst [vmem:[#allocation2 + $0x3d0] sm:$0xff] %v7937
    %8194 = vst [vmem:[#allocation2 + $0x3d8] sm:$0xff] %v7938
    %8195 = vst [vmem:[#allocation2 + $0x3e0] sm:$0xff] %v7939
    %8196 = vst [vmem:[#allocation2 + $0x3e8] sm:$0xff] %v7940
    %8197 = vst [vmem:[#allocation2 + $0x3f0] sm:$0xff] %v7941
    %8198 = vst [vmem:[#allocation2 + $0x3f8] sm:$0xff] %v7942
    %8199 = vst [vmem:[#allocation2 + $0x400] sm:$0xff] %v7943
    %8200 = vst [vmem:[#allocation2 + $0x408] sm:$0xff] %v7944
    %8201 = vst [vmem:[#allocation2 + $0x410] sm:$0xff] %v7945
    %8202 = vst [vmem:[#allocation2 + $0x418] sm:$0xff] %v7946
    %8203 = vst [vmem:[#allocation2 + $0x420] sm:$0xff] %v7947
    %8204 = vst [vmem:[#allocation2 + $0x428] sm:$0xff] %v7948
    %8205 = vst [vmem:[#allocation2 + $0x430] sm:$0xff] %v7949
    %8206 = vst [vmem:[#allocation2 + $0x438] sm:$0xff] %v7950
    %8207 = vst [vmem:[#allocation2 + $0x440] sm:$0xff] %v7951
    %8208 = vst [vmem:[#allocation2 + $0x448] sm:$0xff] %v7952
    %8209 = vst [vmem:[#allocation2 + $0x450] sm:$0xff] %v7953
    %8210 = vst [vmem:[#allocation2 + $0x458] sm:$0xff] %v7954
    %8211 = vst [vmem:[#allocation2 + $0x460] sm:$0xff] %v7955
    %8212 = vst [vmem:[#allocation2 + $0x468] sm:$0xff] %v7956
    %8213 = vst [vmem:[#allocation2 + $0x470] sm:$0xff] %v7957
    %8214 = vst [vmem:[#allocation2 + $0x478] sm:$0xff] %v7958
    %8215 = vst [vmem:[#allocation2 + $0x480] sm:$0xff] %v7959
    %8216 = vst [vmem:[#allocation2 + $0x488] sm:$0xff] %v7960
    %8217 = vst [vmem:[#allocation2 + $0x490] sm:$0xff] %v7961
    %8218 = vst [vmem:[#allocation2 + $0x498] sm:$0xff] %v7962
    %8219 = vst [vmem:[#allocation2 + $0x4a0] sm:$0xff] %v7963
    %8220 = vst [vmem:[#allocation2 + $0x4a8] sm:$0xff] %v7964
    %8221 = vst [vmem:[#allocation2 + $0x4b0] sm:$0xff] %v7965
    %8222 = vst [vmem:[#allocation2 + $0x4b8] sm:$0xff] %v7966
    %8223 = vst [vmem:[#allocation2 + $0x4c0] sm:$0xff] %v7967
    %8224 = vst [vmem:[#allocation2 + $0x4c8] sm:$0xff] %v7968
    %8225 = vst [vmem:[#allocation2 + $0x4d0] sm:$0xff] %v7969
    %8226 = vst [vmem:[#allocation2 + $0x4d8] sm:$0xff] %v7970
    %8227 = vst [vmem:[#allocation2 + $0x4e0] sm:$0xff] %v7971
    %8228 = vst [vmem:[#allocation2 + $0x4e8] sm:$0xff] %v7972
    %8229 = vst [vmem:[#allocation2 + $0x4f0] sm:$0xff] %v7973
    %8230 = vst [vmem:[#allocation2 + $0x4f8] sm:$0xff] %v7974
    %8231 = vst [vmem:[#allocation2 + $0x500] sm:$0xff] %v7975
    %8232 = vst [vmem:[#allocation2 + $0x508] sm:$0xff] %v7976
    %8233 = vst [vmem:[#allocation2 + $0x510] sm:$0xff] %v7977
    %8234 = vst [vmem:[#allocation2 + $0x518] sm:$0xff] %v7978
    %8235 = vst [vmem:[#allocation2 + $0x520] sm:$0xff] %v7979
    %8236 = vst [vmem:[#allocation2 + $0x528] sm:$0xff] %v7980
    %8237 = vst [vmem:[#allocation2 + $0x530] sm:$0xff] %v7981
    %8238 = vst [vmem:[#allocation2 + $0x538] sm:$0xff] %v7982
    %8239 = vst [vmem:[#allocation2 + $0x540] sm:$0xff] %v7983
    %8240 = vst [vmem:[#allocation2 + $0x548] sm:$0xff] %v7984
    %8241 = vst [vmem:[#allocation2 + $0x550] sm:$0xff] %v7985
    %8242 = vst [vmem:[#allocation2 + $0x558] sm:$0xff] %v7986
    %8243 = vst [vmem:[#allocation2 + $0x560] sm:$0xff] %v7987
    %8244 = vst [vmem:[#allocation2 + $0x568] sm:$0xff] %v7988
    %8245 = vst [vmem:[#allocation2 + $0x570] sm:$0xff] %v7989
    %8246 = vst [vmem:[#allocation2 + $0x578] sm:$0xff] %v7990
    %8247 = vst [vmem:[#allocation2 + $0x580] sm:$0xff] %v7991
    %8248 = vst [vmem:[#allocation2 + $0x588] sm:$0xff] %v7992
    %8249 = vst [vmem:[#allocation2 + $0x590] sm:$0xff] %v7993
    %8250 = vst [vmem:[#allocation2 + $0x598] sm:$0xff] %v7994
    %8251 = vst [vmem:[#allocation2 + $0x5a0] sm:$0xff] %v7995
    %8252 = vst [vmem:[#allocation2 + $0x5a8] sm:$0xff] %v7996
    %8253 = vst [vmem:[#allocation2 + $0x5b0] sm:$0xff] %v7997
    %8254 = vst [vmem:[#allocation2 + $0x5b8] sm:$0xff] %v7998
    %8255 = vst [vmem:[#allocation2 + $0x5c0] sm:$0xff] %v7999
    %8256 = vst [vmem:[#allocation2 + $0x5c8] sm:$0xff] %v8000
    %8257 = vst [vmem:[#allocation2 + $0x5d0] sm:$0xff] %v8001
    %8258 = vst [vmem:[#allocation2 + $0x5d8] sm:$0xff] %v8002
    %8259 = vst [vmem:[#allocation2 + $0x5e0] sm:$0xff] %v8003
    %8260 = vst [vmem:[#allocation2 + $0x5e8] sm:$0xff] %v8004
    %8261 = vst [vmem:[#allocation2 + $0x5f0] sm:$0xff] %v8005
    %8262 = vst [vmem:[#allocation2 + $0x5f8] sm:$0xff] %v8006
    %8263 = vst [vmem:[#allocation2 + $0x600] sm:$0xff] %v8007
    %8264 = vst [vmem:[#allocation2 + $0x608] sm:$0xff] %v8008
    %8265 = vst [vmem:[#allocation2 + $0x610] sm:$0xff] %v8009
    %8266 = vst [vmem:[#allocation2 + $0x618] sm:$0xff] %v8010
    %8267 = vst [vmem:[#allocation2 + $0x620] sm:$0xff] %v8011
    %8268 = vst [vmem:[#allocation2 + $0x628] sm:$0xff] %v8012
    %8269 = vst [vmem:[#allocation2 + $0x630] sm:$0xff] %v8013
    %8270 = vst [vmem:[#allocation2 + $0x638] sm:$0xff] %v8014
    %8271 = vst [vmem:[#allocation2 + $0x640] sm:$0xff] %v8015
    %8272 = vst [vmem:[#allocation2 + $0x648] sm:$0xff] %v8016
    %8273 = vst [vmem:[#allocation2 + $0x650] sm:$0xff] %v8017
    %8274 = vst [vmem:[#allocation2 + $0x658] sm:$0xff] %v8018
    %8275 = vst [vmem:[#allocation2 + $0x660] sm:$0xff] %v8019
    %8276 = vst [vmem:[#allocation2 + $0x668] sm:$0xff] %v8020
    %8277 = vst [vmem:[#allocation2 + $0x670] sm:$0xff] %v8021
    %8278 = vst [vmem:[#allocation2 + $0x678] sm:$0xff] %v8022
    %8279 = vst [vmem:[#allocation2 + $0x680] sm:$0xff] %v8023
    %8280 = vst [vmem:[#allocation2 + $0x688] sm:$0xff] %v8024
    %8281 = vst [vmem:[#allocation2 + $0x690] sm:$0xff] %v8025
    %8282 = vst [vmem:[#allocation2 + $0x698] sm:$0xff] %v8026
    %8283 = vst [vmem:[#allocation2 + $0x6a0] sm:$0xff] %v8027
    %8284 = vst [vmem:[#allocation2 + $0x6a8] sm:$0xff] %v8028
    %8285 = vst [vmem:[#allocation2 + $0x6b0] sm:$0xff] %v8029
    %8286 = vst [vmem:[#allocation2 + $0x6b8] sm:$0xff] %v8030
    %8287 = vst [vmem:[#allocation2 + $0x6c0] sm:$0xff] %v8031
    %8288 = vst [vmem:[#allocation2 + $0x6c8] sm:$0xff] %v8032
    %8289 = vst [vmem:[#allocation2 + $0x6d0] sm:$0xff] %v8033
    %8290 = vst [vmem:[#allocation2 + $0x6d8] sm:$0xff] %v8034
    %8291 = vst [vmem:[#allocation2 + $0x6e0] sm:$0xff] %v8035
    %8292 = vst [vmem:[#allocation2 + $0x6e8] sm:$0xff] %v8036
    %8293 = vst [vmem:[#allocation2 + $0x6f0] sm:$0xff] %v8037
    %8294 = vst [vmem:[#allocation2 + $0x6f8] sm:$0xff] %v8038
    %8295 = vst [vmem:[#allocation2 + $0x700] sm:$0xff] %v8039
    %8296 = vst [vmem:[#allocation2 + $0x708] sm:$0xff] %v8040
    %8297 = vst [vmem:[#allocation2 + $0x710] sm:$0xff] %v8041
    %8298 = vst [vmem:[#allocation2 + $0x718] sm:$0xff] %v8042
    %8299 = vst [vmem:[#allocation2 + $0x720] sm:$0xff] %v8043
    %8300 = vst [vmem:[#allocation2 + $0x728] sm:$0xff] %v8044
    %8301 = vst [vmem:[#allocation2 + $0x730] sm:$0xff] %v8045
    %8302 = vst [vmem:[#allocation2 + $0x738] sm:$0xff] %v8046
    %8303 = vst [vmem:[#allocation2 + $0x740] sm:$0xff] %v8047
    %8304 = vst [vmem:[#allocation2 + $0x748] sm:$0xff] %v8048
    %8305 = vst [vmem:[#allocation2 + $0x750] sm:$0xff] %v8049
    %8306 = vst [vmem:[#allocation2 + $0x758] sm:$0xff] %v8050
    %8307 = vst [vmem:[#allocation2 + $0x760] sm:$0xff] %v8051
    %8308 = vst [vmem:[#allocation2 + $0x768] sm:$0xff] %v8052
    %8309 = vst [vmem:[#allocation2 + $0x770] sm:$0xff] %v8053
    %8310 = vst [vmem:[#allocation2 + $0x778] sm:$0xff] %v8054
    %8311 = vst [vmem:[#allocation2 + $0x780] sm:$0xff] %v8055
    %8312 = vst [vmem:[#allocation2 + $0x788] sm:$0xff] %v8056
    %8313 = vst [vmem:[#allocation2 + $0x790] sm:$0xff] %v8057
    %8314 = vst [vmem:[#allocation2 + $0x798] sm:$0xff] %v8058
    %8315 = vst [vmem:[#allocation2 + $0x7a0] sm:$0xff] %v8059
    %8316 = vst [vmem:[#allocation2 + $0x7a8] sm:$0xff] %v8060
    %8317 = vst [vmem:[#allocation2 + $0x7b0] sm:$0xff] %v8061
    %8318 = vst [vmem:[#allocation2 + $0x7b8] sm:$0xff] %v8062
    %8319 = vst [vmem:[#allocation2 + $0x7c0] sm:$0xff] %v8063
    %8320 = vst [vmem:[#allocation2 + $0x7c8] sm:$0xff] %v8064
    %8321 = vst [vmem:[#allocation2 + $0x7d0] sm:$0xff] %v8065
    %8322 = vst [vmem:[#allocation2 + $0x7d8] sm:$0xff] %v8066
    %8323 = vst [vmem:[#allocation2 + $0x7e0] sm:$0xff] %v8067
    %8324 = vst [vmem:[#allocation2 + $0x7e8] sm:$0xff] %v8068
    %8325 = vst [vmem:[#allocation2 + $0x7f0] sm:$0xff] %v8069
    %8326 = vst [vmem:[#allocation2 + $0x7f8] sm:$0xff] %v8070
    // Predicated region
    $region14: #{arcface_loss.1} parent=1 // pred_check
      _
    $region15: #{arcface_loss.1} parent=1 // pred_check_branch
      %8328 = sbr.rel (0) target = $region17
    $region16: #{arcface_loss.1} parent=1 // pred_region
      %s8330 = ssub.s32 32768, 32768
      %8331 = vsyncadd [#allocation3], %s8330
      %s8332 = sshll.u32 [#allocation2], 4
      %s8333 = int_to_ptr.vmem [resolvable:$true] %s8332
      %8338 = dma.vmem_to_hbm [thread:$0]  %s8333, 32768, %s3, [#allocation3], 128, 128, 8
    $region17: #{arcface_loss.1} parent=1 // pred_fallthru
      _
    // Predicated region
    $region18: #{arcface_loss.1} parent=1 // pred_check
      _
    $region19: #{arcface_loss.1} parent=1 // pred_check_branch
      %8340 = sbr.rel (0) target = $region21
    $region20: #{arcface_loss.1} parent=1 // pred_region
      %8341 = dma.done [#allocation3], 32768
    $region21: #{arcface_loss.1} parent=1 // pred_fallthru
      _
    %8342 = vsyncpa [#allocation3], 1

</llo_original>
